<compile_context>
chip_gen: v7x
topology: tpu7x:2x2x1
jax: 0.10.0
libtpu: 0.0.40
codegen_flags: <defaults>
</compile_context>

<pallas_src>
import functools
import math

import jax
import jax.numpy as jnp
from jax import lax
from jax.experimental import pallas as pl
from jax.experimental.pallas import tpu as pltpu

MY_INF = 1.0e12
LN_EPS = 1e-5


# ----------------------------------------------------------------------------
# In-kernel helpers
# ----------------------------------------------------------------------------
def _layer_norm(x, gamma, beta):
    # x: (S, D); gamma/beta: (1, D)
    mean = jnp.mean(x, axis=-1, keepdims=True)
    var = jnp.mean((x - mean) ** 2, axis=-1, keepdims=True)
    inv = lax.rsqrt(var + LN_EPS)
    return (x - mean) * inv * gamma + beta


def _multi_head_attention(q, k, v, masked, heads, d_k):
    # q: (Sq, D), k/v: (Sk, D), masked: (Sq, Sk) bool (True == masked out).
    # 1/sqrt(d_k) is already folded into the Q projection weights at init.
    outs = []
    for h in range(heads):  # static unroll over heads (see TODO at file top)
        lo = h * d_k
        qh = q[:, lo:lo + d_k]
        kh = k[:, lo:lo + d_k]
        vh = v[:, lo:lo + d_k]
        s = jnp.dot(qh, kh.T, preferred_element_type=jnp.float32)
        s = jnp.where(masked, -MY_INF, s)            # masked_fill before max-sub
        s = s - jnp.max(s, axis=-1, keepdims=True)
        p = jnp.exp(s)
        p = p / jnp.sum(p, axis=-1, keepdims=True)   # exact divide (torch parity)
        outs.append(jnp.dot(p, vh, preferred_element_type=jnp.float32))
    return jnp.concatenate(outs, axis=-1)


# ----------------------------------------------------------------------------
# Fused whole-model kernel (encoder stack + decoder stack + output head)
# ----------------------------------------------------------------------------
def transformer_kernel(
    # per-batch activations / masks
    x_ref, y_ref, pe_src_ref, pe_dst_ref, smask_ref, dmask_ref, xmask_ref,
    # encoder weight stacks (L, ...)
    e_wqkv, e_bqkv, e_wo, e_vecs, e_w1, e_b1, e_w2,
    # decoder weight stacks (L, ...)
    d_wqkv, d_bqkv, d_wo1, d_wq2, d_wkv2, d_bkv2, d_wo2,
    d_w1, d_b1, d_w2, d_vecs,
    # output head
    wout_ref, bout_ref,
    # output
    o_ref,
    *, heads, d_k, d_model, n_layers,
):
    smask = smask_ref[0] > 0.5          # (Ss, Ss)
    dmask = dmask_ref[0] > 0.5          # (Sd, Sd)
    xmask = xmask_ref[0] > 0.5          # (Sd, Ss)

    # ---------------- encoder stack ----------------
    # sqrt(d_model) rescale is folded into the embedding table; dropout = identity.
    x0 = x_ref[0] + pe_src_ref[0]       # (Ss, D)

    def enc_layer(l, h):
        vecs = e_vecs[l]                # (6, D): [bo, g1, be1, b2_ffn, g2, be2]
        qkv = jnp.dot(h, e_wqkv[l], preferred_element_type=jnp.float32) + e_bqkv[l]
        attn = _multi_head_attention(
            qkv[:, :d_model], qkv[:, d_model:2 * d_model], qkv[:, 2 * d_model:],
            smask, heads, d_k)
        attn = jnp.dot(attn, e_wo[l], preferred_element_type=jnp.float32) + vecs[0:1]
        h1 = _layer_norm(h + attn, vecs[1:2], vecs[2:3])
        ff = jnp.maximum(
            jnp.dot(h1, e_w1[l], preferred_element_type=jnp.float32) + e_b1[l], 0.0)
        ff = jnp.dot(ff, e_w2[l], preferred_element_type=jnp.float32) + vecs[3:4]
        return _layer_norm(h1 + ff, vecs[4:5], vecs[5:6])

    enc = lax.fori_loop(0, n_layers, enc_layer, x0, unroll=True)   # (Ss, D)

    # ---------------- decoder stack ----------------
    y0 = y_ref[0] + pe_dst_ref[0]       # (Sd, D)

    def dec_layer(l, h):
        # (10, D): [bo1, g1, be1, bq2, bo2, g2, be2, b2_ffn, g3, be3]
        vecs = d_vecs[l]

        # masked self-attention
        qkv = jnp.dot(h, d_wqkv[l], preferred_element_type=jnp.float32) + d_bqkv[l]
        sa = _multi_head_attention(
            qkv[:, :d_model], qkv[:, d_model:2 * d_model], qkv[:, 2 * d_model:],
            dmask, heads, d_k)
        sa = jnp.dot(sa, d_wo1[l], preferred_element_type=jnp.float32) + vecs[0:1]
        h1 = _layer_norm(h + sa, vecs[1:2], vecs[2:3])

        # cross-attention over the (VMEM-resident) encoder output
        q2 = jnp.dot(h1, d_wq2[l], preferred_element_type=jnp.float32) + vecs[3:4]
        kv2 = jnp.dot(enc, d_wkv2[l], preferred_element_type=jnp.float32) + d_bkv2[l]
        ca = _multi_head_attention(
            q2, kv2[:, :d_model], kv2[:, d_model:], xmask, heads, d_k)
        ca = jnp.dot(ca, d_wo2[l], preferred_element_type=jnp.float32) + vecs[4:5]
        h2 = _layer_norm(h1 + ca, vecs[5:6], vecs[6:7])

        # feed-forward
        ff = jnp.maximum(
            jnp.dot(h2, d_w1[l], preferred_element_type=jnp.float32) + d_b1[l], 0.0)
        ff = jnp.dot(ff, d_w2[l], preferred_element_type=jnp.float32) + vecs[7:8]
        return _layer_norm(h2 + ff, vecs[8:9], vecs[9:10])

    dec = lax.fori_loop(0, n_layers, dec_layer, y0, unroll=True)   # (Sd, D)

    # ---------------- output projection (lane-dense, V = 128) ----------------
    logits = jnp.dot(dec, wout_ref[...], preferred_element_type=jnp.float32) + bout_ref[...]
    o_ref[0] = logits.astype(o_ref.dtype)


# ----------------------------------------------------------------------------
# Wrapper
# ----------------------------------------------------------------------------
def transformer_pallas(x_emb, y_emb, pe_src, pe_dst, src_mask, dst_mask,
                       src_dst_mask, enc_p, dec_p, out_w, out_b, heads):
    B, Ss, D = x_emb.shape
    Sd = y_emb.shape[1]
    V = out_w.shape[1]
    L = enc_p["wqkv"].shape[0]
    d_ff = enc_p["w1"].shape[2]

    bmap3 = lambda b: (b, 0, 0)     # per-batch block
    cmap3 = lambda b: (0, 0, 0)     # constant block (fetched once, VMEM-resident)
    cmap2 = lambda b: (0, 0)

    kernel = functools.partial(
        transformer_kernel, heads=heads, d_k=D // heads, d_model=D, n_layers=L)

    in_specs = [
        pl.BlockSpec((1, Ss, D), bmap3),           # embedded src (pre-scaled)
        pl.BlockSpec((1, Sd, D), bmap3),           # embedded dst (pre-scaled)
        pl.BlockSpec((1, Ss, D), cmap3),           # positional encoding (src)
        pl.BlockSpec((1, Sd, D), cmap3),           # positional encoding (dst)
        pl.BlockSpec((1, Ss, Ss), bmap3),          # src mask
        pl.BlockSpec((1, Sd, Sd), bmap3),          # dst (pad + causal) mask
        pl.BlockSpec((1, Sd, Ss), bmap3),          # src-dst pad mask
        # encoder weight stacks (whole arrays, constant index map)
        pl.BlockSpec((L, D, 3 * D), cmap3),        # fused Wqkv
        pl.BlockSpec((L, 1, 3 * D), cmap3),        # fused bqkv
        pl.BlockSpec((L, D, D), cmap3),            # Wo
        pl.BlockSpec((L, 6, D), cmap3),            # packed small params
        pl.BlockSpec((L, D, d_ff), cmap3),         # W1
        pl.BlockSpec((L, 1, d_ff), cmap3),         # b1
        pl.BlockSpec((L, d_ff, D), cmap3),         # W2
        # decoder weight stacks
        pl.BlockSpec((L, D, 3 * D), cmap3),        # self-attn fused Wqkv
        pl.BlockSpec((L, 1, 3 * D), cmap3),        # self-attn fused bqkv
        pl.BlockSpec((L, D, D), cmap3),            # self-attn Wo
        pl.BlockSpec((L, D, D), cmap3),            # cross-attn Wq
        pl.BlockSpec((L, D, 2 * D), cmap3),        # cross-attn fused Wkv
        pl.BlockSpec((L, 1, 2 * D), cmap3),        # cross-attn fused bkv
        pl.BlockSpec((L, D, D), cmap3),            # cross-attn Wo
        pl.BlockSpec((L, D, d_ff), cmap3),         # W1
        pl.BlockSpec((L, 1, d_ff), cmap3),         # b1
        pl.BlockSpec((L, d_ff, D), cmap3),         # W2
        pl.BlockSpec((L, 10, D), cmap3),           # packed small params
        # output head
        pl.BlockSpec((D, V), cmap2),               # output-layer weight
        pl.BlockSpec((1, V), cmap2),               # output-layer bias
    ]

    return pl.pallas_call(
        kernel,
        out_shape=jax.ShapeDtypeStruct((B, Sd, V), jnp.float32),
        grid=(B,),
        in_specs=in_specs,
        out_specs=pl.BlockSpec((1, Sd, V), bmap3),
        compiler_params=pltpu.CompilerParams(
            dimension_semantics=("parallel",)),    # batch -> 2 TCs on v7x
    )(x_emb, y_emb, pe_src, pe_dst, src_mask, dst_mask, src_dst_mask,
      enc_p["wqkv"], enc_p["bqkv"], enc_p["wo"], enc_p["vecs"],
      enc_p["w1"], enc_p["b1"], enc_p["w2"],
      dec_p["wqkv"], dec_p["bqkv"], dec_p["wo1"], dec_p["wq2"], dec_p["wkv2"],
      dec_p["bkv2"], dec_p["wo2"], dec_p["w1"], dec_p["b1"], dec_p["w2"],
      dec_p["vecs"], out_w, out_b)


def generate_mask(q_pad, k_pad, with_left_mask):
    """q_pad: (B, Lq) bool, k_pad: (B, Lk) bool -> (B, Lq, Lk) float, 1.0 == masked."""
    B, Lq = q_pad.shape
    Lk = k_pad.shape[1]
    if with_left_mask:
        base = jnp.triu(jnp.ones((Lq, Lk), jnp.float32), k=1) > 0   # 1 - tril
    else:
        base = jnp.zeros((Lq, Lk), dtype=bool)
    mask = base[None, :, :] | q_pad[:, :, None] | k_pad[:, None, :]
    return mask.astype(jnp.float32)


def transformer_forward(x_tok, y_tok, params, heads, pad_idx):
    S_src = x_tok.shape[1]
    S_dst = y_tok.shape[1]

    src_pad = x_tok == pad_idx
    dst_pad = y_tok == pad_idx
    src_mask = generate_mask(src_pad, src_pad, False)
    dst_mask = generate_mask(dst_pad, dst_pad, True)
    src_dst_mask = generate_mask(dst_pad, src_pad, False)

    # Embedding lookups (gathers) are plain-JAX glue; sqrt(d_model) is folded
    # into the tables at init so the kernel only adds the positional encoding.
    x_emb = jnp.take(params["emb_src"], x_tok, axis=0)
    y_emb = jnp.take(params["emb_dst"], y_tok, axis=0)
    pe_src = params["pe"][:, :S_src, :]
    pe_dst = params["pe"][:, :S_dst, :]

    return transformer_pallas(x_emb, y_emb, pe_src, pe_dst, src_mask, dst_mask,
                              src_dst_mask, params["enc"], params["dec"],
                              params["out_w"], params["out_b"], heads)


# ----------------------------------------------------------------------------
# Deterministic parameter construction
# ----------------------------------------------------------------------------
def make_positional_encoding(d_model, max_seq_len):
    pos = jnp.arange(max_seq_len, dtype=jnp.float32)
    two_i = jnp.arange(0, d_model, 2, dtype=jnp.float32)
    angle = pos[:, None] / (10000.0 ** (two_i[None, :] / d_model))
    pe = jnp.stack([jnp.sin(angle), jnp.cos(angle)], axis=2)   # interleave sin/cos
    return pe.reshape(1, max_seq_len, d_model)


def init_params(key, src_vocab, dst_vocab, pad_idx, d_model, d_ff, n_layers,
                max_seq_len, heads):
    d_k = d_model // heads
    q_scale = 1.0 / math.sqrt(d_k)           # folded into Q projections
    emb_scale = math.sqrt(d_model)           # folded into embedding tables
    keys = iter(jax.random.split(key, 4 + 16 * n_layers))

    def rnd(shape, scale=0.05):
        return scale * jax.random.normal(next(keys), shape, jnp.float32)

    emb_src = (rnd((src_vocab, d_model), 0.02) * emb_scale).at[pad_idx].set(0.0)
    emb_dst = (rnd((dst_vocab, d_model), 0.02) * emb_scale).at[pad_idx].set(0.0)

    # encoder packed small-param rows: [bo, g1, be1, b2_ffn, g2, be2]
    enc_vec = jnp.zeros((6, d_model), jnp.float32).at[1].set(1.0).at[4].set(1.0)
    enc = {
        "wqkv": jnp.stack([rnd((d_model, 3 * d_model)) for _ in range(n_layers)]),
        "bqkv": jnp.zeros((n_layers, 1, 3 * d_model), jnp.float32),
        "wo":   jnp.stack([rnd((d_model, d_model)) for _ in range(n_layers)]),
        "vecs": jnp.stack([enc_vec for _ in range(n_layers)]),
        "w1":   jnp.stack([rnd((d_model, d_ff)) for _ in range(n_layers)]),
        "b1":   jnp.zeros((n_layers, 1, d_ff), jnp.float32),
        "w2":   jnp.stack([rnd((d_ff, d_model)) for _ in range(n_layers)]),
    }
    # fold 1/sqrt(d_k) into the Q columns of the fused QKV projection (+ its bias)
    enc["wqkv"] = enc["wqkv"].at[:, :, :d_model].multiply(q_scale)
    enc["bqkv"] = enc["bqkv"].at[:, :, :d_model].multiply(q_scale)

    # decoder packed rows: [bo1, g1, be1, bq2, bo2, g2, be2, b2_ffn, g3, be3]
    # (bq2 is row 3; it is zero-initialized so the q_scale fold is a no-op for it)
    dec_vec = (jnp.zeros((10, d_model), jnp.float32)
               .at[1].set(1.0).at[5].set(1.0).at[8].set(1.0))
    dec = {
        "wqkv": jnp.stack([rnd((d_model, 3 * d_model)) for _ in range(n_layers)]),
        "bqkv": jnp.zeros((n_layers, 1, 3 * d_model), jnp.float32),
        "wo1":  jnp.stack([rnd((d_model, d_model)) for _ in range(n_layers)]),
        "wq2":  jnp.stack([rnd((d_model, d_model)) for _ in range(n_layers)]),
        "wkv2": jnp.stack([rnd((d_model, 2 * d_model)) for _ in range(n_layers)]),
        "bkv2": jnp.zeros((n_layers, 1, 2 * d_model), jnp.float32),
        "wo2":  jnp.stack([rnd((d_model, d_model)) for _ in range(n_layers)]),
        "w1":   jnp.stack([rnd((d_model, d_ff)) for _ in range(n_layers)]),
        "b1":   jnp.zeros((n_layers, 1, d_ff), jnp.float32),
        "w2":   jnp.stack([rnd((d_ff, d_model)) for _ in range(n_layers)]),
        "vecs": jnp.stack([dec_vec for _ in range(n_layers)]),
    }
    dec["wqkv"] = dec["wqkv"].at[:, :, :d_model].multiply(q_scale)
    dec["bqkv"] = dec["bqkv"].at[:, :, :d_model].multiply(q_scale)
    dec["wq2"] = dec["wq2"] * q_scale

    out_w = rnd((d_model, dst_vocab))
    out_b = jnp.zeros((1, dst_vocab), jnp.float32)

    return {
        "emb_src": emb_src, "emb_dst": emb_dst,
        "pe": make_positional_encoding(d_model, max_seq_len),
        "enc": enc, "dec": dec, "out_w": out_w, "out_b": out_b,
    }


# ----------------------------------------------------------------------------
# Main
# ----------------------------------------------------------------------------
if __name__ == "__main__":
    src_vocab = 100
    dst_vocab = 128          # multiple of 128 -> lane-dense logits store
    pad_idx = 0
    d_model = 32
    d_ff = 64
    n_layers = 2
    heads = 4
    max_seq_len = 16
    batch = 2
    src_len = 8
    dst_len = 8

    key = jax.random.PRNGKey(0)
    pkey, xkey, ykey = jax.random.split(key, 3)
    params = init_params(pkey, src_vocab, dst_vocab, pad_idx, d_model, d_ff,
                         n_layers, max_seq_len, heads)

    x_tok = jax.random.randint(xkey, (batch, src_len), 1, src_vocab, dtype=jnp.int32)
    y_tok = jax.random.randint(ykey, (batch, dst_len), 1, dst_vocab, dtype=jnp.int32)
    # introduce padding positions to exercise the pad / causal masks
    x_tok = x_tok.at[:, -1].set(pad_idx)
    y_tok = y_tok.at[:, -2:].set(pad_idx)

    fwd = jax.jit(functools.partial(transformer_forward, heads=heads, pad_idx=pad_idx))
    logits = fwd(x_tok, y_tok, params)
    logits = jax.block_until_ready(logits)

    assert logits.shape == (batch, dst_len, dst_vocab)
    assert bool(jnp.all(jnp.isfinite(logits)))
    print("KERNEL_OK")
</pallas_src>

<mosaic_0001>
module attributes {stable_mosaic.version = 11 : i64} {
  func.func @transformer_kernel(%arg0: i32, %arg1: memref<1x8x32xf32, #tpu.memory_space<vmem>>, %arg2: memref<1x8x32xf32, #tpu.memory_space<vmem>>, %arg3: memref<1x8x32xf32, #tpu.memory_space<vmem>>, %arg4: memref<1x8x32xf32, #tpu.memory_space<vmem>>, %arg5: memref<1x8x8xf32, #tpu.memory_space<vmem>>, %arg6: memref<1x8x8xf32, #tpu.memory_space<vmem>>, %arg7: memref<1x8x8xf32, #tpu.memory_space<vmem>>, %arg8: memref<2x32x96xf32, #tpu.memory_space<vmem>>, %arg9: memref<2x1x96xf32, #tpu.memory_space<vmem>>, %arg10: memref<2x32x32xf32, #tpu.memory_space<vmem>>, %arg11: memref<2x6x32xf32, #tpu.memory_space<vmem>>, %arg12: memref<2x32x64xf32, #tpu.memory_space<vmem>>, %arg13: memref<2x1x64xf32, #tpu.memory_space<vmem>>, %arg14: memref<2x64x32xf32, #tpu.memory_space<vmem>>, %arg15: memref<2x32x96xf32, #tpu.memory_space<vmem>>, %arg16: memref<2x1x96xf32, #tpu.memory_space<vmem>>, %arg17: memref<2x32x32xf32, #tpu.memory_space<vmem>>, %arg18: memref<2x32x32xf32, #tpu.memory_space<vmem>>, %arg19: memref<2x32x64xf32, #tpu.memory_space<vmem>>, %arg20: memref<2x1x64xf32, #tpu.memory_space<vmem>>, %arg21: memref<2x32x32xf32, #tpu.memory_space<vmem>>, %arg22: memref<2x32x64xf32, #tpu.memory_space<vmem>>, %arg23: memref<2x1x64xf32, #tpu.memory_space<vmem>>, %arg24: memref<2x64x32xf32, #tpu.memory_space<vmem>>, %arg25: memref<2x10x32xf32, #tpu.memory_space<vmem>>, %arg26: memref<32x128xf32, #tpu.memory_space<vmem>>, %arg27: memref<1x128xf32, #tpu.memory_space<vmem>>, %arg28: memref<1x8x128xf32, #tpu.memory_space<vmem>>) attributes {dimension_semantics = [#tpu.dimension_semantics<parallel>], iteration_bounds = array<i64: 2>, scalar_prefetch = 0 : i64, scratch_operands = 0 : i64, tpu.core_type = #tpu.core_type<tc>, window_params = [{transform_indices = @transform_0, window_bounds = array<i64: 1, 8, 32>}, {transform_indices = @transform_1, window_bounds = array<i64: 1, 8, 32>}, {pipeline_mode = #tpu.pipeline_mode<synchronous>, transform_indices = @transform_2, window_bounds = array<i64: 1, 8, 32>}, {pipeline_mode = #tpu.pipeline_mode<synchronous>, transform_indices = @transform_3, window_bounds = array<i64: 1, 8, 32>}, {transform_indices = @transform_4, window_bounds = array<i64: 1, 8, 8>}, {transform_indices = @transform_5, window_bounds = array<i64: 1, 8, 8>}, {transform_indices = @transform_6, window_bounds = array<i64: 1, 8, 8>}, {pipeline_mode = #tpu.pipeline_mode<synchronous>, transform_indices = @transform_7, window_bounds = array<i64: 2, 32, 96>}, {pipeline_mode = #tpu.pipeline_mode<synchronous>, transform_indices = @transform_8, window_bounds = array<i64: 2, 1, 96>}, {pipeline_mode = #tpu.pipeline_mode<synchronous>, transform_indices = @transform_9, window_bounds = array<i64: 2, 32, 32>}, {pipeline_mode = #tpu.pipeline_mode<synchronous>, transform_indices = @transform_10, window_bounds = array<i64: 2, 6, 32>}, {pipeline_mode = #tpu.pipeline_mode<synchronous>, transform_indices = @transform_11, window_bounds = array<i64: 2, 32, 64>}, {pipeline_mode = #tpu.pipeline_mode<synchronous>, transform_indices = @transform_12, window_bounds = array<i64: 2, 1, 64>}, {pipeline_mode = #tpu.pipeline_mode<synchronous>, transform_indices = @transform_13, window_bounds = array<i64: 2, 64, 32>}, {pipeline_mode = #tpu.pipeline_mode<synchronous>, transform_indices = @transform_14, window_bounds = array<i64: 2, 32, 96>}, {pipeline_mode = #tpu.pipeline_mode<synchronous>, transform_indices = @transform_15, window_bounds = array<i64: 2, 1, 96>}, {pipeline_mode = #tpu.pipeline_mode<synchronous>, transform_indices = @transform_16, window_bounds = array<i64: 2, 32, 32>}, {pipeline_mode = #tpu.pipeline_mode<synchronous>, transform_indices = @transform_17, window_bounds = array<i64: 2, 32, 32>}, {pipeline_mode = #tpu.pipeline_mode<synchronous>, transform_indices = @transform_18, window_bounds = array<i64: 2, 32, 64>}, {pipeline_mode = #tpu.pipeline_mode<synchronous>, transform_indices = @transform_19, window_bounds = array<i64: 2, 1, 64>}, {pipeline_mode = #tpu.pipeline_mode<synchronous>, transform_indices = @transform_20, window_bounds = array<i64: 2, 32, 32>}, {pipeline_mode = #tpu.pipeline_mode<synchronous>, transform_indices = @transform_21, window_bounds = array<i64: 2, 32, 64>}, {pipeline_mode = #tpu.pipeline_mode<synchronous>, transform_indices = @transform_22, window_bounds = array<i64: 2, 1, 64>}, {pipeline_mode = #tpu.pipeline_mode<synchronous>, transform_indices = @transform_23, window_bounds = array<i64: 2, 64, 32>}, {pipeline_mode = #tpu.pipeline_mode<synchronous>, transform_indices = @transform_24, window_bounds = array<i64: 2, 10, 32>}, {pipeline_mode = #tpu.pipeline_mode<synchronous>, transform_indices = @transform_25, window_bounds = array<i64: 32, 128>}, {pipeline_mode = #tpu.pipeline_mode<synchronous>, transform_indices = @transform_26, window_bounds = array<i64: 1, 128>}, {transform_indices = @transform_27, window_bounds = array<i64: 1, 8, 128>}]} {
    %c0 = arith.constant 0 : index
    %c0_0 = arith.constant 0 : index
    %c0_1 = arith.constant 0 : index
    %0 = vector.load %arg5[%c0, %c0_0, %c0_1] : memref<1x8x8xf32, #tpu.memory_space<vmem>>, vector<1x8x8xf32>
    %1 = vector.shape_cast %0 : vector<1x8x8xf32> to vector<8x8xf32>
    %cst = arith.constant 5.000000e-01 : f32
    %2 = vector.broadcast %cst : f32 to vector<8x8xf32>
    %3 = arith.cmpf ogt, %1, %2 : vector<8x8xf32>
    %c0_2 = arith.constant 0 : index
    %c0_3 = arith.constant 0 : index
    %c0_4 = arith.constant 0 : index
    %4 = vector.load %arg6[%c0_2, %c0_3, %c0_4] : memref<1x8x8xf32, #tpu.memory_space<vmem>>, vector<1x8x8xf32>
    %5 = vector.shape_cast %4 : vector<1x8x8xf32> to vector<8x8xf32>
    %cst_5 = arith.constant 5.000000e-01 : f32
    %6 = vector.broadcast %cst_5 : f32 to vector<8x8xf32>
    %7 = arith.cmpf ogt, %5, %6 : vector<8x8xf32>
    %c0_6 = arith.constant 0 : index
    %c0_7 = arith.constant 0 : index
    %c0_8 = arith.constant 0 : index
    %8 = vector.load %arg7[%c0_6, %c0_7, %c0_8] : memref<1x8x8xf32, #tpu.memory_space<vmem>>, vector<1x8x8xf32>
    %9 = vector.shape_cast %8 : vector<1x8x8xf32> to vector<8x8xf32>
    %cst_9 = arith.constant 5.000000e-01 : f32
    %10 = vector.broadcast %cst_9 : f32 to vector<8x8xf32>
    %11 = arith.cmpf ogt, %9, %10 : vector<8x8xf32>
    %c0_10 = arith.constant 0 : index
    %c0_11 = arith.constant 0 : index
    %c0_12 = arith.constant 0 : index
    %12 = vector.load %arg1[%c0_10, %c0_11, %c0_12] : memref<1x8x32xf32, #tpu.memory_space<vmem>>, vector<1x8x32xf32>
    %13 = vector.shape_cast %12 : vector<1x8x32xf32> to vector<8x32xf32>
    %c0_13 = arith.constant 0 : index
    %c0_14 = arith.constant 0 : index
    %c0_15 = arith.constant 0 : index
    %14 = vector.load %arg3[%c0_13, %c0_14, %c0_15] : memref<1x8x32xf32, #tpu.memory_space<vmem>>, vector<1x8x32xf32>
    %15 = vector.shape_cast %14 : vector<1x8x32xf32> to vector<8x32xf32>
    %16 = arith.addf %13, %15 : vector<8x32xf32>
    %c0_i32 = arith.constant 0 : i32
    %17 = arith.index_cast %c0_i32 : i32 to index
    %c0_16 = arith.constant 0 : index
    %c0_17 = arith.constant 0 : index
    %18 = vector.load %arg11[%17, %c0_16, %c0_17] : memref<2x6x32xf32, #tpu.memory_space<vmem>>, vector<1x6x32xf32>
    %19 = vector.shape_cast %18 : vector<1x6x32xf32> to vector<6x32xf32>
    %20 = arith.index_cast %c0_i32 : i32 to index
    %c0_18 = arith.constant 0 : index
    %c0_19 = arith.constant 0 : index
    %21 = vector.load %arg8[%20, %c0_18, %c0_19] : memref<2x32x96xf32, #tpu.memory_space<vmem>>, vector<1x32x96xf32>
    %22 = vector.shape_cast %21 : vector<1x32x96xf32> to vector<32x96xf32>
    %cst_20 = arith.constant dense<0.000000e+00> : vector<8x96xf32>
    %23 = tpu.matmul %16, %22, %cst_20 {dimension_numbers = #tpu.dot_dimension_numbers<[1], [0], [0], [1], [0, 0, 1, 1], [], []>} : vector<8x32xf32>, vector<32x96xf32>, vector<8x96xf32> -> vector<8x96xf32>
    %24 = arith.index_cast %c0_i32 : i32 to index
    %c0_21 = arith.constant 0 : index
    %c0_22 = arith.constant 0 : index
    %25 = vector.load %arg9[%24, %c0_21, %c0_22] : memref<2x1x96xf32, #tpu.memory_space<vmem>>, vector<1x1x96xf32>
    %26 = vector.shape_cast %25 : vector<1x1x96xf32> to vector<1x96xf32>
    %27 = vector.broadcast %26 : vector<1x96xf32> to vector<8x96xf32>
    %28 = arith.addf %23, %27 : vector<8x96xf32>
    %29 = vector.extract_strided_slice %28 {offsets = [0, 0], sizes = [8, 32], strides = [1, 1]} : vector<8x96xf32> to vector<8x32xf32>
    %30 = vector.extract_strided_slice %28 {offsets = [0, 32], sizes = [8, 32], strides = [1, 1]} : vector<8x96xf32> to vector<8x32xf32>
    %31 = vector.extract_strided_slice %28 {offsets = [0, 64], sizes = [8, 32], strides = [1, 1]} : vector<8x96xf32> to vector<8x32xf32>
    %32 = vector.extract_strided_slice %29 {offsets = [0, 0], sizes = [8, 8], strides = [1, 1]} : vector<8x32xf32> to vector<8x8xf32>
    %33 = vector.extract_strided_slice %30 {offsets = [0, 0], sizes = [8, 8], strides = [1, 1]} : vector<8x32xf32> to vector<8x8xf32>
    %34 = vector.extract_strided_slice %31 {offsets = [0, 0], sizes = [8, 8], strides = [1, 1]} : vector<8x32xf32> to vector<8x8xf32>
    %35 = tpu.transpose %33, [1, 0] : vector<8x8xf32> -> vector<8x8xf32>
    %cst_23 = arith.constant dense<0.000000e+00> : vector<8x8xf32>
    %36 = tpu.matmul %32, %35, %cst_23 {dimension_numbers = #tpu.dot_dimension_numbers<[1], [0], [0], [1], [0, 0, 1, 1], [], []>} : vector<8x8xf32>, vector<8x8xf32>, vector<8x8xf32> -> vector<8x8xf32>
    %cst_24 = arith.constant -9.99999995E+11 : f32
    %37 = vector.broadcast %cst_24 : f32 to vector<8x8xf32>
    %38 = arith.select %3, %37, %36 : vector<8x8xi1>, vector<8x8xf32>
    %cst_25 = arith.constant dense<0xFF800000> : vector<8xf32>
    %39 = vector.multi_reduction <maximumf>, %38, %cst_25 [1] : vector<8x8xf32> to vector<8xf32>
    %40 = vector.shape_cast %39 : vector<8xf32> to vector<8x1xf32>
    %41 = vector.broadcast %40 : vector<8x1xf32> to vector<8x8xf32>
    %42 = arith.subf %38, %41 : vector<8x8xf32>
    %43 = math.exp %42 : vector<8x8xf32>
    %cst_26 = arith.constant dense<0.000000e+00> : vector<8xf32>
    %44 = vector.multi_reduction <add>, %43, %cst_26 [1] : vector<8x8xf32> to vector<8xf32>
    %45 = vector.shape_cast %44 : vector<8xf32> to vector<8x1xf32>
    %46 = vector.broadcast %45 : vector<8x1xf32> to vector<8x8xf32>
    %47 = arith.divf %43, %46 : vector<8x8xf32>
    %cst_27 = arith.constant dense<0.000000e+00> : vector<8x8xf32>
    %48 = tpu.matmul %47, %34, %cst_27 {dimension_numbers = #tpu.dot_dimension_numbers<[1], [0], [0], [1], [0, 0, 1, 1], [], []>} : vector<8x8xf32>, vector<8x8xf32>, vector<8x8xf32> -> vector<8x8xf32>
    %49 = vector.extract_strided_slice %29 {offsets = [0, 8], sizes = [8, 8], strides = [1, 1]} : vector<8x32xf32> to vector<8x8xf32>
    %50 = vector.extract_strided_slice %30 {offsets = [0, 8], sizes = [8, 8], strides = [1, 1]} : vector<8x32xf32> to vector<8x8xf32>
    %51 = vector.extract_strided_slice %31 {offsets = [0, 8], sizes = [8, 8], strides = [1, 1]} : vector<8x32xf32> to vector<8x8xf32>
    %52 = tpu.transpose %50, [1, 0] : vector<8x8xf32> -> vector<8x8xf32>
    %cst_28 = arith.constant dense<0.000000e+00> : vector<8x8xf32>
    %53 = tpu.matmul %49, %52, %cst_28 {dimension_numbers = #tpu.dot_dimension_numbers<[1], [0], [0], [1], [0, 0, 1, 1], [], []>} : vector<8x8xf32>, vector<8x8xf32>, vector<8x8xf32> -> vector<8x8xf32>
    %cst_29 = arith.constant -9.99999995E+11 : f32
    %54 = vector.broadcast %cst_29 : f32 to vector<8x8xf32>
    %55 = arith.select %3, %54, %53 : vector<8x8xi1>, vector<8x8xf32>
    %cst_30 = arith.constant dense<0xFF800000> : vector<8xf32>
    %56 = vector.multi_reduction <maximumf>, %55, %cst_30 [1] : vector<8x8xf32> to vector<8xf32>
    %57 = vector.shape_cast %56 : vector<8xf32> to vector<8x1xf32>
    %58 = vector.broadcast %57 : vector<8x1xf32> to vector<8x8xf32>
    %59 = arith.subf %55, %58 : vector<8x8xf32>
    %60 = math.exp %59 : vector<8x8xf32>
    %cst_31 = arith.constant dense<0.000000e+00> : vector<8xf32>
    %61 = vector.multi_reduction <add>, %60, %cst_31 [1] : vector<8x8xf32> to vector<8xf32>
    %62 = vector.shape_cast %61 : vector<8xf32> to vector<8x1xf32>
    %63 = vector.broadcast %62 : vector<8x1xf32> to vector<8x8xf32>
    %64 = arith.divf %60, %63 : vector<8x8xf32>
    %cst_32 = arith.constant dense<0.000000e+00> : vector<8x8xf32>
    %65 = tpu.matmul %64, %51, %cst_32 {dimension_numbers = #tpu.dot_dimension_numbers<[1], [0], [0], [1], [0, 0, 1, 1], [], []>} : vector<8x8xf32>, vector<8x8xf32>, vector<8x8xf32> -> vector<8x8xf32>
    %66 = vector.extract_strided_slice %29 {offsets = [0, 16], sizes = [8, 8], strides = [1, 1]} : vector<8x32xf32> to vector<8x8xf32>
    %67 = vector.extract_strided_slice %30 {offsets = [0, 16], sizes = [8, 8], strides = [1, 1]} : vector<8x32xf32> to vector<8x8xf32>
    %68 = vector.extract_strided_slice %31 {offsets = [0, 16], sizes = [8, 8], strides = [1, 1]} : vector<8x32xf32> to vector<8x8xf32>
    %69 = tpu.transpose %67, [1, 0] : vector<8x8xf32> -> vector<8x8xf32>
    %cst_33 = arith.constant dense<0.000000e+00> : vector<8x8xf32>
    %70 = tpu.matmul %66, %69, %cst_33 {dimension_numbers = #tpu.dot_dimension_numbers<[1], [0], [0], [1], [0, 0, 1, 1], [], []>} : vector<8x8xf32>, vector<8x8xf32>, vector<8x8xf32> -> vector<8x8xf32>
    %cst_34 = arith.constant -9.99999995E+11 : f32
    %71 = vector.broadcast %cst_34 : f32 to vector<8x8xf32>
    %72 = arith.select %3, %71, %70 : vector<8x8xi1>, vector<8x8xf32>
    %cst_35 = arith.constant dense<0xFF800000> : vector<8xf32>
    %73 = vector.multi_reduction <maximumf>, %72, %cst_35 [1] : vector<8x8xf32> to vector<8xf32>
    %74 = vector.shape_cast %73 : vector<8xf32> to vector<8x1xf32>
    %75 = vector.broadcast %74 : vector<8x1xf32> to vector<8x8xf32>
    %76 = arith.subf %72, %75 : vector<8x8xf32>
    %77 = math.exp %76 : vector<8x8xf32>
    %cst_36 = arith.constant dense<0.000000e+00> : vector<8xf32>
    %78 = vector.multi_reduction <add>, %77, %cst_36 [1] : vector<8x8xf32> to vector<8xf32>
    %79 = vector.shape_cast %78 : vector<8xf32> to vector<8x1xf32>
    %80 = vector.broadcast %79 : vector<8x1xf32> to vector<8x8xf32>
    %81 = arith.divf %77, %80 : vector<8x8xf32>
    %cst_37 = arith.constant dense<0.000000e+00> : vector<8x8xf32>
    %82 = tpu.matmul %81, %68, %cst_37 {dimension_numbers = #tpu.dot_dimension_numbers<[1], [0], [0], [1], [0, 0, 1, 1], [], []>} : vector<8x8xf32>, vector<8x8xf32>, vector<8x8xf32> -> vector<8x8xf32>
    %83 = vector.extract_strided_slice %29 {offsets = [0, 24], sizes = [8, 8], strides = [1, 1]} : vector<8x32xf32> to vector<8x8xf32>
    %84 = vector.extract_strided_slice %30 {offsets = [0, 24], sizes = [8, 8], strides = [1, 1]} : vector<8x32xf32> to vector<8x8xf32>
    %85 = vector.extract_strided_slice %31 {offsets = [0, 24], sizes = [8, 8], strides = [1, 1]} : vector<8x32xf32> to vector<8x8xf32>
    %86 = tpu.transpose %84, [1, 0] : vector<8x8xf32> -> vector<8x8xf32>
    %cst_38 = arith.constant dense<0.000000e+00> : vector<8x8xf32>
    %87 = tpu.matmul %83, %86, %cst_38 {dimension_numbers = #tpu.dot_dimension_numbers<[1], [0], [0], [1], [0, 0, 1, 1], [], []>} : vector<8x8xf32>, vector<8x8xf32>, vector<8x8xf32> -> vector<8x8xf32>
    %cst_39 = arith.constant -9.99999995E+11 : f32
    %88 = vector.broadcast %cst_39 : f32 to vector<8x8xf32>
    %89 = arith.select %3, %88, %87 : vector<8x8xi1>, vector<8x8xf32>
    %cst_40 = arith.constant dense<0xFF800000> : vector<8xf32>
    %90 = vector.multi_reduction <maximumf>, %89, %cst_40 [1] : vector<8x8xf32> to vector<8xf32>
    %91 = vector.shape_cast %90 : vector<8xf32> to vector<8x1xf32>
    %92 = vector.broadcast %91 : vector<8x1xf32> to vector<8x8xf32>
    %93 = arith.subf %89, %92 : vector<8x8xf32>
    %94 = math.exp %93 : vector<8x8xf32>
    %cst_41 = arith.constant dense<0.000000e+00> : vector<8xf32>
    %95 = vector.multi_reduction <add>, %94, %cst_41 [1] : vector<8x8xf32> to vector<8xf32>
    %96 = vector.shape_cast %95 : vector<8xf32> to vector<8x1xf32>
    %97 = vector.broadcast %96 : vector<8x1xf32> to vector<8x8xf32>
    %98 = arith.divf %94, %97 : vector<8x8xf32>
    %cst_42 = arith.constant dense<0.000000e+00> : vector<8x8xf32>
    %99 = tpu.matmul %98, %85, %cst_42 {dimension_numbers = #tpu.dot_dimension_numbers<[1], [0], [0], [1], [0, 0, 1, 1], [], []>} : vector<8x8xf32>, vector<8x8xf32>, vector<8x8xf32> -> vector<8x8xf32>
    %100 = tpu.concatenate %48, %65, %82, %99 in 1 : vector<8x8xf32>, vector<8x8xf32>, vector<8x8xf32>, vector<8x8xf32> -> vector<8x32xf32>
    %101 = arith.index_cast %c0_i32 : i32 to index
    %c0_43 = arith.constant 0 : index
    %c0_44 = arith.constant 0 : index
    %102 = vector.load %arg10[%101, %c0_43, %c0_44] : memref<2x32x32xf32, #tpu.memory_space<vmem>>, vector<1x32x32xf32>
    %103 = vector.shape_cast %102 : vector<1x32x32xf32> to vector<32x32xf32>
    %cst_45 = arith.constant dense<0.000000e+00> : vector<8x32xf32>
    %104 = tpu.matmul %100, %103, %cst_45 {dimension_numbers = #tpu.dot_dimension_numbers<[1], [0], [0], [1], [0, 0, 1, 1], [], []>} : vector<8x32xf32>, vector<32x32xf32>, vector<8x32xf32> -> vector<8x32xf32>
    %105 = vector.extract_strided_slice %19 {offsets = [0, 0], sizes = [1, 32], strides = [1, 1]} : vector<6x32xf32> to vector<1x32xf32>
    %106 = vector.broadcast %105 : vector<1x32xf32> to vector<8x32xf32>
    %107 = arith.addf %104, %106 : vector<8x32xf32>
    %108 = arith.addf %16, %107 : vector<8x32xf32>
    %109 = vector.extract_strided_slice %19 {offsets = [1, 0], sizes = [1, 32], strides = [1, 1]} : vector<6x32xf32> to vector<1x32xf32>
    %110 = vector.extract_strided_slice %19 {offsets = [2, 0], sizes = [1, 32], strides = [1, 1]} : vector<6x32xf32> to vector<1x32xf32>
    %cst_46 = arith.constant dense<0.000000e+00> : vector<8xf32>
    %111 = vector.multi_reduction <add>, %108, %cst_46 [1] : vector<8x32xf32> to vector<8xf32>
    %112 = vector.shape_cast %111 : vector<8xf32> to vector<8x1xf32>
    %cst_47 = arith.constant 3.200000e+01 : f32
    %113 = vector.broadcast %cst_47 : f32 to vector<8x1xf32>
    %114 = arith.divf %112, %113 : vector<8x1xf32>
    %115 = vector.broadcast %114 : vector<8x1xf32> to vector<8x32xf32>
    %116 = arith.subf %108, %115 : vector<8x32xf32>
    %117 = arith.mulf %116, %116 : vector<8x32xf32>
    %cst_48 = arith.constant dense<0.000000e+00> : vector<8xf32>
    %118 = vector.multi_reduction <add>, %117, %cst_48 [1] : vector<8x32xf32> to vector<8xf32>
    %119 = vector.shape_cast %118 : vector<8xf32> to vector<8x1xf32>
    %cst_49 = arith.constant 3.200000e+01 : f32
    %120 = vector.broadcast %cst_49 : f32 to vector<8x1xf32>
    %121 = arith.divf %119, %120 : vector<8x1xf32>
    %cst_50 = arith.constant 9.99999974E-6 : f32
    %122 = vector.broadcast %cst_50 : f32 to vector<8x1xf32>
    %123 = arith.addf %121, %122 : vector<8x1xf32>
    %124 = math.rsqrt %123 : vector<8x1xf32>
    %125 = vector.broadcast %114 : vector<8x1xf32> to vector<8x32xf32>
    %126 = arith.subf %108, %125 : vector<8x32xf32>
    %127 = vector.broadcast %124 : vector<8x1xf32> to vector<8x32xf32>
    %128 = arith.mulf %126, %127 : vector<8x32xf32>
    %129 = vector.broadcast %109 : vector<1x32xf32> to vector<8x32xf32>
    %130 = arith.mulf %128, %129 : vector<8x32xf32>
    %131 = vector.broadcast %110 : vector<1x32xf32> to vector<8x32xf32>
    %132 = arith.addf %130, %131 : vector<8x32xf32>
    %133 = arith.index_cast %c0_i32 : i32 to index
    %c0_51 = arith.constant 0 : index
    %c0_52 = arith.constant 0 : index
    %134 = vector.load %arg12[%133, %c0_51, %c0_52] : memref<2x32x64xf32, #tpu.memory_space<vmem>>, vector<1x32x64xf32>
    %135 = vector.shape_cast %134 : vector<1x32x64xf32> to vector<32x64xf32>
    %cst_53 = arith.constant dense<0.000000e+00> : vector<8x64xf32>
    %136 = tpu.matmul %132, %135, %cst_53 {dimension_numbers = #tpu.dot_dimension_numbers<[1], [0], [0], [1], [0, 0, 1, 1], [], []>} : vector<8x32xf32>, vector<32x64xf32>, vector<8x64xf32> -> vector<8x64xf32>
    %137 = arith.index_cast %c0_i32 : i32 to index
    %c0_54 = arith.constant 0 : index
    %c0_55 = arith.constant 0 : index
    %138 = vector.load %arg13[%137, %c0_54, %c0_55] : memref<2x1x64xf32, #tpu.memory_space<vmem>>, vector<1x1x64xf32>
    %139 = vector.shape_cast %138 : vector<1x1x64xf32> to vector<1x64xf32>
    %140 = vector.broadcast %139 : vector<1x64xf32> to vector<8x64xf32>
    %141 = arith.addf %136, %140 : vector<8x64xf32>
    %cst_56 = arith.constant 0.000000e+00 : f32
    %142 = vector.broadcast %cst_56 : f32 to vector<8x64xf32>
    %143 = arith.maximumf %141, %142 : vector<8x64xf32>
    %144 = arith.index_cast %c0_i32 : i32 to index
    %c0_57 = arith.constant 0 : index
    %c0_58 = arith.constant 0 : index
    %145 = vector.load %arg14[%144, %c0_57, %c0_58] : memref<2x64x32xf32, #tpu.memory_space<vmem>>, vector<1x64x32xf32>
    %146 = vector.shape_cast %145 : vector<1x64x32xf32> to vector<64x32xf32>
    %cst_59 = arith.constant dense<0.000000e+00> : vector<8x32xf32>
    %147 = tpu.matmul %143, %146, %cst_59 {dimension_numbers = #tpu.dot_dimension_numbers<[1], [0], [0], [1], [0, 0, 1, 1], [], []>} : vector<8x64xf32>, vector<64x32xf32>, vector<8x32xf32> -> vector<8x32xf32>
    %148 = vector.extract_strided_slice %19 {offsets = [3, 0], sizes = [1, 32], strides = [1, 1]} : vector<6x32xf32> to vector<1x32xf32>
    %149 = vector.broadcast %148 : vector<1x32xf32> to vector<8x32xf32>
    %150 = arith.addf %147, %149 : vector<8x32xf32>
    %151 = arith.addf %132, %150 : vector<8x32xf32>
    %152 = vector.extract_strided_slice %19 {offsets = [4, 0], sizes = [1, 32], strides = [1, 1]} : vector<6x32xf32> to vector<1x32xf32>
    %153 = vector.extract_strided_slice %19 {offsets = [5, 0], sizes = [1, 32], strides = [1, 1]} : vector<6x32xf32> to vector<1x32xf32>
    %cst_60 = arith.constant dense<0.000000e+00> : vector<8xf32>
    %154 = vector.multi_reduction <add>, %151, %cst_60 [1] : vector<8x32xf32> to vector<8xf32>
    %155 = vector.shape_cast %154 : vector<8xf32> to vector<8x1xf32>
    %cst_61 = arith.constant 3.200000e+01 : f32
    %156 = vector.broadcast %cst_61 : f32 to vector<8x1xf32>
    %157 = arith.divf %155, %156 : vector<8x1xf32>
    %158 = vector.broadcast %157 : vector<8x1xf32> to vector<8x32xf32>
    %159 = arith.subf %151, %158 : vector<8x32xf32>
    %160 = arith.mulf %159, %159 : vector<8x32xf32>
    %cst_62 = arith.constant dense<0.000000e+00> : vector<8xf32>
    %161 = vector.multi_reduction <add>, %160, %cst_62 [1] : vector<8x32xf32> to vector<8xf32>
    %162 = vector.shape_cast %161 : vector<8xf32> to vector<8x1xf32>
    %cst_63 = arith.constant 3.200000e+01 : f32
    %163 = vector.broadcast %cst_63 : f32 to vector<8x1xf32>
    %164 = arith.divf %162, %163 : vector<8x1xf32>
    %cst_64 = arith.constant 9.99999974E-6 : f32
    %165 = vector.broadcast %cst_64 : f32 to vector<8x1xf32>
    %166 = arith.addf %164, %165 : vector<8x1xf32>
    %167 = math.rsqrt %166 : vector<8x1xf32>
    %168 = vector.broadcast %157 : vector<8x1xf32> to vector<8x32xf32>
    %169 = arith.subf %151, %168 : vector<8x32xf32>
    %170 = vector.broadcast %167 : vector<8x1xf32> to vector<8x32xf32>
    %171 = arith.mulf %169, %170 : vector<8x32xf32>
    %172 = vector.broadcast %152 : vector<1x32xf32> to vector<8x32xf32>
    %173 = arith.mulf %171, %172 : vector<8x32xf32>
    %174 = vector.broadcast %153 : vector<1x32xf32> to vector<8x32xf32>
    %175 = arith.addf %173, %174 : vector<8x32xf32>
    %c1_i32 = arith.constant 1 : i32
    %176 = arith.index_cast %c1_i32 : i32 to index
    %c0_65 = arith.constant 0 : index
    %c0_66 = arith.constant 0 : index
    %177 = vector.load %arg11[%176, %c0_65, %c0_66] : memref<2x6x32xf32, #tpu.memory_space<vmem>>, vector<1x6x32xf32>
    %178 = vector.shape_cast %177 : vector<1x6x32xf32> to vector<6x32xf32>
    %179 = arith.index_cast %c1_i32 : i32 to index
    %c0_67 = arith.constant 0 : index
    %c0_68 = arith.constant 0 : index
    %180 = vector.load %arg8[%179, %c0_67, %c0_68] : memref<2x32x96xf32, #tpu.memory_space<vmem>>, vector<1x32x96xf32>
    %181 = vector.shape_cast %180 : vector<1x32x96xf32> to vector<32x96xf32>
    %cst_69 = arith.constant dense<0.000000e+00> : vector<8x96xf32>
    %182 = tpu.matmul %175, %181, %cst_69 {dimension_numbers = #tpu.dot_dimension_numbers<[1], [0], [0], [1], [0, 0, 1, 1], [], []>} : vector<8x32xf32>, vector<32x96xf32>, vector<8x96xf32> -> vector<8x96xf32>
    %183 = arith.index_cast %c1_i32 : i32 to index
    %c0_70 = arith.constant 0 : index
    %c0_71 = arith.constant 0 : index
    %184 = vector.load %arg9[%183, %c0_70, %c0_71] : memref<2x1x96xf32, #tpu.memory_space<vmem>>, vector<1x1x96xf32>
    %185 = vector.shape_cast %184 : vector<1x1x96xf32> to vector<1x96xf32>
    %186 = vector.broadcast %185 : vector<1x96xf32> to vector<8x96xf32>
    %187 = arith.addf %182, %186 : vector<8x96xf32>
    %188 = vector.extract_strided_slice %187 {offsets = [0, 0], sizes = [8, 32], strides = [1, 1]} : vector<8x96xf32> to vector<8x32xf32>
    %189 = vector.extract_strided_slice %187 {offsets = [0, 32], sizes = [8, 32], strides = [1, 1]} : vector<8x96xf32> to vector<8x32xf32>
    %190 = vector.extract_strided_slice %187 {offsets = [0, 64], sizes = [8, 32], strides = [1, 1]} : vector<8x96xf32> to vector<8x32xf32>
    %191 = vector.extract_strided_slice %188 {offsets = [0, 0], sizes = [8, 8], strides = [1, 1]} : vector<8x32xf32> to vector<8x8xf32>
    %192 = vector.extract_strided_slice %189 {offsets = [0, 0], sizes = [8, 8], strides = [1, 1]} : vector<8x32xf32> to vector<8x8xf32>
    %193 = vector.extract_strided_slice %190 {offsets = [0, 0], sizes = [8, 8], strides = [1, 1]} : vector<8x32xf32> to vector<8x8xf32>
    %194 = tpu.transpose %192, [1, 0] : vector<8x8xf32> -> vector<8x8xf32>
    %cst_72 = arith.constant dense<0.000000e+00> : vector<8x8xf32>
    %195 = tpu.matmul %191, %194, %cst_72 {dimension_numbers = #tpu.dot_dimension_numbers<[1], [0], [0], [1], [0, 0, 1, 1], [], []>} : vector<8x8xf32>, vector<8x8xf32>, vector<8x8xf32> -> vector<8x8xf32>
    %cst_73 = arith.constant -9.99999995E+11 : f32
    %196 = vector.broadcast %cst_73 : f32 to vector<8x8xf32>
    %197 = arith.select %3, %196, %195 : vector<8x8xi1>, vector<8x8xf32>
    %cst_74 = arith.constant dense<0xFF800000> : vector<8xf32>
    %198 = vector.multi_reduction <maximumf>, %197, %cst_74 [1] : vector<8x8xf32> to vector<8xf32>
    %199 = vector.shape_cast %198 : vector<8xf32> to vector<8x1xf32>
    %200 = vector.broadcast %199 : vector<8x1xf32> to vector<8x8xf32>
    %201 = arith.subf %197, %200 : vector<8x8xf32>
    %202 = math.exp %201 : vector<8x8xf32>
    %cst_75 = arith.constant dense<0.000000e+00> : vector<8xf32>
    %203 = vector.multi_reduction <add>, %202, %cst_75 [1] : vector<8x8xf32> to vector<8xf32>
    %204 = vector.shape_cast %203 : vector<8xf32> to vector<8x1xf32>
    %205 = vector.broadcast %204 : vector<8x1xf32> to vector<8x8xf32>
    %206 = arith.divf %202, %205 : vector<8x8xf32>
    %cst_76 = arith.constant dense<0.000000e+00> : vector<8x8xf32>
    %207 = tpu.matmul %206, %193, %cst_76 {dimension_numbers = #tpu.dot_dimension_numbers<[1], [0], [0], [1], [0, 0, 1, 1], [], []>} : vector<8x8xf32>, vector<8x8xf32>, vector<8x8xf32> -> vector<8x8xf32>
    %208 = vector.extract_strided_slice %188 {offsets = [0, 8], sizes = [8, 8], strides = [1, 1]} : vector<8x32xf32> to vector<8x8xf32>
    %209 = vector.extract_strided_slice %189 {offsets = [0, 8], sizes = [8, 8], strides = [1, 1]} : vector<8x32xf32> to vector<8x8xf32>
    %210 = vector.extract_strided_slice %190 {offsets = [0, 8], sizes = [8, 8], strides = [1, 1]} : vector<8x32xf32> to vector<8x8xf32>
    %211 = tpu.transpose %209, [1, 0] : vector<8x8xf32> -> vector<8x8xf32>
    %cst_77 = arith.constant dense<0.000000e+00> : vector<8x8xf32>
    %212 = tpu.matmul %208, %211, %cst_77 {dimension_numbers = #tpu.dot_dimension_numbers<[1], [0], [0], [1], [0, 0, 1, 1], [], []>} : vector<8x8xf32>, vector<8x8xf32>, vector<8x8xf32> -> vector<8x8xf32>
    %cst_78 = arith.constant -9.99999995E+11 : f32
    %213 = vector.broadcast %cst_78 : f32 to vector<8x8xf32>
    %214 = arith.select %3, %213, %212 : vector<8x8xi1>, vector<8x8xf32>
    %cst_79 = arith.constant dense<0xFF800000> : vector<8xf32>
    %215 = vector.multi_reduction <maximumf>, %214, %cst_79 [1] : vector<8x8xf32> to vector<8xf32>
    %216 = vector.shape_cast %215 : vector<8xf32> to vector<8x1xf32>
    %217 = vector.broadcast %216 : vector<8x1xf32> to vector<8x8xf32>
    %218 = arith.subf %214, %217 : vector<8x8xf32>
    %219 = math.exp %218 : vector<8x8xf32>
    %cst_80 = arith.constant dense<0.000000e+00> : vector<8xf32>
    %220 = vector.multi_reduction <add>, %219, %cst_80 [1] : vector<8x8xf32> to vector<8xf32>
    %221 = vector.shape_cast %220 : vector<8xf32> to vector<8x1xf32>
    %222 = vector.broadcast %221 : vector<8x1xf32> to vector<8x8xf32>
    %223 = arith.divf %219, %222 : vector<8x8xf32>
    %cst_81 = arith.constant dense<0.000000e+00> : vector<8x8xf32>
    %224 = tpu.matmul %223, %210, %cst_81 {dimension_numbers = #tpu.dot_dimension_numbers<[1], [0], [0], [1], [0, 0, 1, 1], [], []>} : vector<8x8xf32>, vector<8x8xf32>, vector<8x8xf32> -> vector<8x8xf32>
    %225 = vector.extract_strided_slice %188 {offsets = [0, 16], sizes = [8, 8], strides = [1, 1]} : vector<8x32xf32> to vector<8x8xf32>
    %226 = vector.extract_strided_slice %189 {offsets = [0, 16], sizes = [8, 8], strides = [1, 1]} : vector<8x32xf32> to vector<8x8xf32>
    %227 = vector.extract_strided_slice %190 {offsets = [0, 16], sizes = [8, 8], strides = [1, 1]} : vector<8x32xf32> to vector<8x8xf32>
    %228 = tpu.transpose %226, [1, 0] : vector<8x8xf32> -> vector<8x8xf32>
    %cst_82 = arith.constant dense<0.000000e+00> : vector<8x8xf32>
    %229 = tpu.matmul %225, %228, %cst_82 {dimension_numbers = #tpu.dot_dimension_numbers<[1], [0], [0], [1], [0, 0, 1, 1], [], []>} : vector<8x8xf32>, vector<8x8xf32>, vector<8x8xf32> -> vector<8x8xf32>
    %cst_83 = arith.constant -9.99999995E+11 : f32
    %230 = vector.broadcast %cst_83 : f32 to vector<8x8xf32>
    %231 = arith.select %3, %230, %229 : vector<8x8xi1>, vector<8x8xf32>
    %cst_84 = arith.constant dense<0xFF800000> : vector<8xf32>
    %232 = vector.multi_reduction <maximumf>, %231, %cst_84 [1] : vector<8x8xf32> to vector<8xf32>
    %233 = vector.shape_cast %232 : vector<8xf32> to vector<8x1xf32>
    %234 = vector.broadcast %233 : vector<8x1xf32> to vector<8x8xf32>
    %235 = arith.subf %231, %234 : vector<8x8xf32>
    %236 = math.exp %235 : vector<8x8xf32>
    %cst_85 = arith.constant dense<0.000000e+00> : vector<8xf32>
    %237 = vector.multi_reduction <add>, %236, %cst_85 [1] : vector<8x8xf32> to vector<8xf32>
    %238 = vector.shape_cast %237 : vector<8xf32> to vector<8x1xf32>
    %239 = vector.broadcast %238 : vector<8x1xf32> to vector<8x8xf32>
    %240 = arith.divf %236, %239 : vector<8x8xf32>
    %cst_86 = arith.constant dense<0.000000e+00> : vector<8x8xf32>
    %241 = tpu.matmul %240, %227, %cst_86 {dimension_numbers = #tpu.dot_dimension_numbers<[1], [0], [0], [1], [0, 0, 1, 1], [], []>} : vector<8x8xf32>, vector<8x8xf32>, vector<8x8xf32> -> vector<8x8xf32>
    %242 = vector.extract_strided_slice %188 {offsets = [0, 24], sizes = [8, 8], strides = [1, 1]} : vector<8x32xf32> to vector<8x8xf32>
    %243 = vector.extract_strided_slice %189 {offsets = [0, 24], sizes = [8, 8], strides = [1, 1]} : vector<8x32xf32> to vector<8x8xf32>
    %244 = vector.extract_strided_slice %190 {offsets = [0, 24], sizes = [8, 8], strides = [1, 1]} : vector<8x32xf32> to vector<8x8xf32>
    %245 = tpu.transpose %243, [1, 0] : vector<8x8xf32> -> vector<8x8xf32>
    %cst_87 = arith.constant dense<0.000000e+00> : vector<8x8xf32>
    %246 = tpu.matmul %242, %245, %cst_87 {dimension_numbers = #tpu.dot_dimension_numbers<[1], [0], [0], [1], [0, 0, 1, 1], [], []>} : vector<8x8xf32>, vector<8x8xf32>, vector<8x8xf32> -> vector<8x8xf32>
    %cst_88 = arith.constant -9.99999995E+11 : f32
    %247 = vector.broadcast %cst_88 : f32 to vector<8x8xf32>
    %248 = arith.select %3, %247, %246 : vector<8x8xi1>, vector<8x8xf32>
    %cst_89 = arith.constant dense<0xFF800000> : vector<8xf32>
    %249 = vector.multi_reduction <maximumf>, %248, %cst_89 [1] : vector<8x8xf32> to vector<8xf32>
    %250 = vector.shape_cast %249 : vector<8xf32> to vector<8x1xf32>
    %251 = vector.broadcast %250 : vector<8x1xf32> to vector<8x8xf32>
    %252 = arith.subf %248, %251 : vector<8x8xf32>
    %253 = math.exp %252 : vector<8x8xf32>
    %cst_90 = arith.constant dense<0.000000e+00> : vector<8xf32>
    %254 = vector.multi_reduction <add>, %253, %cst_90 [1] : vector<8x8xf32> to vector<8xf32>
    %255 = vector.shape_cast %254 : vector<8xf32> to vector<8x1xf32>
    %256 = vector.broadcast %255 : vector<8x1xf32> to vector<8x8xf32>
    %257 = arith.divf %253, %256 : vector<8x8xf32>
    %cst_91 = arith.constant dense<0.000000e+00> : vector<8x8xf32>
    %258 = tpu.matmul %257, %244, %cst_91 {dimension_numbers = #tpu.dot_dimension_numbers<[1], [0], [0], [1], [0, 0, 1, 1], [], []>} : vector<8x8xf32>, vector<8x8xf32>, vector<8x8xf32> -> vector<8x8xf32>
    %259 = tpu.concatenate %207, %224, %241, %258 in 1 : vector<8x8xf32>, vector<8x8xf32>, vector<8x8xf32>, vector<8x8xf32> -> vector<8x32xf32>
    %260 = arith.index_cast %c1_i32 : i32 to index
    %c0_92 = arith.constant 0 : index
    %c0_93 = arith.constant 0 : index
    %261 = vector.load %arg10[%260, %c0_92, %c0_93] : memref<2x32x32xf32, #tpu.memory_space<vmem>>, vector<1x32x32xf32>
    %262 = vector.shape_cast %261 : vector<1x32x32xf32> to vector<32x32xf32>
    %cst_94 = arith.constant dense<0.000000e+00> : vector<8x32xf32>
    %263 = tpu.matmul %259, %262, %cst_94 {dimension_numbers = #tpu.dot_dimension_numbers<[1], [0], [0], [1], [0, 0, 1, 1], [], []>} : vector<8x32xf32>, vector<32x32xf32>, vector<8x32xf32> -> vector<8x32xf32>
    %264 = vector.extract_strided_slice %178 {offsets = [0, 0], sizes = [1, 32], strides = [1, 1]} : vector<6x32xf32> to vector<1x32xf32>
    %265 = vector.broadcast %264 : vector<1x32xf32> to vector<8x32xf32>
    %266 = arith.addf %263, %265 : vector<8x32xf32>
    %267 = arith.addf %175, %266 : vector<8x32xf32>
    %268 = vector.extract_strided_slice %178 {offsets = [1, 0], sizes = [1, 32], strides = [1, 1]} : vector<6x32xf32> to vector<1x32xf32>
    %269 = vector.extract_strided_slice %178 {offsets = [2, 0], sizes = [1, 32], strides = [1, 1]} : vector<6x32xf32> to vector<1x32xf32>
    %cst_95 = arith.constant dense<0.000000e+00> : vector<8xf32>
    %270 = vector.multi_reduction <add>, %267, %cst_95 [1] : vector<8x32xf32> to vector<8xf32>
    %271 = vector.shape_cast %270 : vector<8xf32> to vector<8x1xf32>
    %cst_96 = arith.constant 3.200000e+01 : f32
    %272 = vector.broadcast %cst_96 : f32 to vector<8x1xf32>
    %273 = arith.divf %271, %272 : vector<8x1xf32>
    %274 = vector.broadcast %273 : vector<8x1xf32> to vector<8x32xf32>
    %275 = arith.subf %267, %274 : vector<8x32xf32>
    %276 = arith.mulf %275, %275 : vector<8x32xf32>
    %cst_97 = arith.constant dense<0.000000e+00> : vector<8xf32>
    %277 = vector.multi_reduction <add>, %276, %cst_97 [1] : vector<8x32xf32> to vector<8xf32>
    %278 = vector.shape_cast %277 : vector<8xf32> to vector<8x1xf32>
    %cst_98 = arith.constant 3.200000e+01 : f32
    %279 = vector.broadcast %cst_98 : f32 to vector<8x1xf32>
    %280 = arith.divf %278, %279 : vector<8x1xf32>
    %cst_99 = arith.constant 9.99999974E-6 : f32
    %281 = vector.broadcast %cst_99 : f32 to vector<8x1xf32>
    %282 = arith.addf %280, %281 : vector<8x1xf32>
    %283 = math.rsqrt %282 : vector<8x1xf32>
    %284 = vector.broadcast %273 : vector<8x1xf32> to vector<8x32xf32>
    %285 = arith.subf %267, %284 : vector<8x32xf32>
    %286 = vector.broadcast %283 : vector<8x1xf32> to vector<8x32xf32>
    %287 = arith.mulf %285, %286 : vector<8x32xf32>
    %288 = vector.broadcast %268 : vector<1x32xf32> to vector<8x32xf32>
    %289 = arith.mulf %287, %288 : vector<8x32xf32>
    %290 = vector.broadcast %269 : vector<1x32xf32> to vector<8x32xf32>
    %291 = arith.addf %289, %290 : vector<8x32xf32>
    %292 = arith.index_cast %c1_i32 : i32 to index
    %c0_100 = arith.constant 0 : index
    %c0_101 = arith.constant 0 : index
    %293 = vector.load %arg12[%292, %c0_100, %c0_101] : memref<2x32x64xf32, #tpu.memory_space<vmem>>, vector<1x32x64xf32>
    %294 = vector.shape_cast %293 : vector<1x32x64xf32> to vector<32x64xf32>
    %cst_102 = arith.constant dense<0.000000e+00> : vector<8x64xf32>
    %295 = tpu.matmul %291, %294, %cst_102 {dimension_numbers = #tpu.dot_dimension_numbers<[1], [0], [0], [1], [0, 0, 1, 1], [], []>} : vector<8x32xf32>, vector<32x64xf32>, vector<8x64xf32> -> vector<8x64xf32>
    %296 = arith.index_cast %c1_i32 : i32 to index
    %c0_103 = arith.constant 0 : index
    %c0_104 = arith.constant 0 : index
    %297 = vector.load %arg13[%296, %c0_103, %c0_104] : memref<2x1x64xf32, #tpu.memory_space<vmem>>, vector<1x1x64xf32>
    %298 = vector.shape_cast %297 : vector<1x1x64xf32> to vector<1x64xf32>
    %299 = vector.broadcast %298 : vector<1x64xf32> to vector<8x64xf32>
    %300 = arith.addf %295, %299 : vector<8x64xf32>
    %cst_105 = arith.constant 0.000000e+00 : f32
    %301 = vector.broadcast %cst_105 : f32 to vector<8x64xf32>
    %302 = arith.maximumf %300, %301 : vector<8x64xf32>
    %303 = arith.index_cast %c1_i32 : i32 to index
    %c0_106 = arith.constant 0 : index
    %c0_107 = arith.constant 0 : index
    %304 = vector.load %arg14[%303, %c0_106, %c0_107] : memref<2x64x32xf32, #tpu.memory_space<vmem>>, vector<1x64x32xf32>
    %305 = vector.shape_cast %304 : vector<1x64x32xf32> to vector<64x32xf32>
    %cst_108 = arith.constant dense<0.000000e+00> : vector<8x32xf32>
    %306 = tpu.matmul %302, %305, %cst_108 {dimension_numbers = #tpu.dot_dimension_numbers<[1], [0], [0], [1], [0, 0, 1, 1], [], []>} : vector<8x64xf32>, vector<64x32xf32>, vector<8x32xf32> -> vector<8x32xf32>
    %307 = vector.extract_strided_slice %178 {offsets = [3, 0], sizes = [1, 32], strides = [1, 1]} : vector<6x32xf32> to vector<1x32xf32>
    %308 = vector.broadcast %307 : vector<1x32xf32> to vector<8x32xf32>
    %309 = arith.addf %306, %308 : vector<8x32xf32>
    %310 = arith.addf %291, %309 : vector<8x32xf32>
    %311 = vector.extract_strided_slice %178 {offsets = [4, 0], sizes = [1, 32], strides = [1, 1]} : vector<6x32xf32> to vector<1x32xf32>
    %312 = vector.extract_strided_slice %178 {offsets = [5, 0], sizes = [1, 32], strides = [1, 1]} : vector<6x32xf32> to vector<1x32xf32>
    %cst_109 = arith.constant dense<0.000000e+00> : vector<8xf32>
    %313 = vector.multi_reduction <add>, %310, %cst_109 [1] : vector<8x32xf32> to vector<8xf32>
    %314 = vector.shape_cast %313 : vector<8xf32> to vector<8x1xf32>
    %cst_110 = arith.constant 3.200000e+01 : f32
    %315 = vector.broadcast %cst_110 : f32 to vector<8x1xf32>
    %316 = arith.divf %314, %315 : vector<8x1xf32>
    %317 = vector.broadcast %316 : vector<8x1xf32> to vector<8x32xf32>
    %318 = arith.subf %310, %317 : vector<8x32xf32>
    %319 = arith.mulf %318, %318 : vector<8x32xf32>
    %cst_111 = arith.constant dense<0.000000e+00> : vector<8xf32>
    %320 = vector.multi_reduction <add>, %319, %cst_111 [1] : vector<8x32xf32> to vector<8xf32>
    %321 = vector.shape_cast %320 : vector<8xf32> to vector<8x1xf32>
    %cst_112 = arith.constant 3.200000e+01 : f32
    %322 = vector.broadcast %cst_112 : f32 to vector<8x1xf32>
    %323 = arith.divf %321, %322 : vector<8x1xf32>
    %cst_113 = arith.constant 9.99999974E-6 : f32
    %324 = vector.broadcast %cst_113 : f32 to vector<8x1xf32>
    %325 = arith.addf %323, %324 : vector<8x1xf32>
    %326 = math.rsqrt %325 : vector<8x1xf32>
    %327 = vector.broadcast %316 : vector<8x1xf32> to vector<8x32xf32>
    %328 = arith.subf %310, %327 : vector<8x32xf32>
    %329 = vector.broadcast %326 : vector<8x1xf32> to vector<8x32xf32>
    %330 = arith.mulf %328, %329 : vector<8x32xf32>
    %331 = vector.broadcast %311 : vector<1x32xf32> to vector<8x32xf32>
    %332 = arith.mulf %330, %331 : vector<8x32xf32>
    %333 = vector.broadcast %312 : vector<1x32xf32> to vector<8x32xf32>
    %334 = arith.addf %332, %333 : vector<8x32xf32>
    %c2_i32 = arith.constant 2 : i32
    %c0_114 = arith.constant 0 : index
    %c0_115 = arith.constant 0 : index
    %c0_116 = arith.constant 0 : index
    %335 = vector.load %arg2[%c0_114, %c0_115, %c0_116] : memref<1x8x32xf32, #tpu.memory_space<vmem>>, vector<1x8x32xf32>
    %336 = vector.shape_cast %335 : vector<1x8x32xf32> to vector<8x32xf32>
    %c0_117 = arith.constant 0 : index
    %c0_118 = arith.constant 0 : index
    %c0_119 = arith.constant 0 : index
    %337 = vector.load %arg4[%c0_117, %c0_118, %c0_119] : memref<1x8x32xf32, #tpu.memory_space<vmem>>, vector<1x8x32xf32>
    %338 = vector.shape_cast %337 : vector<1x8x32xf32> to vector<8x32xf32>
    %339 = arith.addf %336, %338 : vector<8x32xf32>
    %c0_i32_120 = arith.constant 0 : i32
    %340 = arith.index_cast %c0_i32_120 : i32 to index
    %c0_121 = arith.constant 0 : index
    %c0_122 = arith.constant 0 : index
    %341 = vector.load %arg25[%340, %c0_121, %c0_122] : memref<2x10x32xf32, #tpu.memory_space<vmem>>, vector<1x10x32xf32>
    %342 = vector.shape_cast %341 : vector<1x10x32xf32> to vector<10x32xf32>
    %343 = arith.index_cast %c0_i32_120 : i32 to index
    %c0_123 = arith.constant 0 : index
    %c0_124 = arith.constant 0 : index
    %344 = vector.load %arg15[%343, %c0_123, %c0_124] : memref<2x32x96xf32, #tpu.memory_space<vmem>>, vector<1x32x96xf32>
    %345 = vector.shape_cast %344 : vector<1x32x96xf32> to vector<32x96xf32>
    %cst_125 = arith.constant dense<0.000000e+00> : vector<8x96xf32>
    %346 = tpu.matmul %339, %345, %cst_125 {dimension_numbers = #tpu.dot_dimension_numbers<[1], [0], [0], [1], [0, 0, 1, 1], [], []>} : vector<8x32xf32>, vector<32x96xf32>, vector<8x96xf32> -> vector<8x96xf32>
    %347 = arith.index_cast %c0_i32_120 : i32 to index
    %c0_126 = arith.constant 0 : index
    %c0_127 = arith.constant 0 : index
    %348 = vector.load %arg16[%347, %c0_126, %c0_127] : memref<2x1x96xf32, #tpu.memory_space<vmem>>, vector<1x1x96xf32>
    %349 = vector.shape_cast %348 : vector<1x1x96xf32> to vector<1x96xf32>
    %350 = vector.broadcast %349 : vector<1x96xf32> to vector<8x96xf32>
    %351 = arith.addf %346, %350 : vector<8x96xf32>
    %352 = vector.extract_strided_slice %351 {offsets = [0, 0], sizes = [8, 32], strides = [1, 1]} : vector<8x96xf32> to vector<8x32xf32>
    %353 = vector.extract_strided_slice %351 {offsets = [0, 32], sizes = [8, 32], strides = [1, 1]} : vector<8x96xf32> to vector<8x32xf32>
    %354 = vector.extract_strided_slice %351 {offsets = [0, 64], sizes = [8, 32], strides = [1, 1]} : vector<8x96xf32> to vector<8x32xf32>
    %355 = vector.extract_strided_slice %352 {offsets = [0, 0], sizes = [8, 8], strides = [1, 1]} : vector<8x32xf32> to vector<8x8xf32>
    %356 = vector.extract_strided_slice %353 {offsets = [0, 0], sizes = [8, 8], strides = [1, 1]} : vector<8x32xf32> to vector<8x8xf32>
    %357 = vector.extract_strided_slice %354 {offsets = [0, 0], sizes = [8, 8], strides = [1, 1]} : vector<8x32xf32> to vector<8x8xf32>
    %358 = tpu.transpose %356, [1, 0] : vector<8x8xf32> -> vector<8x8xf32>
    %cst_128 = arith.constant dense<0.000000e+00> : vector<8x8xf32>
    %359 = tpu.matmul %355, %358, %cst_128 {dimension_numbers = #tpu.dot_dimension_numbers<[1], [0], [0], [1], [0, 0, 1, 1], [], []>} : vector<8x8xf32>, vector<8x8xf32>, vector<8x8xf32> -> vector<8x8xf32>
    %cst_129 = arith.constant -9.99999995E+11 : f32
    %360 = vector.broadcast %cst_129 : f32 to vector<8x8xf32>
    %361 = arith.select %7, %360, %359 : vector<8x8xi1>, vector<8x8xf32>
    %cst_130 = arith.constant dense<0xFF800000> : vector<8xf32>
    %362 = vector.multi_reduction <maximumf>, %361, %cst_130 [1] : vector<8x8xf32> to vector<8xf32>
    %363 = vector.shape_cast %362 : vector<8xf32> to vector<8x1xf32>
    %364 = vector.broadcast %363 : vector<8x1xf32> to vector<8x8xf32>
    %365 = arith.subf %361, %364 : vector<8x8xf32>
    %366 = math.exp %365 : vector<8x8xf32>
    %cst_131 = arith.constant dense<0.000000e+00> : vector<8xf32>
    %367 = vector.multi_reduction <add>, %366, %cst_131 [1] : vector<8x8xf32> to vector<8xf32>
    %368 = vector.shape_cast %367 : vector<8xf32> to vector<8x1xf32>
    %369 = vector.broadcast %368 : vector<8x1xf32> to vector<8x8xf32>
    %370 = arith.divf %366, %369 : vector<8x8xf32>
    %cst_132 = arith.constant dense<0.000000e+00> : vector<8x8xf32>
    %371 = tpu.matmul %370, %357, %cst_132 {dimension_numbers = #tpu.dot_dimension_numbers<[1], [0], [0], [1], [0, 0, 1, 1], [], []>} : vector<8x8xf32>, vector<8x8xf32>, vector<8x8xf32> -> vector<8x8xf32>
    %372 = vector.extract_strided_slice %352 {offsets = [0, 8], sizes = [8, 8], strides = [1, 1]} : vector<8x32xf32> to vector<8x8xf32>
    %373 = vector.extract_strided_slice %353 {offsets = [0, 8], sizes = [8, 8], strides = [1, 1]} : vector<8x32xf32> to vector<8x8xf32>
    %374 = vector.extract_strided_slice %354 {offsets = [0, 8], sizes = [8, 8], strides = [1, 1]} : vector<8x32xf32> to vector<8x8xf32>
    %375 = tpu.transpose %373, [1, 0] : vector<8x8xf32> -> vector<8x8xf32>
    %cst_133 = arith.constant dense<0.000000e+00> : vector<8x8xf32>
    %376 = tpu.matmul %372, %375, %cst_133 {dimension_numbers = #tpu.dot_dimension_numbers<[1], [0], [0], [1], [0, 0, 1, 1], [], []>} : vector<8x8xf32>, vector<8x8xf32>, vector<8x8xf32> -> vector<8x8xf32>
    %cst_134 = arith.constant -9.99999995E+11 : f32
    %377 = vector.broadcast %cst_134 : f32 to vector<8x8xf32>
    %378 = arith.select %7, %377, %376 : vector<8x8xi1>, vector<8x8xf32>
    %cst_135 = arith.constant dense<0xFF800000> : vector<8xf32>
    %379 = vector.multi_reduction <maximumf>, %378, %cst_135 [1] : vector<8x8xf32> to vector<8xf32>
    %380 = vector.shape_cast %379 : vector<8xf32> to vector<8x1xf32>
    %381 = vector.broadcast %380 : vector<8x1xf32> to vector<8x8xf32>
    %382 = arith.subf %378, %381 : vector<8x8xf32>
    %383 = math.exp %382 : vector<8x8xf32>
    %cst_136 = arith.constant dense<0.000000e+00> : vector<8xf32>
    %384 = vector.multi_reduction <add>, %383, %cst_136 [1] : vector<8x8xf32> to vector<8xf32>
    %385 = vector.shape_cast %384 : vector<8xf32> to vector<8x1xf32>
    %386 = vector.broadcast %385 : vector<8x1xf32> to vector<8x8xf32>
    %387 = arith.divf %383, %386 : vector<8x8xf32>
    %cst_137 = arith.constant dense<0.000000e+00> : vector<8x8xf32>
    %388 = tpu.matmul %387, %374, %cst_137 {dimension_numbers = #tpu.dot_dimension_numbers<[1], [0], [0], [1], [0, 0, 1, 1], [], []>} : vector<8x8xf32>, vector<8x8xf32>, vector<8x8xf32> -> vector<8x8xf32>
    %389 = vector.extract_strided_slice %352 {offsets = [0, 16], sizes = [8, 8], strides = [1, 1]} : vector<8x32xf32> to vector<8x8xf32>
    %390 = vector.extract_strided_slice %353 {offsets = [0, 16], sizes = [8, 8], strides = [1, 1]} : vector<8x32xf32> to vector<8x8xf32>
    %391 = vector.extract_strided_slice %354 {offsets = [0, 16], sizes = [8, 8], strides = [1, 1]} : vector<8x32xf32> to vector<8x8xf32>
    %392 = tpu.transpose %390, [1, 0] : vector<8x8xf32> -> vector<8x8xf32>
    %cst_138 = arith.constant dense<0.000000e+00> : vector<8x8xf32>
    %393 = tpu.matmul %389, %392, %cst_138 {dimension_numbers = #tpu.dot_dimension_numbers<[1], [0], [0], [1], [0, 0, 1, 1], [], []>} : vector<8x8xf32>, vector<8x8xf32>, vector<8x8xf32> -> vector<8x8xf32>
    %cst_139 = arith.constant -9.99999995E+11 : f32
    %394 = vector.broadcast %cst_139 : f32 to vector<8x8xf32>
    %395 = arith.select %7, %394, %393 : vector<8x8xi1>, vector<8x8xf32>
    %cst_140 = arith.constant dense<0xFF800000> : vector<8xf32>
    %396 = vector.multi_reduction <maximumf>, %395, %cst_140 [1] : vector<8x8xf32> to vector<8xf32>
    %397 = vector.shape_cast %396 : vector<8xf32> to vector<8x1xf32>
    %398 = vector.broadcast %397 : vector<8x1xf32> to vector<8x8xf32>
    %399 = arith.subf %395, %398 : vector<8x8xf32>
    %400 = math.exp %399 : vector<8x8xf32>
    %cst_141 = arith.constant dense<0.000000e+00> : vector<8xf32>
    %401 = vector.multi_reduction <add>, %400, %cst_141 [1] : vector<8x8xf32> to vector<8xf32>
    %402 = vector.shape_cast %401 : vector<8xf32> to vector<8x1xf32>
    %403 = vector.broadcast %402 : vector<8x1xf32> to vector<8x8xf32>
    %404 = arith.divf %400, %403 : vector<8x8xf32>
    %cst_142 = arith.constant dense<0.000000e+00> : vector<8x8xf32>
    %405 = tpu.matmul %404, %391, %cst_142 {dimension_numbers = #tpu.dot_dimension_numbers<[1], [0], [0], [1], [0, 0, 1, 1], [], []>} : vector<8x8xf32>, vector<8x8xf32>, vector<8x8xf32> -> vector<8x8xf32>
    %406 = vector.extract_strided_slice %352 {offsets = [0, 24], sizes = [8, 8], strides = [1, 1]} : vector<8x32xf32> to vector<8x8xf32>
    %407 = vector.extract_strided_slice %353 {offsets = [0, 24], sizes = [8, 8], strides = [1, 1]} : vector<8x32xf32> to vector<8x8xf32>
    %408 = vector.extract_strided_slice %354 {offsets = [0, 24], sizes = [8, 8], strides = [1, 1]} : vector<8x32xf32> to vector<8x8xf32>
    %409 = tpu.transpose %407, [1, 0] : vector<8x8xf32> -> vector<8x8xf32>
    %cst_143 = arith.constant dense<0.000000e+00> : vector<8x8xf32>
    %410 = tpu.matmul %406, %409, %cst_143 {dimension_numbers = #tpu.dot_dimension_numbers<[1], [0], [0], [1], [0, 0, 1, 1], [], []>} : vector<8x8xf32>, vector<8x8xf32>, vector<8x8xf32> -> vector<8x8xf32>
    %cst_144 = arith.constant -9.99999995E+11 : f32
    %411 = vector.broadcast %cst_144 : f32 to vector<8x8xf32>
    %412 = arith.select %7, %411, %410 : vector<8x8xi1>, vector<8x8xf32>
    %cst_145 = arith.constant dense<0xFF800000> : vector<8xf32>
    %413 = vector.multi_reduction <maximumf>, %412, %cst_145 [1] : vector<8x8xf32> to vector<8xf32>
    %414 = vector.shape_cast %413 : vector<8xf32> to vector<8x1xf32>
    %415 = vector.broadcast %414 : vector<8x1xf32> to vector<8x8xf32>
    %416 = arith.subf %412, %415 : vector<8x8xf32>
    %417 = math.exp %416 : vector<8x8xf32>
    %cst_146 = arith.constant dense<0.000000e+00> : vector<8xf32>
    %418 = vector.multi_reduction <add>, %417, %cst_146 [1] : vector<8x8xf32> to vector<8xf32>
    %419 = vector.shape_cast %418 : vector<8xf32> to vector<8x1xf32>
    %420 = vector.broadcast %419 : vector<8x1xf32> to vector<8x8xf32>
    %421 = arith.divf %417, %420 : vector<8x8xf32>
    %cst_147 = arith.constant dense<0.000000e+00> : vector<8x8xf32>
    %422 = tpu.matmul %421, %408, %cst_147 {dimension_numbers = #tpu.dot_dimension_numbers<[1], [0], [0], [1], [0, 0, 1, 1], [], []>} : vector<8x8xf32>, vector<8x8xf32>, vector<8x8xf32> -> vector<8x8xf32>
    %423 = tpu.concatenate %371, %388, %405, %422 in 1 : vector<8x8xf32>, vector<8x8xf32>, vector<8x8xf32>, vector<8x8xf32> -> vector<8x32xf32>
    %424 = arith.index_cast %c0_i32_120 : i32 to index
    %c0_148 = arith.constant 0 : index
    %c0_149 = arith.constant 0 : index
    %425 = vector.load %arg17[%424, %c0_148, %c0_149] : memref<2x32x32xf32, #tpu.memory_space<vmem>>, vector<1x32x32xf32>
    %426 = vector.shape_cast %425 : vector<1x32x32xf32> to vector<32x32xf32>
    %cst_150 = arith.constant dense<0.000000e+00> : vector<8x32xf32>
    %427 = tpu.matmul %423, %426, %cst_150 {dimension_numbers = #tpu.dot_dimension_numbers<[1], [0], [0], [1], [0, 0, 1, 1], [], []>} : vector<8x32xf32>, vector<32x32xf32>, vector<8x32xf32> -> vector<8x32xf32>
    %428 = vector.extract_strided_slice %342 {offsets = [0, 0], sizes = [1, 32], strides = [1, 1]} : vector<10x32xf32> to vector<1x32xf32>
    %429 = vector.broadcast %428 : vector<1x32xf32> to vector<8x32xf32>
    %430 = arith.addf %427, %429 : vector<8x32xf32>
    %431 = arith.addf %339, %430 : vector<8x32xf32>
    %432 = vector.extract_strided_slice %342 {offsets = [1, 0], sizes = [1, 32], strides = [1, 1]} : vector<10x32xf32> to vector<1x32xf32>
    %433 = vector.extract_strided_slice %342 {offsets = [2, 0], sizes = [1, 32], strides = [1, 1]} : vector<10x32xf32> to vector<1x32xf32>
    %cst_151 = arith.constant dense<0.000000e+00> : vector<8xf32>
    %434 = vector.multi_reduction <add>, %431, %cst_151 [1] : vector<8x32xf32> to vector<8xf32>
    %435 = vector.shape_cast %434 : vector<8xf32> to vector<8x1xf32>
    %cst_152 = arith.constant 3.200000e+01 : f32
    %436 = vector.broadcast %cst_152 : f32 to vector<8x1xf32>
    %437 = arith.divf %435, %436 : vector<8x1xf32>
    %438 = vector.broadcast %437 : vector<8x1xf32> to vector<8x32xf32>
    %439 = arith.subf %431, %438 : vector<8x32xf32>
    %440 = arith.mulf %439, %439 : vector<8x32xf32>
    %cst_153 = arith.constant dense<0.000000e+00> : vector<8xf32>
    %441 = vector.multi_reduction <add>, %440, %cst_153 [1] : vector<8x32xf32> to vector<8xf32>
    %442 = vector.shape_cast %441 : vector<8xf32> to vector<8x1xf32>
    %cst_154 = arith.constant 3.200000e+01 : f32
    %443 = vector.broadcast %cst_154 : f32 to vector<8x1xf32>
    %444 = arith.divf %442, %443 : vector<8x1xf32>
    %cst_155 = arith.constant 9.99999974E-6 : f32
    %445 = vector.broadcast %cst_155 : f32 to vector<8x1xf32>
    %446 = arith.addf %444, %445 : vector<8x1xf32>
    %447 = math.rsqrt %446 : vector<8x1xf32>
    %448 = vector.broadcast %437 : vector<8x1xf32> to vector<8x32xf32>
    %449 = arith.subf %431, %448 : vector<8x32xf32>
    %450 = vector.broadcast %447 : vector<8x1xf32> to vector<8x32xf32>
    %451 = arith.mulf %449, %450 : vector<8x32xf32>
    %452 = vector.broadcast %432 : vector<1x32xf32> to vector<8x32xf32>
    %453 = arith.mulf %451, %452 : vector<8x32xf32>
    %454 = vector.broadcast %433 : vector<1x32xf32> to vector<8x32xf32>
    %455 = arith.addf %453, %454 : vector<8x32xf32>
    %456 = arith.index_cast %c0_i32_120 : i32 to index
    %c0_156 = arith.constant 0 : index
    %c0_157 = arith.constant 0 : index
    %457 = vector.load %arg18[%456, %c0_156, %c0_157] : memref<2x32x32xf32, #tpu.memory_space<vmem>>, vector<1x32x32xf32>
    %458 = vector.shape_cast %457 : vector<1x32x32xf32> to vector<32x32xf32>
    %cst_158 = arith.constant dense<0.000000e+00> : vector<8x32xf32>
    %459 = tpu.matmul %455, %458, %cst_158 {dimension_numbers = #tpu.dot_dimension_numbers<[1], [0], [0], [1], [0, 0, 1, 1], [], []>} : vector<8x32xf32>, vector<32x32xf32>, vector<8x32xf32> -> vector<8x32xf32>
    %460 = vector.extract_strided_slice %342 {offsets = [3, 0], sizes = [1, 32], strides = [1, 1]} : vector<10x32xf32> to vector<1x32xf32>
    %461 = vector.broadcast %460 : vector<1x32xf32> to vector<8x32xf32>
    %462 = arith.addf %459, %461 : vector<8x32xf32>
    %463 = arith.index_cast %c0_i32_120 : i32 to index
    %c0_159 = arith.constant 0 : index
    %c0_160 = arith.constant 0 : index
    %464 = vector.load %arg19[%463, %c0_159, %c0_160] : memref<2x32x64xf32, #tpu.memory_space<vmem>>, vector<1x32x64xf32>
    %465 = vector.shape_cast %464 : vector<1x32x64xf32> to vector<32x64xf32>
    %cst_161 = arith.constant dense<0.000000e+00> : vector<8x64xf32>
    %466 = tpu.matmul %334, %465, %cst_161 {dimension_numbers = #tpu.dot_dimension_numbers<[1], [0], [0], [1], [0, 0, 1, 1], [], []>} : vector<8x32xf32>, vector<32x64xf32>, vector<8x64xf32> -> vector<8x64xf32>
    %467 = arith.index_cast %c0_i32_120 : i32 to index
    %c0_162 = arith.constant 0 : index
    %c0_163 = arith.constant 0 : index
    %468 = vector.load %arg20[%467, %c0_162, %c0_163] : memref<2x1x64xf32, #tpu.memory_space<vmem>>, vector<1x1x64xf32>
    %469 = vector.shape_cast %468 : vector<1x1x64xf32> to vector<1x64xf32>
    %470 = vector.broadcast %469 : vector<1x64xf32> to vector<8x64xf32>
    %471 = arith.addf %466, %470 : vector<8x64xf32>
    %472 = vector.extract_strided_slice %471 {offsets = [0, 0], sizes = [8, 32], strides = [1, 1]} : vector<8x64xf32> to vector<8x32xf32>
    %473 = vector.extract_strided_slice %471 {offsets = [0, 32], sizes = [8, 32], strides = [1, 1]} : vector<8x64xf32> to vector<8x32xf32>
    %474 = vector.extract_strided_slice %462 {offsets = [0, 0], sizes = [8, 8], strides = [1, 1]} : vector<8x32xf32> to vector<8x8xf32>
    %475 = vector.extract_strided_slice %472 {offsets = [0, 0], sizes = [8, 8], strides = [1, 1]} : vector<8x32xf32> to vector<8x8xf32>
    %476 = vector.extract_strided_slice %473 {offsets = [0, 0], sizes = [8, 8], strides = [1, 1]} : vector<8x32xf32> to vector<8x8xf32>
    %477 = tpu.transpose %475, [1, 0] : vector<8x8xf32> -> vector<8x8xf32>
    %cst_164 = arith.constant dense<0.000000e+00> : vector<8x8xf32>
    %478 = tpu.matmul %474, %477, %cst_164 {dimension_numbers = #tpu.dot_dimension_numbers<[1], [0], [0], [1], [0, 0, 1, 1], [], []>} : vector<8x8xf32>, vector<8x8xf32>, vector<8x8xf32> -> vector<8x8xf32>
    %cst_165 = arith.constant -9.99999995E+11 : f32
    %479 = vector.broadcast %cst_165 : f32 to vector<8x8xf32>
    %480 = arith.select %11, %479, %478 : vector<8x8xi1>, vector<8x8xf32>
    %cst_166 = arith.constant dense<0xFF800000> : vector<8xf32>
    %481 = vector.multi_reduction <maximumf>, %480, %cst_166 [1] : vector<8x8xf32> to vector<8xf32>
    %482 = vector.shape_cast %481 : vector<8xf32> to vector<8x1xf32>
    %483 = vector.broadcast %482 : vector<8x1xf32> to vector<8x8xf32>
    %484 = arith.subf %480, %483 : vector<8x8xf32>
    %485 = math.exp %484 : vector<8x8xf32>
    %cst_167 = arith.constant dense<0.000000e+00> : vector<8xf32>
    %486 = vector.multi_reduction <add>, %485, %cst_167 [1] : vector<8x8xf32> to vector<8xf32>
    %487 = vector.shape_cast %486 : vector<8xf32> to vector<8x1xf32>
    %488 = vector.broadcast %487 : vector<8x1xf32> to vector<8x8xf32>
    %489 = arith.divf %485, %488 : vector<8x8xf32>
    %cst_168 = arith.constant dense<0.000000e+00> : vector<8x8xf32>
    %490 = tpu.matmul %489, %476, %cst_168 {dimension_numbers = #tpu.dot_dimension_numbers<[1], [0], [0], [1], [0, 0, 1, 1], [], []>} : vector<8x8xf32>, vector<8x8xf32>, vector<8x8xf32> -> vector<8x8xf32>
    %491 = vector.extract_strided_slice %462 {offsets = [0, 8], sizes = [8, 8], strides = [1, 1]} : vector<8x32xf32> to vector<8x8xf32>
    %492 = vector.extract_strided_slice %472 {offsets = [0, 8], sizes = [8, 8], strides = [1, 1]} : vector<8x32xf32> to vector<8x8xf32>
    %493 = vector.extract_strided_slice %473 {offsets = [0, 8], sizes = [8, 8], strides = [1, 1]} : vector<8x32xf32> to vector<8x8xf32>
    %494 = tpu.transpose %492, [1, 0] : vector<8x8xf32> -> vector<8x8xf32>
    %cst_169 = arith.constant dense<0.000000e+00> : vector<8x8xf32>
    %495 = tpu.matmul %491, %494, %cst_169 {dimension_numbers = #tpu.dot_dimension_numbers<[1], [0], [0], [1], [0, 0, 1, 1], [], []>} : vector<8x8xf32>, vector<8x8xf32>, vector<8x8xf32> -> vector<8x8xf32>
    %cst_170 = arith.constant -9.99999995E+11 : f32
    %496 = vector.broadcast %cst_170 : f32 to vector<8x8xf32>
    %497 = arith.select %11, %496, %495 : vector<8x8xi1>, vector<8x8xf32>
    %cst_171 = arith.constant dense<0xFF800000> : vector<8xf32>
    %498 = vector.multi_reduction <maximumf>, %497, %cst_171 [1] : vector<8x8xf32> to vector<8xf32>
    %499 = vector.shape_cast %498 : vector<8xf32> to vector<8x1xf32>
    %500 = vector.broadcast %499 : vector<8x1xf32> to vector<8x8xf32>
    %501 = arith.subf %497, %500 : vector<8x8xf32>
    %502 = math.exp %501 : vector<8x8xf32>
    %cst_172 = arith.constant dense<0.000000e+00> : vector<8xf32>
    %503 = vector.multi_reduction <add>, %502, %cst_172 [1] : vector<8x8xf32> to vector<8xf32>
    %504 = vector.shape_cast %503 : vector<8xf32> to vector<8x1xf32>
    %505 = vector.broadcast %504 : vector<8x1xf32> to vector<8x8xf32>
    %506 = arith.divf %502, %505 : vector<8x8xf32>
    %cst_173 = arith.constant dense<0.000000e+00> : vector<8x8xf32>
    %507 = tpu.matmul %506, %493, %cst_173 {dimension_numbers = #tpu.dot_dimension_numbers<[1], [0], [0], [1], [0, 0, 1, 1], [], []>} : vector<8x8xf32>, vector<8x8xf32>, vector<8x8xf32> -> vector<8x8xf32>
    %508 = vector.extract_strided_slice %462 {offsets = [0, 16], sizes = [8, 8], strides = [1, 1]} : vector<8x32xf32> to vector<8x8xf32>
    %509 = vector.extract_strided_slice %472 {offsets = [0, 16], sizes = [8, 8], strides = [1, 1]} : vector<8x32xf32> to vector<8x8xf32>
    %510 = vector.extract_strided_slice %473 {offsets = [0, 16], sizes = [8, 8], strides = [1, 1]} : vector<8x32xf32> to vector<8x8xf32>
    %511 = tpu.transpose %509, [1, 0] : vector<8x8xf32> -> vector<8x8xf32>
    %cst_174 = arith.constant dense<0.000000e+00> : vector<8x8xf32>
    %512 = tpu.matmul %508, %511, %cst_174 {dimension_numbers = #tpu.dot_dimension_numbers<[1], [0], [0], [1], [0, 0, 1, 1], [], []>} : vector<8x8xf32>, vector<8x8xf32>, vector<8x8xf32> -> vector<8x8xf32>
    %cst_175 = arith.constant -9.99999995E+11 : f32
    %513 = vector.broadcast %cst_175 : f32 to vector<8x8xf32>
    %514 = arith.select %11, %513, %512 : vector<8x8xi1>, vector<8x8xf32>
    %cst_176 = arith.constant dense<0xFF800000> : vector<8xf32>
    %515 = vector.multi_reduction <maximumf>, %514, %cst_176 [1] : vector<8x8xf32> to vector<8xf32>
    %516 = vector.shape_cast %515 : vector<8xf32> to vector<8x1xf32>
    %517 = vector.broadcast %516 : vector<8x1xf32> to vector<8x8xf32>
    %518 = arith.subf %514, %517 : vector<8x8xf32>
    %519 = math.exp %518 : vector<8x8xf32>
    %cst_177 = arith.constant dense<0.000000e+00> : vector<8xf32>
    %520 = vector.multi_reduction <add>, %519, %cst_177 [1] : vector<8x8xf32> to vector<8xf32>
    %521 = vector.shape_cast %520 : vector<8xf32> to vector<8x1xf32>
    %522 = vector.broadcast %521 : vector<8x1xf32> to vector<8x8xf32>
    %523 = arith.divf %519, %522 : vector<8x8xf32>
    %cst_178 = arith.constant dense<0.000000e+00> : vector<8x8xf32>
    %524 = tpu.matmul %523, %510, %cst_178 {dimension_numbers = #tpu.dot_dimension_numbers<[1], [0], [0], [1], [0, 0, 1, 1], [], []>} : vector<8x8xf32>, vector<8x8xf32>, vector<8x8xf32> -> vector<8x8xf32>
    %525 = vector.extract_strided_slice %462 {offsets = [0, 24], sizes = [8, 8], strides = [1, 1]} : vector<8x32xf32> to vector<8x8xf32>
    %526 = vector.extract_strided_slice %472 {offsets = [0, 24], sizes = [8, 8], strides = [1, 1]} : vector<8x32xf32> to vector<8x8xf32>
    %527 = vector.extract_strided_slice %473 {offsets = [0, 24], sizes = [8, 8], strides = [1, 1]} : vector<8x32xf32> to vector<8x8xf32>
    %528 = tpu.transpose %526, [1, 0] : vector<8x8xf32> -> vector<8x8xf32>
    %cst_179 = arith.constant dense<0.000000e+00> : vector<8x8xf32>
    %529 = tpu.matmul %525, %528, %cst_179 {dimension_numbers = #tpu.dot_dimension_numbers<[1], [0], [0], [1], [0, 0, 1, 1], [], []>} : vector<8x8xf32>, vector<8x8xf32>, vector<8x8xf32> -> vector<8x8xf32>
    %cst_180 = arith.constant -9.99999995E+11 : f32
    %530 = vector.broadcast %cst_180 : f32 to vector<8x8xf32>
    %531 = arith.select %11, %530, %529 : vector<8x8xi1>, vector<8x8xf32>
    %cst_181 = arith.constant dense<0xFF800000> : vector<8xf32>
    %532 = vector.multi_reduction <maximumf>, %531, %cst_181 [1] : vector<8x8xf32> to vector<8xf32>
    %533 = vector.shape_cast %532 : vector<8xf32> to vector<8x1xf32>
    %534 = vector.broadcast %533 : vector<8x1xf32> to vector<8x8xf32>
    %535 = arith.subf %531, %534 : vector<8x8xf32>
    %536 = math.exp %535 : vector<8x8xf32>
    %cst_182 = arith.constant dense<0.000000e+00> : vector<8xf32>
    %537 = vector.multi_reduction <add>, %536, %cst_182 [1] : vector<8x8xf32> to vector<8xf32>
    %538 = vector.shape_cast %537 : vector<8xf32> to vector<8x1xf32>
    %539 = vector.broadcast %538 : vector<8x1xf32> to vector<8x8xf32>
    %540 = arith.divf %536, %539 : vector<8x8xf32>
    %cst_183 = arith.constant dense<0.000000e+00> : vector<8x8xf32>
    %541 = tpu.matmul %540, %527, %cst_183 {dimension_numbers = #tpu.dot_dimension_numbers<[1], [0], [0], [1], [0, 0, 1, 1], [], []>} : vector<8x8xf32>, vector<8x8xf32>, vector<8x8xf32> -> vector<8x8xf32>
    %542 = tpu.concatenate %490, %507, %524, %541 in 1 : vector<8x8xf32>, vector<8x8xf32>, vector<8x8xf32>, vector<8x8xf32> -> vector<8x32xf32>
    %543 = arith.index_cast %c0_i32_120 : i32 to index
    %c0_184 = arith.constant 0 : index
    %c0_185 = arith.constant 0 : index
    %544 = vector.load %arg21[%543, %c0_184, %c0_185] : memref<2x32x32xf32, #tpu.memory_space<vmem>>, vector<1x32x32xf32>
    %545 = vector.shape_cast %544 : vector<1x32x32xf32> to vector<32x32xf32>
    %cst_186 = arith.constant dense<0.000000e+00> : vector<8x32xf32>
    %546 = tpu.matmul %542, %545, %cst_186 {dimension_numbers = #tpu.dot_dimension_numbers<[1], [0], [0], [1], [0, 0, 1, 1], [], []>} : vector<8x32xf32>, vector<32x32xf32>, vector<8x32xf32> -> vector<8x32xf32>
    %547 = vector.extract_strided_slice %342 {offsets = [4, 0], sizes = [1, 32], strides = [1, 1]} : vector<10x32xf32> to vector<1x32xf32>
    %548 = vector.broadcast %547 : vector<1x32xf32> to vector<8x32xf32>
    %549 = arith.addf %546, %548 : vector<8x32xf32>
    %550 = arith.addf %455, %549 : vector<8x32xf32>
    %551 = vector.extract_strided_slice %342 {offsets = [5, 0], sizes = [1, 32], strides = [1, 1]} : vector<10x32xf32> to vector<1x32xf32>
    %552 = vector.extract_strided_slice %342 {offsets = [6, 0], sizes = [1, 32], strides = [1, 1]} : vector<10x32xf32> to vector<1x32xf32>
    %cst_187 = arith.constant dense<0.000000e+00> : vector<8xf32>
    %553 = vector.multi_reduction <add>, %550, %cst_187 [1] : vector<8x32xf32> to vector<8xf32>
    %554 = vector.shape_cast %553 : vector<8xf32> to vector<8x1xf32>
    %cst_188 = arith.constant 3.200000e+01 : f32
    %555 = vector.broadcast %cst_188 : f32 to vector<8x1xf32>
    %556 = arith.divf %554, %555 : vector<8x1xf32>
    %557 = vector.broadcast %556 : vector<8x1xf32> to vector<8x32xf32>
    %558 = arith.subf %550, %557 : vector<8x32xf32>
    %559 = arith.mulf %558, %558 : vector<8x32xf32>
    %cst_189 = arith.constant dense<0.000000e+00> : vector<8xf32>
    %560 = vector.multi_reduction <add>, %559, %cst_189 [1] : vector<8x32xf32> to vector<8xf32>
    %561 = vector.shape_cast %560 : vector<8xf32> to vector<8x1xf32>
    %cst_190 = arith.constant 3.200000e+01 : f32
    %562 = vector.broadcast %cst_190 : f32 to vector<8x1xf32>
    %563 = arith.divf %561, %562 : vector<8x1xf32>
    %cst_191 = arith.constant 9.99999974E-6 : f32
    %564 = vector.broadcast %cst_191 : f32 to vector<8x1xf32>
    %565 = arith.addf %563, %564 : vector<8x1xf32>
    %566 = math.rsqrt %565 : vector<8x1xf32>
    %567 = vector.broadcast %556 : vector<8x1xf32> to vector<8x32xf32>
    %568 = arith.subf %550, %567 : vector<8x32xf32>
    %569 = vector.broadcast %566 : vector<8x1xf32> to vector<8x32xf32>
    %570 = arith.mulf %568, %569 : vector<8x32xf32>
    %571 = vector.broadcast %551 : vector<1x32xf32> to vector<8x32xf32>
    %572 = arith.mulf %570, %571 : vector<8x32xf32>
    %573 = vector.broadcast %552 : vector<1x32xf32> to vector<8x32xf32>
    %574 = arith.addf %572, %573 : vector<8x32xf32>
    %575 = arith.index_cast %c0_i32_120 : i32 to index
    %c0_192 = arith.constant 0 : index
    %c0_193 = arith.constant 0 : index
    %576 = vector.load %arg22[%575, %c0_192, %c0_193] : memref<2x32x64xf32, #tpu.memory_space<vmem>>, vector<1x32x64xf32>
    %577 = vector.shape_cast %576 : vector<1x32x64xf32> to vector<32x64xf32>
    %cst_194 = arith.constant dense<0.000000e+00> : vector<8x64xf32>
    %578 = tpu.matmul %574, %577, %cst_194 {dimension_numbers = #tpu.dot_dimension_numbers<[1], [0], [0], [1], [0, 0, 1, 1], [], []>} : vector<8x32xf32>, vector<32x64xf32>, vector<8x64xf32> -> vector<8x64xf32>
    %579 = arith.index_cast %c0_i32_120 : i32 to index
    %c0_195 = arith.constant 0 : index
    %c0_196 = arith.constant 0 : index
    %580 = vector.load %arg23[%579, %c0_195, %c0_196] : memref<2x1x64xf32, #tpu.memory_space<vmem>>, vector<1x1x64xf32>
    %581 = vector.shape_cast %580 : vector<1x1x64xf32> to vector<1x64xf32>
    %582 = vector.broadcast %581 : vector<1x64xf32> to vector<8x64xf32>
    %583 = arith.addf %578, %582 : vector<8x64xf32>
    %cst_197 = arith.constant 0.000000e+00 : f32
    %584 = vector.broadcast %cst_197 : f32 to vector<8x64xf32>
    %585 = arith.maximumf %583, %584 : vector<8x64xf32>
    %586 = arith.index_cast %c0_i32_120 : i32 to index
    %c0_198 = arith.constant 0 : index
    %c0_199 = arith.constant 0 : index
    %587 = vector.load %arg24[%586, %c0_198, %c0_199] : memref<2x64x32xf32, #tpu.memory_space<vmem>>, vector<1x64x32xf32>
    %588 = vector.shape_cast %587 : vector<1x64x32xf32> to vector<64x32xf32>
    %cst_200 = arith.constant dense<0.000000e+00> : vector<8x32xf32>
    %589 = tpu.matmul %585, %588, %cst_200 {dimension_numbers = #tpu.dot_dimension_numbers<[1], [0], [0], [1], [0, 0, 1, 1], [], []>} : vector<8x64xf32>, vector<64x32xf32>, vector<8x32xf32> -> vector<8x32xf32>
    %590 = vector.extract_strided_slice %342 {offsets = [7, 0], sizes = [1, 32], strides = [1, 1]} : vector<10x32xf32> to vector<1x32xf32>
    %591 = vector.broadcast %590 : vector<1x32xf32> to vector<8x32xf32>
    %592 = arith.addf %589, %591 : vector<8x32xf32>
    %593 = arith.addf %574, %592 : vector<8x32xf32>
    %594 = vector.extract_strided_slice %342 {offsets = [8, 0], sizes = [1, 32], strides = [1, 1]} : vector<10x32xf32> to vector<1x32xf32>
    %595 = vector.extract_strided_slice %342 {offsets = [9, 0], sizes = [1, 32], strides = [1, 1]} : vector<10x32xf32> to vector<1x32xf32>
    %cst_201 = arith.constant dense<0.000000e+00> : vector<8xf32>
    %596 = vector.multi_reduction <add>, %593, %cst_201 [1] : vector<8x32xf32> to vector<8xf32>
    %597 = vector.shape_cast %596 : vector<8xf32> to vector<8x1xf32>
    %cst_202 = arith.constant 3.200000e+01 : f32
    %598 = vector.broadcast %cst_202 : f32 to vector<8x1xf32>
    %599 = arith.divf %597, %598 : vector<8x1xf32>
    %600 = vector.broadcast %599 : vector<8x1xf32> to vector<8x32xf32>
    %601 = arith.subf %593, %600 : vector<8x32xf32>
    %602 = arith.mulf %601, %601 : vector<8x32xf32>
    %cst_203 = arith.constant dense<0.000000e+00> : vector<8xf32>
    %603 = vector.multi_reduction <add>, %602, %cst_203 [1] : vector<8x32xf32> to vector<8xf32>
    %604 = vector.shape_cast %603 : vector<8xf32> to vector<8x1xf32>
    %cst_204 = arith.constant 3.200000e+01 : f32
    %605 = vector.broadcast %cst_204 : f32 to vector<8x1xf32>
    %606 = arith.divf %604, %605 : vector<8x1xf32>
    %cst_205 = arith.constant 9.99999974E-6 : f32
    %607 = vector.broadcast %cst_205 : f32 to vector<8x1xf32>
    %608 = arith.addf %606, %607 : vector<8x1xf32>
    %609 = math.rsqrt %608 : vector<8x1xf32>
    %610 = vector.broadcast %599 : vector<8x1xf32> to vector<8x32xf32>
    %611 = arith.subf %593, %610 : vector<8x32xf32>
    %612 = vector.broadcast %609 : vector<8x1xf32> to vector<8x32xf32>
    %613 = arith.mulf %611, %612 : vector<8x32xf32>
    %614 = vector.broadcast %594 : vector<1x32xf32> to vector<8x32xf32>
    %615 = arith.mulf %613, %614 : vector<8x32xf32>
    %616 = vector.broadcast %595 : vector<1x32xf32> to vector<8x32xf32>
    %617 = arith.addf %615, %616 : vector<8x32xf32>
    %c1_i32_206 = arith.constant 1 : i32
    %618 = arith.index_cast %c1_i32_206 : i32 to index
    %c0_207 = arith.constant 0 : index
    %c0_208 = arith.constant 0 : index
    %619 = vector.load %arg25[%618, %c0_207, %c0_208] : memref<2x10x32xf32, #tpu.memory_space<vmem>>, vector<1x10x32xf32>
    %620 = vector.shape_cast %619 : vector<1x10x32xf32> to vector<10x32xf32>
    %621 = arith.index_cast %c1_i32_206 : i32 to index
    %c0_209 = arith.constant 0 : index
    %c0_210 = arith.constant 0 : index
    %622 = vector.load %arg15[%621, %c0_209, %c0_210] : memref<2x32x96xf32, #tpu.memory_space<vmem>>, vector<1x32x96xf32>
    %623 = vector.shape_cast %622 : vector<1x32x96xf32> to vector<32x96xf32>
    %cst_211 = arith.constant dense<0.000000e+00> : vector<8x96xf32>
    %624 = tpu.matmul %617, %623, %cst_211 {dimension_numbers = #tpu.dot_dimension_numbers<[1], [0], [0], [1], [0, 0, 1, 1], [], []>} : vector<8x32xf32>, vector<32x96xf32>, vector<8x96xf32> -> vector<8x96xf32>
    %625 = arith.index_cast %c1_i32_206 : i32 to index
    %c0_212 = arith.constant 0 : index
    %c0_213 = arith.constant 0 : index
    %626 = vector.load %arg16[%625, %c0_212, %c0_213] : memref<2x1x96xf32, #tpu.memory_space<vmem>>, vector<1x1x96xf32>
    %627 = vector.shape_cast %626 : vector<1x1x96xf32> to vector<1x96xf32>
    %628 = vector.broadcast %627 : vector<1x96xf32> to vector<8x96xf32>
    %629 = arith.addf %624, %628 : vector<8x96xf32>
    %630 = vector.extract_strided_slice %629 {offsets = [0, 0], sizes = [8, 32], strides = [1, 1]} : vector<8x96xf32> to vector<8x32xf32>
    %631 = vector.extract_strided_slice %629 {offsets = [0, 32], sizes = [8, 32], strides = [1, 1]} : vector<8x96xf32> to vector<8x32xf32>
    %632 = vector.extract_strided_slice %629 {offsets = [0, 64], sizes = [8, 32], strides = [1, 1]} : vector<8x96xf32> to vector<8x32xf32>
    %633 = vector.extract_strided_slice %630 {offsets = [0, 0], sizes = [8, 8], strides = [1, 1]} : vector<8x32xf32> to vector<8x8xf32>
    %634 = vector.extract_strided_slice %631 {offsets = [0, 0], sizes = [8, 8], strides = [1, 1]} : vector<8x32xf32> to vector<8x8xf32>
    %635 = vector.extract_strided_slice %632 {offsets = [0, 0], sizes = [8, 8], strides = [1, 1]} : vector<8x32xf32> to vector<8x8xf32>
    %636 = tpu.transpose %634, [1, 0] : vector<8x8xf32> -> vector<8x8xf32>
    %cst_214 = arith.constant dense<0.000000e+00> : vector<8x8xf32>
    %637 = tpu.matmul %633, %636, %cst_214 {dimension_numbers = #tpu.dot_dimension_numbers<[1], [0], [0], [1], [0, 0, 1, 1], [], []>} : vector<8x8xf32>, vector<8x8xf32>, vector<8x8xf32> -> vector<8x8xf32>
    %cst_215 = arith.constant -9.99999995E+11 : f32
    %638 = vector.broadcast %cst_215 : f32 to vector<8x8xf32>
    %639 = arith.select %7, %638, %637 : vector<8x8xi1>, vector<8x8xf32>
    %cst_216 = arith.constant dense<0xFF800000> : vector<8xf32>
    %640 = vector.multi_reduction <maximumf>, %639, %cst_216 [1] : vector<8x8xf32> to vector<8xf32>
    %641 = vector.shape_cast %640 : vector<8xf32> to vector<8x1xf32>
    %642 = vector.broadcast %641 : vector<8x1xf32> to vector<8x8xf32>
    %643 = arith.subf %639, %642 : vector<8x8xf32>
    %644 = math.exp %643 : vector<8x8xf32>
    %cst_217 = arith.constant dense<0.000000e+00> : vector<8xf32>
    %645 = vector.multi_reduction <add>, %644, %cst_217 [1] : vector<8x8xf32> to vector<8xf32>
    %646 = vector.shape_cast %645 : vector<8xf32> to vector<8x1xf32>
    %647 = vector.broadcast %646 : vector<8x1xf32> to vector<8x8xf32>
    %648 = arith.divf %644, %647 : vector<8x8xf32>
    %cst_218 = arith.constant dense<0.000000e+00> : vector<8x8xf32>
    %649 = tpu.matmul %648, %635, %cst_218 {dimension_numbers = #tpu.dot_dimension_numbers<[1], [0], [0], [1], [0, 0, 1, 1], [], []>} : vector<8x8xf32>, vector<8x8xf32>, vector<8x8xf32> -> vector<8x8xf32>
    %650 = vector.extract_strided_slice %630 {offsets = [0, 8], sizes = [8, 8], strides = [1, 1]} : vector<8x32xf32> to vector<8x8xf32>
    %651 = vector.extract_strided_slice %631 {offsets = [0, 8], sizes = [8, 8], strides = [1, 1]} : vector<8x32xf32> to vector<8x8xf32>
    %652 = vector.extract_strided_slice %632 {offsets = [0, 8], sizes = [8, 8], strides = [1, 1]} : vector<8x32xf32> to vector<8x8xf32>
    %653 = tpu.transpose %651, [1, 0] : vector<8x8xf32> -> vector<8x8xf32>
    %cst_219 = arith.constant dense<0.000000e+00> : vector<8x8xf32>
    %654 = tpu.matmul %650, %653, %cst_219 {dimension_numbers = #tpu.dot_dimension_numbers<[1], [0], [0], [1], [0, 0, 1, 1], [], []>} : vector<8x8xf32>, vector<8x8xf32>, vector<8x8xf32> -> vector<8x8xf32>
    %cst_220 = arith.constant -9.99999995E+11 : f32
    %655 = vector.broadcast %cst_220 : f32 to vector<8x8xf32>
    %656 = arith.select %7, %655, %654 : vector<8x8xi1>, vector<8x8xf32>
    %cst_221 = arith.constant dense<0xFF800000> : vector<8xf32>
    %657 = vector.multi_reduction <maximumf>, %656, %cst_221 [1] : vector<8x8xf32> to vector<8xf32>
    %658 = vector.shape_cast %657 : vector<8xf32> to vector<8x1xf32>
    %659 = vector.broadcast %658 : vector<8x1xf32> to vector<8x8xf32>
    %660 = arith.subf %656, %659 : vector<8x8xf32>
    %661 = math.exp %660 : vector<8x8xf32>
    %cst_222 = arith.constant dense<0.000000e+00> : vector<8xf32>
    %662 = vector.multi_reduction <add>, %661, %cst_222 [1] : vector<8x8xf32> to vector<8xf32>
    %663 = vector.shape_cast %662 : vector<8xf32> to vector<8x1xf32>
    %664 = vector.broadcast %663 : vector<8x1xf32> to vector<8x8xf32>
    %665 = arith.divf %661, %664 : vector<8x8xf32>
    %cst_223 = arith.constant dense<0.000000e+00> : vector<8x8xf32>
    %666 = tpu.matmul %665, %652, %cst_223 {dimension_numbers = #tpu.dot_dimension_numbers<[1], [0], [0], [1], [0, 0, 1, 1], [], []>} : vector<8x8xf32>, vector<8x8xf32>, vector<8x8xf32> -> vector<8x8xf32>
    %667 = vector.extract_strided_slice %630 {offsets = [0, 16], sizes = [8, 8], strides = [1, 1]} : vector<8x32xf32> to vector<8x8xf32>
    %668 = vector.extract_strided_slice %631 {offsets = [0, 16], sizes = [8, 8], strides = [1, 1]} : vector<8x32xf32> to vector<8x8xf32>
    %669 = vector.extract_strided_slice %632 {offsets = [0, 16], sizes = [8, 8], strides = [1, 1]} : vector<8x32xf32> to vector<8x8xf32>
    %670 = tpu.transpose %668, [1, 0] : vector<8x8xf32> -> vector<8x8xf32>
    %cst_224 = arith.constant dense<0.000000e+00> : vector<8x8xf32>
    %671 = tpu.matmul %667, %670, %cst_224 {dimension_numbers = #tpu.dot_dimension_numbers<[1], [0], [0], [1], [0, 0, 1, 1], [], []>} : vector<8x8xf32>, vector<8x8xf32>, vector<8x8xf32> -> vector<8x8xf32>
    %cst_225 = arith.constant -9.99999995E+11 : f32
    %672 = vector.broadcast %cst_225 : f32 to vector<8x8xf32>
    %673 = arith.select %7, %672, %671 : vector<8x8xi1>, vector<8x8xf32>
    %cst_226 = arith.constant dense<0xFF800000> : vector<8xf32>
    %674 = vector.multi_reduction <maximumf>, %673, %cst_226 [1] : vector<8x8xf32> to vector<8xf32>
    %675 = vector.shape_cast %674 : vector<8xf32> to vector<8x1xf32>
    %676 = vector.broadcast %675 : vector<8x1xf32> to vector<8x8xf32>
    %677 = arith.subf %673, %676 : vector<8x8xf32>
    %678 = math.exp %677 : vector<8x8xf32>
    %cst_227 = arith.constant dense<0.000000e+00> : vector<8xf32>
    %679 = vector.multi_reduction <add>, %678, %cst_227 [1] : vector<8x8xf32> to vector<8xf32>
    %680 = vector.shape_cast %679 : vector<8xf32> to vector<8x1xf32>
    %681 = vector.broadcast %680 : vector<8x1xf32> to vector<8x8xf32>
    %682 = arith.divf %678, %681 : vector<8x8xf32>
    %cst_228 = arith.constant dense<0.000000e+00> : vector<8x8xf32>
    %683 = tpu.matmul %682, %669, %cst_228 {dimension_numbers = #tpu.dot_dimension_numbers<[1], [0], [0], [1], [0, 0, 1, 1], [], []>} : vector<8x8xf32>, vector<8x8xf32>, vector<8x8xf32> -> vector<8x8xf32>
    %684 = vector.extract_strided_slice %630 {offsets = [0, 24], sizes = [8, 8], strides = [1, 1]} : vector<8x32xf32> to vector<8x8xf32>
    %685 = vector.extract_strided_slice %631 {offsets = [0, 24], sizes = [8, 8], strides = [1, 1]} : vector<8x32xf32> to vector<8x8xf32>
    %686 = vector.extract_strided_slice %632 {offsets = [0, 24], sizes = [8, 8], strides = [1, 1]} : vector<8x32xf32> to vector<8x8xf32>
    %687 = tpu.transpose %685, [1, 0] : vector<8x8xf32> -> vector<8x8xf32>
    %cst_229 = arith.constant dense<0.000000e+00> : vector<8x8xf32>
    %688 = tpu.matmul %684, %687, %cst_229 {dimension_numbers = #tpu.dot_dimension_numbers<[1], [0], [0], [1], [0, 0, 1, 1], [], []>} : vector<8x8xf32>, vector<8x8xf32>, vector<8x8xf32> -> vector<8x8xf32>
    %cst_230 = arith.constant -9.99999995E+11 : f32
    %689 = vector.broadcast %cst_230 : f32 to vector<8x8xf32>
    %690 = arith.select %7, %689, %688 : vector<8x8xi1>, vector<8x8xf32>
    %cst_231 = arith.constant dense<0xFF800000> : vector<8xf32>
    %691 = vector.multi_reduction <maximumf>, %690, %cst_231 [1] : vector<8x8xf32> to vector<8xf32>
    %692 = vector.shape_cast %691 : vector<8xf32> to vector<8x1xf32>
    %693 = vector.broadcast %692 : vector<8x1xf32> to vector<8x8xf32>
    %694 = arith.subf %690, %693 : vector<8x8xf32>
    %695 = math.exp %694 : vector<8x8xf32>
    %cst_232 = arith.constant dense<0.000000e+00> : vector<8xf32>
    %696 = vector.multi_reduction <add>, %695, %cst_232 [1] : vector<8x8xf32> to vector<8xf32>
    %697 = vector.shape_cast %696 : vector<8xf32> to vector<8x1xf32>
    %698 = vector.broadcast %697 : vector<8x1xf32> to vector<8x8xf32>
    %699 = arith.divf %695, %698 : vector<8x8xf32>
    %cst_233 = arith.constant dense<0.000000e+00> : vector<8x8xf32>
    %700 = tpu.matmul %699, %686, %cst_233 {dimension_numbers = #tpu.dot_dimension_numbers<[1], [0], [0], [1], [0, 0, 1, 1], [], []>} : vector<8x8xf32>, vector<8x8xf32>, vector<8x8xf32> -> vector<8x8xf32>
    %701 = tpu.concatenate %649, %666, %683, %700 in 1 : vector<8x8xf32>, vector<8x8xf32>, vector<8x8xf32>, vector<8x8xf32> -> vector<8x32xf32>
    %702 = arith.index_cast %c1_i32_206 : i32 to index
    %c0_234 = arith.constant 0 : index
    %c0_235 = arith.constant 0 : index
    %703 = vector.load %arg17[%702, %c0_234, %c0_235] : memref<2x32x32xf32, #tpu.memory_space<vmem>>, vector<1x32x32xf32>
    %704 = vector.shape_cast %703 : vector<1x32x32xf32> to vector<32x32xf32>
    %cst_236 = arith.constant dense<0.000000e+00> : vector<8x32xf32>
    %705 = tpu.matmul %701, %704, %cst_236 {dimension_numbers = #tpu.dot_dimension_numbers<[1], [0], [0], [1], [0, 0, 1, 1], [], []>} : vector<8x32xf32>, vector<32x32xf32>, vector<8x32xf32> -> vector<8x32xf32>
    %706 = vector.extract_strided_slice %620 {offsets = [0, 0], sizes = [1, 32], strides = [1, 1]} : vector<10x32xf32> to vector<1x32xf32>
    %707 = vector.broadcast %706 : vector<1x32xf32> to vector<8x32xf32>
    %708 = arith.addf %705, %707 : vector<8x32xf32>
    %709 = arith.addf %617, %708 : vector<8x32xf32>
    %710 = vector.extract_strided_slice %620 {offsets = [1, 0], sizes = [1, 32], strides = [1, 1]} : vector<10x32xf32> to vector<1x32xf32>
    %711 = vector.extract_strided_slice %620 {offsets = [2, 0], sizes = [1, 32], strides = [1, 1]} : vector<10x32xf32> to vector<1x32xf32>
    %cst_237 = arith.constant dense<0.000000e+00> : vector<8xf32>
    %712 = vector.multi_reduction <add>, %709, %cst_237 [1] : vector<8x32xf32> to vector<8xf32>
    %713 = vector.shape_cast %712 : vector<8xf32> to vector<8x1xf32>
    %cst_238 = arith.constant 3.200000e+01 : f32
    %714 = vector.broadcast %cst_238 : f32 to vector<8x1xf32>
    %715 = arith.divf %713, %714 : vector<8x1xf32>
    %716 = vector.broadcast %715 : vector<8x1xf32> to vector<8x32xf32>
    %717 = arith.subf %709, %716 : vector<8x32xf32>
    %718 = arith.mulf %717, %717 : vector<8x32xf32>
    %cst_239 = arith.constant dense<0.000000e+00> : vector<8xf32>
    %719 = vector.multi_reduction <add>, %718, %cst_239 [1] : vector<8x32xf32> to vector<8xf32>
    %720 = vector.shape_cast %719 : vector<8xf32> to vector<8x1xf32>
    %cst_240 = arith.constant 3.200000e+01 : f32
    %721 = vector.broadcast %cst_240 : f32 to vector<8x1xf32>
    %722 = arith.divf %720, %721 : vector<8x1xf32>
    %cst_241 = arith.constant 9.99999974E-6 : f32
    %723 = vector.broadcast %cst_241 : f32 to vector<8x1xf32>
    %724 = arith.addf %722, %723 : vector<8x1xf32>
    %725 = math.rsqrt %724 : vector<8x1xf32>
    %726 = vector.broadcast %715 : vector<8x1xf32> to vector<8x32xf32>
    %727 = arith.subf %709, %726 : vector<8x32xf32>
    %728 = vector.broadcast %725 : vector<8x1xf32> to vector<8x32xf32>
    %729 = arith.mulf %727, %728 : vector<8x32xf32>
    %730 = vector.broadcast %710 : vector<1x32xf32> to vector<8x32xf32>
    %731 = arith.mulf %729, %730 : vector<8x32xf32>
    %732 = vector.broadcast %711 : vector<1x32xf32> to vector<8x32xf32>
    %733 = arith.addf %731, %732 : vector<8x32xf32>
    %734 = arith.index_cast %c1_i32_206 : i32 to index
    %c0_242 = arith.constant 0 : index
    %c0_243 = arith.constant 0 : index
    %735 = vector.load %arg18[%734, %c0_242, %c0_243] : memref<2x32x32xf32, #tpu.memory_space<vmem>>, vector<1x32x32xf32>
    %736 = vector.shape_cast %735 : vector<1x32x32xf32> to vector<32x32xf32>
    %cst_244 = arith.constant dense<0.000000e+00> : vector<8x32xf32>
    %737 = tpu.matmul %733, %736, %cst_244 {dimension_numbers = #tpu.dot_dimension_numbers<[1], [0], [0], [1], [0, 0, 1, 1], [], []>} : vector<8x32xf32>, vector<32x32xf32>, vector<8x32xf32> -> vector<8x32xf32>
    %738 = vector.extract_strided_slice %620 {offsets = [3, 0], sizes = [1, 32], strides = [1, 1]} : vector<10x32xf32> to vector<1x32xf32>
    %739 = vector.broadcast %738 : vector<1x32xf32> to vector<8x32xf32>
    %740 = arith.addf %737, %739 : vector<8x32xf32>
    %741 = arith.index_cast %c1_i32_206 : i32 to index
    %c0_245 = arith.constant 0 : index
    %c0_246 = arith.constant 0 : index
    %742 = vector.load %arg19[%741, %c0_245, %c0_246] : memref<2x32x64xf32, #tpu.memory_space<vmem>>, vector<1x32x64xf32>
    %743 = vector.shape_cast %742 : vector<1x32x64xf32> to vector<32x64xf32>
    %cst_247 = arith.constant dense<0.000000e+00> : vector<8x64xf32>
    %744 = tpu.matmul %334, %743, %cst_247 {dimension_numbers = #tpu.dot_dimension_numbers<[1], [0], [0], [1], [0, 0, 1, 1], [], []>} : vector<8x32xf32>, vector<32x64xf32>, vector<8x64xf32> -> vector<8x64xf32>
    %745 = arith.index_cast %c1_i32_206 : i32 to index
    %c0_248 = arith.constant 0 : index
    %c0_249 = arith.constant 0 : index
    %746 = vector.load %arg20[%745, %c0_248, %c0_249] : memref<2x1x64xf32, #tpu.memory_space<vmem>>, vector<1x1x64xf32>
    %747 = vector.shape_cast %746 : vector<1x1x64xf32> to vector<1x64xf32>
    %748 = vector.broadcast %747 : vector<1x64xf32> to vector<8x64xf32>
    %749 = arith.addf %744, %748 : vector<8x64xf32>
    %750 = vector.extract_strided_slice %749 {offsets = [0, 0], sizes = [8, 32], strides = [1, 1]} : vector<8x64xf32> to vector<8x32xf32>
    %751 = vector.extract_strided_slice %749 {offsets = [0, 32], sizes = [8, 32], strides = [1, 1]} : vector<8x64xf32> to vector<8x32xf32>
    %752 = vector.extract_strided_slice %740 {offsets = [0, 0], sizes = [8, 8], strides = [1, 1]} : vector<8x32xf32> to vector<8x8xf32>
    %753 = vector.extract_strided_slice %750 {offsets = [0, 0], sizes = [8, 8], strides = [1, 1]} : vector<8x32xf32> to vector<8x8xf32>
    %754 = vector.extract_strided_slice %751 {offsets = [0, 0], sizes = [8, 8], strides = [1, 1]} : vector<8x32xf32> to vector<8x8xf32>
    %755 = tpu.transpose %753, [1, 0] : vector<8x8xf32> -> vector<8x8xf32>
    %cst_250 = arith.constant dense<0.000000e+00> : vector<8x8xf32>
    %756 = tpu.matmul %752, %755, %cst_250 {dimension_numbers = #tpu.dot_dimension_numbers<[1], [0], [0], [1], [0, 0, 1, 1], [], []>} : vector<8x8xf32>, vector<8x8xf32>, vector<8x8xf32> -> vector<8x8xf32>
    %cst_251 = arith.constant -9.99999995E+11 : f32
    %757 = vector.broadcast %cst_251 : f32 to vector<8x8xf32>
    %758 = arith.select %11, %757, %756 : vector<8x8xi1>, vector<8x8xf32>
    %cst_252 = arith.constant dense<0xFF800000> : vector<8xf32>
    %759 = vector.multi_reduction <maximumf>, %758, %cst_252 [1] : vector<8x8xf32> to vector<8xf32>
    %760 = vector.shape_cast %759 : vector<8xf32> to vector<8x1xf32>
    %761 = vector.broadcast %760 : vector<8x1xf32> to vector<8x8xf32>
    %762 = arith.subf %758, %761 : vector<8x8xf32>
    %763 = math.exp %762 : vector<8x8xf32>
    %cst_253 = arith.constant dense<0.000000e+00> : vector<8xf32>
    %764 = vector.multi_reduction <add>, %763, %cst_253 [1] : vector<8x8xf32> to vector<8xf32>
    %765 = vector.shape_cast %764 : vector<8xf32> to vector<8x1xf32>
    %766 = vector.broadcast %765 : vector<8x1xf32> to vector<8x8xf32>
    %767 = arith.divf %763, %766 : vector<8x8xf32>
    %cst_254 = arith.constant dense<0.000000e+00> : vector<8x8xf32>
    %768 = tpu.matmul %767, %754, %cst_254 {dimension_numbers = #tpu.dot_dimension_numbers<[1], [0], [0], [1], [0, 0, 1, 1], [], []>} : vector<8x8xf32>, vector<8x8xf32>, vector<8x8xf32> -> vector<8x8xf32>
    %769 = vector.extract_strided_slice %740 {offsets = [0, 8], sizes = [8, 8], strides = [1, 1]} : vector<8x32xf32> to vector<8x8xf32>
    %770 = vector.extract_strided_slice %750 {offsets = [0, 8], sizes = [8, 8], strides = [1, 1]} : vector<8x32xf32> to vector<8x8xf32>
    %771 = vector.extract_strided_slice %751 {offsets = [0, 8], sizes = [8, 8], strides = [1, 1]} : vector<8x32xf32> to vector<8x8xf32>
    %772 = tpu.transpose %770, [1, 0] : vector<8x8xf32> -> vector<8x8xf32>
    %cst_255 = arith.constant dense<0.000000e+00> : vector<8x8xf32>
    %773 = tpu.matmul %769, %772, %cst_255 {dimension_numbers = #tpu.dot_dimension_numbers<[1], [0], [0], [1], [0, 0, 1, 1], [], []>} : vector<8x8xf32>, vector<8x8xf32>, vector<8x8xf32> -> vector<8x8xf32>
    %cst_256 = arith.constant -9.99999995E+11 : f32
    %774 = vector.broadcast %cst_256 : f32 to vector<8x8xf32>
    %775 = arith.select %11, %774, %773 : vector<8x8xi1>, vector<8x8xf32>
    %cst_257 = arith.constant dense<0xFF800000> : vector<8xf32>
    %776 = vector.multi_reduction <maximumf>, %775, %cst_257 [1] : vector<8x8xf32> to vector<8xf32>
    %777 = vector.shape_cast %776 : vector<8xf32> to vector<8x1xf32>
    %778 = vector.broadcast %777 : vector<8x1xf32> to vector<8x8xf32>
    %779 = arith.subf %775, %778 : vector<8x8xf32>
    %780 = math.exp %779 : vector<8x8xf32>
    %cst_258 = arith.constant dense<0.000000e+00> : vector<8xf32>
    %781 = vector.multi_reduction <add>, %780, %cst_258 [1] : vector<8x8xf32> to vector<8xf32>
    %782 = vector.shape_cast %781 : vector<8xf32> to vector<8x1xf32>
    %783 = vector.broadcast %782 : vector<8x1xf32> to vector<8x8xf32>
    %784 = arith.divf %780, %783 : vector<8x8xf32>
    %cst_259 = arith.constant dense<0.000000e+00> : vector<8x8xf32>
    %785 = tpu.matmul %784, %771, %cst_259 {dimension_numbers = #tpu.dot_dimension_numbers<[1], [0], [0], [1], [0, 0, 1, 1], [], []>} : vector<8x8xf32>, vector<8x8xf32>, vector<8x8xf32> -> vector<8x8xf32>
    %786 = vector.extract_strided_slice %740 {offsets = [0, 16], sizes = [8, 8], strides = [1, 1]} : vector<8x32xf32> to vector<8x8xf32>
    %787 = vector.extract_strided_slice %750 {offsets = [0, 16], sizes = [8, 8], strides = [1, 1]} : vector<8x32xf32> to vector<8x8xf32>
    %788 = vector.extract_strided_slice %751 {offsets = [0, 16], sizes = [8, 8], strides = [1, 1]} : vector<8x32xf32> to vector<8x8xf32>
    %789 = tpu.transpose %787, [1, 0] : vector<8x8xf32> -> vector<8x8xf32>
    %cst_260 = arith.constant dense<0.000000e+00> : vector<8x8xf32>
    %790 = tpu.matmul %786, %789, %cst_260 {dimension_numbers = #tpu.dot_dimension_numbers<[1], [0], [0], [1], [0, 0, 1, 1], [], []>} : vector<8x8xf32>, vector<8x8xf32>, vector<8x8xf32> -> vector<8x8xf32>
    %cst_261 = arith.constant -9.99999995E+11 : f32
    %791 = vector.broadcast %cst_261 : f32 to vector<8x8xf32>
    %792 = arith.select %11, %791, %790 : vector<8x8xi1>, vector<8x8xf32>
    %cst_262 = arith.constant dense<0xFF800000> : vector<8xf32>
    %793 = vector.multi_reduction <maximumf>, %792, %cst_262 [1] : vector<8x8xf32> to vector<8xf32>
    %794 = vector.shape_cast %793 : vector<8xf32> to vector<8x1xf32>
    %795 = vector.broadcast %794 : vector<8x1xf32> to vector<8x8xf32>
    %796 = arith.subf %792, %795 : vector<8x8xf32>
    %797 = math.exp %796 : vector<8x8xf32>
    %cst_263 = arith.constant dense<0.000000e+00> : vector<8xf32>
    %798 = vector.multi_reduction <add>, %797, %cst_263 [1] : vector<8x8xf32> to vector<8xf32>
    %799 = vector.shape_cast %798 : vector<8xf32> to vector<8x1xf32>
    %800 = vector.broadcast %799 : vector<8x1xf32> to vector<8x8xf32>
    %801 = arith.divf %797, %800 : vector<8x8xf32>
    %cst_264 = arith.constant dense<0.000000e+00> : vector<8x8xf32>
    %802 = tpu.matmul %801, %788, %cst_264 {dimension_numbers = #tpu.dot_dimension_numbers<[1], [0], [0], [1], [0, 0, 1, 1], [], []>} : vector<8x8xf32>, vector<8x8xf32>, vector<8x8xf32> -> vector<8x8xf32>
    %803 = vector.extract_strided_slice %740 {offsets = [0, 24], sizes = [8, 8], strides = [1, 1]} : vector<8x32xf32> to vector<8x8xf32>
    %804 = vector.extract_strided_slice %750 {offsets = [0, 24], sizes = [8, 8], strides = [1, 1]} : vector<8x32xf32> to vector<8x8xf32>
    %805 = vector.extract_strided_slice %751 {offsets = [0, 24], sizes = [8, 8], strides = [1, 1]} : vector<8x32xf32> to vector<8x8xf32>
    %806 = tpu.transpose %804, [1, 0] : vector<8x8xf32> -> vector<8x8xf32>
    %cst_265 = arith.constant dense<0.000000e+00> : vector<8x8xf32>
    %807 = tpu.matmul %803, %806, %cst_265 {dimension_numbers = #tpu.dot_dimension_numbers<[1], [0], [0], [1], [0, 0, 1, 1], [], []>} : vector<8x8xf32>, vector<8x8xf32>, vector<8x8xf32> -> vector<8x8xf32>
    %cst_266 = arith.constant -9.99999995E+11 : f32
    %808 = vector.broadcast %cst_266 : f32 to vector<8x8xf32>
    %809 = arith.select %11, %808, %807 : vector<8x8xi1>, vector<8x8xf32>
    %cst_267 = arith.constant dense<0xFF800000> : vector<8xf32>
    %810 = vector.multi_reduction <maximumf>, %809, %cst_267 [1] : vector<8x8xf32> to vector<8xf32>
    %811 = vector.shape_cast %810 : vector<8xf32> to vector<8x1xf32>
    %812 = vector.broadcast %811 : vector<8x1xf32> to vector<8x8xf32>
    %813 = arith.subf %809, %812 : vector<8x8xf32>
    %814 = math.exp %813 : vector<8x8xf32>
    %cst_268 = arith.constant dense<0.000000e+00> : vector<8xf32>
    %815 = vector.multi_reduction <add>, %814, %cst_268 [1] : vector<8x8xf32> to vector<8xf32>
    %816 = vector.shape_cast %815 : vector<8xf32> to vector<8x1xf32>
    %817 = vector.broadcast %816 : vector<8x1xf32> to vector<8x8xf32>
    %818 = arith.divf %814, %817 : vector<8x8xf32>
    %cst_269 = arith.constant dense<0.000000e+00> : vector<8x8xf32>
    %819 = tpu.matmul %818, %805, %cst_269 {dimension_numbers = #tpu.dot_dimension_numbers<[1], [0], [0], [1], [0, 0, 1, 1], [], []>} : vector<8x8xf32>, vector<8x8xf32>, vector<8x8xf32> -> vector<8x8xf32>
    %820 = tpu.concatenate %768, %785, %802, %819 in 1 : vector<8x8xf32>, vector<8x8xf32>, vector<8x8xf32>, vector<8x8xf32> -> vector<8x32xf32>
    %821 = arith.index_cast %c1_i32_206 : i32 to index
    %c0_270 = arith.constant 0 : index
    %c0_271 = arith.constant 0 : index
    %822 = vector.load %arg21[%821, %c0_270, %c0_271] : memref<2x32x32xf32, #tpu.memory_space<vmem>>, vector<1x32x32xf32>
    %823 = vector.shape_cast %822 : vector<1x32x32xf32> to vector<32x32xf32>
    %cst_272 = arith.constant dense<0.000000e+00> : vector<8x32xf32>
    %824 = tpu.matmul %820, %823, %cst_272 {dimension_numbers = #tpu.dot_dimension_numbers<[1], [0], [0], [1], [0, 0, 1, 1], [], []>} : vector<8x32xf32>, vector<32x32xf32>, vector<8x32xf32> -> vector<8x32xf32>
    %825 = vector.extract_strided_slice %620 {offsets = [4, 0], sizes = [1, 32], strides = [1, 1]} : vector<10x32xf32> to vector<1x32xf32>
    %826 = vector.broadcast %825 : vector<1x32xf32> to vector<8x32xf32>
    %827 = arith.addf %824, %826 : vector<8x32xf32>
    %828 = arith.addf %733, %827 : vector<8x32xf32>
    %829 = vector.extract_strided_slice %620 {offsets = [5, 0], sizes = [1, 32], strides = [1, 1]} : vector<10x32xf32> to vector<1x32xf32>
    %830 = vector.extract_strided_slice %620 {offsets = [6, 0], sizes = [1, 32], strides = [1, 1]} : vector<10x32xf32> to vector<1x32xf32>
    %cst_273 = arith.constant dense<0.000000e+00> : vector<8xf32>
    %831 = vector.multi_reduction <add>, %828, %cst_273 [1] : vector<8x32xf32> to vector<8xf32>
    %832 = vector.shape_cast %831 : vector<8xf32> to vector<8x1xf32>
    %cst_274 = arith.constant 3.200000e+01 : f32
    %833 = vector.broadcast %cst_274 : f32 to vector<8x1xf32>
    %834 = arith.divf %832, %833 : vector<8x1xf32>
    %835 = vector.broadcast %834 : vector<8x1xf32> to vector<8x32xf32>
    %836 = arith.subf %828, %835 : vector<8x32xf32>
    %837 = arith.mulf %836, %836 : vector<8x32xf32>
    %cst_275 = arith.constant dense<0.000000e+00> : vector<8xf32>
    %838 = vector.multi_reduction <add>, %837, %cst_275 [1] : vector<8x32xf32> to vector<8xf32>
    %839 = vector.shape_cast %838 : vector<8xf32> to vector<8x1xf32>
    %cst_276 = arith.constant 3.200000e+01 : f32
    %840 = vector.broadcast %cst_276 : f32 to vector<8x1xf32>
    %841 = arith.divf %839, %840 : vector<8x1xf32>
    %cst_277 = arith.constant 9.99999974E-6 : f32
    %842 = vector.broadcast %cst_277 : f32 to vector<8x1xf32>
    %843 = arith.addf %841, %842 : vector<8x1xf32>
    %844 = math.rsqrt %843 : vector<8x1xf32>
    %845 = vector.broadcast %834 : vector<8x1xf32> to vector<8x32xf32>
    %846 = arith.subf %828, %845 : vector<8x32xf32>
    %847 = vector.broadcast %844 : vector<8x1xf32> to vector<8x32xf32>
    %848 = arith.mulf %846, %847 : vector<8x32xf32>
    %849 = vector.broadcast %829 : vector<1x32xf32> to vector<8x32xf32>
    %850 = arith.mulf %848, %849 : vector<8x32xf32>
    %851 = vector.broadcast %830 : vector<1x32xf32> to vector<8x32xf32>
    %852 = arith.addf %850, %851 : vector<8x32xf32>
    %853 = arith.index_cast %c1_i32_206 : i32 to index
    %c0_278 = arith.constant 0 : index
    %c0_279 = arith.constant 0 : index
    %854 = vector.load %arg22[%853, %c0_278, %c0_279] : memref<2x32x64xf32, #tpu.memory_space<vmem>>, vector<1x32x64xf32>
    %855 = vector.shape_cast %854 : vector<1x32x64xf32> to vector<32x64xf32>
    %cst_280 = arith.constant dense<0.000000e+00> : vector<8x64xf32>
    %856 = tpu.matmul %852, %855, %cst_280 {dimension_numbers = #tpu.dot_dimension_numbers<[1], [0], [0], [1], [0, 0, 1, 1], [], []>} : vector<8x32xf32>, vector<32x64xf32>, vector<8x64xf32> -> vector<8x64xf32>
    %857 = arith.index_cast %c1_i32_206 : i32 to index
    %c0_281 = arith.constant 0 : index
    %c0_282 = arith.constant 0 : index
    %858 = vector.load %arg23[%857, %c0_281, %c0_282] : memref<2x1x64xf32, #tpu.memory_space<vmem>>, vector<1x1x64xf32>
    %859 = vector.shape_cast %858 : vector<1x1x64xf32> to vector<1x64xf32>
    %860 = vector.broadcast %859 : vector<1x64xf32> to vector<8x64xf32>
    %861 = arith.addf %856, %860 : vector<8x64xf32>
    %cst_283 = arith.constant 0.000000e+00 : f32
    %862 = vector.broadcast %cst_283 : f32 to vector<8x64xf32>
    %863 = arith.maximumf %861, %862 : vector<8x64xf32>
    %864 = arith.index_cast %c1_i32_206 : i32 to index
    %c0_284 = arith.constant 0 : index
    %c0_285 = arith.constant 0 : index
    %865 = vector.load %arg24[%864, %c0_284, %c0_285] : memref<2x64x32xf32, #tpu.memory_space<vmem>>, vector<1x64x32xf32>
    %866 = vector.shape_cast %865 : vector<1x64x32xf32> to vector<64x32xf32>
    %cst_286 = arith.constant dense<0.000000e+00> : vector<8x32xf32>
    %867 = tpu.matmul %863, %866, %cst_286 {dimension_numbers = #tpu.dot_dimension_numbers<[1], [0], [0], [1], [0, 0, 1, 1], [], []>} : vector<8x64xf32>, vector<64x32xf32>, vector<8x32xf32> -> vector<8x32xf32>
    %868 = vector.extract_strided_slice %620 {offsets = [7, 0], sizes = [1, 32], strides = [1, 1]} : vector<10x32xf32> to vector<1x32xf32>
    %869 = vector.broadcast %868 : vector<1x32xf32> to vector<8x32xf32>
    %870 = arith.addf %867, %869 : vector<8x32xf32>
    %871 = arith.addf %852, %870 : vector<8x32xf32>
    %872 = vector.extract_strided_slice %620 {offsets = [8, 0], sizes = [1, 32], strides = [1, 1]} : vector<10x32xf32> to vector<1x32xf32>
    %873 = vector.extract_strided_slice %620 {offsets = [9, 0], sizes = [1, 32], strides = [1, 1]} : vector<10x32xf32> to vector<1x32xf32>
    %cst_287 = arith.constant dense<0.000000e+00> : vector<8xf32>
    %874 = vector.multi_reduction <add>, %871, %cst_287 [1] : vector<8x32xf32> to vector<8xf32>
    %875 = vector.shape_cast %874 : vector<8xf32> to vector<8x1xf32>
    %cst_288 = arith.constant 3.200000e+01 : f32
    %876 = vector.broadcast %cst_288 : f32 to vector<8x1xf32>
    %877 = arith.divf %875, %876 : vector<8x1xf32>
    %878 = vector.broadcast %877 : vector<8x1xf32> to vector<8x32xf32>
    %879 = arith.subf %871, %878 : vector<8x32xf32>
    %880 = arith.mulf %879, %879 : vector<8x32xf32>
    %cst_289 = arith.constant dense<0.000000e+00> : vector<8xf32>
    %881 = vector.multi_reduction <add>, %880, %cst_289 [1] : vector<8x32xf32> to vector<8xf32>
    %882 = vector.shape_cast %881 : vector<8xf32> to vector<8x1xf32>
    %cst_290 = arith.constant 3.200000e+01 : f32
    %883 = vector.broadcast %cst_290 : f32 to vector<8x1xf32>
    %884 = arith.divf %882, %883 : vector<8x1xf32>
    %cst_291 = arith.constant 9.99999974E-6 : f32
    %885 = vector.broadcast %cst_291 : f32 to vector<8x1xf32>
    %886 = arith.addf %884, %885 : vector<8x1xf32>
    %887 = math.rsqrt %886 : vector<8x1xf32>
    %888 = vector.broadcast %877 : vector<8x1xf32> to vector<8x32xf32>
    %889 = arith.subf %871, %888 : vector<8x32xf32>
    %890 = vector.broadcast %887 : vector<8x1xf32> to vector<8x32xf32>
    %891 = arith.mulf %889, %890 : vector<8x32xf32>
    %892 = vector.broadcast %872 : vector<1x32xf32> to vector<8x32xf32>
    %893 = arith.mulf %891, %892 : vector<8x32xf32>
    %894 = vector.broadcast %873 : vector<1x32xf32> to vector<8x32xf32>
    %895 = arith.addf %893, %894 : vector<8x32xf32>
    %c2_i32_292 = arith.constant 2 : i32
    %c0_293 = arith.constant 0 : index
    %c0_294 = arith.constant 0 : index
    %896 = vector.load %arg26[%c0_293, %c0_294] : memref<32x128xf32, #tpu.memory_space<vmem>>, vector<32x128xf32>
    %cst_295 = arith.constant dense<0.000000e+00> : vector<8x128xf32>
    %897 = tpu.matmul %895, %896, %cst_295 {dimension_numbers = #tpu.dot_dimension_numbers<[1], [0], [0], [1], [0, 0, 1, 1], [], []>} : vector<8x32xf32>, vector<32x128xf32>, vector<8x128xf32> -> vector<8x128xf32>
    %c0_296 = arith.constant 0 : index
    %c0_297 = arith.constant 0 : index
    %898 = vector.load %arg27[%c0_296, %c0_297] : memref<1x128xf32, #tpu.memory_space<vmem>>, vector<1x128xf32>
    %899 = vector.broadcast %898 : vector<1x128xf32> to vector<8x128xf32>
    %900 = arith.addf %897, %899 : vector<8x128xf32>
    %c0_298 = arith.constant 0 : index
    %c0_299 = arith.constant 0 : index
    %c0_300 = arith.constant 0 : index
    %901 = vector.load %arg28[%c0_298, %c0_299, %c0_300] : memref<1x8x128xf32, #tpu.memory_space<vmem>>, vector<1x8x128xf32>
    %902 = vector.shape_cast %901 : vector<1x8x128xf32> to vector<8x128xf32>
    %903 = vector.shape_cast %900 : vector<8x128xf32> to vector<1x8x128xf32>
    tpu.vector_store %arg28[%c0_298, %c0_299, %c0_300], %903 {strides = array<i32>} : memref<1x8x128xf32, #tpu.memory_space<vmem>>, vector<1x8x128xf32>,
    return
  }
  func.func @transform_0(%arg0: i32) -> (i32, i32, i32) {
    %c0_i32 = arith.constant 0 : i32
    %c0_i32_0 = arith.constant 0 : i32
    %c0_i32_1 = arith.constant 0 : i32
    return %arg0, %c0_i32, %c0_i32_0 : i32, i32, i32
  }
  func.func @transform_1(%arg0: i32) -> (i32, i32, i32) {
    %c0_i32 = arith.constant 0 : i32
    %c0_i32_0 = arith.constant 0 : i32
    %c0_i32_1 = arith.constant 0 : i32
    return %arg0, %c0_i32, %c0_i32_0 : i32, i32, i32
  }
  func.func @transform_2(%arg0: i32) -> (i32, i32, i32) {
    %c0_i32 = arith.constant 0 : i32
    %c0_i32_0 = arith.constant 0 : i32
    %c0_i32_1 = arith.constant 0 : i32
    %c0_i32_2 = arith.constant 0 : i32
    return %c0_i32, %c0_i32_0, %c0_i32_1 : i32, i32, i32
  }
  func.func @transform_3(%arg0: i32) -> (i32, i32, i32) {
    %c0_i32 = arith.constant 0 : i32
    %c0_i32_0 = arith.constant 0 : i32
    %c0_i32_1 = arith.constant 0 : i32
    %c0_i32_2 = arith.constant 0 : i32
    return %c0_i32, %c0_i32_0, %c0_i32_1 : i32, i32, i32
  }
  func.func @transform_4(%arg0: i32) -> (i32, i32, i32) {
    %c0_i32 = arith.constant 0 : i32
    %c0_i32_0 = arith.constant 0 : i32
    %c0_i32_1 = arith.constant 0 : i32
    return %arg0, %c0_i32, %c0_i32_0 : i32, i32, i32
  }
  func.func @transform_5(%arg0: i32) -> (i32, i32, i32) {
    %c0_i32 = arith.constant 0 : i32
    %c0_i32_0 = arith.constant 0 : i32
    %c0_i32_1 = arith.constant 0 : i32
    return %arg0, %c0_i32, %c0_i32_0 : i32, i32, i32
  }
  func.func @transform_6(%arg0: i32) -> (i32, i32, i32) {
    %c0_i32 = arith.constant 0 : i32
    %c0_i32_0 = arith.constant 0 : i32
    %c0_i32_1 = arith.constant 0 : i32
    return %arg0, %c0_i32, %c0_i32_0 : i32, i32, i32
  }
  func.func @transform_7(%arg0: i32) -> (i32, i32, i32) {
    %c0_i32 = arith.constant 0 : i32
    %c0_i32_0 = arith.constant 0 : i32
    %c0_i32_1 = arith.constant 0 : i32
    %c0_i32_2 = arith.constant 0 : i32
    return %c0_i32, %c0_i32_0, %c0_i32_1 : i32, i32, i32
  }
  func.func @transform_8(%arg0: i32) -> (i32, i32, i32) {
    %c0_i32 = arith.constant 0 : i32
    %c0_i32_0 = arith.constant 0 : i32
    %c0_i32_1 = arith.constant 0 : i32
    %c0_i32_2 = arith.constant 0 : i32
    return %c0_i32, %c0_i32_0, %c0_i32_1 : i32, i32, i32
  }
  func.func @transform_9(%arg0: i32) -> (i32, i32, i32) {
    %c0_i32 = arith.constant 0 : i32
    %c0_i32_0 = arith.constant 0 : i32
    %c0_i32_1 = arith.constant 0 : i32
    %c0_i32_2 = arith.constant 0 : i32
    return %c0_i32, %c0_i32_0, %c0_i32_1 : i32, i32, i32
  }
  func.func @transform_10(%arg0: i32) -> (i32, i32, i32) {
    %c0_i32 = arith.constant 0 : i32
    %c0_i32_0 = arith.constant 0 : i32
    %c0_i32_1 = arith.constant 0 : i32
    %c0_i32_2 = arith.constant 0 : i32
    return %c0_i32, %c0_i32_0, %c0_i32_1 : i32, i32, i32
  }
  func.func @transform_11(%arg0: i32) -> (i32, i32, i32) {
    %c0_i32 = arith.constant 0 : i32
    %c0_i32_0 = arith.constant 0 : i32
    %c0_i32_1 = arith.constant 0 : i32
    %c0_i32_2 = arith.constant 0 : i32
    return %c0_i32, %c0_i32_0, %c0_i32_1 : i32, i32, i32
  }
  func.func @transform_12(%arg0: i32) -> (i32, i32, i32) {
    %c0_i32 = arith.constant 0 : i32
    %c0_i32_0 = arith.constant 0 : i32
    %c0_i32_1 = arith.constant 0 : i32
    %c0_i32_2 = arith.constant 0 : i32
    return %c0_i32, %c0_i32_0, %c0_i32_1 : i32, i32, i32
  }
  func.func @transform_13(%arg0: i32) -> (i32, i32, i32) {
    %c0_i32 = arith.constant 0 : i32
    %c0_i32_0 = arith.constant 0 : i32
    %c0_i32_1 = arith.constant 0 : i32
    %c0_i32_2 = arith.constant 0 : i32
    return %c0_i32, %c0_i32_0, %c0_i32_1 : i32, i32, i32
  }
  func.func @transform_14(%arg0: i32) -> (i32, i32, i32) {
    %c0_i32 = arith.constant 0 : i32
    %c0_i32_0 = arith.constant 0 : i32
    %c0_i32_1 = arith.constant 0 : i32
    %c0_i32_2 = arith.constant 0 : i32
    return %c0_i32, %c0_i32_0, %c0_i32_1 : i32, i32, i32
  }
  func.func @transform_15(%arg0: i32) -> (i32, i32, i32) {
    %c0_i32 = arith.constant 0 : i32
    %c0_i32_0 = arith.constant 0 : i32
    %c0_i32_1 = arith.constant 0 : i32
    %c0_i32_2 = arith.constant 0 : i32
    return %c0_i32, %c0_i32_0, %c0_i32_1 : i32, i32, i32
  }
  func.func @transform_16(%arg0: i32) -> (i32, i32, i32) {
    %c0_i32 = arith.constant 0 : i32
    %c0_i32_0 = arith.constant 0 : i32
    %c0_i32_1 = arith.constant 0 : i32
    %c0_i32_2 = arith.constant 0 : i32
    return %c0_i32, %c0_i32_0, %c0_i32_1 : i32, i32, i32
  }
  func.func @transform_17(%arg0: i32) -> (i32, i32, i32) {
    %c0_i32 = arith.constant 0 : i32
    %c0_i32_0 = arith.constant 0 : i32
    %c0_i32_1 = arith.constant 0 : i32
    %c0_i32_2 = arith.constant 0 : i32
    return %c0_i32, %c0_i32_0, %c0_i32_1 : i32, i32, i32
  }
  func.func @transform_18(%arg0: i32) -> (i32, i32, i32) {
    %c0_i32 = arith.constant 0 : i32
    %c0_i32_0 = arith.constant 0 : i32
    %c0_i32_1 = arith.constant 0 : i32
    %c0_i32_2 = arith.constant 0 : i32
    return %c0_i32, %c0_i32_0, %c0_i32_1 : i32, i32, i32
  }
  func.func @transform_19(%arg0: i32) -> (i32, i32, i32) {
    %c0_i32 = arith.constant 0 : i32
    %c0_i32_0 = arith.constant 0 : i32
    %c0_i32_1 = arith.constant 0 : i32
    %c0_i32_2 = arith.constant 0 : i32
    return %c0_i32, %c0_i32_0, %c0_i32_1 : i32, i32, i32
  }
  func.func @transform_20(%arg0: i32) -> (i32, i32, i32) {
    %c0_i32 = arith.constant 0 : i32
    %c0_i32_0 = arith.constant 0 : i32
    %c0_i32_1 = arith.constant 0 : i32
    %c0_i32_2 = arith.constant 0 : i32
    return %c0_i32, %c0_i32_0, %c0_i32_1 : i32, i32, i32
  }
  func.func @transform_21(%arg0: i32) -> (i32, i32, i32) {
    %c0_i32 = arith.constant 0 : i32
    %c0_i32_0 = arith.constant 0 : i32
    %c0_i32_1 = arith.constant 0 : i32
    %c0_i32_2 = arith.constant 0 : i32
    return %c0_i32, %c0_i32_0, %c0_i32_1 : i32, i32, i32
  }
  func.func @transform_22(%arg0: i32) -> (i32, i32, i32) {
    %c0_i32 = arith.constant 0 : i32
    %c0_i32_0 = arith.constant 0 : i32
    %c0_i32_1 = arith.constant 0 : i32
    %c0_i32_2 = arith.constant 0 : i32
    return %c0_i32, %c0_i32_0, %c0_i32_1 : i32, i32, i32
  }
  func.func @transform_23(%arg0: i32) -> (i32, i32, i32) {
    %c0_i32 = arith.constant 0 : i32
    %c0_i32_0 = arith.constant 0 : i32
    %c0_i32_1 = arith.constant 0 : i32
    %c0_i32_2 = arith.constant 0 : i32
    return %c0_i32, %c0_i32_0, %c0_i32_1 : i32, i32, i32
  }
  func.func @transform_24(%arg0: i32) -> (i32, i32, i32) {
    %c0_i32 = arith.constant 0 : i32
    %c0_i32_0 = arith.constant 0 : i32
    %c0_i32_1 = arith.constant 0 : i32
    %c0_i32_2 = arith.constant 0 : i32
    return %c0_i32, %c0_i32_0, %c0_i32_1 : i32, i32, i32
  }
  func.func @transform_25(%arg0: i32) -> (i32, i32) {
    %c0_i32 = arith.constant 0 : i32
    %c0_i32_0 = arith.constant 0 : i32
    %c0_i32_1 = arith.constant 0 : i32
    return %c0_i32, %c0_i32_0 : i32, i32
  }
  func.func @transform_26(%arg0: i32) -> (i32, i32) {
    %c0_i32 = arith.constant 0 : i32
    %c0_i32_0 = arith.constant 0 : i32
    %c0_i32_1 = arith.constant 0 : i32
    return %c0_i32, %c0_i32_0 : i32, i32
  }
  func.func @transform_27(%arg0: i32) -> (i32, i32, i32) {
    %c0_i32 = arith.constant 0 : i32
    %c0_i32_0 = arith.constant 0 : i32
    %c0_i32_1 = arith.constant 0 : i32
    return %arg0, %c0_i32, %c0_i32_0 : i32, i32, i32
  }
}

</mosaic_0001>

<llo_original>
// kernel: transformer_forward.1
$region0: #{transformer_forward.1}
  #allocation0 [shape = 'u32[]', space=smem, size = 0x4, offset = 0x4, fixed_abs, tag = 'smem constant byte address 0x4 - core index']
  #allocation1 [shape = 'u32[144,128]{1,0:T(1,128)}', space=vmem, size = 0x12000, scoped, tag = 'internal scratch']
  %s0 = inlined_call_operand.vmem [shape: f32[2,8,32], index: 0, kind: input, shape index: {}]
  %s1 = inlined_call_operand.vmem [shape: f32[2,8,32], index: 1, kind: input, shape index: {}]
  %s2 = inlined_call_operand.vmem [shape: f32[1,8,32], index: 2, kind: input, shape index: {}, may-alias: {2,3}]
  %s3 = inlined_call_operand.vmem [shape: f32[1,8,32], index: 3, kind: input, shape index: {}, may-alias: {2,3}]
  %s4 = inlined_call_operand.vmem [shape: f32[2,8,8], index: 4, kind: input, shape index: {}]
  %s5 = inlined_call_operand.vmem [shape: f32[2,8,8], index: 5, kind: input, shape index: {}]
  %s6 = inlined_call_operand.vmem [shape: f32[2,8,8], index: 6, kind: input, shape index: {}]
  %s7 = inlined_call_operand.vmem [shape: f32[2,32,96], index: 7, kind: input, shape index: {}]
  %s8 = inlined_call_operand.vmem [shape: f32[2,1,96], index: 8, kind: input, shape index: {}]
  %s9 = inlined_call_operand.vmem [shape: f32[2,32,32], index: 9, kind: input, shape index: {}]
  %s10 = inlined_call_operand.vmem [shape: f32[2,6,32], index: 10, kind: input, shape index: {}]
  %s11 = inlined_call_operand.vmem [shape: f32[2,32,64], index: 11, kind: input, shape index: {}]
  %s12 = inlined_call_operand.vmem [shape: f32[2,1,64], index: 12, kind: input, shape index: {}]
  %s13 = inlined_call_operand.vmem [shape: f32[2,64,32], index: 13, kind: input, shape index: {}]
  %s14 = inlined_call_operand.vmem [shape: f32[2,32,96], index: 14, kind: input, shape index: {}]
  %s15 = inlined_call_operand.vmem [shape: f32[2,1,96], index: 15, kind: input, shape index: {}]
  %s16 = inlined_call_operand.vmem [shape: f32[2,32,32], index: 16, kind: input, shape index: {}]
  %s17 = inlined_call_operand.vmem [shape: f32[2,32,32], index: 17, kind: input, shape index: {}]
  %s18 = inlined_call_operand.vmem [shape: f32[2,32,64], index: 18, kind: input, shape index: {}]
  %s19 = inlined_call_operand.vmem [shape: f32[2,1,64], index: 19, kind: input, shape index: {}]
  %s20 = inlined_call_operand.vmem [shape: f32[2,32,32], index: 20, kind: input, shape index: {}]
  %s21 = inlined_call_operand.vmem [shape: f32[2,32,64], index: 21, kind: input, shape index: {}]
  %s22 = inlined_call_operand.vmem [shape: f32[2,1,64], index: 22, kind: input, shape index: {}]
  %s23 = inlined_call_operand.vmem [shape: f32[2,64,32], index: 23, kind: input, shape index: {}]
  %s24 = inlined_call_operand.vmem [shape: f32[2,10,32], index: 24, kind: input, shape index: {}]
  %s25 = inlined_call_operand.vmem [shape: f32[32,128], index: 25, kind: input, shape index: {}]
  %s26 = inlined_call_operand.vmem [shape: f32[1,128], index: 26, kind: input, shape index: {}]
  %s27 = inlined_call_operand.hbm [shape: f32[2,8,128], index: 27, kind: output, shape index: {}]
  %s28 = sld [smem:[#allocation0]]
  $region141: #{transformer_forward.1} parent=0
    _
  %s30 = ssub.s32 1, %s28
  %s31 = scalar_select 0, %s30, %s28
  $region1: #{transformer_forward.1} parent=0
    #allocation2 [shape = 'u8[8192]{0}', space=vmem, size = 0x2000, scoped, tag = 'output window, operand 0']
    #allocation3 [shape = 's32[2]{0}', space=sflag, size = 0x8, scoped, tag = 'scoped memory for transformer_forward.1']
    %32 = vsyncpa [#allocation3], 0
    %s33 = scalar_lea.sflag [#allocation3], 1
    %34 = vsyncpa %s33, 0
    loop: start=0, step=1, limit=4
    $region2: #{transformer_forward.1} parent=1 // loop_pre_header
      _
    $region3: #{transformer_forward.1} parent=1 // loop_header
      %s36 = sphi 0, %s40
      %p37 = scmp.ge.s32.totalorder %s36, 4
      %s46 = sphi 0, %s48
      %s49 = sphi 0, %s46
      %s50 = sphi 0, %s49
      %s66 = sphi 0, %s50
      %s72 = sphi 0, %s74
      %s75 = sphi 0, %s72
      %s76 = sphi 0, %s75
      %s92 = sphi 0, %s76
      %s96 = sphi 0, %s96
      %s98 = sphi 0, %s96
      %s99 = sphi 0, %s98
      %s113 = sphi 0, %s99
      %s117 = sphi 0, %s117
      %s119 = sphi 0, %s117
      %s120 = sphi 0, %s119
      %s134 = sphi 0, %s120
      %s140 = sphi 0, %s142
      %s143 = sphi 0, %s140
      %s144 = sphi 0, %s143
      %s160 = sphi 0, %s144
      %s166 = sphi 0, %s168
      %s169 = sphi 0, %s166
      %s170 = sphi 0, %s169
      %s186 = sphi 0, %s170
      %s192 = sphi 0, %s194
      %s195 = sphi 0, %s192
      %s196 = sphi 0, %s195
      %s212 = sphi 0, %s196
      %s216 = sphi 0, %s216
      %s218 = sphi 0, %s216
      %s219 = sphi 0, %s218
      %s233 = sphi 0, %s219
      %s237 = sphi 0, %s237
      %s239 = sphi 0, %s237
      %s240 = sphi 0, %s239
      %s254 = sphi 0, %s240
      %s258 = sphi 0, %s258
      %s260 = sphi 0, %s258
      %s261 = sphi 0, %s260
      %s275 = sphi 0, %s261
      %s279 = sphi 0, %s279
      %s281 = sphi 0, %s279
      %s282 = sphi 0, %s281
      %s296 = sphi 0, %s282
      %s300 = sphi 0, %s300
      %s302 = sphi 0, %s300
      %s303 = sphi 0, %s302
      %s317 = sphi 0, %s303
      %s321 = sphi 0, %s321
      %s323 = sphi 0, %s321
      %s324 = sphi 0, %s323
      %s338 = sphi 0, %s324
      %s342 = sphi 0, %s342
      %s344 = sphi 0, %s342
      %s345 = sphi 0, %s344
      %s359 = sphi 0, %s345
      %s363 = sphi 0, %s363
      %s365 = sphi 0, %s363
      %s366 = sphi 0, %s365
      %s380 = sphi 0, %s366
      %s384 = sphi 0, %s384
      %s386 = sphi 0, %s384
      %s387 = sphi 0, %s386
      %s401 = sphi 0, %s387
      %s405 = sphi 0, %s405
      %s407 = sphi 0, %s405
      %s408 = sphi 0, %s407
      %s422 = sphi 0, %s408
      %s426 = sphi 0, %s426
      %s428 = sphi 0, %s426
      %s429 = sphi 0, %s428
      %s443 = sphi 0, %s429
      %s447 = sphi 0, %s447
      %s449 = sphi 0, %s447
      %s450 = sphi 0, %s449
      %s464 = sphi 0, %s450
      %s468 = sphi 0, %s468
      %s470 = sphi 0, %s468
      %s471 = sphi 0, %s470
      %s485 = sphi 0, %s471
      %s489 = sphi 0, %s489
      %s491 = sphi 0, %s489
      %s492 = sphi 0, %s491
      %s506 = sphi 0, %s492
      %s510 = sphi 0, %s510
      %s512 = sphi 0, %s510
      %s513 = sphi 0, %s512
      %s527 = sphi 0, %s513
      %s531 = sphi 0, %s531
      %s533 = sphi 0, %s531
      %s534 = sphi 0, %s533
      %s548 = sphi 0, %s534
      %s552 = sphi 0, %s552
      %s554 = sphi 0, %s552
      %s555 = sphi 0, %s554
      %s569 = sphi 0, %s555
      %s573 = sphi 0, %s573
      %s575 = sphi 0, %s573
      %s576 = sphi 0, %s575
      %s590 = sphi 0, %s576
      %s594 = sphi 0, %s594
      %s596 = sphi 0, %s594
      %s597 = sphi 0, %s596
      %s611 = sphi 0, %s597
      %s615 = sphi 0, %s615
      %s617 = sphi 0, %s615
      %s618 = sphi 0, %s617
      %s632 = sphi 0, %s618
      %s638 = sphi 0, %s640
      %s641 = sphi 0, %s638
      %s642 = sphi 0, %s641
      %s658 = sphi 0, %s642
    $region4: #{transformer_forward.1} parent=1 // loop_header_branch
      %39 = sbr.rel (%p37) target = $region8
    $region5: #{transformer_forward.1} parent=1 // loop_body
      %s41 = ssub.s32 %s36, 1
      %s42 = ssub.s32 %s36, 2
      %s43 = sadd.s32 %s36, 1
      %s44 = ssub.s32 %s36, %s43
      %p45 = scmp.eq.s32.totalorder %s44, 0
      %s47 = sadd.s32 %s46, 1
      %s48 = scalar_select %p45, %s46, %s47
      %p51 = pneg %p45
      %p52 = scmp.eq.s32.totalorder %s36, 1
      %p53 = por %p51, %p52
      %p54 = scmp.ne.s32.totalorder %s46, %s49
      %p55 = scmp.eq.s32.totalorder %s36, 0
      %p56 = por %p54, %p55
      %p57 = scmp.ne.s32.totalorder %s46, %s49
      %p58 = scmp.eq.s32.totalorder %s41, 1
      %p59 = por %p57, %p58
      %p60 = scmp.ne.s32.totalorder %s49, %s50
      %p61 = scmp.eq.s32.totalorder %s41, 0
      %p62 = por %p60, %p61
      %p63 = scmp.ne.s32.totalorder %s49, %s50
      %p64 = scmp.eq.s32.totalorder %s42, 1
      %p65 = por %p63, %p64
      %p67 = scmp.ne.s32.totalorder %s50, %s66
      %p68 = scmp.eq.s32.totalorder %s42, 0
      %p69 = por %p67, %p68
      %s70 = ssub.s32 %s36, %s43
      %p71 = scmp.eq.s32.totalorder %s70, 0
      %s73 = sadd.s32 %s72, 1
      %s74 = scalar_select %p71, %s72, %s73
      %p77 = pneg %p71
      %p78 = scmp.eq.s32.totalorder %s36, 1
      %p79 = por %p77, %p78
      %p80 = scmp.ne.s32.totalorder %s72, %s75
      %p81 = scmp.eq.s32.totalorder %s36, 0
      %p82 = por %p80, %p81
      %p83 = scmp.ne.s32.totalorder %s72, %s75
      %p84 = scmp.eq.s32.totalorder %s41, 1
      %p85 = por %p83, %p84
      %p86 = scmp.ne.s32.totalorder %s75, %s76
      %p87 = scmp.eq.s32.totalorder %s41, 0
      %p88 = por %p86, %p87
      %p89 = scmp.ne.s32.totalorder %s75, %s76
      %p90 = scmp.eq.s32.totalorder %s42, 1
      %p91 = por %p89, %p90
      %p93 = scmp.ne.s32.totalorder %s76, %s92
      %p94 = scmp.eq.s32.totalorder %s42, 0
      %p95 = por %p93, %p94
      %s97 = sadd.s32 %s96, 1
      %p100 = scmp.eq.s32.totalorder %s36, 1
      %p101 = scmp.ne.s32.totalorder %s96, %s98
      %p102 = scmp.eq.s32.totalorder %s36, 0
      %p103 = por %p101, %p102
      %p104 = scmp.ne.s32.totalorder %s96, %s98
      %p105 = scmp.eq.s32.totalorder %s41, 1
      %p106 = por %p104, %p105
      %p107 = scmp.ne.s32.totalorder %s98, %s99
      %p108 = scmp.eq.s32.totalorder %s41, 0
      %p109 = por %p107, %p108
      %p110 = scmp.ne.s32.totalorder %s98, %s99
      %p111 = scmp.eq.s32.totalorder %s42, 1
      %p112 = por %p110, %p111
      %p114 = scmp.ne.s32.totalorder %s99, %s113
      %p115 = scmp.eq.s32.totalorder %s42, 0
      %p116 = por %p114, %p115
      %s118 = sadd.s32 %s117, 1
      %p121 = scmp.eq.s32.totalorder %s36, 1
      %p122 = scmp.ne.s32.totalorder %s117, %s119
      %p123 = scmp.eq.s32.totalorder %s36, 0
      %p124 = por %p122, %p123
      %p125 = scmp.ne.s32.totalorder %s117, %s119
      %p126 = scmp.eq.s32.totalorder %s41, 1
      %p127 = por %p125, %p126
      %p128 = scmp.ne.s32.totalorder %s119, %s120
      %p129 = scmp.eq.s32.totalorder %s41, 0
      %p130 = por %p128, %p129
      %p131 = scmp.ne.s32.totalorder %s119, %s120
      %p132 = scmp.eq.s32.totalorder %s42, 1
      %p133 = por %p131, %p132
      %p135 = scmp.ne.s32.totalorder %s120, %s134
      %p136 = scmp.eq.s32.totalorder %s42, 0
      %p137 = por %p135, %p136
      %s138 = ssub.s32 %s36, %s43
      %p139 = scmp.eq.s32.totalorder %s138, 0
      %s141 = sadd.s32 %s140, 1
      %s142 = scalar_select %p139, %s140, %s141
      %p145 = pneg %p139
      %p146 = scmp.eq.s32.totalorder %s36, 1
      %p147 = por %p145, %p146
      %p148 = scmp.ne.s32.totalorder %s140, %s143
      %p149 = scmp.eq.s32.totalorder %s36, 0
      %p150 = por %p148, %p149
      %p151 = scmp.ne.s32.totalorder %s140, %s143
      %p152 = scmp.eq.s32.totalorder %s41, 1
      %p153 = por %p151, %p152
      %p154 = scmp.ne.s32.totalorder %s143, %s144
      %p155 = scmp.eq.s32.totalorder %s41, 0
      %p156 = por %p154, %p155
      %p157 = scmp.ne.s32.totalorder %s143, %s144
      %p158 = scmp.eq.s32.totalorder %s42, 1
      %p159 = por %p157, %p158
      %p161 = scmp.ne.s32.totalorder %s144, %s160
      %p162 = scmp.eq.s32.totalorder %s42, 0
      %p163 = por %p161, %p162
      %s164 = ssub.s32 %s36, %s43
      %p165 = scmp.eq.s32.totalorder %s164, 0
      %s167 = sadd.s32 %s166, 1
      %s168 = scalar_select %p165, %s166, %s167
      %p171 = pneg %p165
      %p172 = scmp.eq.s32.totalorder %s36, 1
      %p173 = por %p171, %p172
      %p174 = scmp.ne.s32.totalorder %s166, %s169
      %p175 = scmp.eq.s32.totalorder %s36, 0
      %p176 = por %p174, %p175
      %p177 = scmp.ne.s32.totalorder %s166, %s169
      %p178 = scmp.eq.s32.totalorder %s41, 1
      %p179 = por %p177, %p178
      %p180 = scmp.ne.s32.totalorder %s169, %s170
      %p181 = scmp.eq.s32.totalorder %s41, 0
      %p182 = por %p180, %p181
      %p183 = scmp.ne.s32.totalorder %s169, %s170
      %p184 = scmp.eq.s32.totalorder %s42, 1
      %p185 = por %p183, %p184
      %p187 = scmp.ne.s32.totalorder %s170, %s186
      %p188 = scmp.eq.s32.totalorder %s42, 0
      %p189 = por %p187, %p188
      %s190 = ssub.s32 %s36, %s43
      %p191 = scmp.eq.s32.totalorder %s190, 0
      %s193 = sadd.s32 %s192, 1
      %s194 = scalar_select %p191, %s192, %s193
      %p197 = pneg %p191
      %p198 = scmp.eq.s32.totalorder %s36, 1
      %p199 = por %p197, %p198
      %p200 = scmp.ne.s32.totalorder %s192, %s195
      %p201 = scmp.eq.s32.totalorder %s36, 0
      %p202 = por %p200, %p201
      %p203 = scmp.ne.s32.totalorder %s192, %s195
      %p204 = scmp.eq.s32.totalorder %s41, 1
      %p205 = por %p203, %p204
      %p206 = scmp.ne.s32.totalorder %s195, %s196
      %p207 = scmp.eq.s32.totalorder %s41, 0
      %p208 = por %p206, %p207
      %p209 = scmp.ne.s32.totalorder %s195, %s196
      %p210 = scmp.eq.s32.totalorder %s42, 1
      %p211 = por %p209, %p210
      %p213 = scmp.ne.s32.totalorder %s196, %s212
      %p214 = scmp.eq.s32.totalorder %s42, 0
      %p215 = por %p213, %p214
      %s217 = sadd.s32 %s216, 1
      %p220 = scmp.eq.s32.totalorder %s36, 1
      %p221 = scmp.ne.s32.totalorder %s216, %s218
      %p222 = scmp.eq.s32.totalorder %s36, 0
      %p223 = por %p221, %p222
      %p224 = scmp.ne.s32.totalorder %s216, %s218
      %p225 = scmp.eq.s32.totalorder %s41, 1
      %p226 = por %p224, %p225
      %p227 = scmp.ne.s32.totalorder %s218, %s219
      %p228 = scmp.eq.s32.totalorder %s41, 0
      %p229 = por %p227, %p228
      %p230 = scmp.ne.s32.totalorder %s218, %s219
      %p231 = scmp.eq.s32.totalorder %s42, 1
      %p232 = por %p230, %p231
      %p234 = scmp.ne.s32.totalorder %s219, %s233
      %p235 = scmp.eq.s32.totalorder %s42, 0
      %p236 = por %p234, %p235
      %s238 = sadd.s32 %s237, 1
      %p241 = scmp.eq.s32.totalorder %s36, 1
      %p242 = scmp.ne.s32.totalorder %s237, %s239
      %p243 = scmp.eq.s32.totalorder %s36, 0
      %p244 = por %p242, %p243
      %p245 = scmp.ne.s32.totalorder %s237, %s239
      %p246 = scmp.eq.s32.totalorder %s41, 1
      %p247 = por %p245, %p246
      %p248 = scmp.ne.s32.totalorder %s239, %s240
      %p249 = scmp.eq.s32.totalorder %s41, 0
      %p250 = por %p248, %p249
      %p251 = scmp.ne.s32.totalorder %s239, %s240
      %p252 = scmp.eq.s32.totalorder %s42, 1
      %p253 = por %p251, %p252
      %p255 = scmp.ne.s32.totalorder %s240, %s254
      %p256 = scmp.eq.s32.totalorder %s42, 0
      %p257 = por %p255, %p256
      %s259 = sadd.s32 %s258, 1
      %p262 = scmp.eq.s32.totalorder %s36, 1
      %p263 = scmp.ne.s32.totalorder %s258, %s260
      %p264 = scmp.eq.s32.totalorder %s36, 0
      %p265 = por %p263, %p264
      %p266 = scmp.ne.s32.totalorder %s258, %s260
      %p267 = scmp.eq.s32.totalorder %s41, 1
      %p268 = por %p266, %p267
      %p269 = scmp.ne.s32.totalorder %s260, %s261
      %p270 = scmp.eq.s32.totalorder %s41, 0
      %p271 = por %p269, %p270
      %p272 = scmp.ne.s32.totalorder %s260, %s261
      %p273 = scmp.eq.s32.totalorder %s42, 1
      %p274 = por %p272, %p273
      %p276 = scmp.ne.s32.totalorder %s261, %s275
      %p277 = scmp.eq.s32.totalorder %s42, 0
      %p278 = por %p276, %p277
      %s280 = sadd.s32 %s279, 1
      %p283 = scmp.eq.s32.totalorder %s36, 1
      %p284 = scmp.ne.s32.totalorder %s279, %s281
      %p285 = scmp.eq.s32.totalorder %s36, 0
      %p286 = por %p284, %p285
      %p287 = scmp.ne.s32.totalorder %s279, %s281
      %p288 = scmp.eq.s32.totalorder %s41, 1
      %p289 = por %p287, %p288
      %p290 = scmp.ne.s32.totalorder %s281, %s282
      %p291 = scmp.eq.s32.totalorder %s41, 0
      %p292 = por %p290, %p291
      %p293 = scmp.ne.s32.totalorder %s281, %s282
      %p294 = scmp.eq.s32.totalorder %s42, 1
      %p295 = por %p293, %p294
      %p297 = scmp.ne.s32.totalorder %s282, %s296
      %p298 = scmp.eq.s32.totalorder %s42, 0
      %p299 = por %p297, %p298
      %s301 = sadd.s32 %s300, 1
      %p304 = scmp.eq.s32.totalorder %s36, 1
      %p305 = scmp.ne.s32.totalorder %s300, %s302
      %p306 = scmp.eq.s32.totalorder %s36, 0
      %p307 = por %p305, %p306
      %p308 = scmp.ne.s32.totalorder %s300, %s302
      %p309 = scmp.eq.s32.totalorder %s41, 1
      %p310 = por %p308, %p309
      %p311 = scmp.ne.s32.totalorder %s302, %s303
      %p312 = scmp.eq.s32.totalorder %s41, 0
      %p313 = por %p311, %p312
      %p314 = scmp.ne.s32.totalorder %s302, %s303
      %p315 = scmp.eq.s32.totalorder %s42, 1
      %p316 = por %p314, %p315
      %p318 = scmp.ne.s32.totalorder %s303, %s317
      %p319 = scmp.eq.s32.totalorder %s42, 0
      %p320 = por %p318, %p319
      %s322 = sadd.s32 %s321, 1
      %p325 = scmp.eq.s32.totalorder %s36, 1
      %p326 = scmp.ne.s32.totalorder %s321, %s323
      %p327 = scmp.eq.s32.totalorder %s36, 0
      %p328 = por %p326, %p327
      %p329 = scmp.ne.s32.totalorder %s321, %s323
      %p330 = scmp.eq.s32.totalorder %s41, 1
      %p331 = por %p329, %p330
      %p332 = scmp.ne.s32.totalorder %s323, %s324
      %p333 = scmp.eq.s32.totalorder %s41, 0
      %p334 = por %p332, %p333
      %p335 = scmp.ne.s32.totalorder %s323, %s324
      %p336 = scmp.eq.s32.totalorder %s42, 1
      %p337 = por %p335, %p336
      %p339 = scmp.ne.s32.totalorder %s324, %s338
      %p340 = scmp.eq.s32.totalorder %s42, 0
      %p341 = por %p339, %p340
      %s343 = sadd.s32 %s342, 1
      %p346 = scmp.eq.s32.totalorder %s36, 1
      %p347 = scmp.ne.s32.totalorder %s342, %s344
      %p348 = scmp.eq.s32.totalorder %s36, 0
      %p349 = por %p347, %p348
      %p350 = scmp.ne.s32.totalorder %s342, %s344
      %p351 = scmp.eq.s32.totalorder %s41, 1
      %p352 = por %p350, %p351
      %p353 = scmp.ne.s32.totalorder %s344, %s345
      %p354 = scmp.eq.s32.totalorder %s41, 0
      %p355 = por %p353, %p354
      %p356 = scmp.ne.s32.totalorder %s344, %s345
      %p357 = scmp.eq.s32.totalorder %s42, 1
      %p358 = por %p356, %p357
      %p360 = scmp.ne.s32.totalorder %s345, %s359
      %p361 = scmp.eq.s32.totalorder %s42, 0
      %p362 = por %p360, %p361
      %s364 = sadd.s32 %s363, 1
      %p367 = scmp.eq.s32.totalorder %s36, 1
      %p368 = scmp.ne.s32.totalorder %s363, %s365
      %p369 = scmp.eq.s32.totalorder %s36, 0
      %p370 = por %p368, %p369
      %p371 = scmp.ne.s32.totalorder %s363, %s365
      %p372 = scmp.eq.s32.totalorder %s41, 1
      %p373 = por %p371, %p372
      %p374 = scmp.ne.s32.totalorder %s365, %s366
      %p375 = scmp.eq.s32.totalorder %s41, 0
      %p376 = por %p374, %p375
      %p377 = scmp.ne.s32.totalorder %s365, %s366
      %p378 = scmp.eq.s32.totalorder %s42, 1
      %p379 = por %p377, %p378
      %p381 = scmp.ne.s32.totalorder %s366, %s380
      %p382 = scmp.eq.s32.totalorder %s42, 0
      %p383 = por %p381, %p382
      %s385 = sadd.s32 %s384, 1
      %p388 = scmp.eq.s32.totalorder %s36, 1
      %p389 = scmp.ne.s32.totalorder %s384, %s386
      %p390 = scmp.eq.s32.totalorder %s36, 0
      %p391 = por %p389, %p390
      %p392 = scmp.ne.s32.totalorder %s384, %s386
      %p393 = scmp.eq.s32.totalorder %s41, 1
      %p394 = por %p392, %p393
      %p395 = scmp.ne.s32.totalorder %s386, %s387
      %p396 = scmp.eq.s32.totalorder %s41, 0
      %p397 = por %p395, %p396
      %p398 = scmp.ne.s32.totalorder %s386, %s387
      %p399 = scmp.eq.s32.totalorder %s42, 1
      %p400 = por %p398, %p399
      %p402 = scmp.ne.s32.totalorder %s387, %s401
      %p403 = scmp.eq.s32.totalorder %s42, 0
      %p404 = por %p402, %p403
      %s406 = sadd.s32 %s405, 1
      %p409 = scmp.eq.s32.totalorder %s36, 1
      %p410 = scmp.ne.s32.totalorder %s405, %s407
      %p411 = scmp.eq.s32.totalorder %s36, 0
      %p412 = por %p410, %p411
      %p413 = scmp.ne.s32.totalorder %s405, %s407
      %p414 = scmp.eq.s32.totalorder %s41, 1
      %p415 = por %p413, %p414
      %p416 = scmp.ne.s32.totalorder %s407, %s408
      %p417 = scmp.eq.s32.totalorder %s41, 0
      %p418 = por %p416, %p417
      %p419 = scmp.ne.s32.totalorder %s407, %s408
      %p420 = scmp.eq.s32.totalorder %s42, 1
      %p421 = por %p419, %p420
      %p423 = scmp.ne.s32.totalorder %s408, %s422
      %p424 = scmp.eq.s32.totalorder %s42, 0
      %p425 = por %p423, %p424
      %s427 = sadd.s32 %s426, 1
      %p430 = scmp.eq.s32.totalorder %s36, 1
      %p431 = scmp.ne.s32.totalorder %s426, %s428
      %p432 = scmp.eq.s32.totalorder %s36, 0
      %p433 = por %p431, %p432
      %p434 = scmp.ne.s32.totalorder %s426, %s428
      %p435 = scmp.eq.s32.totalorder %s41, 1
      %p436 = por %p434, %p435
      %p437 = scmp.ne.s32.totalorder %s428, %s429
      %p438 = scmp.eq.s32.totalorder %s41, 0
      %p439 = por %p437, %p438
      %p440 = scmp.ne.s32.totalorder %s428, %s429
      %p441 = scmp.eq.s32.totalorder %s42, 1
      %p442 = por %p440, %p441
      %p444 = scmp.ne.s32.totalorder %s429, %s443
      %p445 = scmp.eq.s32.totalorder %s42, 0
      %p446 = por %p444, %p445
      %s448 = sadd.s32 %s447, 1
      %p451 = scmp.eq.s32.totalorder %s36, 1
      %p452 = scmp.ne.s32.totalorder %s447, %s449
      %p453 = scmp.eq.s32.totalorder %s36, 0
      %p454 = por %p452, %p453
      %p455 = scmp.ne.s32.totalorder %s447, %s449
      %p456 = scmp.eq.s32.totalorder %s41, 1
      %p457 = por %p455, %p456
      %p458 = scmp.ne.s32.totalorder %s449, %s450
      %p459 = scmp.eq.s32.totalorder %s41, 0
      %p460 = por %p458, %p459
      %p461 = scmp.ne.s32.totalorder %s449, %s450
      %p462 = scmp.eq.s32.totalorder %s42, 1
      %p463 = por %p461, %p462
      %p465 = scmp.ne.s32.totalorder %s450, %s464
      %p466 = scmp.eq.s32.totalorder %s42, 0
      %p467 = por %p465, %p466
      %s469 = sadd.s32 %s468, 1
      %p472 = scmp.eq.s32.totalorder %s36, 1
      %p473 = scmp.ne.s32.totalorder %s468, %s470
      %p474 = scmp.eq.s32.totalorder %s36, 0
      %p475 = por %p473, %p474
      %p476 = scmp.ne.s32.totalorder %s468, %s470
      %p477 = scmp.eq.s32.totalorder %s41, 1
      %p478 = por %p476, %p477
      %p479 = scmp.ne.s32.totalorder %s470, %s471
      %p480 = scmp.eq.s32.totalorder %s41, 0
      %p481 = por %p479, %p480
      %p482 = scmp.ne.s32.totalorder %s470, %s471
      %p483 = scmp.eq.s32.totalorder %s42, 1
      %p484 = por %p482, %p483
      %p486 = scmp.ne.s32.totalorder %s471, %s485
      %p487 = scmp.eq.s32.totalorder %s42, 0
      %p488 = por %p486, %p487
      %s490 = sadd.s32 %s489, 1
      %p493 = scmp.eq.s32.totalorder %s36, 1
      %p494 = scmp.ne.s32.totalorder %s489, %s491
      %p495 = scmp.eq.s32.totalorder %s36, 0
      %p496 = por %p494, %p495
      %p497 = scmp.ne.s32.totalorder %s489, %s491
      %p498 = scmp.eq.s32.totalorder %s41, 1
      %p499 = por %p497, %p498
      %p500 = scmp.ne.s32.totalorder %s491, %s492
      %p501 = scmp.eq.s32.totalorder %s41, 0
      %p502 = por %p500, %p501
      %p503 = scmp.ne.s32.totalorder %s491, %s492
      %p504 = scmp.eq.s32.totalorder %s42, 1
      %p505 = por %p503, %p504
      %p507 = scmp.ne.s32.totalorder %s492, %s506
      %p508 = scmp.eq.s32.totalorder %s42, 0
      %p509 = por %p507, %p508
      %s511 = sadd.s32 %s510, 1
      %p514 = scmp.eq.s32.totalorder %s36, 1
      %p515 = scmp.ne.s32.totalorder %s510, %s512
      %p516 = scmp.eq.s32.totalorder %s36, 0
      %p517 = por %p515, %p516
      %p518 = scmp.ne.s32.totalorder %s510, %s512
      %p519 = scmp.eq.s32.totalorder %s41, 1
      %p520 = por %p518, %p519
      %p521 = scmp.ne.s32.totalorder %s512, %s513
      %p522 = scmp.eq.s32.totalorder %s41, 0
      %p523 = por %p521, %p522
      %p524 = scmp.ne.s32.totalorder %s512, %s513
      %p525 = scmp.eq.s32.totalorder %s42, 1
      %p526 = por %p524, %p525
      %p528 = scmp.ne.s32.totalorder %s513, %s527
      %p529 = scmp.eq.s32.totalorder %s42, 0
      %p530 = por %p528, %p529
      %s532 = sadd.s32 %s531, 1
      %p535 = scmp.eq.s32.totalorder %s36, 1
      %p536 = scmp.ne.s32.totalorder %s531, %s533
      %p537 = scmp.eq.s32.totalorder %s36, 0
      %p538 = por %p536, %p537
      %p539 = scmp.ne.s32.totalorder %s531, %s533
      %p540 = scmp.eq.s32.totalorder %s41, 1
      %p541 = por %p539, %p540
      %p542 = scmp.ne.s32.totalorder %s533, %s534
      %p543 = scmp.eq.s32.totalorder %s41, 0
      %p544 = por %p542, %p543
      %p545 = scmp.ne.s32.totalorder %s533, %s534
      %p546 = scmp.eq.s32.totalorder %s42, 1
      %p547 = por %p545, %p546
      %p549 = scmp.ne.s32.totalorder %s534, %s548
      %p550 = scmp.eq.s32.totalorder %s42, 0
      %p551 = por %p549, %p550
      %s553 = sadd.s32 %s552, 1
      %p556 = scmp.eq.s32.totalorder %s36, 1
      %p557 = scmp.ne.s32.totalorder %s552, %s554
      %p558 = scmp.eq.s32.totalorder %s36, 0
      %p559 = por %p557, %p558
      %p560 = scmp.ne.s32.totalorder %s552, %s554
      %p561 = scmp.eq.s32.totalorder %s41, 1
      %p562 = por %p560, %p561
      %p563 = scmp.ne.s32.totalorder %s554, %s555
      %p564 = scmp.eq.s32.totalorder %s41, 0
      %p565 = por %p563, %p564
      %p566 = scmp.ne.s32.totalorder %s554, %s555
      %p567 = scmp.eq.s32.totalorder %s42, 1
      %p568 = por %p566, %p567
      %p570 = scmp.ne.s32.totalorder %s555, %s569
      %p571 = scmp.eq.s32.totalorder %s42, 0
      %p572 = por %p570, %p571
      %s574 = sadd.s32 %s573, 1
      %p577 = scmp.eq.s32.totalorder %s36, 1
      %p578 = scmp.ne.s32.totalorder %s573, %s575
      %p579 = scmp.eq.s32.totalorder %s36, 0
      %p580 = por %p578, %p579
      %p581 = scmp.ne.s32.totalorder %s573, %s575
      %p582 = scmp.eq.s32.totalorder %s41, 1
      %p583 = por %p581, %p582
      %p584 = scmp.ne.s32.totalorder %s575, %s576
      %p585 = scmp.eq.s32.totalorder %s41, 0
      %p586 = por %p584, %p585
      %p587 = scmp.ne.s32.totalorder %s575, %s576
      %p588 = scmp.eq.s32.totalorder %s42, 1
      %p589 = por %p587, %p588
      %p591 = scmp.ne.s32.totalorder %s576, %s590
      %p592 = scmp.eq.s32.totalorder %s42, 0
      %p593 = por %p591, %p592
      %s595 = sadd.s32 %s594, 1
      %p598 = scmp.eq.s32.totalorder %s36, 1
      %p599 = scmp.ne.s32.totalorder %s594, %s596
      %p600 = scmp.eq.s32.totalorder %s36, 0
      %p601 = por %p599, %p600
      %p602 = scmp.ne.s32.totalorder %s594, %s596
      %p603 = scmp.eq.s32.totalorder %s41, 1
      %p604 = por %p602, %p603
      %p605 = scmp.ne.s32.totalorder %s596, %s597
      %p606 = scmp.eq.s32.totalorder %s41, 0
      %p607 = por %p605, %p606
      %p608 = scmp.ne.s32.totalorder %s596, %s597
      %p609 = scmp.eq.s32.totalorder %s42, 1
      %p610 = por %p608, %p609
      %p612 = scmp.ne.s32.totalorder %s597, %s611
      %p613 = scmp.eq.s32.totalorder %s42, 0
      %p614 = por %p612, %p613
      %s616 = sadd.s32 %s615, 1
      %p619 = scmp.eq.s32.totalorder %s36, 1
      %p620 = scmp.ne.s32.totalorder %s615, %s617
      %p621 = scmp.eq.s32.totalorder %s36, 0
      %p622 = por %p620, %p621
      %p623 = scmp.ne.s32.totalorder %s615, %s617
      %p624 = scmp.eq.s32.totalorder %s41, 1
      %p625 = por %p623, %p624
      %p626 = scmp.ne.s32.totalorder %s617, %s618
      %p627 = scmp.eq.s32.totalorder %s41, 0
      %p628 = por %p626, %p627
      %p629 = scmp.ne.s32.totalorder %s617, %s618
      %p630 = scmp.eq.s32.totalorder %s42, 1
      %p631 = por %p629, %p630
      %p633 = scmp.ne.s32.totalorder %s618, %s632
      %p634 = scmp.eq.s32.totalorder %s42, 0
      %p635 = por %p633, %p634
      %s636 = ssub.s32 %s36, %s43
      %p637 = scmp.eq.s32.totalorder %s636, 0
      %s639 = sadd.s32 %s638, 1
      %s640 = scalar_select %p637, %s638, %s639
      %p643 = pneg %p637
      %p644 = scmp.eq.s32.totalorder %s36, 1
      %p645 = por %p643, %p644
      %p646 = scmp.ne.s32.totalorder %s638, %s641
      %p647 = scmp.eq.s32.totalorder %s36, 0
      %p648 = por %p646, %p647
      %p649 = scmp.ne.s32.totalorder %s638, %s641
      %p650 = scmp.eq.s32.totalorder %s41, 1
      %p651 = por %p649, %p650
      %p652 = scmp.ne.s32.totalorder %s641, %s642
      %p653 = scmp.eq.s32.totalorder %s41, 0
      %p654 = por %p652, %p653
      %p655 = scmp.ne.s32.totalorder %s641, %s642
      %p656 = scmp.eq.s32.totalorder %s42, 1
      %p657 = por %p655, %p656
      %p659 = scmp.ne.s32.totalorder %s642, %s658
      %p660 = scmp.eq.s32.totalorder %s42, 0
      %p661 = por %p659, %p660
      %p662 = scmp.le.s32.totalorder 1, %s36
      %p663 = scmp.lt.s32.totalorder %s36, 3
      %p664 = pnand %p662, %p663
      %p665 = pneg %p664
      // Predicated region
      $region9: #{transformer_forward.1} parent=5 // pred_check
        _
      $region10: #{transformer_forward.1} parent=5 // pred_check_branch
        %667 = sbr.rel (%p664) target = $region12
      $region11: #{transformer_forward.1} parent=5 // pred_region
        %s668 = ssub.s32 %s36, 1
        // Predicated region
        $region13: #{transformer_forward.1} parent=11 // pred_check
          %p669 = pneg %p109
        $region14: #{transformer_forward.1} parent=11 // pred_check_branch
          %671 = sbr.rel (%p669) target = $region16
        $region15: #{transformer_forward.1} parent=11 // pred_region
          _
        $region16: #{transformer_forward.1} parent=11 // pred_fallthru
          _
        // Predicated region
        $region17: #{transformer_forward.1} parent=11 // pred_check
          %p672 = pneg %p130
        $region18: #{transformer_forward.1} parent=11 // pred_check_branch
          %674 = sbr.rel (%p672) target = $region20
        $region19: #{transformer_forward.1} parent=11 // pred_region
          _
        $region20: #{transformer_forward.1} parent=11 // pred_fallthru
          _
        // Predicated region
        $region21: #{transformer_forward.1} parent=11 // pred_check
          %p675 = pneg %p229
        $region22: #{transformer_forward.1} parent=11 // pred_check_branch
          %677 = sbr.rel (%p675) target = $region24
        $region23: #{transformer_forward.1} parent=11 // pred_region
          _
        $region24: #{transformer_forward.1} parent=11 // pred_fallthru
          _
        // Predicated region
        $region25: #{transformer_forward.1} parent=11 // pred_check
          %p678 = pneg %p250
        $region26: #{transformer_forward.1} parent=11 // pred_check_branch
          %680 = sbr.rel (%p678) target = $region28
        $region27: #{transformer_forward.1} parent=11 // pred_region
          _
        $region28: #{transformer_forward.1} parent=11 // pred_fallthru
          _
        // Predicated region
        $region29: #{transformer_forward.1} parent=11 // pred_check
          %p681 = pneg %p271
        $region30: #{transformer_forward.1} parent=11 // pred_check_branch
          %683 = sbr.rel (%p681) target = $region32
        $region31: #{transformer_forward.1} parent=11 // pred_region
          _
        $region32: #{transformer_forward.1} parent=11 // pred_fallthru
          _
        // Predicated region
        $region33: #{transformer_forward.1} parent=11 // pred_check
          %p684 = pneg %p292
        $region34: #{transformer_forward.1} parent=11 // pred_check_branch
          %686 = sbr.rel (%p684) target = $region36
        $region35: #{transformer_forward.1} parent=11 // pred_region
          _
        $region36: #{transformer_forward.1} parent=11 // pred_fallthru
          _
        // Predicated region
        $region37: #{transformer_forward.1} parent=11 // pred_check
          %p687 = pneg %p313
        $region38: #{transformer_forward.1} parent=11 // pred_check_branch
          %689 = sbr.rel (%p687) target = $region40
        $region39: #{transformer_forward.1} parent=11 // pred_region
          _
        $region40: #{transformer_forward.1} parent=11 // pred_fallthru
          _
        // Predicated region
        $region41: #{transformer_forward.1} parent=11 // pred_check
          %p690 = pneg %p334
        $region42: #{transformer_forward.1} parent=11 // pred_check_branch
          %692 = sbr.rel (%p690) target = $region44
        $region43: #{transformer_forward.1} parent=11 // pred_region
          _
        $region44: #{transformer_forward.1} parent=11 // pred_fallthru
          _
        // Predicated region
        $region45: #{transformer_forward.1} parent=11 // pred_check
          %p693 = pneg %p355
        $region46: #{transformer_forward.1} parent=11 // pred_check_branch
          %695 = sbr.rel (%p693) target = $region48
        $region47: #{transformer_forward.1} parent=11 // pred_region
          _
        $region48: #{transformer_forward.1} parent=11 // pred_fallthru
          _
        // Predicated region
        $region49: #{transformer_forward.1} parent=11 // pred_check
          %p696 = pneg %p376
        $region50: #{transformer_forward.1} parent=11 // pred_check_branch
          %698 = sbr.rel (%p696) target = $region52
        $region51: #{transformer_forward.1} parent=11 // pred_region
          _
        $region52: #{transformer_forward.1} parent=11 // pred_fallthru
          _
        // Predicated region
        $region53: #{transformer_forward.1} parent=11 // pred_check
          %p699 = pneg %p397
        $region54: #{transformer_forward.1} parent=11 // pred_check_branch
          %701 = sbr.rel (%p699) target = $region56
        $region55: #{transformer_forward.1} parent=11 // pred_region
          _
        $region56: #{transformer_forward.1} parent=11 // pred_fallthru
          _
        // Predicated region
        $region57: #{transformer_forward.1} parent=11 // pred_check
          %p702 = pneg %p418
        $region58: #{transformer_forward.1} parent=11 // pred_check_branch
          %704 = sbr.rel (%p702) target = $region60
        $region59: #{transformer_forward.1} parent=11 // pred_region
          _
        $region60: #{transformer_forward.1} parent=11 // pred_fallthru
          _
        // Predicated region
        $region61: #{transformer_forward.1} parent=11 // pred_check
          %p705 = pneg %p439
        $region62: #{transformer_forward.1} parent=11 // pred_check_branch
          %707 = sbr.rel (%p705) target = $region64
        $region63: #{transformer_forward.1} parent=11 // pred_region
          _
        $region64: #{transformer_forward.1} parent=11 // pred_fallthru
          _
        // Predicated region
        $region65: #{transformer_forward.1} parent=11 // pred_check
          %p708 = pneg %p460
        $region66: #{transformer_forward.1} parent=11 // pred_check_branch
          %710 = sbr.rel (%p708) target = $region68
        $region67: #{transformer_forward.1} parent=11 // pred_region
          _
        $region68: #{transformer_forward.1} parent=11 // pred_fallthru
          _
        // Predicated region
        $region69: #{transformer_forward.1} parent=11 // pred_check
          %p711 = pneg %p481
        $region70: #{transformer_forward.1} parent=11 // pred_check_branch
          %713 = sbr.rel (%p711) target = $region72
        $region71: #{transformer_forward.1} parent=11 // pred_region
          _
        $region72: #{transformer_forward.1} parent=11 // pred_fallthru
          _
        // Predicated region
        $region73: #{transformer_forward.1} parent=11 // pred_check
          %p714 = pneg %p502
        $region74: #{transformer_forward.1} parent=11 // pred_check_branch
          %716 = sbr.rel (%p714) target = $region76
        $region75: #{transformer_forward.1} parent=11 // pred_region
          _
        $region76: #{transformer_forward.1} parent=11 // pred_fallthru
          _
        // Predicated region
        $region77: #{transformer_forward.1} parent=11 // pred_check
          %p717 = pneg %p523
        $region78: #{transformer_forward.1} parent=11 // pred_check_branch
          %719 = sbr.rel (%p717) target = $region80
        $region79: #{transformer_forward.1} parent=11 // pred_region
          _
        $region80: #{transformer_forward.1} parent=11 // pred_fallthru
          _
        // Predicated region
        $region81: #{transformer_forward.1} parent=11 // pred_check
          %p720 = pneg %p544
        $region82: #{transformer_forward.1} parent=11 // pred_check_branch
          %722 = sbr.rel (%p720) target = $region84
        $region83: #{transformer_forward.1} parent=11 // pred_region
          _
        $region84: #{transformer_forward.1} parent=11 // pred_fallthru
          _
        // Predicated region
        $region85: #{transformer_forward.1} parent=11 // pred_check
          %p723 = pneg %p565
        $region86: #{transformer_forward.1} parent=11 // pred_check_branch
          %725 = sbr.rel (%p723) target = $region88
        $region87: #{transformer_forward.1} parent=11 // pred_region
          _
        $region88: #{transformer_forward.1} parent=11 // pred_fallthru
          _
        // Predicated region
        $region89: #{transformer_forward.1} parent=11 // pred_check
          %p726 = pneg %p586
        $region90: #{transformer_forward.1} parent=11 // pred_check_branch
          %728 = sbr.rel (%p726) target = $region92
        $region91: #{transformer_forward.1} parent=11 // pred_region
          _
        $region92: #{transformer_forward.1} parent=11 // pred_fallthru
          _
        // Predicated region
        $region93: #{transformer_forward.1} parent=11 // pred_check
          %p729 = pneg %p607
        $region94: #{transformer_forward.1} parent=11 // pred_check_branch
          %731 = sbr.rel (%p729) target = $region96
        $region95: #{transformer_forward.1} parent=11 // pred_region
          _
        $region96: #{transformer_forward.1} parent=11 // pred_fallthru
          _
        // Predicated region
        $region97: #{transformer_forward.1} parent=11 // pred_check
          %p732 = pneg %p628
        $region98: #{transformer_forward.1} parent=11 // pred_check_branch
          %734 = sbr.rel (%p732) target = $region100
        $region99: #{transformer_forward.1} parent=11 // pred_region
          _
        $region100: #{transformer_forward.1} parent=11 // pred_fallthru
          _
      $region12: #{transformer_forward.1} parent=5 // pred_fallthru
        _
      %p735 = scmp.lt.s32.totalorder %s36, 2
      // Predicated region
      $region101: #{transformer_forward.1} parent=5 // pred_check
        %p736 = pneg %p735
      $region102: #{transformer_forward.1} parent=5 // pred_check_branch
        %738 = sbr.rel (%p736) target = $region104
      $region103: #{transformer_forward.1} parent=5 // pred_region
        // Predicated region
        $region105: #{transformer_forward.1} parent=103 // pred_check
          %p739 = pneg %p56
        $region106: #{transformer_forward.1} parent=103 // pred_check_branch
          %741 = sbr.rel (%p739) target = $region108
        $region107: #{transformer_forward.1} parent=103 // pred_region
          %p742 = scmp.lt.s32.totalorder %s36, 1
          %s743 = scalar_select %p742, %s36, 1
          %s744 = smul.addr %s743, 8
          %s745 = scalar_lea.vmem %s0, %s744
        $region108: #{transformer_forward.1} parent=103 // pred_fallthru
          _
        // Predicated region
        $region109: #{transformer_forward.1} parent=103 // pred_check
          %p746 = pneg %p82
        $region110: #{transformer_forward.1} parent=103 // pred_check_branch
          %748 = sbr.rel (%p746) target = $region112
        $region111: #{transformer_forward.1} parent=103 // pred_region
          %p749 = scmp.lt.s32.totalorder %s36, 1
          %s750 = scalar_select %p749, %s36, 1
          %s751 = smul.addr %s750, 8
          %s752 = scalar_lea.vmem %s1, %s751
        $region112: #{transformer_forward.1} parent=103 // pred_fallthru
          _
        // Predicated region
        $region113: #{transformer_forward.1} parent=103 // pred_check
          %p753 = pneg %p150
        $region114: #{transformer_forward.1} parent=103 // pred_check_branch
          %755 = sbr.rel (%p753) target = $region116
        $region115: #{transformer_forward.1} parent=103 // pred_region
          %p756 = scmp.lt.s32.totalorder %s36, 1
          %s757 = scalar_select %p756, %s36, 1
          %s758 = smul.addr %s757, 8
          %s759 = scalar_lea.vmem %s4, %s758
        $region116: #{transformer_forward.1} parent=103 // pred_fallthru
          _
        // Predicated region
        $region117: #{transformer_forward.1} parent=103 // pred_check
          %p760 = pneg %p176
        $region118: #{transformer_forward.1} parent=103 // pred_check_branch
          %762 = sbr.rel (%p760) target = $region120
        $region119: #{transformer_forward.1} parent=103 // pred_region
          %p763 = scmp.lt.s32.totalorder %s36, 1
          %s764 = scalar_select %p763, %s36, 1
          %s765 = smul.addr %s764, 8
          %s766 = scalar_lea.vmem %s5, %s765
        $region120: #{transformer_forward.1} parent=103 // pred_fallthru
          _
        // Predicated region
        $region121: #{transformer_forward.1} parent=103 // pred_check
          %p767 = pneg %p202
        $region122: #{transformer_forward.1} parent=103 // pred_check_branch
          %769 = sbr.rel (%p767) target = $region124
        $region123: #{transformer_forward.1} parent=103 // pred_region
          %p770 = scmp.lt.s32.totalorder %s36, 1
          %s771 = scalar_select %p770, %s36, 1
          %s772 = smul.addr %s771, 8
          %s773 = scalar_lea.vmem %s6, %s772
        $region124: #{transformer_forward.1} parent=103 // pred_fallthru
          _
      $region104: #{transformer_forward.1} parent=5 // pred_fallthru
        _
      %p774 = scmp.le.s32.totalorder 1, %s36
      %p775 = scmp.lt.s32.totalorder %s36, 3
      %p776 = pnand %p774, %p775
      %p777 = pneg %p776
      // Predicated region
      $region125: #{transformer_forward.1} parent=5 // pred_check
        _
      $region126: #{transformer_forward.1} parent=5 // pred_check_branch
        %779 = sbr.rel (%p776) target = $region128
      $region127: #{transformer_forward.1} parent=5 // pred_region
        %s780 = ssub.s32 %s36, 1
        %p781 = scmp.lt.s32.totalorder %s41, 1
        %s782 = scalar_select %p781, %s41, 1
        %s783 = smul.addr %s782, 8
        %s784 = scalar_lea.vmem %s0, %s783
        %p785 = pneg %p62
        %p786 = pneg %p59
        %p787 = scmp.lt.s32.totalorder %s41, 1
        %s788 = scalar_select %p787, %s41, 1
        %s789 = smul.addr %s788, 8
        %s790 = scalar_lea.vmem %s1, %s789
        %p791 = pneg %p88
        %p792 = pneg %p85
        %p793 = pneg %p109
        %p794 = pneg %p106
        %p795 = pneg %p130
        %p796 = pneg %p127
        %p797 = scmp.lt.s32.totalorder %s41, 1
        %s798 = scalar_select %p797, %s41, 1
        %s799 = smul.addr %s798, 8
        %s800 = scalar_lea.vmem %s4, %s799
        %p801 = pneg %p156
        %p802 = pneg %p153
        %p803 = scmp.lt.s32.totalorder %s41, 1
        %s804 = scalar_select %p803, %s41, 1
        %s805 = smul.addr %s804, 8
        %s806 = scalar_lea.vmem %s5, %s805
        %p807 = pneg %p182
        %p808 = pneg %p179
        %p809 = scmp.lt.s32.totalorder %s41, 1
        %s810 = scalar_select %p809, %s41, 1
        %s811 = smul.addr %s810, 8
        %s812 = scalar_lea.vmem %s6, %s811
        %p813 = pneg %p208
        %p814 = pneg %p205
        %p815 = pneg %p229
        %p816 = pneg %p226
        %p817 = pneg %p250
        %p818 = pneg %p247
        %p819 = pneg %p271
        %p820 = pneg %p268
        %p821 = pneg %p292
        %p822 = pneg %p289
        %p823 = pneg %p313
        %p824 = pneg %p310
        %p825 = pneg %p334
        %p826 = pneg %p331
        %p827 = pneg %p355
        %p828 = pneg %p352
        %p829 = pneg %p376
        %p830 = pneg %p373
        %p831 = pneg %p397
        %p832 = pneg %p394
        %p833 = pneg %p418
        %p834 = pneg %p415
        %p835 = pneg %p439
        %p836 = pneg %p436
        %p837 = pneg %p460
        %p838 = pneg %p457
        %p839 = pneg %p481
        %p840 = pneg %p478
        %p841 = pneg %p502
        %p842 = pneg %p499
        %p843 = pneg %p523
        %p844 = pneg %p520
        %p845 = pneg %p544
        %p846 = pneg %p541
        %p847 = pneg %p565
        %p848 = pneg %p562
        %p849 = pneg %p586
        %p850 = pneg %p583
        %p851 = pneg %p607
        %p852 = pneg %p604
        %p853 = pneg %p628
        %p854 = pneg %p625
        %p855 = pneg %p654
        %p856 = pneg %p651
        %s857 = sand.u32 %s641, 1
        %s858 = scalar_lea.sflag [#allocation3], %s857
        %s859 = sand.u32 %s641, 1
        %s860 = smul.addr %s859, 8
        %s861 = scalar_lea.vmem [#allocation2], %s860
        %p862 = scmp.lt.s32.totalorder %s41, 1
        %s863 = scalar_select %p862, %s41, 1
        %s864 = smul.addr %s863, 8
        %s865 = scalar_lea.vmem %s0, %s864
        %p866 = scmp.lt.s32.totalorder %s41, 1
        %s867 = scalar_select %p866, %s41, 1
        %s868 = smul.addr %s867, 8
        %s869 = scalar_lea.vmem %s1, %s868
        %p870 = scmp.lt.s32.totalorder %s41, 1
        %s871 = scalar_select %p870, %s41, 1
        %s872 = smul.addr %s871, 8
        %s873 = scalar_lea.vmem %s4, %s872
        %p874 = scmp.lt.s32.totalorder %s41, 1
        %s875 = scalar_select %p874, %s41, 1
        %s876 = smul.addr %s875, 8
        %s877 = scalar_lea.vmem %s5, %s876
        %p878 = scmp.lt.s32.totalorder %s41, 1
        %s879 = scalar_select %p878, %s41, 1
        %s880 = smul.addr %s879, 8
        %s881 = scalar_lea.vmem %s6, %s880
        %v882 = vld [vmem:[%s873] sm:$0xff]
        %vm883 = vcmp.gt.f32.partialorder %v882, 0.5
        %v884 = vld [vmem:[%s877] sm:$0xff]
        %vm885 = vcmp.gt.f32.partialorder %v884, 0.5
        %v886 = vld [vmem:[%s881] sm:$0xff]
        %vm887 = vcmp.gt.f32.partialorder %v886, 0.5
        %v888 = vld [vmem:[%s865] sm:$0xff]
        %v889 = vld [vmem:[%s2] sm:$0xff]
        %v890 = vadd.f32 %v888, %v889
        %v891 = vld [vmem:[%s10] sm:$0x3f]
        %v892 = vld [vmem:[%s7] sm:$0xff]
        %v893 = vld [vmem:[%s7 + $0x8] sm:$0xff]
        %v894 = vld [vmem:[%s7 + $0x10] sm:$0xff]
        %v895 = vld [vmem:[%s7 + $0x18] sm:$0xff]
        %v896 = vld [vmem:[%s8] sm:$0x1]
        %v898 = vlaneseq
        %v899 = vshrl.u32 %v898, 7
        %v900 = vsub.s32 0, %v899
        %v901 = vrot.slane %v896, %v900
        %vm903 = vcmask 261120
        %v905 = vsel %vm903, %v890, 0
        %907 = vmatprep.subr.mxu0 0.0
        %908 = vmatpush1.msra.mxu0 %v892
        %909 = vmatprep.subr.mxu0 0.0
        %910 = vmatpush1.msra.mxu0 %v893
        %911 = vmatprep.subr.mxu0 0.0
        %912 = vmatpush1.msra.mxu0 %v894
        %913 = vmatprep.subr.mxu0 0.0
        %914 = vmatpush1.msra.mxu0 %v895
        %915 = vmatprep.subr.mxu0 0.0
        %916 = vmatpush1.msra.mxu0 0.0
        %917 = vmatprep.subr.mxu0 0.0
        %918 = vmatpush1.msra.mxu0 0.0
        %919 = vmatprep.subr.mxu0 0.0
        %920 = vmatpush1.msra.mxu0 0.0
        %921 = vmatprep.subr.mxu0 0.0
        %922 = vmatpush1.msra.mxu0 0.0
        %923 = vmatprep.subr.mxu0 0.0
        %924 = vmatpush1.msra.mxu0 0.0
        %925 = vmatprep.subr.mxu0 0.0
        %926 = vmatpush1.msra.mxu0 0.0
        %927 = vmatprep.subr.mxu0 0.0
        %928 = vmatpush1.msra.mxu0 0.0
        %929 = vmatprep.subr.mxu0 0.0
        %930 = vmatpush1.msra.mxu0 0.0
        %931 = vmatprep.subr.mxu0 0.0
        %932 = vmatpush1.msra.mxu0 0.0
        %933 = vmatprep.subr.mxu0 0.0
        %934 = vmatpush1.msra.mxu0 0.0
        %935 = vmatprep.subr.mxu0 0.0
        %936 = vmatpush1.msra.mxu0 0.0
        %937 = vmatprep.subr.mxu0 0.0
        %938 = vmatpush1.msra.mxu0 0.0
        %939 = vmatprep.subr.mxu0 0.0
        %940 = vmatpush1.msra.mxu0 0.0
        %941 = vmatprep.subr.mxu0 0.0
        %942 = vmatpush1.msra.mxu0 0.0
        %943 = vmatprep.subr.mxu0 0.0
        %944 = vmatpush1.msra.mxu0 0.0
        %945 = vmatprep.subr.mxu0 0.0
        %946 = vmatpush1.msra.mxu0 0.0
        %947 = vmatprep.subr.mxu0 0.0
        %948 = vmatpush1.msra.mxu0 0.0
        %949 = vmatprep.subr.mxu0 0.0
        %950 = vmatpush1.msra.mxu0 0.0
        %951 = vmatprep.subr.mxu0 0.0
        %952 = vmatpush1.msra.mxu0 0.0
        %953 = vmatprep.subr.mxu0 0.0
        %954 = vmatpush1.msra.mxu0 0.0
        %955 = vmatprep.subr.mxu0 0.0
        %956 = vmatpush1.msra.mxu0 0.0
        %957 = vmatprep.subr.mxu0 0.0
        %958 = vmatpush1.msra.mxu0 0.0
        %959 = vmatprep.subr.mxu0 0.0
        %960 = vmatpush1.msra.mxu0 0.0
        %961 = vmatprep.subr.mxu0 0.0
        %962 = vmatpush1.msra.mxu0 0.0
        %963 = vmatprep.subr.mxu0 0.0
        %964 = vmatpush1.msra.mxu0 0.0
        %965 = vmatprep.subr.mxu0 0.0
        %966 = vmatpush1.msra.mxu0 0.0
        %967 = vmatprep.subr.mxu0 0.0
        %968 = vmatpush1.msra.mxu0 0.0
        %969 = vmatprep.subr.mxu0 0.0
        %970 = vmatpush1.msra.mxu0 0.0
        %971 = vmatprep.mubr.f32.mxu0 0.0
        %972 = vmatmul.mubr.f32.gmra.mrb[0].mxu0 %v905
        %v973 = vpop.f32.mrb[0].mxu0
        %v974 = vadd.f32 %v901, %v973
        %v975 = vpop.f32.mrb[0].mxu0
        %976 = vdwg.mxu0
        %978 = vrot.lane.b32.xlu0 %v974, 96
        %v979 = vpop.permute.xlu0 %978
        %vm980 = vcmask 64512
        %v981 = vsel %vm980, %v974, 0
        %v983 = vsel %vm980, %v979, 0
        %985 = vmatprep.subr.mxu0 0.0
        %986 = vmatpush1.xpose.msra.mxu0 %v983
        %987 = vmatprep.subr.mxu0 0.0
        %988 = vmatpush1.xpose.msra.mxu0 0.0
        %989 = vmatprep.subr.mxu0 0.0
        %990 = vmatpush1.xpose.msra.mxu0 0.0
        %991 = vmatprep.subr.mxu0 0.0
        %992 = vmatpush1.xpose.msra.mxu0 0.0
        %993 = vmatprep.subr.mxu0 0.0
        %994 = vmatpush1.xpose.msra.mxu0 0.0
        %995 = vmatprep.subr.mxu0 0.0
        %996 = vmatpush1.xpose.msra.mxu0 0.0
        %997 = vmatprep.subr.mxu0 0.0
        %998 = vmatpush1.xpose.msra.mxu0 0.0
        %999 = vmatprep.subr.mxu0 0.0
        %1000 = vmatpush1.xpose.msra.mxu0 0.0
        %1001 = vmatprep.subr.mxu0 0.0
        %1002 = vmatpush1.xpose.msra.mxu0 0.0
        %1003 = vmatprep.subr.mxu0 0.0
        %1004 = vmatpush1.xpose.msra.mxu0 0.0
        %1005 = vmatprep.subr.mxu0 0.0
        %1006 = vmatpush1.xpose.msra.mxu0 0.0
        %1007 = vmatprep.subr.mxu0 0.0
        %1008 = vmatpush1.xpose.msra.mxu0 0.0
        %1009 = vmatprep.subr.mxu0 0.0
        %1010 = vmatpush1.xpose.msra.mxu0 0.0
        %1011 = vmatprep.subr.mxu0 0.0
        %1012 = vmatpush1.xpose.msra.mxu0 0.0
        %1013 = vmatprep.subr.mxu0 0.0
        %1014 = vmatpush1.xpose.msra.mxu0 0.0
        %1015 = vmatprep.subr.mxu0 0.0
        %1016 = vmatpush1.xpose.msra.mxu0 0.0
        %1017 = vmatprep.subr.mxu0 0.0
        %1018 = vmatpush1.xpose.msra.mxu0 0.0
        %1019 = vmatprep.subr.mxu0 0.0
        %1020 = vmatpush1.xpose.msra.mxu0 0.0
        %1021 = vmatprep.subr.mxu0 0.0
        %1022 = vmatpush1.xpose.msra.mxu0 0.0
        %1023 = vmatprep.subr.mxu0 0.0
        %1024 = vmatpush1.xpose.msra.mxu0 0.0
        %1025 = vmatprep.subr.mxu0 0.0
        %1026 = vmatpush1.xpose.msra.mxu0 0.0
        %1027 = vmatprep.subr.mxu0 0.0
        %1028 = vmatpush1.xpose.msra.mxu0 0.0
        %1029 = vmatprep.subr.mxu0 0.0
        %1030 = vmatpush1.xpose.msra.mxu0 0.0
        %1031 = vmatprep.subr.mxu0 0.0
        %1032 = vmatpush1.xpose.msra.mxu0 0.0
        %1033 = vmatprep.subr.mxu0 0.0
        %1034 = vmatpush1.xpose.msra.mxu0 0.0
        %1035 = vmatprep.subr.mxu0 0.0
        %1036 = vmatpush1.xpose.msra.mxu0 0.0
        %1037 = vmatprep.subr.mxu0 0.0
        %1038 = vmatpush1.xpose.msra.mxu0 0.0
        %1039 = vmatprep.subr.mxu0 0.0
        %1040 = vmatpush1.xpose.msra.mxu0 0.0
        %1041 = vmatprep.subr.mxu0 0.0
        %1042 = vmatpush1.xpose.msra.mxu0 0.0
        %1043 = vmatprep.subr.mxu0 0.0
        %1044 = vmatpush1.xpose.msra.mxu0 0.0
        %1045 = vmatprep.subr.mxu0 0.0
        %1046 = vmatpush1.xpose.msra.mxu0 0.0
        %1047 = vmatprep.subr.mxu0 0.0
        %1048 = vmatpush1.xpose.msra.mxu0 0.0
        %1049 = vmatprep.mubr.f32.mxu0 0.0
        %1050 = vmatmul.mubr.f32.gmra.mrb[0].mxu0 %v981
        %v1051 = vpop.f32.mrb[0].mxu0
        %v1052 = vadd.f32 0.0, %v1051
        %v1053 = vpop.f32.mrb[0].mxu0
        %1054 = vdwg.mxu0
        %v1055 = vsel %vm883, -1e+12, %v1052
        %v1056 = vsel %vm980, %v1055, -inf
        %1057 = vmax.xlane.f32.xlu0 %v1056
        %v1058 = vpop.xlane.xlu0 %1057
        %v1059 = vsub.f32 %v1055, %v1058
        %v1060 = vmul.f32 %v1059, 1.442695
        %v1061 = vpow.pop %v1060
        %v1062 = vsel %vm980, %v1061, 0.0
        %1063 = vadd.xlane.f32.xlu0 %v1062
        %v1064 = vpop.xlane.xlu0 %1063
        %v1065 = vrcp.pop %v1064
        %v1066 = vmul.f32 %v1061, %v1065
        %1067 = vrot.lane.b32.xlu0 %v974, 64
        %v1068 = vpop.permute.xlu0 %1067
        %v1071 = vsel %vm980, %v1066, 0
        %1073 = vmatprep.subr.mxu0 0.0
        %1074 = vmatpush1.msra.mxu0 %v1068
        %1075 = vmatprep.subr.mxu0 0.0
        %1076 = vmatpush1.msra.mxu0 0.0
        %1077 = vmatprep.subr.mxu0 0.0
        %1078 = vmatpush1.msra.mxu0 0.0
        %1079 = vmatprep.subr.mxu0 0.0
        %1080 = vmatpush1.msra.mxu0 0.0
        %1081 = vmatprep.subr.mxu0 0.0
        %1082 = vmatpush1.msra.mxu0 0.0
        %1083 = vmatprep.subr.mxu0 0.0
        %1084 = vmatpush1.msra.mxu0 0.0
        %1085 = vmatprep.subr.mxu0 0.0
        %1086 = vmatpush1.msra.mxu0 0.0
        %1087 = vmatprep.subr.mxu0 0.0
        %1088 = vmatpush1.msra.mxu0 0.0
        %1089 = vmatprep.subr.mxu0 0.0
        %1090 = vmatpush1.msra.mxu0 0.0
        %1091 = vmatprep.subr.mxu0 0.0
        %1092 = vmatpush1.msra.mxu0 0.0
        %1093 = vmatprep.subr.mxu0 0.0
        %1094 = vmatpush1.msra.mxu0 0.0
        %1095 = vmatprep.subr.mxu0 0.0
        %1096 = vmatpush1.msra.mxu0 0.0
        %1097 = vmatprep.subr.mxu0 0.0
        %1098 = vmatpush1.msra.mxu0 0.0
        %1099 = vmatprep.subr.mxu0 0.0
        %1100 = vmatpush1.msra.mxu0 0.0
        %1101 = vmatprep.subr.mxu0 0.0
        %1102 = vmatpush1.msra.mxu0 0.0
        %1103 = vmatprep.subr.mxu0 0.0
        %1104 = vmatpush1.msra.mxu0 0.0
        %1105 = vmatprep.subr.mxu0 0.0
        %1106 = vmatpush1.msra.mxu0 0.0
        %1107 = vmatprep.subr.mxu0 0.0
        %1108 = vmatpush1.msra.mxu0 0.0
        %1109 = vmatprep.subr.mxu0 0.0
        %1110 = vmatpush1.msra.mxu0 0.0
        %1111 = vmatprep.subr.mxu0 0.0
        %1112 = vmatpush1.msra.mxu0 0.0
        %1113 = vmatprep.subr.mxu0 0.0
        %1114 = vmatpush1.msra.mxu0 0.0
        %1115 = vmatprep.subr.mxu0 0.0
        %1116 = vmatpush1.msra.mxu0 0.0
        %1117 = vmatprep.subr.mxu0 0.0
        %1118 = vmatpush1.msra.mxu0 0.0
        %1119 = vmatprep.subr.mxu0 0.0
        %1120 = vmatpush1.msra.mxu0 0.0
        %1121 = vmatprep.subr.mxu0 0.0
        %1122 = vmatpush1.msra.mxu0 0.0
        %1123 = vmatprep.subr.mxu0 0.0
        %1124 = vmatpush1.msra.mxu0 0.0
        %1125 = vmatprep.subr.mxu0 0.0
        %1126 = vmatpush1.msra.mxu0 0.0
        %1127 = vmatprep.subr.mxu0 0.0
        %1128 = vmatpush1.msra.mxu0 0.0
        %1129 = vmatprep.subr.mxu0 0.0
        %1130 = vmatpush1.msra.mxu0 0.0
        %1131 = vmatprep.subr.mxu0 0.0
        %1132 = vmatpush1.msra.mxu0 0.0
        %1133 = vmatprep.subr.mxu0 0.0
        %1134 = vmatpush1.msra.mxu0 0.0
        %1135 = vmatprep.subr.mxu0 0.0
        %1136 = vmatpush1.msra.mxu0 0.0
        %1137 = vmatprep.mubr.f32.mxu0 0.0
        %1138 = vmatmul.mubr.f32.gmra.mrb[0].mxu0 %v1071
        %v1139 = vpop.f32.mrb[0].mxu0
        %v1140 = vadd.f32 0.0, %v1139
        %v1141 = vpop.f32.mrb[0].mxu0
        %1142 = vdwg.mxu0
        %1143 = vrot.lane.b32.xlu0 %v974, 120
        %v1144 = vpop.permute.xlu0 %1143
        %1145 = vrot.lane.b32.xlu0 %v974, 88
        %v1146 = vpop.permute.xlu0 %1145
        %v1147 = vsel %vm980, %v1144, 0
        %v1149 = vsel %vm980, %v1146, 0
        %1151 = vmatprep.subr.mxu0 0.0
        %1152 = vmatpush1.xpose.msra.mxu0 %v1149
        %1153 = vmatprep.subr.mxu0 0.0
        %1154 = vmatpush1.xpose.msra.mxu0 0.0
        %1155 = vmatprep.subr.mxu0 0.0
        %1156 = vmatpush1.xpose.msra.mxu0 0.0
        %1157 = vmatprep.subr.mxu0 0.0
        %1158 = vmatpush1.xpose.msra.mxu0 0.0
        %1159 = vmatprep.subr.mxu0 0.0
        %1160 = vmatpush1.xpose.msra.mxu0 0.0
        %1161 = vmatprep.subr.mxu0 0.0
        %1162 = vmatpush1.xpose.msra.mxu0 0.0
        %1163 = vmatprep.subr.mxu0 0.0
        %1164 = vmatpush1.xpose.msra.mxu0 0.0
        %1165 = vmatprep.subr.mxu0 0.0
        %1166 = vmatpush1.xpose.msra.mxu0 0.0
        %1167 = vmatprep.subr.mxu0 0.0
        %1168 = vmatpush1.xpose.msra.mxu0 0.0
        %1169 = vmatprep.subr.mxu0 0.0
        %1170 = vmatpush1.xpose.msra.mxu0 0.0
        %1171 = vmatprep.subr.mxu0 0.0
        %1172 = vmatpush1.xpose.msra.mxu0 0.0
        %1173 = vmatprep.subr.mxu0 0.0
        %1174 = vmatpush1.xpose.msra.mxu0 0.0
        %1175 = vmatprep.subr.mxu0 0.0
        %1176 = vmatpush1.xpose.msra.mxu0 0.0
        %1177 = vmatprep.subr.mxu0 0.0
        %1178 = vmatpush1.xpose.msra.mxu0 0.0
        %1179 = vmatprep.subr.mxu0 0.0
        %1180 = vmatpush1.xpose.msra.mxu0 0.0
        %1181 = vmatprep.subr.mxu0 0.0
        %1182 = vmatpush1.xpose.msra.mxu0 0.0
        %1183 = vmatprep.subr.mxu0 0.0
        %1184 = vmatpush1.xpose.msra.mxu0 0.0
        %1185 = vmatprep.subr.mxu0 0.0
        %1186 = vmatpush1.xpose.msra.mxu0 0.0
        %1187 = vmatprep.subr.mxu0 0.0
        %1188 = vmatpush1.xpose.msra.mxu0 0.0
        %1189 = vmatprep.subr.mxu0 0.0
        %1190 = vmatpush1.xpose.msra.mxu0 0.0
        %1191 = vmatprep.subr.mxu0 0.0
        %1192 = vmatpush1.xpose.msra.mxu0 0.0
        %1193 = vmatprep.subr.mxu0 0.0
        %1194 = vmatpush1.xpose.msra.mxu0 0.0
        %1195 = vmatprep.subr.mxu0 0.0
        %1196 = vmatpush1.xpose.msra.mxu0 0.0
        %1197 = vmatprep.subr.mxu0 0.0
        %1198 = vmatpush1.xpose.msra.mxu0 0.0
        %1199 = vmatprep.subr.mxu0 0.0
        %1200 = vmatpush1.xpose.msra.mxu0 0.0
        %1201 = vmatprep.subr.mxu0 0.0
        %1202 = vmatpush1.xpose.msra.mxu0 0.0
        %1203 = vmatprep.subr.mxu0 0.0
        %1204 = vmatpush1.xpose.msra.mxu0 0.0
        %1205 = vmatprep.subr.mxu0 0.0
        %1206 = vmatpush1.xpose.msra.mxu0 0.0
        %1207 = vmatprep.subr.mxu0 0.0
        %1208 = vmatpush1.xpose.msra.mxu0 0.0
        %1209 = vmatprep.subr.mxu0 0.0
        %1210 = vmatpush1.xpose.msra.mxu0 0.0
        %1211 = vmatprep.subr.mxu0 0.0
        %1212 = vmatpush1.xpose.msra.mxu0 0.0
        %1213 = vmatprep.subr.mxu0 0.0
        %1214 = vmatpush1.xpose.msra.mxu0 0.0
        %1215 = vmatprep.mubr.f32.mxu0 0.0
        %1216 = vmatmul.mubr.f32.gmra.mrb[0].mxu0 %v1147
        %v1217 = vpop.f32.mrb[0].mxu0
        %v1218 = vadd.f32 0.0, %v1217
        %v1219 = vpop.f32.mrb[0].mxu0
        %1220 = vdwg.mxu0
        %v1221 = vsel %vm883, -1e+12, %v1218
        %v1222 = vsel %vm980, %v1221, -inf
        %1223 = vmax.xlane.f32.xlu0 %v1222
        %v1224 = vpop.xlane.xlu0 %1223
        %v1225 = vsub.f32 %v1221, %v1224
        %v1226 = vmul.f32 %v1225, 1.442695
        %v1227 = vpow.pop %v1226
        %v1228 = vsel %vm980, %v1227, 0.0
        %1229 = vadd.xlane.f32.xlu0 %v1228
        %v1230 = vpop.xlane.xlu0 %1229
        %v1231 = vrcp.pop %v1230
        %v1232 = vmul.f32 %v1227, %v1231
        %1233 = vrot.lane.b32.xlu0 %v974, 56
        %v1234 = vpop.permute.xlu0 %1233
        %v1237 = vsel %vm980, %v1232, 0
        %1239 = vmatprep.subr.mxu0 0.0
        %1240 = vmatpush1.msra.mxu0 %v1234
        %1241 = vmatprep.subr.mxu0 0.0
        %1242 = vmatpush1.msra.mxu0 0.0
        %1243 = vmatprep.subr.mxu0 0.0
        %1244 = vmatpush1.msra.mxu0 0.0
        %1245 = vmatprep.subr.mxu0 0.0
        %1246 = vmatpush1.msra.mxu0 0.0
        %1247 = vmatprep.subr.mxu0 0.0
        %1248 = vmatpush1.msra.mxu0 0.0
        %1249 = vmatprep.subr.mxu0 0.0
        %1250 = vmatpush1.msra.mxu0 0.0
        %1251 = vmatprep.subr.mxu0 0.0
        %1252 = vmatpush1.msra.mxu0 0.0
        %1253 = vmatprep.subr.mxu0 0.0
        %1254 = vmatpush1.msra.mxu0 0.0
        %1255 = vmatprep.subr.mxu0 0.0
        %1256 = vmatpush1.msra.mxu0 0.0
        %1257 = vmatprep.subr.mxu0 0.0
        %1258 = vmatpush1.msra.mxu0 0.0
        %1259 = vmatprep.subr.mxu0 0.0
        %1260 = vmatpush1.msra.mxu0 0.0
        %1261 = vmatprep.subr.mxu0 0.0
        %1262 = vmatpush1.msra.mxu0 0.0
        %1263 = vmatprep.subr.mxu0 0.0
        %1264 = vmatpush1.msra.mxu0 0.0
        %1265 = vmatprep.subr.mxu0 0.0
        %1266 = vmatpush1.msra.mxu0 0.0
        %1267 = vmatprep.subr.mxu0 0.0
        %1268 = vmatpush1.msra.mxu0 0.0
        %1269 = vmatprep.subr.mxu0 0.0
        %1270 = vmatpush1.msra.mxu0 0.0
        %1271 = vmatprep.subr.mxu0 0.0
        %1272 = vmatpush1.msra.mxu0 0.0
        %1273 = vmatprep.subr.mxu0 0.0
        %1274 = vmatpush1.msra.mxu0 0.0
        %1275 = vmatprep.subr.mxu0 0.0
        %1276 = vmatpush1.msra.mxu0 0.0
        %1277 = vmatprep.subr.mxu0 0.0
        %1278 = vmatpush1.msra.mxu0 0.0
        %1279 = vmatprep.subr.mxu0 0.0
        %1280 = vmatpush1.msra.mxu0 0.0
        %1281 = vmatprep.subr.mxu0 0.0
        %1282 = vmatpush1.msra.mxu0 0.0
        %1283 = vmatprep.subr.mxu0 0.0
        %1284 = vmatpush1.msra.mxu0 0.0
        %1285 = vmatprep.subr.mxu0 0.0
        %1286 = vmatpush1.msra.mxu0 0.0
        %1287 = vmatprep.subr.mxu0 0.0
        %1288 = vmatpush1.msra.mxu0 0.0
        %1289 = vmatprep.subr.mxu0 0.0
        %1290 = vmatpush1.msra.mxu0 0.0
        %1291 = vmatprep.subr.mxu0 0.0
        %1292 = vmatpush1.msra.mxu0 0.0
        %1293 = vmatprep.subr.mxu0 0.0
        %1294 = vmatpush1.msra.mxu0 0.0
        %1295 = vmatprep.subr.mxu0 0.0
        %1296 = vmatpush1.msra.mxu0 0.0
        %1297 = vmatprep.subr.mxu0 0.0
        %1298 = vmatpush1.msra.mxu0 0.0
        %1299 = vmatprep.subr.mxu0 0.0
        %1300 = vmatpush1.msra.mxu0 0.0
        %1301 = vmatprep.subr.mxu0 0.0
        %1302 = vmatpush1.msra.mxu0 0.0
        %1303 = vmatprep.mubr.f32.mxu0 0.0
        %1304 = vmatmul.mubr.f32.gmra.mrb[0].mxu0 %v1237
        %v1305 = vpop.f32.mrb[0].mxu0
        %v1306 = vadd.f32 0.0, %v1305
        %v1307 = vpop.f32.mrb[0].mxu0
        %1308 = vdwg.mxu0
        %1309 = vrot.lane.b32.xlu0 %v974, 112
        %v1310 = vpop.permute.xlu0 %1309
        %1311 = vrot.lane.b32.xlu0 %v974, 80
        %v1312 = vpop.permute.xlu0 %1311
        %v1313 = vsel %vm980, %v1310, 0
        %v1315 = vsel %vm980, %v1312, 0
        %1317 = vmatprep.subr.mxu0 0.0
        %1318 = vmatpush1.xpose.msra.mxu0 %v1315
        %1319 = vmatprep.subr.mxu0 0.0
        %1320 = vmatpush1.xpose.msra.mxu0 0.0
        %1321 = vmatprep.subr.mxu0 0.0
        %1322 = vmatpush1.xpose.msra.mxu0 0.0
        %1323 = vmatprep.subr.mxu0 0.0
        %1324 = vmatpush1.xpose.msra.mxu0 0.0
        %1325 = vmatprep.subr.mxu0 0.0
        %1326 = vmatpush1.xpose.msra.mxu0 0.0
        %1327 = vmatprep.subr.mxu0 0.0
        %1328 = vmatpush1.xpose.msra.mxu0 0.0
        %1329 = vmatprep.subr.mxu0 0.0
        %1330 = vmatpush1.xpose.msra.mxu0 0.0
        %1331 = vmatprep.subr.mxu0 0.0
        %1332 = vmatpush1.xpose.msra.mxu0 0.0
        %1333 = vmatprep.subr.mxu0 0.0
        %1334 = vmatpush1.xpose.msra.mxu0 0.0
        %1335 = vmatprep.subr.mxu0 0.0
        %1336 = vmatpush1.xpose.msra.mxu0 0.0
        %1337 = vmatprep.subr.mxu0 0.0
        %1338 = vmatpush1.xpose.msra.mxu0 0.0
        %1339 = vmatprep.subr.mxu0 0.0
        %1340 = vmatpush1.xpose.msra.mxu0 0.0
        %1341 = vmatprep.subr.mxu0 0.0
        %1342 = vmatpush1.xpose.msra.mxu0 0.0
        %1343 = vmatprep.subr.mxu0 0.0
        %1344 = vmatpush1.xpose.msra.mxu0 0.0
        %1345 = vmatprep.subr.mxu0 0.0
        %1346 = vmatpush1.xpose.msra.mxu0 0.0
        %1347 = vmatprep.subr.mxu0 0.0
        %1348 = vmatpush1.xpose.msra.mxu0 0.0
        %1349 = vmatprep.subr.mxu0 0.0
        %1350 = vmatpush1.xpose.msra.mxu0 0.0
        %1351 = vmatprep.subr.mxu0 0.0
        %1352 = vmatpush1.xpose.msra.mxu0 0.0
        %1353 = vmatprep.subr.mxu0 0.0
        %1354 = vmatpush1.xpose.msra.mxu0 0.0
        %1355 = vmatprep.subr.mxu0 0.0
        %1356 = vmatpush1.xpose.msra.mxu0 0.0
        %1357 = vmatprep.subr.mxu0 0.0
        %1358 = vmatpush1.xpose.msra.mxu0 0.0
        %1359 = vmatprep.subr.mxu0 0.0
        %1360 = vmatpush1.xpose.msra.mxu0 0.0
        %1361 = vmatprep.subr.mxu0 0.0
        %1362 = vmatpush1.xpose.msra.mxu0 0.0
        %1363 = vmatprep.subr.mxu0 0.0
        %1364 = vmatpush1.xpose.msra.mxu0 0.0
        %1365 = vmatprep.subr.mxu0 0.0
        %1366 = vmatpush1.xpose.msra.mxu0 0.0
        %1367 = vmatprep.subr.mxu0 0.0
        %1368 = vmatpush1.xpose.msra.mxu0 0.0
        %1369 = vmatprep.subr.mxu0 0.0
        %1370 = vmatpush1.xpose.msra.mxu0 0.0
        %1371 = vmatprep.subr.mxu0 0.0
        %1372 = vmatpush1.xpose.msra.mxu0 0.0
        %1373 = vmatprep.subr.mxu0 0.0
        %1374 = vmatpush1.xpose.msra.mxu0 0.0
        %1375 = vmatprep.subr.mxu0 0.0
        %1376 = vmatpush1.xpose.msra.mxu0 0.0
        %1377 = vmatprep.subr.mxu0 0.0
        %1378 = vmatpush1.xpose.msra.mxu0 0.0
        %1379 = vmatprep.subr.mxu0 0.0
        %1380 = vmatpush1.xpose.msra.mxu0 0.0
        %1381 = vmatprep.mubr.f32.mxu0 0.0
        %1382 = vmatmul.mubr.f32.gmra.mrb[0].mxu0 %v1313
        %v1383 = vpop.f32.mrb[0].mxu0
        %v1384 = vadd.f32 0.0, %v1383
        %v1385 = vpop.f32.mrb[0].mxu0
        %1386 = vdwg.mxu0
        %v1387 = vsel %vm883, -1e+12, %v1384
        %v1388 = vsel %vm980, %v1387, -inf
        %1389 = vmax.xlane.f32.xlu0 %v1388
        %v1390 = vpop.xlane.xlu0 %1389
        %v1391 = vsub.f32 %v1387, %v1390
        %v1392 = vmul.f32 %v1391, 1.442695
        %v1393 = vpow.pop %v1392
        %v1394 = vsel %vm980, %v1393, 0.0
        %1395 = vadd.xlane.f32.xlu0 %v1394
        %v1396 = vpop.xlane.xlu0 %1395
        %v1397 = vrcp.pop %v1396
        %v1398 = vmul.f32 %v1393, %v1397
        %1399 = vrot.lane.b32.xlu0 %v974, 48
        %v1400 = vpop.permute.xlu0 %1399
        %v1403 = vsel %vm980, %v1398, 0
        %1405 = vmatprep.subr.mxu0 0.0
        %1406 = vmatpush1.msra.mxu0 %v1400
        %1407 = vmatprep.subr.mxu0 0.0
        %1408 = vmatpush1.msra.mxu0 0.0
        %1409 = vmatprep.subr.mxu0 0.0
        %1410 = vmatpush1.msra.mxu0 0.0
        %1411 = vmatprep.subr.mxu0 0.0
        %1412 = vmatpush1.msra.mxu0 0.0
        %1413 = vmatprep.subr.mxu0 0.0
        %1414 = vmatpush1.msra.mxu0 0.0
        %1415 = vmatprep.subr.mxu0 0.0
        %1416 = vmatpush1.msra.mxu0 0.0
        %1417 = vmatprep.subr.mxu0 0.0
        %1418 = vmatpush1.msra.mxu0 0.0
        %1419 = vmatprep.subr.mxu0 0.0
        %1420 = vmatpush1.msra.mxu0 0.0
        %1421 = vmatprep.subr.mxu0 0.0
        %1422 = vmatpush1.msra.mxu0 0.0
        %1423 = vmatprep.subr.mxu0 0.0
        %1424 = vmatpush1.msra.mxu0 0.0
        %1425 = vmatprep.subr.mxu0 0.0
        %1426 = vmatpush1.msra.mxu0 0.0
        %1427 = vmatprep.subr.mxu0 0.0
        %1428 = vmatpush1.msra.mxu0 0.0
        %1429 = vmatprep.subr.mxu0 0.0
        %1430 = vmatpush1.msra.mxu0 0.0
        %1431 = vmatprep.subr.mxu0 0.0
        %1432 = vmatpush1.msra.mxu0 0.0
        %1433 = vmatprep.subr.mxu0 0.0
        %1434 = vmatpush1.msra.mxu0 0.0
        %1435 = vmatprep.subr.mxu0 0.0
        %1436 = vmatpush1.msra.mxu0 0.0
        %1437 = vmatprep.subr.mxu0 0.0
        %1438 = vmatpush1.msra.mxu0 0.0
        %1439 = vmatprep.subr.mxu0 0.0
        %1440 = vmatpush1.msra.mxu0 0.0
        %1441 = vmatprep.subr.mxu0 0.0
        %1442 = vmatpush1.msra.mxu0 0.0
        %1443 = vmatprep.subr.mxu0 0.0
        %1444 = vmatpush1.msra.mxu0 0.0
        %1445 = vmatprep.subr.mxu0 0.0
        %1446 = vmatpush1.msra.mxu0 0.0
        %1447 = vmatprep.subr.mxu0 0.0
        %1448 = vmatpush1.msra.mxu0 0.0
        %1449 = vmatprep.subr.mxu0 0.0
        %1450 = vmatpush1.msra.mxu0 0.0
        %1451 = vmatprep.subr.mxu0 0.0
        %1452 = vmatpush1.msra.mxu0 0.0
        %1453 = vmatprep.subr.mxu0 0.0
        %1454 = vmatpush1.msra.mxu0 0.0
        %1455 = vmatprep.subr.mxu0 0.0
        %1456 = vmatpush1.msra.mxu0 0.0
        %1457 = vmatprep.subr.mxu0 0.0
        %1458 = vmatpush1.msra.mxu0 0.0
        %1459 = vmatprep.subr.mxu0 0.0
        %1460 = vmatpush1.msra.mxu0 0.0
        %1461 = vmatprep.subr.mxu0 0.0
        %1462 = vmatpush1.msra.mxu0 0.0
        %1463 = vmatprep.subr.mxu0 0.0
        %1464 = vmatpush1.msra.mxu0 0.0
        %1465 = vmatprep.subr.mxu0 0.0
        %1466 = vmatpush1.msra.mxu0 0.0
        %1467 = vmatprep.subr.mxu0 0.0
        %1468 = vmatpush1.msra.mxu0 0.0
        %1469 = vmatprep.mubr.f32.mxu0 0.0
        %1470 = vmatmul.mubr.f32.gmra.mrb[0].mxu0 %v1403
        %v1471 = vpop.f32.mrb[0].mxu0
        %v1472 = vadd.f32 0.0, %v1471
        %v1473 = vpop.f32.mrb[0].mxu0
        %1474 = vdwg.mxu0
        %1475 = vrot.lane.b32.xlu0 %v974, 104
        %v1476 = vpop.permute.xlu0 %1475
        %1477 = vrot.lane.b32.xlu0 %v974, 72
        %v1478 = vpop.permute.xlu0 %1477
        %v1479 = vsel %vm980, %v1476, 0
        %v1481 = vsel %vm980, %v1478, 0
        %1483 = vmatprep.subr.mxu0 0.0
        %1484 = vmatpush1.xpose.msra.mxu0 %v1481
        %1485 = vmatprep.subr.mxu0 0.0
        %1486 = vmatpush1.xpose.msra.mxu0 0.0
        %1487 = vmatprep.subr.mxu0 0.0
        %1488 = vmatpush1.xpose.msra.mxu0 0.0
        %1489 = vmatprep.subr.mxu0 0.0
        %1490 = vmatpush1.xpose.msra.mxu0 0.0
        %1491 = vmatprep.subr.mxu0 0.0
        %1492 = vmatpush1.xpose.msra.mxu0 0.0
        %1493 = vmatprep.subr.mxu0 0.0
        %1494 = vmatpush1.xpose.msra.mxu0 0.0
        %1495 = vmatprep.subr.mxu0 0.0
        %1496 = vmatpush1.xpose.msra.mxu0 0.0
        %1497 = vmatprep.subr.mxu0 0.0
        %1498 = vmatpush1.xpose.msra.mxu0 0.0
        %1499 = vmatprep.subr.mxu0 0.0
        %1500 = vmatpush1.xpose.msra.mxu0 0.0
        %1501 = vmatprep.subr.mxu0 0.0
        %1502 = vmatpush1.xpose.msra.mxu0 0.0
        %1503 = vmatprep.subr.mxu0 0.0
        %1504 = vmatpush1.xpose.msra.mxu0 0.0
        %1505 = vmatprep.subr.mxu0 0.0
        %1506 = vmatpush1.xpose.msra.mxu0 0.0
        %1507 = vmatprep.subr.mxu0 0.0
        %1508 = vmatpush1.xpose.msra.mxu0 0.0
        %1509 = vmatprep.subr.mxu0 0.0
        %1510 = vmatpush1.xpose.msra.mxu0 0.0
        %1511 = vmatprep.subr.mxu0 0.0
        %1512 = vmatpush1.xpose.msra.mxu0 0.0
        %1513 = vmatprep.subr.mxu0 0.0
        %1514 = vmatpush1.xpose.msra.mxu0 0.0
        %1515 = vmatprep.subr.mxu0 0.0
        %1516 = vmatpush1.xpose.msra.mxu0 0.0
        %1517 = vmatprep.subr.mxu0 0.0
        %1518 = vmatpush1.xpose.msra.mxu0 0.0
        %1519 = vmatprep.subr.mxu0 0.0
        %1520 = vmatpush1.xpose.msra.mxu0 0.0
        %1521 = vmatprep.subr.mxu0 0.0
        %1522 = vmatpush1.xpose.msra.mxu0 0.0
        %1523 = vmatprep.subr.mxu0 0.0
        %1524 = vmatpush1.xpose.msra.mxu0 0.0
        %1525 = vmatprep.subr.mxu0 0.0
        %1526 = vmatpush1.xpose.msra.mxu0 0.0
        %1527 = vmatprep.subr.mxu0 0.0
        %1528 = vmatpush1.xpose.msra.mxu0 0.0
        %1529 = vmatprep.subr.mxu0 0.0
        %1530 = vmatpush1.xpose.msra.mxu0 0.0
        %1531 = vmatprep.subr.mxu0 0.0
        %1532 = vmatpush1.xpose.msra.mxu0 0.0
        %1533 = vmatprep.subr.mxu0 0.0
        %1534 = vmatpush1.xpose.msra.mxu0 0.0
        %1535 = vmatprep.subr.mxu0 0.0
        %1536 = vmatpush1.xpose.msra.mxu0 0.0
        %1537 = vmatprep.subr.mxu0 0.0
        %1538 = vmatpush1.xpose.msra.mxu0 0.0
        %1539 = vmatprep.subr.mxu0 0.0
        %1540 = vmatpush1.xpose.msra.mxu0 0.0
        %1541 = vmatprep.subr.mxu0 0.0
        %1542 = vmatpush1.xpose.msra.mxu0 0.0
        %1543 = vmatprep.subr.mxu0 0.0
        %1544 = vmatpush1.xpose.msra.mxu0 0.0
        %1545 = vmatprep.subr.mxu0 0.0
        %1546 = vmatpush1.xpose.msra.mxu0 0.0
        %1547 = vmatprep.mubr.f32.mxu0 0.0
        %1548 = vmatmul.mubr.f32.gmra.mrb[0].mxu0 %v1479
        %v1549 = vpop.f32.mrb[0].mxu0
        %v1550 = vadd.f32 0.0, %v1549
        %v1551 = vpop.f32.mrb[0].mxu0
        %1552 = vdwg.mxu0
        %v1553 = vsel %vm883, -1e+12, %v1550
        %v1554 = vsel %vm980, %v1553, -inf
        %1555 = vmax.xlane.f32.xlu0 %v1554
        %v1556 = vpop.xlane.xlu0 %1555
        %v1557 = vsub.f32 %v1553, %v1556
        %v1558 = vmul.f32 %v1557, 1.442695
        %v1559 = vpow.pop %v1558
        %v1560 = vsel %vm980, %v1559, 0.0
        %1561 = vadd.xlane.f32.xlu0 %v1560
        %v1562 = vpop.xlane.xlu0 %1561
        %v1563 = vrcp.pop %v1562
        %v1564 = vmul.f32 %v1559, %v1563
        %1565 = vrot.lane.b32.xlu0 %v974, 40
        %v1566 = vpop.permute.xlu0 %1565
        %v1569 = vsel %vm980, %v1564, 0
        %1571 = vmatprep.subr.mxu0 0.0
        %1572 = vmatpush1.msra.mxu0 %v1566
        %1573 = vmatprep.subr.mxu0 0.0
        %1574 = vmatpush1.msra.mxu0 0.0
        %1575 = vmatprep.subr.mxu0 0.0
        %1576 = vmatpush1.msra.mxu0 0.0
        %1577 = vmatprep.subr.mxu0 0.0
        %1578 = vmatpush1.msra.mxu0 0.0
        %1579 = vmatprep.subr.mxu0 0.0
        %1580 = vmatpush1.msra.mxu0 0.0
        %1581 = vmatprep.subr.mxu0 0.0
        %1582 = vmatpush1.msra.mxu0 0.0
        %1583 = vmatprep.subr.mxu0 0.0
        %1584 = vmatpush1.msra.mxu0 0.0
        %1585 = vmatprep.subr.mxu0 0.0
        %1586 = vmatpush1.msra.mxu0 0.0
        %1587 = vmatprep.subr.mxu0 0.0
        %1588 = vmatpush1.msra.mxu0 0.0
        %1589 = vmatprep.subr.mxu0 0.0
        %1590 = vmatpush1.msra.mxu0 0.0
        %1591 = vmatprep.subr.mxu0 0.0
        %1592 = vmatpush1.msra.mxu0 0.0
        %1593 = vmatprep.subr.mxu0 0.0
        %1594 = vmatpush1.msra.mxu0 0.0
        %1595 = vmatprep.subr.mxu0 0.0
        %1596 = vmatpush1.msra.mxu0 0.0
        %1597 = vmatprep.subr.mxu0 0.0
        %1598 = vmatpush1.msra.mxu0 0.0
        %1599 = vmatprep.subr.mxu0 0.0
        %1600 = vmatpush1.msra.mxu0 0.0
        %1601 = vmatprep.subr.mxu0 0.0
        %1602 = vmatpush1.msra.mxu0 0.0
        %1603 = vmatprep.subr.mxu0 0.0
        %1604 = vmatpush1.msra.mxu0 0.0
        %1605 = vmatprep.subr.mxu0 0.0
        %1606 = vmatpush1.msra.mxu0 0.0
        %1607 = vmatprep.subr.mxu0 0.0
        %1608 = vmatpush1.msra.mxu0 0.0
        %1609 = vmatprep.subr.mxu0 0.0
        %1610 = vmatpush1.msra.mxu0 0.0
        %1611 = vmatprep.subr.mxu0 0.0
        %1612 = vmatpush1.msra.mxu0 0.0
        %1613 = vmatprep.subr.mxu0 0.0
        %1614 = vmatpush1.msra.mxu0 0.0
        %1615 = vmatprep.subr.mxu0 0.0
        %1616 = vmatpush1.msra.mxu0 0.0
        %1617 = vmatprep.subr.mxu0 0.0
        %1618 = vmatpush1.msra.mxu0 0.0
        %1619 = vmatprep.subr.mxu0 0.0
        %1620 = vmatpush1.msra.mxu0 0.0
        %1621 = vmatprep.subr.mxu0 0.0
        %1622 = vmatpush1.msra.mxu0 0.0
        %1623 = vmatprep.subr.mxu0 0.0
        %1624 = vmatpush1.msra.mxu0 0.0
        %1625 = vmatprep.subr.mxu0 0.0
        %1626 = vmatpush1.msra.mxu0 0.0
        %1627 = vmatprep.subr.mxu0 0.0
        %1628 = vmatpush1.msra.mxu0 0.0
        %1629 = vmatprep.subr.mxu0 0.0
        %1630 = vmatpush1.msra.mxu0 0.0
        %1631 = vmatprep.subr.mxu0 0.0
        %1632 = vmatpush1.msra.mxu0 0.0
        %1633 = vmatprep.subr.mxu0 0.0
        %1634 = vmatpush1.msra.mxu0 0.0
        %1635 = vmatprep.mubr.f32.mxu0 0.0
        %1636 = vmatmul.mubr.f32.gmra.mrb[0].mxu0 %v1569
        %v1637 = vpop.f32.mrb[0].mxu0
        %v1638 = vadd.f32 0.0, %v1637
        %v1639 = vpop.f32.mrb[0].mxu0
        %1640 = vdwg.mxu0
        %1642 = vrot.lane.b32.xlu0 %v1306, 8
        %v1643 = vpop.permute.xlu0 %1642
        %1646 = vrot.lane.b32.xlu0 %v1472, 16
        %v1647 = vpop.permute.xlu0 %1646
        %1650 = vrot.lane.b32.xlu0 %v1638, 24
        %v1651 = vpop.permute.xlu0 %1650
        %v1653 = vsel %vm980, %v1140, %v1643
        %vm1654 = vcmask 130048
        %v1655 = vsel %vm1654, %v1653, %v1647
        %vm1656 = vcmask 195584
        %v1657 = vsel %vm1656, %v1655, %v1651
        %v1658 = vld [vmem:[%s9] sm:$0xff]
        %v1659 = vld [vmem:[%s9 + $0x8] sm:$0xff]
        %v1660 = vld [vmem:[%s9 + $0x10] sm:$0xff]
        %v1661 = vld [vmem:[%s9 + $0x18] sm:$0xff]
        %v1662 = vlaneseq
        %v1663 = vshrl.u32 %v1662, 7
        %v1664 = vsub.s32 0, %v1663
        %v1665 = vrot.slane %v891, %v1664
        %v1667 = vsel %vm903, %v1657, 0
        %1669 = vmatprep.subr.mxu0 0.0
        %1670 = vmatpush1.msra.mxu0 %v1658
        %1671 = vmatprep.subr.mxu0 0.0
        %1672 = vmatpush1.msra.mxu0 %v1659
        %1673 = vmatprep.subr.mxu0 0.0
        %1674 = vmatpush1.msra.mxu0 %v1660
        %1675 = vmatprep.subr.mxu0 0.0
        %1676 = vmatpush1.msra.mxu0 %v1661
        %1677 = vmatprep.subr.mxu0 0.0
        %1678 = vmatpush1.msra.mxu0 0.0
        %1679 = vmatprep.subr.mxu0 0.0
        %1680 = vmatpush1.msra.mxu0 0.0
        %1681 = vmatprep.subr.mxu0 0.0
        %1682 = vmatpush1.msra.mxu0 0.0
        %1683 = vmatprep.subr.mxu0 0.0
        %1684 = vmatpush1.msra.mxu0 0.0
        %1685 = vmatprep.subr.mxu0 0.0
        %1686 = vmatpush1.msra.mxu0 0.0
        %1687 = vmatprep.subr.mxu0 0.0
        %1688 = vmatpush1.msra.mxu0 0.0
        %1689 = vmatprep.subr.mxu0 0.0
        %1690 = vmatpush1.msra.mxu0 0.0
        %1691 = vmatprep.subr.mxu0 0.0
        %1692 = vmatpush1.msra.mxu0 0.0
        %1693 = vmatprep.subr.mxu0 0.0
        %1694 = vmatpush1.msra.mxu0 0.0
        %1695 = vmatprep.subr.mxu0 0.0
        %1696 = vmatpush1.msra.mxu0 0.0
        %1697 = vmatprep.subr.mxu0 0.0
        %1698 = vmatpush1.msra.mxu0 0.0
        %1699 = vmatprep.subr.mxu0 0.0
        %1700 = vmatpush1.msra.mxu0 0.0
        %1701 = vmatprep.subr.mxu0 0.0
        %1702 = vmatpush1.msra.mxu0 0.0
        %1703 = vmatprep.subr.mxu0 0.0
        %1704 = vmatpush1.msra.mxu0 0.0
        %1705 = vmatprep.subr.mxu0 0.0
        %1706 = vmatpush1.msra.mxu0 0.0
        %1707 = vmatprep.subr.mxu0 0.0
        %1708 = vmatpush1.msra.mxu0 0.0
        %1709 = vmatprep.subr.mxu0 0.0
        %1710 = vmatpush1.msra.mxu0 0.0
        %1711 = vmatprep.subr.mxu0 0.0
        %1712 = vmatpush1.msra.mxu0 0.0
        %1713 = vmatprep.subr.mxu0 0.0
        %1714 = vmatpush1.msra.mxu0 0.0
        %1715 = vmatprep.subr.mxu0 0.0
        %1716 = vmatpush1.msra.mxu0 0.0
        %1717 = vmatprep.subr.mxu0 0.0
        %1718 = vmatpush1.msra.mxu0 0.0
        %1719 = vmatprep.subr.mxu0 0.0
        %1720 = vmatpush1.msra.mxu0 0.0
        %1721 = vmatprep.subr.mxu0 0.0
        %1722 = vmatpush1.msra.mxu0 0.0
        %1723 = vmatprep.subr.mxu0 0.0
        %1724 = vmatpush1.msra.mxu0 0.0
        %1725 = vmatprep.subr.mxu0 0.0
        %1726 = vmatpush1.msra.mxu0 0.0
        %1727 = vmatprep.subr.mxu0 0.0
        %1728 = vmatpush1.msra.mxu0 0.0
        %1729 = vmatprep.subr.mxu0 0.0
        %1730 = vmatpush1.msra.mxu0 0.0
        %1731 = vmatprep.subr.mxu0 0.0
        %1732 = vmatpush1.msra.mxu0 0.0
        %1733 = vmatprep.mubr.f32.mxu0 0.0
        %1734 = vmatmul.mubr.f32.gmra.mrb[0].mxu0 %v1667
        %v1735 = vpop.f32.mrb[0].mxu0
        %v1736 = vadd.f32 %v1665, %v1735
        %v1737 = vpop.f32.mrb[0].mxu0
        %1738 = vdwg.mxu0
        %v1739 = vadd.f32 %v890, %v1736
        %v1740 = vsel %vm903, %v1739, 0.0
        %1741 = vadd.xlane.f32.xlu0 %v1740
        %v1742 = vpop.xlane.xlu0 %1741
        %v1743 = vrcp.pop 32.0
        %v1744 = vmul.f32 %v1742, %v1743
        %v1745 = vsub.f32 %v1739, %v1744
        %v1746 = vmul.f32 %v1745, %v1745
        %v1747 = vsel %vm903, %v1746, 0.0
        %1748 = vadd.xlane.f32.xlu0 %v1747
        %v1749 = vpop.xlane.xlu0 %1748
        %v1750 = vmul.f32 %v1749, %v1743
        %v1751 = vadd.f32 %v1750, 1e-05
        %v1752 = vrsqrt.pop %v1751
        %v1753 = vmul.f32 %v1745, %v1752
        %v1754 = vlaneseq
        %v1755 = vshrl.u32 %v1754, 7
        %v1756 = vsub.s32 1, %v1755
        %v1757 = vrot.slane %v891, %v1756
        %v1758 = vmul.f32 %v1753, %v1757
        %v1759 = vlaneseq
        %v1760 = vshrl.u32 %v1759, 7
        %v1761 = vsub.s32 2, %v1760
        %v1762 = vrot.slane %v891, %v1761
        %v1763 = vadd.f32 %v1758, %v1762
        %v1764 = vld [vmem:[%s11] sm:$0xff]
        %v1765 = vld [vmem:[%s11 + $0x8] sm:$0xff]
        %v1766 = vld [vmem:[%s11 + $0x10] sm:$0xff]
        %v1767 = vld [vmem:[%s11 + $0x18] sm:$0xff]
        %v1768 = vld [vmem:[%s12] sm:$0x1]
        %v1770 = vlaneseq
        %v1771 = vshrl.u32 %v1770, 7
        %v1772 = vsub.s32 0, %v1771
        %v1773 = vrot.slane %v1768, %v1772
        %v1776 = vsel %vm903, %v1763, 0
        %1778 = vmatprep.subr.mxu0 0.0
        %1779 = vmatpush1.msra.mxu0 %v1764
        %1780 = vmatprep.subr.mxu0 0.0
        %1781 = vmatpush1.msra.mxu0 %v1765
        %1782 = vmatprep.subr.mxu0 0.0
        %1783 = vmatpush1.msra.mxu0 %v1766
        %1784 = vmatprep.subr.mxu0 0.0
        %1785 = vmatpush1.msra.mxu0 %v1767
        %1786 = vmatprep.subr.mxu0 0.0
        %1787 = vmatpush1.msra.mxu0 0.0
        %1788 = vmatprep.subr.mxu0 0.0
        %1789 = vmatpush1.msra.mxu0 0.0
        %1790 = vmatprep.subr.mxu0 0.0
        %1791 = vmatpush1.msra.mxu0 0.0
        %1792 = vmatprep.subr.mxu0 0.0
        %1793 = vmatpush1.msra.mxu0 0.0
        %1794 = vmatprep.subr.mxu0 0.0
        %1795 = vmatpush1.msra.mxu0 0.0
        %1796 = vmatprep.subr.mxu0 0.0
        %1797 = vmatpush1.msra.mxu0 0.0
        %1798 = vmatprep.subr.mxu0 0.0
        %1799 = vmatpush1.msra.mxu0 0.0
        %1800 = vmatprep.subr.mxu0 0.0
        %1801 = vmatpush1.msra.mxu0 0.0
        %1802 = vmatprep.subr.mxu0 0.0
        %1803 = vmatpush1.msra.mxu0 0.0
        %1804 = vmatprep.subr.mxu0 0.0
        %1805 = vmatpush1.msra.mxu0 0.0
        %1806 = vmatprep.subr.mxu0 0.0
        %1807 = vmatpush1.msra.mxu0 0.0
        %1808 = vmatprep.subr.mxu0 0.0
        %1809 = vmatpush1.msra.mxu0 0.0
        %1810 = vmatprep.subr.mxu0 0.0
        %1811 = vmatpush1.msra.mxu0 0.0
        %1812 = vmatprep.subr.mxu0 0.0
        %1813 = vmatpush1.msra.mxu0 0.0
        %1814 = vmatprep.subr.mxu0 0.0
        %1815 = vmatpush1.msra.mxu0 0.0
        %1816 = vmatprep.subr.mxu0 0.0
        %1817 = vmatpush1.msra.mxu0 0.0
        %1818 = vmatprep.subr.mxu0 0.0
        %1819 = vmatpush1.msra.mxu0 0.0
        %1820 = vmatprep.subr.mxu0 0.0
        %1821 = vmatpush1.msra.mxu0 0.0
        %1822 = vmatprep.subr.mxu0 0.0
        %1823 = vmatpush1.msra.mxu0 0.0
        %1824 = vmatprep.subr.mxu0 0.0
        %1825 = vmatpush1.msra.mxu0 0.0
        %1826 = vmatprep.subr.mxu0 0.0
        %1827 = vmatpush1.msra.mxu0 0.0
        %1828 = vmatprep.subr.mxu0 0.0
        %1829 = vmatpush1.msra.mxu0 0.0
        %1830 = vmatprep.subr.mxu0 0.0
        %1831 = vmatpush1.msra.mxu0 0.0
        %1832 = vmatprep.subr.mxu0 0.0
        %1833 = vmatpush1.msra.mxu0 0.0
        %1834 = vmatprep.subr.mxu0 0.0
        %1835 = vmatpush1.msra.mxu0 0.0
        %1836 = vmatprep.subr.mxu0 0.0
        %1837 = vmatpush1.msra.mxu0 0.0
        %1838 = vmatprep.subr.mxu0 0.0
        %1839 = vmatpush1.msra.mxu0 0.0
        %1840 = vmatprep.subr.mxu0 0.0
        %1841 = vmatpush1.msra.mxu0 0.0
        %1842 = vmatprep.mubr.f32.mxu0 0.0
        %1843 = vmatmul.mubr.f32.gmra.mrb[0].mxu0 %v1776
        %v1844 = vpop.f32.mrb[0].mxu0
        %v1845 = vadd.f32 %v1773, %v1844
        %v1846 = vpop.f32.mrb[0].mxu0
        %1847 = vdwg.mxu0
        %v1848 = vmax.f32 %v1845, 0.0
        %v1849 = vld [vmem:[%s13] sm:$0xff]
        %v1850 = vld [vmem:[%s13 + $0x8] sm:$0xff]
        %v1851 = vld [vmem:[%s13 + $0x10] sm:$0xff]
        %v1852 = vld [vmem:[%s13 + $0x18] sm:$0xff]
        %v1853 = vld [vmem:[%s13 + $0x20] sm:$0xff]
        %v1854 = vld [vmem:[%s13 + $0x28] sm:$0xff]
        %v1855 = vld [vmem:[%s13 + $0x30] sm:$0xff]
        %v1856 = vld [vmem:[%s13 + $0x38] sm:$0xff]
        %v1857 = vlaneseq
        %v1858 = vshrl.u32 %v1857, 7
        %v1859 = vsub.s32 3, %v1858
        %v1860 = vrot.slane %v891, %v1859
        %vm1861 = vcmask 523264
        %v1863 = vsel %vm1861, %v1848, 0
        %1865 = vmatprep.subr.mxu0 0.0
        %1866 = vmatpush1.msra.mxu0 %v1849
        %1867 = vmatprep.subr.mxu0 0.0
        %1868 = vmatpush1.msra.mxu0 %v1850
        %1869 = vmatprep.subr.mxu0 0.0
        %1870 = vmatpush1.msra.mxu0 %v1851
        %1871 = vmatprep.subr.mxu0 0.0
        %1872 = vmatpush1.msra.mxu0 %v1852
        %1873 = vmatprep.subr.mxu0 0.0
        %1874 = vmatpush1.msra.mxu0 %v1853
        %1875 = vmatprep.subr.mxu0 0.0
        %1876 = vmatpush1.msra.mxu0 %v1854
        %1877 = vmatprep.subr.mxu0 0.0
        %1878 = vmatpush1.msra.mxu0 %v1855
        %1879 = vmatprep.subr.mxu0 0.0
        %1880 = vmatpush1.msra.mxu0 %v1856
        %1881 = vmatprep.subr.mxu0 0.0
        %1882 = vmatpush1.msra.mxu0 0.0
        %1883 = vmatprep.subr.mxu0 0.0
        %1884 = vmatpush1.msra.mxu0 0.0
        %1885 = vmatprep.subr.mxu0 0.0
        %1886 = vmatpush1.msra.mxu0 0.0
        %1887 = vmatprep.subr.mxu0 0.0
        %1888 = vmatpush1.msra.mxu0 0.0
        %1889 = vmatprep.subr.mxu0 0.0
        %1890 = vmatpush1.msra.mxu0 0.0
        %1891 = vmatprep.subr.mxu0 0.0
        %1892 = vmatpush1.msra.mxu0 0.0
        %1893 = vmatprep.subr.mxu0 0.0
        %1894 = vmatpush1.msra.mxu0 0.0
        %1895 = vmatprep.subr.mxu0 0.0
        %1896 = vmatpush1.msra.mxu0 0.0
        %1897 = vmatprep.subr.mxu0 0.0
        %1898 = vmatpush1.msra.mxu0 0.0
        %1899 = vmatprep.subr.mxu0 0.0
        %1900 = vmatpush1.msra.mxu0 0.0
        %1901 = vmatprep.subr.mxu0 0.0
        %1902 = vmatpush1.msra.mxu0 0.0
        %1903 = vmatprep.subr.mxu0 0.0
        %1904 = vmatpush1.msra.mxu0 0.0
        %1905 = vmatprep.subr.mxu0 0.0
        %1906 = vmatpush1.msra.mxu0 0.0
        %1907 = vmatprep.subr.mxu0 0.0
        %1908 = vmatpush1.msra.mxu0 0.0
        %1909 = vmatprep.subr.mxu0 0.0
        %1910 = vmatpush1.msra.mxu0 0.0
        %1911 = vmatprep.subr.mxu0 0.0
        %1912 = vmatpush1.msra.mxu0 0.0
        %1913 = vmatprep.subr.mxu0 0.0
        %1914 = vmatpush1.msra.mxu0 0.0
        %1915 = vmatprep.subr.mxu0 0.0
        %1916 = vmatpush1.msra.mxu0 0.0
        %1917 = vmatprep.subr.mxu0 0.0
        %1918 = vmatpush1.msra.mxu0 0.0
        %1919 = vmatprep.subr.mxu0 0.0
        %1920 = vmatpush1.msra.mxu0 0.0
        %1921 = vmatprep.subr.mxu0 0.0
        %1922 = vmatpush1.msra.mxu0 0.0
        %1923 = vmatprep.subr.mxu0 0.0
        %1924 = vmatpush1.msra.mxu0 0.0
        %1925 = vmatprep.subr.mxu0 0.0
        %1926 = vmatpush1.msra.mxu0 0.0
        %1927 = vmatprep.subr.mxu0 0.0
        %1928 = vmatpush1.msra.mxu0 0.0
        %1929 = vmatprep.mubr.f32.mxu0 0.0
        %1930 = vmatmul.mubr.f32.gmra.mrb[0].mxu0 %v1863
        %v1931 = vpop.f32.mrb[0].mxu0
        %v1932 = vadd.f32 %v1860, %v1931
        %v1933 = vpop.f32.mrb[0].mxu0
        %1934 = vdwg.mxu0
        %v1935 = vadd.f32 %v1763, %v1932
        %v1936 = vsel %vm903, %v1935, 0.0
        %1937 = vadd.xlane.f32.xlu0 %v1936
        %v1938 = vpop.xlane.xlu0 %1937
        %v1939 = vmul.f32 %v1938, %v1743
        %v1940 = vsub.f32 %v1935, %v1939
        %v1941 = vmul.f32 %v1940, %v1940
        %v1942 = vsel %vm903, %v1941, 0.0
        %1943 = vadd.xlane.f32.xlu0 %v1942
        %v1944 = vpop.xlane.xlu0 %1943
        %v1945 = vmul.f32 %v1944, %v1743
        %v1946 = vadd.f32 %v1945, 1e-05
        %v1947 = vrsqrt.pop %v1946
        %v1948 = vmul.f32 %v1940, %v1947
        %v1949 = vlaneseq
        %v1950 = vshrl.u32 %v1949, 7
        %v1951 = vsub.s32 4, %v1950
        %v1952 = vrot.slane %v891, %v1951
        %v1953 = vmul.f32 %v1948, %v1952
        %v1954 = vlaneseq
        %v1955 = vshrl.u32 %v1954, 7
        %v1956 = vsub.s32 5, %v1955
        %v1957 = vrot.slane %v891, %v1956
        %v1958 = vadd.f32 %v1953, %v1957
        %s1959 = scalar_lea.vmem %s10, 8
        %v1960 = vld [vmem:[%s1959] sm:$0x3f]
        %s1961 = scalar_lea.vmem %s7, 32
        %v1962 = vld [vmem:[%s1961] sm:$0xff]
        %v1963 = vld [vmem:[%s1961 + $0x8] sm:$0xff]
        %v1964 = vld [vmem:[%s1961 + $0x10] sm:$0xff]
        %v1965 = vld [vmem:[%s1961 + $0x18] sm:$0xff]
        %s1966 = scalar_lea.vmem %s8, 1
        %v1967 = vld [vmem:[%s1966] sm:$0x1]
        %v1969 = vlaneseq
        %v1970 = vshrl.u32 %v1969, 7
        %v1971 = vsub.s32 0, %v1970
        %v1972 = vrot.slane %v1967, %v1971
        %v1975 = vsel %vm903, %v1958, 0
        %1977 = vmatprep.subr.mxu0 0.0
        %1978 = vmatpush1.msra.mxu0 %v1962
        %1979 = vmatprep.subr.mxu0 0.0
        %1980 = vmatpush1.msra.mxu0 %v1963
        %1981 = vmatprep.subr.mxu0 0.0
        %1982 = vmatpush1.msra.mxu0 %v1964
        %1983 = vmatprep.subr.mxu0 0.0
        %1984 = vmatpush1.msra.mxu0 %v1965
        %1985 = vmatprep.subr.mxu0 0.0
        %1986 = vmatpush1.msra.mxu0 0.0
        %1987 = vmatprep.subr.mxu0 0.0
        %1988 = vmatpush1.msra.mxu0 0.0
        %1989 = vmatprep.subr.mxu0 0.0
        %1990 = vmatpush1.msra.mxu0 0.0
        %1991 = vmatprep.subr.mxu0 0.0
        %1992 = vmatpush1.msra.mxu0 0.0
        %1993 = vmatprep.subr.mxu0 0.0
        %1994 = vmatpush1.msra.mxu0 0.0
        %1995 = vmatprep.subr.mxu0 0.0
        %1996 = vmatpush1.msra.mxu0 0.0
        %1997 = vmatprep.subr.mxu0 0.0
        %1998 = vmatpush1.msra.mxu0 0.0
        %1999 = vmatprep.subr.mxu0 0.0
        %2000 = vmatpush1.msra.mxu0 0.0
        %2001 = vmatprep.subr.mxu0 0.0
        %2002 = vmatpush1.msra.mxu0 0.0
        %2003 = vmatprep.subr.mxu0 0.0
        %2004 = vmatpush1.msra.mxu0 0.0
        %2005 = vmatprep.subr.mxu0 0.0
        %2006 = vmatpush1.msra.mxu0 0.0
        %2007 = vmatprep.subr.mxu0 0.0
        %2008 = vmatpush1.msra.mxu0 0.0
        %2009 = vmatprep.subr.mxu0 0.0
        %2010 = vmatpush1.msra.mxu0 0.0
        %2011 = vmatprep.subr.mxu0 0.0
        %2012 = vmatpush1.msra.mxu0 0.0
        %2013 = vmatprep.subr.mxu0 0.0
        %2014 = vmatpush1.msra.mxu0 0.0
        %2015 = vmatprep.subr.mxu0 0.0
        %2016 = vmatpush1.msra.mxu0 0.0
        %2017 = vmatprep.subr.mxu0 0.0
        %2018 = vmatpush1.msra.mxu0 0.0
        %2019 = vmatprep.subr.mxu0 0.0
        %2020 = vmatpush1.msra.mxu0 0.0
        %2021 = vmatprep.subr.mxu0 0.0
        %2022 = vmatpush1.msra.mxu0 0.0
        %2023 = vmatprep.subr.mxu0 0.0
        %2024 = vmatpush1.msra.mxu0 0.0
        %2025 = vmatprep.subr.mxu0 0.0
        %2026 = vmatpush1.msra.mxu0 0.0
        %2027 = vmatprep.subr.mxu0 0.0
        %2028 = vmatpush1.msra.mxu0 0.0
        %2029 = vmatprep.subr.mxu0 0.0
        %2030 = vmatpush1.msra.mxu0 0.0
        %2031 = vmatprep.subr.mxu0 0.0
        %2032 = vmatpush1.msra.mxu0 0.0
        %2033 = vmatprep.subr.mxu0 0.0
        %2034 = vmatpush1.msra.mxu0 0.0
        %2035 = vmatprep.subr.mxu0 0.0
        %2036 = vmatpush1.msra.mxu0 0.0
        %2037 = vmatprep.subr.mxu0 0.0
        %2038 = vmatpush1.msra.mxu0 0.0
        %2039 = vmatprep.subr.mxu0 0.0
        %2040 = vmatpush1.msra.mxu0 0.0
        %2041 = vmatprep.mubr.f32.mxu0 0.0
        %2042 = vmatmul.mubr.f32.gmra.mrb[0].mxu0 %v1975
        %v2043 = vpop.f32.mrb[0].mxu0
        %v2044 = vadd.f32 %v1972, %v2043
        %v2045 = vpop.f32.mrb[0].mxu0
        %2046 = vdwg.mxu0
        %2048 = vrot.lane.b32.xlu0 %v2044, 96
        %v2049 = vpop.permute.xlu0 %2048
        %v2050 = vsel %vm980, %v2044, 0
        %v2052 = vsel %vm980, %v2049, 0
        %2054 = vmatprep.subr.mxu0 0.0
        %2055 = vmatpush1.xpose.msra.mxu0 %v2052
        %2056 = vmatprep.subr.mxu0 0.0
        %2057 = vmatpush1.xpose.msra.mxu0 0.0
        %2058 = vmatprep.subr.mxu0 0.0
        %2059 = vmatpush1.xpose.msra.mxu0 0.0
        %2060 = vmatprep.subr.mxu0 0.0
        %2061 = vmatpush1.xpose.msra.mxu0 0.0
        %2062 = vmatprep.subr.mxu0 0.0
        %2063 = vmatpush1.xpose.msra.mxu0 0.0
        %2064 = vmatprep.subr.mxu0 0.0
        %2065 = vmatpush1.xpose.msra.mxu0 0.0
        %2066 = vmatprep.subr.mxu0 0.0
        %2067 = vmatpush1.xpose.msra.mxu0 0.0
        %2068 = vmatprep.subr.mxu0 0.0
        %2069 = vmatpush1.xpose.msra.mxu0 0.0
        %2070 = vmatprep.subr.mxu0 0.0
        %2071 = vmatpush1.xpose.msra.mxu0 0.0
        %2072 = vmatprep.subr.mxu0 0.0
        %2073 = vmatpush1.xpose.msra.mxu0 0.0
        %2074 = vmatprep.subr.mxu0 0.0
        %2075 = vmatpush1.xpose.msra.mxu0 0.0
        %2076 = vmatprep.subr.mxu0 0.0
        %2077 = vmatpush1.xpose.msra.mxu0 0.0
        %2078 = vmatprep.subr.mxu0 0.0
        %2079 = vmatpush1.xpose.msra.mxu0 0.0
        %2080 = vmatprep.subr.mxu0 0.0
        %2081 = vmatpush1.xpose.msra.mxu0 0.0
        %2082 = vmatprep.subr.mxu0 0.0
        %2083 = vmatpush1.xpose.msra.mxu0 0.0
        %2084 = vmatprep.subr.mxu0 0.0
        %2085 = vmatpush1.xpose.msra.mxu0 0.0
        %2086 = vmatprep.subr.mxu0 0.0
        %2087 = vmatpush1.xpose.msra.mxu0 0.0
        %2088 = vmatprep.subr.mxu0 0.0
        %2089 = vmatpush1.xpose.msra.mxu0 0.0
        %2090 = vmatprep.subr.mxu0 0.0
        %2091 = vmatpush1.xpose.msra.mxu0 0.0
        %2092 = vmatprep.subr.mxu0 0.0
        %2093 = vmatpush1.xpose.msra.mxu0 0.0
        %2094 = vmatprep.subr.mxu0 0.0
        %2095 = vmatpush1.xpose.msra.mxu0 0.0
        %2096 = vmatprep.subr.mxu0 0.0
        %2097 = vmatpush1.xpose.msra.mxu0 0.0
        %2098 = vmatprep.subr.mxu0 0.0
        %2099 = vmatpush1.xpose.msra.mxu0 0.0
        %2100 = vmatprep.subr.mxu0 0.0
        %2101 = vmatpush1.xpose.msra.mxu0 0.0
        %2102 = vmatprep.subr.mxu0 0.0
        %2103 = vmatpush1.xpose.msra.mxu0 0.0
        %2104 = vmatprep.subr.mxu0 0.0
        %2105 = vmatpush1.xpose.msra.mxu0 0.0
        %2106 = vmatprep.subr.mxu0 0.0
        %2107 = vmatpush1.xpose.msra.mxu0 0.0
        %2108 = vmatprep.subr.mxu0 0.0
        %2109 = vmatpush1.xpose.msra.mxu0 0.0
        %2110 = vmatprep.subr.mxu0 0.0
        %2111 = vmatpush1.xpose.msra.mxu0 0.0
        %2112 = vmatprep.subr.mxu0 0.0
        %2113 = vmatpush1.xpose.msra.mxu0 0.0
        %2114 = vmatprep.subr.mxu0 0.0
        %2115 = vmatpush1.xpose.msra.mxu0 0.0
        %2116 = vmatprep.subr.mxu0 0.0
        %2117 = vmatpush1.xpose.msra.mxu0 0.0
        %2118 = vmatprep.mubr.f32.mxu0 0.0
        %2119 = vmatmul.mubr.f32.gmra.mrb[0].mxu0 %v2050
        %v2120 = vpop.f32.mrb[0].mxu0
        %v2121 = vadd.f32 0.0, %v2120
        %v2122 = vpop.f32.mrb[0].mxu0
        %2123 = vdwg.mxu0
        %v2124 = vsel %vm883, -1e+12, %v2121
        %v2125 = vsel %vm980, %v2124, -inf
        %2126 = vmax.xlane.f32.xlu0 %v2125
        %v2127 = vpop.xlane.xlu0 %2126
        %v2128 = vsub.f32 %v2124, %v2127
        %v2129 = vmul.f32 %v2128, 1.442695
        %v2130 = vpow.pop %v2129
        %v2131 = vsel %vm980, %v2130, 0.0
        %2132 = vadd.xlane.f32.xlu0 %v2131
        %v2133 = vpop.xlane.xlu0 %2132
        %v2134 = vrcp.pop %v2133
        %v2135 = vmul.f32 %v2130, %v2134
        %2136 = vrot.lane.b32.xlu0 %v2044, 64
        %v2137 = vpop.permute.xlu0 %2136
        %v2140 = vsel %vm980, %v2135, 0
        %2142 = vmatprep.subr.mxu0 0.0
        %2143 = vmatpush1.msra.mxu0 %v2137
        %2144 = vmatprep.subr.mxu0 0.0
        %2145 = vmatpush1.msra.mxu0 0.0
        %2146 = vmatprep.subr.mxu0 0.0
        %2147 = vmatpush1.msra.mxu0 0.0
        %2148 = vmatprep.subr.mxu0 0.0
        %2149 = vmatpush1.msra.mxu0 0.0
        %2150 = vmatprep.subr.mxu0 0.0
        %2151 = vmatpush1.msra.mxu0 0.0
        %2152 = vmatprep.subr.mxu0 0.0
        %2153 = vmatpush1.msra.mxu0 0.0
        %2154 = vmatprep.subr.mxu0 0.0
        %2155 = vmatpush1.msra.mxu0 0.0
        %2156 = vmatprep.subr.mxu0 0.0
        %2157 = vmatpush1.msra.mxu0 0.0
        %2158 = vmatprep.subr.mxu0 0.0
        %2159 = vmatpush1.msra.mxu0 0.0
        %2160 = vmatprep.subr.mxu0 0.0
        %2161 = vmatpush1.msra.mxu0 0.0
        %2162 = vmatprep.subr.mxu0 0.0
        %2163 = vmatpush1.msra.mxu0 0.0
        %2164 = vmatprep.subr.mxu0 0.0
        %2165 = vmatpush1.msra.mxu0 0.0
        %2166 = vmatprep.subr.mxu0 0.0
        %2167 = vmatpush1.msra.mxu0 0.0
        %2168 = vmatprep.subr.mxu0 0.0
        %2169 = vmatpush1.msra.mxu0 0.0
        %2170 = vmatprep.subr.mxu0 0.0
        %2171 = vmatpush1.msra.mxu0 0.0
        %2172 = vmatprep.subr.mxu0 0.0
        %2173 = vmatpush1.msra.mxu0 0.0
        %2174 = vmatprep.subr.mxu0 0.0
        %2175 = vmatpush1.msra.mxu0 0.0
        %2176 = vmatprep.subr.mxu0 0.0
        %2177 = vmatpush1.msra.mxu0 0.0
        %2178 = vmatprep.subr.mxu0 0.0
        %2179 = vmatpush1.msra.mxu0 0.0
        %2180 = vmatprep.subr.mxu0 0.0
        %2181 = vmatpush1.msra.mxu0 0.0
        %2182 = vmatprep.subr.mxu0 0.0
        %2183 = vmatpush1.msra.mxu0 0.0
        %2184 = vmatprep.subr.mxu0 0.0
        %2185 = vmatpush1.msra.mxu0 0.0
        %2186 = vmatprep.subr.mxu0 0.0
        %2187 = vmatpush1.msra.mxu0 0.0
        %2188 = vmatprep.subr.mxu0 0.0
        %2189 = vmatpush1.msra.mxu0 0.0
        %2190 = vmatprep.subr.mxu0 0.0
        %2191 = vmatpush1.msra.mxu0 0.0
        %2192 = vmatprep.subr.mxu0 0.0
        %2193 = vmatpush1.msra.mxu0 0.0
        %2194 = vmatprep.subr.mxu0 0.0
        %2195 = vmatpush1.msra.mxu0 0.0
        %2196 = vmatprep.subr.mxu0 0.0
        %2197 = vmatpush1.msra.mxu0 0.0
        %2198 = vmatprep.subr.mxu0 0.0
        %2199 = vmatpush1.msra.mxu0 0.0
        %2200 = vmatprep.subr.mxu0 0.0
        %2201 = vmatpush1.msra.mxu0 0.0
        %2202 = vmatprep.subr.mxu0 0.0
        %2203 = vmatpush1.msra.mxu0 0.0
        %2204 = vmatprep.subr.mxu0 0.0
        %2205 = vmatpush1.msra.mxu0 0.0
        %2206 = vmatprep.mubr.f32.mxu0 0.0
        %2207 = vmatmul.mubr.f32.gmra.mrb[0].mxu0 %v2140
        %v2208 = vpop.f32.mrb[0].mxu0
        %v2209 = vadd.f32 0.0, %v2208
        %v2210 = vpop.f32.mrb[0].mxu0
        %2211 = vdwg.mxu0
        %2212 = vrot.lane.b32.xlu0 %v2044, 120
        %v2213 = vpop.permute.xlu0 %2212
        %2214 = vrot.lane.b32.xlu0 %v2044, 88
        %v2215 = vpop.permute.xlu0 %2214
        %v2216 = vsel %vm980, %v2213, 0
        %v2218 = vsel %vm980, %v2215, 0
        %2220 = vmatprep.subr.mxu0 0.0
        %2221 = vmatpush1.xpose.msra.mxu0 %v2218
        %2222 = vmatprep.subr.mxu0 0.0
        %2223 = vmatpush1.xpose.msra.mxu0 0.0
        %2224 = vmatprep.subr.mxu0 0.0
        %2225 = vmatpush1.xpose.msra.mxu0 0.0
        %2226 = vmatprep.subr.mxu0 0.0
        %2227 = vmatpush1.xpose.msra.mxu0 0.0
        %2228 = vmatprep.subr.mxu0 0.0
        %2229 = vmatpush1.xpose.msra.mxu0 0.0
        %2230 = vmatprep.subr.mxu0 0.0
        %2231 = vmatpush1.xpose.msra.mxu0 0.0
        %2232 = vmatprep.subr.mxu0 0.0
        %2233 = vmatpush1.xpose.msra.mxu0 0.0
        %2234 = vmatprep.subr.mxu0 0.0
        %2235 = vmatpush1.xpose.msra.mxu0 0.0
        %2236 = vmatprep.subr.mxu0 0.0
        %2237 = vmatpush1.xpose.msra.mxu0 0.0
        %2238 = vmatprep.subr.mxu0 0.0
        %2239 = vmatpush1.xpose.msra.mxu0 0.0
        %2240 = vmatprep.subr.mxu0 0.0
        %2241 = vmatpush1.xpose.msra.mxu0 0.0
        %2242 = vmatprep.subr.mxu0 0.0
        %2243 = vmatpush1.xpose.msra.mxu0 0.0
        %2244 = vmatprep.subr.mxu0 0.0
        %2245 = vmatpush1.xpose.msra.mxu0 0.0
        %2246 = vmatprep.subr.mxu0 0.0
        %2247 = vmatpush1.xpose.msra.mxu0 0.0
        %2248 = vmatprep.subr.mxu0 0.0
        %2249 = vmatpush1.xpose.msra.mxu0 0.0
        %2250 = vmatprep.subr.mxu0 0.0
        %2251 = vmatpush1.xpose.msra.mxu0 0.0
        %2252 = vmatprep.subr.mxu0 0.0
        %2253 = vmatpush1.xpose.msra.mxu0 0.0
        %2254 = vmatprep.subr.mxu0 0.0
        %2255 = vmatpush1.xpose.msra.mxu0 0.0
        %2256 = vmatprep.subr.mxu0 0.0
        %2257 = vmatpush1.xpose.msra.mxu0 0.0
        %2258 = vmatprep.subr.mxu0 0.0
        %2259 = vmatpush1.xpose.msra.mxu0 0.0
        %2260 = vmatprep.subr.mxu0 0.0
        %2261 = vmatpush1.xpose.msra.mxu0 0.0
        %2262 = vmatprep.subr.mxu0 0.0
        %2263 = vmatpush1.xpose.msra.mxu0 0.0
        %2264 = vmatprep.subr.mxu0 0.0
        %2265 = vmatpush1.xpose.msra.mxu0 0.0
        %2266 = vmatprep.subr.mxu0 0.0
        %2267 = vmatpush1.xpose.msra.mxu0 0.0
        %2268 = vmatprep.subr.mxu0 0.0
        %2269 = vmatpush1.xpose.msra.mxu0 0.0
        %2270 = vmatprep.subr.mxu0 0.0
        %2271 = vmatpush1.xpose.msra.mxu0 0.0
        %2272 = vmatprep.subr.mxu0 0.0
        %2273 = vmatpush1.xpose.msra.mxu0 0.0
        %2274 = vmatprep.subr.mxu0 0.0
        %2275 = vmatpush1.xpose.msra.mxu0 0.0
        %2276 = vmatprep.subr.mxu0 0.0
        %2277 = vmatpush1.xpose.msra.mxu0 0.0
        %2278 = vmatprep.subr.mxu0 0.0
        %2279 = vmatpush1.xpose.msra.mxu0 0.0
        %2280 = vmatprep.subr.mxu0 0.0
        %2281 = vmatpush1.xpose.msra.mxu0 0.0
        %2282 = vmatprep.subr.mxu0 0.0
        %2283 = vmatpush1.xpose.msra.mxu0 0.0
        %2284 = vmatprep.mubr.f32.mxu0 0.0
        %2285 = vmatmul.mubr.f32.gmra.mrb[0].mxu0 %v2216
        %v2286 = vpop.f32.mrb[0].mxu0
        %v2287 = vadd.f32 0.0, %v2286
        %v2288 = vpop.f32.mrb[0].mxu0
        %2289 = vdwg.mxu0
        %v2290 = vsel %vm883, -1e+12, %v2287
        %v2291 = vsel %vm980, %v2290, -inf
        %2292 = vmax.xlane.f32.xlu0 %v2291
        %v2293 = vpop.xlane.xlu0 %2292
        %v2294 = vsub.f32 %v2290, %v2293
        %v2295 = vmul.f32 %v2294, 1.442695
        %v2296 = vpow.pop %v2295
        %v2297 = vsel %vm980, %v2296, 0.0
        %2298 = vadd.xlane.f32.xlu0 %v2297
        %v2299 = vpop.xlane.xlu0 %2298
        %v2300 = vrcp.pop %v2299
        %v2301 = vmul.f32 %v2296, %v2300
        %2302 = vrot.lane.b32.xlu0 %v2044, 56
        %v2303 = vpop.permute.xlu0 %2302
        %v2306 = vsel %vm980, %v2301, 0
        %2308 = vmatprep.subr.mxu0 0.0
        %2309 = vmatpush1.msra.mxu0 %v2303
        %2310 = vmatprep.subr.mxu0 0.0
        %2311 = vmatpush1.msra.mxu0 0.0
        %2312 = vmatprep.subr.mxu0 0.0
        %2313 = vmatpush1.msra.mxu0 0.0
        %2314 = vmatprep.subr.mxu0 0.0
        %2315 = vmatpush1.msra.mxu0 0.0
        %2316 = vmatprep.subr.mxu0 0.0
        %2317 = vmatpush1.msra.mxu0 0.0
        %2318 = vmatprep.subr.mxu0 0.0
        %2319 = vmatpush1.msra.mxu0 0.0
        %2320 = vmatprep.subr.mxu0 0.0
        %2321 = vmatpush1.msra.mxu0 0.0
        %2322 = vmatprep.subr.mxu0 0.0
        %2323 = vmatpush1.msra.mxu0 0.0
        %2324 = vmatprep.subr.mxu0 0.0
        %2325 = vmatpush1.msra.mxu0 0.0
        %2326 = vmatprep.subr.mxu0 0.0
        %2327 = vmatpush1.msra.mxu0 0.0
        %2328 = vmatprep.subr.mxu0 0.0
        %2329 = vmatpush1.msra.mxu0 0.0
        %2330 = vmatprep.subr.mxu0 0.0
        %2331 = vmatpush1.msra.mxu0 0.0
        %2332 = vmatprep.subr.mxu0 0.0
        %2333 = vmatpush1.msra.mxu0 0.0
        %2334 = vmatprep.subr.mxu0 0.0
        %2335 = vmatpush1.msra.mxu0 0.0
        %2336 = vmatprep.subr.mxu0 0.0
        %2337 = vmatpush1.msra.mxu0 0.0
        %2338 = vmatprep.subr.mxu0 0.0
        %2339 = vmatpush1.msra.mxu0 0.0
        %2340 = vmatprep.subr.mxu0 0.0
        %2341 = vmatpush1.msra.mxu0 0.0
        %2342 = vmatprep.subr.mxu0 0.0
        %2343 = vmatpush1.msra.mxu0 0.0
        %2344 = vmatprep.subr.mxu0 0.0
        %2345 = vmatpush1.msra.mxu0 0.0
        %2346 = vmatprep.subr.mxu0 0.0
        %2347 = vmatpush1.msra.mxu0 0.0
        %2348 = vmatprep.subr.mxu0 0.0
        %2349 = vmatpush1.msra.mxu0 0.0
        %2350 = vmatprep.subr.mxu0 0.0
        %2351 = vmatpush1.msra.mxu0 0.0
        %2352 = vmatprep.subr.mxu0 0.0
        %2353 = vmatpush1.msra.mxu0 0.0
        %2354 = vmatprep.subr.mxu0 0.0
        %2355 = vmatpush1.msra.mxu0 0.0
        %2356 = vmatprep.subr.mxu0 0.0
        %2357 = vmatpush1.msra.mxu0 0.0
        %2358 = vmatprep.subr.mxu0 0.0
        %2359 = vmatpush1.msra.mxu0 0.0
        %2360 = vmatprep.subr.mxu0 0.0
        %2361 = vmatpush1.msra.mxu0 0.0
        %2362 = vmatprep.subr.mxu0 0.0
        %2363 = vmatpush1.msra.mxu0 0.0
        %2364 = vmatprep.subr.mxu0 0.0
        %2365 = vmatpush1.msra.mxu0 0.0
        %2366 = vmatprep.subr.mxu0 0.0
        %2367 = vmatpush1.msra.mxu0 0.0
        %2368 = vmatprep.subr.mxu0 0.0
        %2369 = vmatpush1.msra.mxu0 0.0
        %2370 = vmatprep.subr.mxu0 0.0
        %2371 = vmatpush1.msra.mxu0 0.0
        %2372 = vmatprep.mubr.f32.mxu0 0.0
        %2373 = vmatmul.mubr.f32.gmra.mrb[0].mxu0 %v2306
        %v2374 = vpop.f32.mrb[0].mxu0
        %v2375 = vadd.f32 0.0, %v2374
        %v2376 = vpop.f32.mrb[0].mxu0
        %2377 = vdwg.mxu0
        %2378 = vrot.lane.b32.xlu0 %v2044, 112
        %v2379 = vpop.permute.xlu0 %2378
        %2380 = vrot.lane.b32.xlu0 %v2044, 80
        %v2381 = vpop.permute.xlu0 %2380
        %v2382 = vsel %vm980, %v2379, 0
        %v2384 = vsel %vm980, %v2381, 0
        %2386 = vmatprep.subr.mxu0 0.0
        %2387 = vmatpush1.xpose.msra.mxu0 %v2384
        %2388 = vmatprep.subr.mxu0 0.0
        %2389 = vmatpush1.xpose.msra.mxu0 0.0
        %2390 = vmatprep.subr.mxu0 0.0
        %2391 = vmatpush1.xpose.msra.mxu0 0.0
        %2392 = vmatprep.subr.mxu0 0.0
        %2393 = vmatpush1.xpose.msra.mxu0 0.0
        %2394 = vmatprep.subr.mxu0 0.0
        %2395 = vmatpush1.xpose.msra.mxu0 0.0
        %2396 = vmatprep.subr.mxu0 0.0
        %2397 = vmatpush1.xpose.msra.mxu0 0.0
        %2398 = vmatprep.subr.mxu0 0.0
        %2399 = vmatpush1.xpose.msra.mxu0 0.0
        %2400 = vmatprep.subr.mxu0 0.0
        %2401 = vmatpush1.xpose.msra.mxu0 0.0
        %2402 = vmatprep.subr.mxu0 0.0
        %2403 = vmatpush1.xpose.msra.mxu0 0.0
        %2404 = vmatprep.subr.mxu0 0.0
        %2405 = vmatpush1.xpose.msra.mxu0 0.0
        %2406 = vmatprep.subr.mxu0 0.0
        %2407 = vmatpush1.xpose.msra.mxu0 0.0
        %2408 = vmatprep.subr.mxu0 0.0
        %2409 = vmatpush1.xpose.msra.mxu0 0.0
        %2410 = vmatprep.subr.mxu0 0.0
        %2411 = vmatpush1.xpose.msra.mxu0 0.0
        %2412 = vmatprep.subr.mxu0 0.0
        %2413 = vmatpush1.xpose.msra.mxu0 0.0
        %2414 = vmatprep.subr.mxu0 0.0
        %2415 = vmatpush1.xpose.msra.mxu0 0.0
        %2416 = vmatprep.subr.mxu0 0.0
        %2417 = vmatpush1.xpose.msra.mxu0 0.0
        %2418 = vmatprep.subr.mxu0 0.0
        %2419 = vmatpush1.xpose.msra.mxu0 0.0
        %2420 = vmatprep.subr.mxu0 0.0
        %2421 = vmatpush1.xpose.msra.mxu0 0.0
        %2422 = vmatprep.subr.mxu0 0.0
        %2423 = vmatpush1.xpose.msra.mxu0 0.0
        %2424 = vmatprep.subr.mxu0 0.0
        %2425 = vmatpush1.xpose.msra.mxu0 0.0
        %2426 = vmatprep.subr.mxu0 0.0
        %2427 = vmatpush1.xpose.msra.mxu0 0.0
        %2428 = vmatprep.subr.mxu0 0.0
        %2429 = vmatpush1.xpose.msra.mxu0 0.0
        %2430 = vmatprep.subr.mxu0 0.0
        %2431 = vmatpush1.xpose.msra.mxu0 0.0
        %2432 = vmatprep.subr.mxu0 0.0
        %2433 = vmatpush1.xpose.msra.mxu0 0.0
        %2434 = vmatprep.subr.mxu0 0.0
        %2435 = vmatpush1.xpose.msra.mxu0 0.0
        %2436 = vmatprep.subr.mxu0 0.0
        %2437 = vmatpush1.xpose.msra.mxu0 0.0
        %2438 = vmatprep.subr.mxu0 0.0
        %2439 = vmatpush1.xpose.msra.mxu0 0.0
        %2440 = vmatprep.subr.mxu0 0.0
        %2441 = vmatpush1.xpose.msra.mxu0 0.0
        %2442 = vmatprep.subr.mxu0 0.0
        %2443 = vmatpush1.xpose.msra.mxu0 0.0
        %2444 = vmatprep.subr.mxu0 0.0
        %2445 = vmatpush1.xpose.msra.mxu0 0.0
        %2446 = vmatprep.subr.mxu0 0.0
        %2447 = vmatpush1.xpose.msra.mxu0 0.0
        %2448 = vmatprep.subr.mxu0 0.0
        %2449 = vmatpush1.xpose.msra.mxu0 0.0
        %2450 = vmatprep.mubr.f32.mxu0 0.0
        %2451 = vmatmul.mubr.f32.gmra.mrb[0].mxu0 %v2382
        %v2452 = vpop.f32.mrb[0].mxu0
        %v2453 = vadd.f32 0.0, %v2452
        %v2454 = vpop.f32.mrb[0].mxu0
        %2455 = vdwg.mxu0
        %v2456 = vsel %vm883, -1e+12, %v2453
        %v2457 = vsel %vm980, %v2456, -inf
        %2458 = vmax.xlane.f32.xlu0 %v2457
        %v2459 = vpop.xlane.xlu0 %2458
        %v2460 = vsub.f32 %v2456, %v2459
        %v2461 = vmul.f32 %v2460, 1.442695
        %v2462 = vpow.pop %v2461
        %v2463 = vsel %vm980, %v2462, 0.0
        %2464 = vadd.xlane.f32.xlu0 %v2463
        %v2465 = vpop.xlane.xlu0 %2464
        %v2466 = vrcp.pop %v2465
        %v2467 = vmul.f32 %v2462, %v2466
        %2468 = vrot.lane.b32.xlu0 %v2044, 48
        %v2469 = vpop.permute.xlu0 %2468
        %v2472 = vsel %vm980, %v2467, 0
        %2474 = vmatprep.subr.mxu0 0.0
        %2475 = vmatpush1.msra.mxu0 %v2469
        %2476 = vmatprep.subr.mxu0 0.0
        %2477 = vmatpush1.msra.mxu0 0.0
        %2478 = vmatprep.subr.mxu0 0.0
        %2479 = vmatpush1.msra.mxu0 0.0
        %2480 = vmatprep.subr.mxu0 0.0
        %2481 = vmatpush1.msra.mxu0 0.0
        %2482 = vmatprep.subr.mxu0 0.0
        %2483 = vmatpush1.msra.mxu0 0.0
        %2484 = vmatprep.subr.mxu0 0.0
        %2485 = vmatpush1.msra.mxu0 0.0
        %2486 = vmatprep.subr.mxu0 0.0
        %2487 = vmatpush1.msra.mxu0 0.0
        %2488 = vmatprep.subr.mxu0 0.0
        %2489 = vmatpush1.msra.mxu0 0.0
        %2490 = vmatprep.subr.mxu0 0.0
        %2491 = vmatpush1.msra.mxu0 0.0
        %2492 = vmatprep.subr.mxu0 0.0
        %2493 = vmatpush1.msra.mxu0 0.0
        %2494 = vmatprep.subr.mxu0 0.0
        %2495 = vmatpush1.msra.mxu0 0.0
        %2496 = vmatprep.subr.mxu0 0.0
        %2497 = vmatpush1.msra.mxu0 0.0
        %2498 = vmatprep.subr.mxu0 0.0
        %2499 = vmatpush1.msra.mxu0 0.0
        %2500 = vmatprep.subr.mxu0 0.0
        %2501 = vmatpush1.msra.mxu0 0.0
        %2502 = vmatprep.subr.mxu0 0.0
        %2503 = vmatpush1.msra.mxu0 0.0
        %2504 = vmatprep.subr.mxu0 0.0
        %2505 = vmatpush1.msra.mxu0 0.0
        %2506 = vmatprep.subr.mxu0 0.0
        %2507 = vmatpush1.msra.mxu0 0.0
        %2508 = vmatprep.subr.mxu0 0.0
        %2509 = vmatpush1.msra.mxu0 0.0
        %2510 = vmatprep.subr.mxu0 0.0
        %2511 = vmatpush1.msra.mxu0 0.0
        %2512 = vmatprep.subr.mxu0 0.0
        %2513 = vmatpush1.msra.mxu0 0.0
        %2514 = vmatprep.subr.mxu0 0.0
        %2515 = vmatpush1.msra.mxu0 0.0
        %2516 = vmatprep.subr.mxu0 0.0
        %2517 = vmatpush1.msra.mxu0 0.0
        %2518 = vmatprep.subr.mxu0 0.0
        %2519 = vmatpush1.msra.mxu0 0.0
        %2520 = vmatprep.subr.mxu0 0.0
        %2521 = vmatpush1.msra.mxu0 0.0
        %2522 = vmatprep.subr.mxu0 0.0
        %2523 = vmatpush1.msra.mxu0 0.0
        %2524 = vmatprep.subr.mxu0 0.0
        %2525 = vmatpush1.msra.mxu0 0.0
        %2526 = vmatprep.subr.mxu0 0.0
        %2527 = vmatpush1.msra.mxu0 0.0
        %2528 = vmatprep.subr.mxu0 0.0
        %2529 = vmatpush1.msra.mxu0 0.0
        %2530 = vmatprep.subr.mxu0 0.0
        %2531 = vmatpush1.msra.mxu0 0.0
        %2532 = vmatprep.subr.mxu0 0.0
        %2533 = vmatpush1.msra.mxu0 0.0
        %2534 = vmatprep.subr.mxu0 0.0
        %2535 = vmatpush1.msra.mxu0 0.0
        %2536 = vmatprep.subr.mxu0 0.0
        %2537 = vmatpush1.msra.mxu0 0.0
        %2538 = vmatprep.mubr.f32.mxu0 0.0
        %2539 = vmatmul.mubr.f32.gmra.mrb[0].mxu0 %v2472
        %v2540 = vpop.f32.mrb[0].mxu0
        %v2541 = vadd.f32 0.0, %v2540
        %v2542 = vpop.f32.mrb[0].mxu0
        %2543 = vdwg.mxu0
        %2544 = vrot.lane.b32.xlu0 %v2044, 104
        %v2545 = vpop.permute.xlu0 %2544
        %2546 = vrot.lane.b32.xlu0 %v2044, 72
        %v2547 = vpop.permute.xlu0 %2546
        %v2548 = vsel %vm980, %v2545, 0
        %v2550 = vsel %vm980, %v2547, 0
        %2552 = vmatprep.subr.mxu0 0.0
        %2553 = vmatpush1.xpose.msra.mxu0 %v2550
        %2554 = vmatprep.subr.mxu0 0.0
        %2555 = vmatpush1.xpose.msra.mxu0 0.0
        %2556 = vmatprep.subr.mxu0 0.0
        %2557 = vmatpush1.xpose.msra.mxu0 0.0
        %2558 = vmatprep.subr.mxu0 0.0
        %2559 = vmatpush1.xpose.msra.mxu0 0.0
        %2560 = vmatprep.subr.mxu0 0.0
        %2561 = vmatpush1.xpose.msra.mxu0 0.0
        %2562 = vmatprep.subr.mxu0 0.0
        %2563 = vmatpush1.xpose.msra.mxu0 0.0
        %2564 = vmatprep.subr.mxu0 0.0
        %2565 = vmatpush1.xpose.msra.mxu0 0.0
        %2566 = vmatprep.subr.mxu0 0.0
        %2567 = vmatpush1.xpose.msra.mxu0 0.0
        %2568 = vmatprep.subr.mxu0 0.0
        %2569 = vmatpush1.xpose.msra.mxu0 0.0
        %2570 = vmatprep.subr.mxu0 0.0
        %2571 = vmatpush1.xpose.msra.mxu0 0.0
        %2572 = vmatprep.subr.mxu0 0.0
        %2573 = vmatpush1.xpose.msra.mxu0 0.0
        %2574 = vmatprep.subr.mxu0 0.0
        %2575 = vmatpush1.xpose.msra.mxu0 0.0
        %2576 = vmatprep.subr.mxu0 0.0
        %2577 = vmatpush1.xpose.msra.mxu0 0.0
        %2578 = vmatprep.subr.mxu0 0.0
        %2579 = vmatpush1.xpose.msra.mxu0 0.0
        %2580 = vmatprep.subr.mxu0 0.0
        %2581 = vmatpush1.xpose.msra.mxu0 0.0
        %2582 = vmatprep.subr.mxu0 0.0
        %2583 = vmatpush1.xpose.msra.mxu0 0.0
        %2584 = vmatprep.subr.mxu0 0.0
        %2585 = vmatpush1.xpose.msra.mxu0 0.0
        %2586 = vmatprep.subr.mxu0 0.0
        %2587 = vmatpush1.xpose.msra.mxu0 0.0
        %2588 = vmatprep.subr.mxu0 0.0
        %2589 = vmatpush1.xpose.msra.mxu0 0.0
        %2590 = vmatprep.subr.mxu0 0.0
        %2591 = vmatpush1.xpose.msra.mxu0 0.0
        %2592 = vmatprep.subr.mxu0 0.0
        %2593 = vmatpush1.xpose.msra.mxu0 0.0
        %2594 = vmatprep.subr.mxu0 0.0
        %2595 = vmatpush1.xpose.msra.mxu0 0.0
        %2596 = vmatprep.subr.mxu0 0.0
        %2597 = vmatpush1.xpose.msra.mxu0 0.0
        %2598 = vmatprep.subr.mxu0 0.0
        %2599 = vmatpush1.xpose.msra.mxu0 0.0
        %2600 = vmatprep.subr.mxu0 0.0
        %2601 = vmatpush1.xpose.msra.mxu0 0.0
        %2602 = vmatprep.subr.mxu0 0.0
        %2603 = vmatpush1.xpose.msra.mxu0 0.0
        %2604 = vmatprep.subr.mxu0 0.0
        %2605 = vmatpush1.xpose.msra.mxu0 0.0
        %2606 = vmatprep.subr.mxu0 0.0
        %2607 = vmatpush1.xpose.msra.mxu0 0.0
        %2608 = vmatprep.subr.mxu0 0.0
        %2609 = vmatpush1.xpose.msra.mxu0 0.0
        %2610 = vmatprep.subr.mxu0 0.0
        %2611 = vmatpush1.xpose.msra.mxu0 0.0
        %2612 = vmatprep.subr.mxu0 0.0
        %2613 = vmatpush1.xpose.msra.mxu0 0.0
        %2614 = vmatprep.subr.mxu0 0.0
        %2615 = vmatpush1.xpose.msra.mxu0 0.0
        %2616 = vmatprep.mubr.f32.mxu0 0.0
        %2617 = vmatmul.mubr.f32.gmra.mrb[0].mxu0 %v2548
        %v2618 = vpop.f32.mrb[0].mxu0
        %v2619 = vadd.f32 0.0, %v2618
        %v2620 = vpop.f32.mrb[0].mxu0
        %2621 = vdwg.mxu0
        %v2622 = vsel %vm883, -1e+12, %v2619
        %v2623 = vsel %vm980, %v2622, -inf
        %2624 = vmax.xlane.f32.xlu0 %v2623
        %v2625 = vpop.xlane.xlu0 %2624
        %v2626 = vsub.f32 %v2622, %v2625
        %v2627 = vmul.f32 %v2626, 1.442695
        %v2628 = vpow.pop %v2627
        %v2629 = vsel %vm980, %v2628, 0.0
        %2630 = vadd.xlane.f32.xlu0 %v2629
        %v2631 = vpop.xlane.xlu0 %2630
        %v2632 = vrcp.pop %v2631
        %v2633 = vmul.f32 %v2628, %v2632
        %2634 = vrot.lane.b32.xlu0 %v2044, 40
        %v2635 = vpop.permute.xlu0 %2634
        %v2638 = vsel %vm980, %v2633, 0
        %2640 = vmatprep.subr.mxu0 0.0
        %2641 = vmatpush1.msra.mxu0 %v2635
        %2642 = vmatprep.subr.mxu0 0.0
        %2643 = vmatpush1.msra.mxu0 0.0
        %2644 = vmatprep.subr.mxu0 0.0
        %2645 = vmatpush1.msra.mxu0 0.0
        %2646 = vmatprep.subr.mxu0 0.0
        %2647 = vmatpush1.msra.mxu0 0.0
        %2648 = vmatprep.subr.mxu0 0.0
        %2649 = vmatpush1.msra.mxu0 0.0
        %2650 = vmatprep.subr.mxu0 0.0
        %2651 = vmatpush1.msra.mxu0 0.0
        %2652 = vmatprep.subr.mxu0 0.0
        %2653 = vmatpush1.msra.mxu0 0.0
        %2654 = vmatprep.subr.mxu0 0.0
        %2655 = vmatpush1.msra.mxu0 0.0
        %2656 = vmatprep.subr.mxu0 0.0
        %2657 = vmatpush1.msra.mxu0 0.0
        %2658 = vmatprep.subr.mxu0 0.0
        %2659 = vmatpush1.msra.mxu0 0.0
        %2660 = vmatprep.subr.mxu0 0.0
        %2661 = vmatpush1.msra.mxu0 0.0
        %2662 = vmatprep.subr.mxu0 0.0
        %2663 = vmatpush1.msra.mxu0 0.0
        %2664 = vmatprep.subr.mxu0 0.0
        %2665 = vmatpush1.msra.mxu0 0.0
        %2666 = vmatprep.subr.mxu0 0.0
        %2667 = vmatpush1.msra.mxu0 0.0
        %2668 = vmatprep.subr.mxu0 0.0
        %2669 = vmatpush1.msra.mxu0 0.0
        %2670 = vmatprep.subr.mxu0 0.0
        %2671 = vmatpush1.msra.mxu0 0.0
        %2672 = vmatprep.subr.mxu0 0.0
        %2673 = vmatpush1.msra.mxu0 0.0
        %2674 = vmatprep.subr.mxu0 0.0
        %2675 = vmatpush1.msra.mxu0 0.0
        %2676 = vmatprep.subr.mxu0 0.0
        %2677 = vmatpush1.msra.mxu0 0.0
        %2678 = vmatprep.subr.mxu0 0.0
        %2679 = vmatpush1.msra.mxu0 0.0
        %2680 = vmatprep.subr.mxu0 0.0
        %2681 = vmatpush1.msra.mxu0 0.0
        %2682 = vmatprep.subr.mxu0 0.0
        %2683 = vmatpush1.msra.mxu0 0.0
        %2684 = vmatprep.subr.mxu0 0.0
        %2685 = vmatpush1.msra.mxu0 0.0
        %2686 = vmatprep.subr.mxu0 0.0
        %2687 = vmatpush1.msra.mxu0 0.0
        %2688 = vmatprep.subr.mxu0 0.0
        %2689 = vmatpush1.msra.mxu0 0.0
        %2690 = vmatprep.subr.mxu0 0.0
        %2691 = vmatpush1.msra.mxu0 0.0
        %2692 = vmatprep.subr.mxu0 0.0
        %2693 = vmatpush1.msra.mxu0 0.0
        %2694 = vmatprep.subr.mxu0 0.0
        %2695 = vmatpush1.msra.mxu0 0.0
        %2696 = vmatprep.subr.mxu0 0.0
        %2697 = vmatpush1.msra.mxu0 0.0
        %2698 = vmatprep.subr.mxu0 0.0
        %2699 = vmatpush1.msra.mxu0 0.0
        %2700 = vmatprep.subr.mxu0 0.0
        %2701 = vmatpush1.msra.mxu0 0.0
        %2702 = vmatprep.subr.mxu0 0.0
        %2703 = vmatpush1.msra.mxu0 0.0
        %2704 = vmatprep.mubr.f32.mxu0 0.0
        %2705 = vmatmul.mubr.f32.gmra.mrb[0].mxu0 %v2638
        %v2706 = vpop.f32.mrb[0].mxu0
        %v2707 = vadd.f32 0.0, %v2706
        %v2708 = vpop.f32.mrb[0].mxu0
        %2709 = vdwg.mxu0
        %2711 = vrot.lane.b32.xlu0 %v2375, 8
        %v2712 = vpop.permute.xlu0 %2711
        %2715 = vrot.lane.b32.xlu0 %v2541, 16
        %v2716 = vpop.permute.xlu0 %2715
        %2719 = vrot.lane.b32.xlu0 %v2707, 24
        %v2720 = vpop.permute.xlu0 %2719
        %v2722 = vsel %vm980, %v2209, %v2712
        %v2723 = vsel %vm1654, %v2722, %v2716
        %v2724 = vsel %vm1656, %v2723, %v2720
        %s2725 = scalar_lea.vmem %s9, 32
        %v2726 = vld [vmem:[%s2725] sm:$0xff]
        %v2727 = vld [vmem:[%s2725 + $0x8] sm:$0xff]
        %v2728 = vld [vmem:[%s2725 + $0x10] sm:$0xff]
        %v2729 = vld [vmem:[%s2725 + $0x18] sm:$0xff]
        %v2730 = vlaneseq
        %v2731 = vshrl.u32 %v2730, 7
        %v2732 = vsub.s32 0, %v2731
        %v2733 = vrot.slane %v1960, %v2732
        %v2735 = vsel %vm903, %v2724, 0
        %2737 = vmatprep.subr.mxu0 0.0
        %2738 = vmatpush1.msra.mxu0 %v2726
        %2739 = vmatprep.subr.mxu0 0.0
        %2740 = vmatpush1.msra.mxu0 %v2727
        %2741 = vmatprep.subr.mxu0 0.0
        %2742 = vmatpush1.msra.mxu0 %v2728
        %2743 = vmatprep.subr.mxu0 0.0
        %2744 = vmatpush1.msra.mxu0 %v2729
        %2745 = vmatprep.subr.mxu0 0.0
        %2746 = vmatpush1.msra.mxu0 0.0
        %2747 = vmatprep.subr.mxu0 0.0
        %2748 = vmatpush1.msra.mxu0 0.0
        %2749 = vmatprep.subr.mxu0 0.0
        %2750 = vmatpush1.msra.mxu0 0.0
        %2751 = vmatprep.subr.mxu0 0.0
        %2752 = vmatpush1.msra.mxu0 0.0
        %2753 = vmatprep.subr.mxu0 0.0
        %2754 = vmatpush1.msra.mxu0 0.0
        %2755 = vmatprep.subr.mxu0 0.0
        %2756 = vmatpush1.msra.mxu0 0.0
        %2757 = vmatprep.subr.mxu0 0.0
        %2758 = vmatpush1.msra.mxu0 0.0
        %2759 = vmatprep.subr.mxu0 0.0
        %2760 = vmatpush1.msra.mxu0 0.0
        %2761 = vmatprep.subr.mxu0 0.0
        %2762 = vmatpush1.msra.mxu0 0.0
        %2763 = vmatprep.subr.mxu0 0.0
        %2764 = vmatpush1.msra.mxu0 0.0
        %2765 = vmatprep.subr.mxu0 0.0
        %2766 = vmatpush1.msra.mxu0 0.0
        %2767 = vmatprep.subr.mxu0 0.0
        %2768 = vmatpush1.msra.mxu0 0.0
        %2769 = vmatprep.subr.mxu0 0.0
        %2770 = vmatpush1.msra.mxu0 0.0
        %2771 = vmatprep.subr.mxu0 0.0
        %2772 = vmatpush1.msra.mxu0 0.0
        %2773 = vmatprep.subr.mxu0 0.0
        %2774 = vmatpush1.msra.mxu0 0.0
        %2775 = vmatprep.subr.mxu0 0.0
        %2776 = vmatpush1.msra.mxu0 0.0
        %2777 = vmatprep.subr.mxu0 0.0
        %2778 = vmatpush1.msra.mxu0 0.0
        %2779 = vmatprep.subr.mxu0 0.0
        %2780 = vmatpush1.msra.mxu0 0.0
        %2781 = vmatprep.subr.mxu0 0.0
        %2782 = vmatpush1.msra.mxu0 0.0
        %2783 = vmatprep.subr.mxu0 0.0
        %2784 = vmatpush1.msra.mxu0 0.0
        %2785 = vmatprep.subr.mxu0 0.0
        %2786 = vmatpush1.msra.mxu0 0.0
        %2787 = vmatprep.subr.mxu0 0.0
        %2788 = vmatpush1.msra.mxu0 0.0
        %2789 = vmatprep.subr.mxu0 0.0
        %2790 = vmatpush1.msra.mxu0 0.0
        %2791 = vmatprep.subr.mxu0 0.0
        %2792 = vmatpush1.msra.mxu0 0.0
        %2793 = vmatprep.subr.mxu0 0.0
        %2794 = vmatpush1.msra.mxu0 0.0
        %2795 = vmatprep.subr.mxu0 0.0
        %2796 = vmatpush1.msra.mxu0 0.0
        %2797 = vmatprep.subr.mxu0 0.0
        %2798 = vmatpush1.msra.mxu0 0.0
        %2799 = vmatprep.subr.mxu0 0.0
        %2800 = vmatpush1.msra.mxu0 0.0
        %2801 = vmatprep.mubr.f32.mxu0 0.0
        %2802 = vmatmul.mubr.f32.gmra.mrb[0].mxu0 %v2735
        %v2803 = vpop.f32.mrb[0].mxu0
        %v2804 = vadd.f32 %v2733, %v2803
        %v2805 = vpop.f32.mrb[0].mxu0
        %2806 = vdwg.mxu0
        %v2807 = vadd.f32 %v1958, %v2804
        %v2808 = vsel %vm903, %v2807, 0.0
        %2809 = vadd.xlane.f32.xlu0 %v2808
        %v2810 = vpop.xlane.xlu0 %2809
        %v2811 = vmul.f32 %v2810, %v1743
        %v2812 = vsub.f32 %v2807, %v2811
        %v2813 = vmul.f32 %v2812, %v2812
        %v2814 = vsel %vm903, %v2813, 0.0
        %2815 = vadd.xlane.f32.xlu0 %v2814
        %v2816 = vpop.xlane.xlu0 %2815
        %v2817 = vmul.f32 %v2816, %v1743
        %v2818 = vadd.f32 %v2817, 1e-05
        %v2819 = vrsqrt.pop %v2818
        %v2820 = vmul.f32 %v2812, %v2819
        %v2821 = vlaneseq
        %v2822 = vshrl.u32 %v2821, 7
        %v2823 = vsub.s32 1, %v2822
        %v2824 = vrot.slane %v1960, %v2823
        %v2825 = vmul.f32 %v2820, %v2824
        %v2826 = vlaneseq
        %v2827 = vshrl.u32 %v2826, 7
        %v2828 = vsub.s32 2, %v2827
        %v2829 = vrot.slane %v1960, %v2828
        %v2830 = vadd.f32 %v2825, %v2829
        %s2831 = scalar_lea.vmem %s11, 32
        %v2832 = vld [vmem:[%s2831] sm:$0xff]
        %v2833 = vld [vmem:[%s2831 + $0x8] sm:$0xff]
        %v2834 = vld [vmem:[%s2831 + $0x10] sm:$0xff]
        %v2835 = vld [vmem:[%s2831 + $0x18] sm:$0xff]
        %s2836 = scalar_lea.vmem %s12, 1
        %v2837 = vld [vmem:[%s2836] sm:$0x1]
        %v2839 = vlaneseq
        %v2840 = vshrl.u32 %v2839, 7
        %v2841 = vsub.s32 0, %v2840
        %v2842 = vrot.slane %v2837, %v2841
        %v2845 = vsel %vm903, %v2830, 0
        %2847 = vmatprep.subr.mxu0 0.0
        %2848 = vmatpush1.msra.mxu0 %v2832
        %2849 = vmatprep.subr.mxu0 0.0
        %2850 = vmatpush1.msra.mxu0 %v2833
        %2851 = vmatprep.subr.mxu0 0.0
        %2852 = vmatpush1.msra.mxu0 %v2834
        %2853 = vmatprep.subr.mxu0 0.0
        %2854 = vmatpush1.msra.mxu0 %v2835
        %2855 = vmatprep.subr.mxu0 0.0
        %2856 = vmatpush1.msra.mxu0 0.0
        %2857 = vmatprep.subr.mxu0 0.0
        %2858 = vmatpush1.msra.mxu0 0.0
        %2859 = vmatprep.subr.mxu0 0.0
        %2860 = vmatpush1.msra.mxu0 0.0
        %2861 = vmatprep.subr.mxu0 0.0
        %2862 = vmatpush1.msra.mxu0 0.0
        %2863 = vmatprep.subr.mxu0 0.0
        %2864 = vmatpush1.msra.mxu0 0.0
        %2865 = vmatprep.subr.mxu0 0.0
        %2866 = vmatpush1.msra.mxu0 0.0
        %2867 = vmatprep.subr.mxu0 0.0
        %2868 = vmatpush1.msra.mxu0 0.0
        %2869 = vmatprep.subr.mxu0 0.0
        %2870 = vmatpush1.msra.mxu0 0.0
        %2871 = vmatprep.subr.mxu0 0.0
        %2872 = vmatpush1.msra.mxu0 0.0
        %2873 = vmatprep.subr.mxu0 0.0
        %2874 = vmatpush1.msra.mxu0 0.0
        %2875 = vmatprep.subr.mxu0 0.0
        %2876 = vmatpush1.msra.mxu0 0.0
        %2877 = vmatprep.subr.mxu0 0.0
        %2878 = vmatpush1.msra.mxu0 0.0
        %2879 = vmatprep.subr.mxu0 0.0
        %2880 = vmatpush1.msra.mxu0 0.0
        %2881 = vmatprep.subr.mxu0 0.0
        %2882 = vmatpush1.msra.mxu0 0.0
        %2883 = vmatprep.subr.mxu0 0.0
        %2884 = vmatpush1.msra.mxu0 0.0
        %2885 = vmatprep.subr.mxu0 0.0
        %2886 = vmatpush1.msra.mxu0 0.0
        %2887 = vmatprep.subr.mxu0 0.0
        %2888 = vmatpush1.msra.mxu0 0.0
        %2889 = vmatprep.subr.mxu0 0.0
        %2890 = vmatpush1.msra.mxu0 0.0
        %2891 = vmatprep.subr.mxu0 0.0
        %2892 = vmatpush1.msra.mxu0 0.0
        %2893 = vmatprep.subr.mxu0 0.0
        %2894 = vmatpush1.msra.mxu0 0.0
        %2895 = vmatprep.subr.mxu0 0.0
        %2896 = vmatpush1.msra.mxu0 0.0
        %2897 = vmatprep.subr.mxu0 0.0
        %2898 = vmatpush1.msra.mxu0 0.0
        %2899 = vmatprep.subr.mxu0 0.0
        %2900 = vmatpush1.msra.mxu0 0.0
        %2901 = vmatprep.subr.mxu0 0.0
        %2902 = vmatpush1.msra.mxu0 0.0
        %2903 = vmatprep.subr.mxu0 0.0
        %2904 = vmatpush1.msra.mxu0 0.0
        %2905 = vmatprep.subr.mxu0 0.0
        %2906 = vmatpush1.msra.mxu0 0.0
        %2907 = vmatprep.subr.mxu0 0.0
        %2908 = vmatpush1.msra.mxu0 0.0
        %2909 = vmatprep.subr.mxu0 0.0
        %2910 = vmatpush1.msra.mxu0 0.0
        %2911 = vmatprep.mubr.f32.mxu0 0.0
        %2912 = vmatmul.mubr.f32.gmra.mrb[0].mxu0 %v2845
        %v2913 = vpop.f32.mrb[0].mxu0
        %v2914 = vadd.f32 %v2842, %v2913
        %v2915 = vpop.f32.mrb[0].mxu0
        %2916 = vdwg.mxu0
        %v2917 = vmax.f32 %v2914, 0.0
        %s2918 = scalar_lea.vmem %s13, 64
        %v2919 = vld [vmem:[%s2918] sm:$0xff]
        %v2920 = vld [vmem:[%s2918 + $0x8] sm:$0xff]
        %v2921 = vld [vmem:[%s2918 + $0x10] sm:$0xff]
        %v2922 = vld [vmem:[%s2918 + $0x18] sm:$0xff]
        %v2923 = vld [vmem:[%s2918 + $0x20] sm:$0xff]
        %v2924 = vld [vmem:[%s2918 + $0x28] sm:$0xff]
        %v2925 = vld [vmem:[%s2918 + $0x30] sm:$0xff]
        %v2926 = vld [vmem:[%s2918 + $0x38] sm:$0xff]
        %v2927 = vlaneseq
        %v2928 = vshrl.u32 %v2927, 7
        %v2929 = vsub.s32 3, %v2928
        %v2930 = vrot.slane %v1960, %v2929
        %v2932 = vsel %vm1861, %v2917, 0
        %2934 = vmatprep.subr.mxu0 0.0
        %2935 = vmatpush1.msra.mxu0 %v2919
        %2936 = vmatprep.subr.mxu0 0.0
        %2937 = vmatpush1.msra.mxu0 %v2920
        %2938 = vmatprep.subr.mxu0 0.0
        %2939 = vmatpush1.msra.mxu0 %v2921
        %2940 = vmatprep.subr.mxu0 0.0
        %2941 = vmatpush1.msra.mxu0 %v2922
        %2942 = vmatprep.subr.mxu0 0.0
        %2943 = vmatpush1.msra.mxu0 %v2923
        %2944 = vmatprep.subr.mxu0 0.0
        %2945 = vmatpush1.msra.mxu0 %v2924
        %2946 = vmatprep.subr.mxu0 0.0
        %2947 = vmatpush1.msra.mxu0 %v2925
        %2948 = vmatprep.subr.mxu0 0.0
        %2949 = vmatpush1.msra.mxu0 %v2926
        %2950 = vmatprep.subr.mxu0 0.0
        %2951 = vmatpush1.msra.mxu0 0.0
        %2952 = vmatprep.subr.mxu0 0.0
        %2953 = vmatpush1.msra.mxu0 0.0
        %2954 = vmatprep.subr.mxu0 0.0
        %2955 = vmatpush1.msra.mxu0 0.0
        %2956 = vmatprep.subr.mxu0 0.0
        %2957 = vmatpush1.msra.mxu0 0.0
        %2958 = vmatprep.subr.mxu0 0.0
        %2959 = vmatpush1.msra.mxu0 0.0
        %2960 = vmatprep.subr.mxu0 0.0
        %2961 = vmatpush1.msra.mxu0 0.0
        %2962 = vmatprep.subr.mxu0 0.0
        %2963 = vmatpush1.msra.mxu0 0.0
        %2964 = vmatprep.subr.mxu0 0.0
        %2965 = vmatpush1.msra.mxu0 0.0
        %2966 = vmatprep.subr.mxu0 0.0
        %2967 = vmatpush1.msra.mxu0 0.0
        %2968 = vmatprep.subr.mxu0 0.0
        %2969 = vmatpush1.msra.mxu0 0.0
        %2970 = vmatprep.subr.mxu0 0.0
        %2971 = vmatpush1.msra.mxu0 0.0
        %2972 = vmatprep.subr.mxu0 0.0
        %2973 = vmatpush1.msra.mxu0 0.0
        %2974 = vmatprep.subr.mxu0 0.0
        %2975 = vmatpush1.msra.mxu0 0.0
        %2976 = vmatprep.subr.mxu0 0.0
        %2977 = vmatpush1.msra.mxu0 0.0
        %2978 = vmatprep.subr.mxu0 0.0
        %2979 = vmatpush1.msra.mxu0 0.0
        %2980 = vmatprep.subr.mxu0 0.0
        %2981 = vmatpush1.msra.mxu0 0.0
        %2982 = vmatprep.subr.mxu0 0.0
        %2983 = vmatpush1.msra.mxu0 0.0
        %2984 = vmatprep.subr.mxu0 0.0
        %2985 = vmatpush1.msra.mxu0 0.0
        %2986 = vmatprep.subr.mxu0 0.0
        %2987 = vmatpush1.msra.mxu0 0.0
        %2988 = vmatprep.subr.mxu0 0.0
        %2989 = vmatpush1.msra.mxu0 0.0
        %2990 = vmatprep.subr.mxu0 0.0
        %2991 = vmatpush1.msra.mxu0 0.0
        %2992 = vmatprep.subr.mxu0 0.0
        %2993 = vmatpush1.msra.mxu0 0.0
        %2994 = vmatprep.subr.mxu0 0.0
        %2995 = vmatpush1.msra.mxu0 0.0
        %2996 = vmatprep.subr.mxu0 0.0
        %2997 = vmatpush1.msra.mxu0 0.0
        %2998 = vmatprep.mubr.f32.mxu0 0.0
        %2999 = vmatmul.mubr.f32.gmra.mrb[0].mxu0 %v2932
        %v3000 = vpop.f32.mrb[0].mxu0
        %v3001 = vadd.f32 %v2930, %v3000
        %v3002 = vpop.f32.mrb[0].mxu0
        %3003 = vdwg.mxu0
        %v3004 = vadd.f32 %v2830, %v3001
        %v3005 = vsel %vm903, %v3004, 0.0
        %3006 = vadd.xlane.f32.xlu0 %v3005
        %v3007 = vpop.xlane.xlu0 %3006
        %v3008 = vmul.f32 %v3007, %v1743
        %v3009 = vsub.f32 %v3004, %v3008
        %v3010 = vmul.f32 %v3009, %v3009
        %v3011 = vsel %vm903, %v3010, 0.0
        %3012 = vadd.xlane.f32.xlu0 %v3011
        %v3013 = vpop.xlane.xlu0 %3012
        %v3014 = vmul.f32 %v3013, %v1743
        %v3015 = vadd.f32 %v3014, 1e-05
        %v3016 = vrsqrt.pop %v3015
        %v3017 = vmul.f32 %v3009, %v3016
        %v3018 = vlaneseq
        %v3019 = vshrl.u32 %v3018, 7
        %v3020 = vsub.s32 4, %v3019
        %v3021 = vrot.slane %v1960, %v3020
        %v3022 = vmul.f32 %v3017, %v3021
        %v3023 = vlaneseq
        %v3024 = vshrl.u32 %v3023, 7
        %v3025 = vsub.s32 5, %v3024
        %v3026 = vrot.slane %v1960, %v3025
        %v3027 = vadd.f32 %v3022, %v3026
        %v3028 = vld [vmem:[%s869] sm:$0xff]
        %v3029 = vld [vmem:[%s3] sm:$0xff]
        %v3030 = vadd.f32 %v3028, %v3029
        %v3031 = vld [vmem:[%s24] sm:$0xff]
        %v3032 = vld [vmem:[%s24 + $0x8] sm:$0x3]
        %v3033 = vld [vmem:[%s14] sm:$0xff]
        %v3034 = vld [vmem:[%s14 + $0x8] sm:$0xff]
        %v3035 = vld [vmem:[%s14 + $0x10] sm:$0xff]
        %v3036 = vld [vmem:[%s14 + $0x18] sm:$0xff]
        %v3037 = vld [vmem:[%s15] sm:$0x1]
        %v3039 = vlaneseq
        %v3040 = vshrl.u32 %v3039, 7
        %v3041 = vsub.s32 0, %v3040
        %v3042 = vrot.slane %v3037, %v3041
        %v3045 = vsel %vm903, %v3030, 0
        %3047 = vmatprep.subr.mxu0 0.0
        %3048 = vmatpush1.msra.mxu0 %v3033
        %3049 = vmatprep.subr.mxu0 0.0
        %3050 = vmatpush1.msra.mxu0 %v3034
        %3051 = vmatprep.subr.mxu0 0.0
        %3052 = vmatpush1.msra.mxu0 %v3035
        %3053 = vmatprep.subr.mxu0 0.0
        %3054 = vmatpush1.msra.mxu0 %v3036
        %3055 = vmatprep.subr.mxu0 0.0
        %3056 = vmatpush1.msra.mxu0 0.0
        %3057 = vmatprep.subr.mxu0 0.0
        %3058 = vmatpush1.msra.mxu0 0.0
        %3059 = vmatprep.subr.mxu0 0.0
        %3060 = vmatpush1.msra.mxu0 0.0
        %3061 = vmatprep.subr.mxu0 0.0
        %3062 = vmatpush1.msra.mxu0 0.0
        %3063 = vmatprep.subr.mxu0 0.0
        %3064 = vmatpush1.msra.mxu0 0.0
        %3065 = vmatprep.subr.mxu0 0.0
        %3066 = vmatpush1.msra.mxu0 0.0
        %3067 = vmatprep.subr.mxu0 0.0
        %3068 = vmatpush1.msra.mxu0 0.0
        %3069 = vmatprep.subr.mxu0 0.0
        %3070 = vmatpush1.msra.mxu0 0.0
        %3071 = vmatprep.subr.mxu0 0.0
        %3072 = vmatpush1.msra.mxu0 0.0
        %3073 = vmatprep.subr.mxu0 0.0
        %3074 = vmatpush1.msra.mxu0 0.0
        %3075 = vmatprep.subr.mxu0 0.0
        %3076 = vmatpush1.msra.mxu0 0.0
        %3077 = vmatprep.subr.mxu0 0.0
        %3078 = vmatpush1.msra.mxu0 0.0
        %3079 = vmatprep.subr.mxu0 0.0
        %3080 = vmatpush1.msra.mxu0 0.0
        %3081 = vmatprep.subr.mxu0 0.0
        %3082 = vmatpush1.msra.mxu0 0.0
        %3083 = vmatprep.subr.mxu0 0.0
        %3084 = vmatpush1.msra.mxu0 0.0
        %3085 = vmatprep.subr.mxu0 0.0
        %3086 = vmatpush1.msra.mxu0 0.0
        %3087 = vmatprep.subr.mxu0 0.0
        %3088 = vmatpush1.msra.mxu0 0.0
        %3089 = vmatprep.subr.mxu0 0.0
        %3090 = vmatpush1.msra.mxu0 0.0
        %3091 = vmatprep.subr.mxu0 0.0
        %3092 = vmatpush1.msra.mxu0 0.0
        %3093 = vmatprep.subr.mxu0 0.0
        %3094 = vmatpush1.msra.mxu0 0.0
        %3095 = vmatprep.subr.mxu0 0.0
        %3096 = vmatpush1.msra.mxu0 0.0
        %3097 = vmatprep.subr.mxu0 0.0
        %3098 = vmatpush1.msra.mxu0 0.0
        %3099 = vmatprep.subr.mxu0 0.0
        %3100 = vmatpush1.msra.mxu0 0.0
        %3101 = vmatprep.subr.mxu0 0.0
        %3102 = vmatpush1.msra.mxu0 0.0
        %3103 = vmatprep.subr.mxu0 0.0
        %3104 = vmatpush1.msra.mxu0 0.0
        %3105 = vmatprep.subr.mxu0 0.0
        %3106 = vmatpush1.msra.mxu0 0.0
        %3107 = vmatprep.subr.mxu0 0.0
        %3108 = vmatpush1.msra.mxu0 0.0
        %3109 = vmatprep.subr.mxu0 0.0
        %3110 = vmatpush1.msra.mxu0 0.0
        %3111 = vmatprep.mubr.f32.mxu0 0.0
        %3112 = vmatmul.mubr.f32.gmra.mrb[0].mxu0 %v3045
        %v3113 = vpop.f32.mrb[0].mxu0
        %v3114 = vadd.f32 %v3042, %v3113
        %v3115 = vpop.f32.mrb[0].mxu0
        %3116 = vdwg.mxu0
        %3118 = vrot.lane.b32.xlu0 %v3114, 96
        %v3119 = vpop.permute.xlu0 %3118
        %v3120 = vsel %vm980, %v3114, 0
        %v3122 = vsel %vm980, %v3119, 0
        %3124 = vmatprep.subr.mxu0 0.0
        %3125 = vmatpush1.xpose.msra.mxu0 %v3122
        %3126 = vmatprep.subr.mxu0 0.0
        %3127 = vmatpush1.xpose.msra.mxu0 0.0
        %3128 = vmatprep.subr.mxu0 0.0
        %3129 = vmatpush1.xpose.msra.mxu0 0.0
        %3130 = vmatprep.subr.mxu0 0.0
        %3131 = vmatpush1.xpose.msra.mxu0 0.0
        %3132 = vmatprep.subr.mxu0 0.0
        %3133 = vmatpush1.xpose.msra.mxu0 0.0
        %3134 = vmatprep.subr.mxu0 0.0
        %3135 = vmatpush1.xpose.msra.mxu0 0.0
        %3136 = vmatprep.subr.mxu0 0.0
        %3137 = vmatpush1.xpose.msra.mxu0 0.0
        %3138 = vmatprep.subr.mxu0 0.0
        %3139 = vmatpush1.xpose.msra.mxu0 0.0
        %3140 = vmatprep.subr.mxu0 0.0
        %3141 = vmatpush1.xpose.msra.mxu0 0.0
        %3142 = vmatprep.subr.mxu0 0.0
        %3143 = vmatpush1.xpose.msra.mxu0 0.0
        %3144 = vmatprep.subr.mxu0 0.0
        %3145 = vmatpush1.xpose.msra.mxu0 0.0
        %3146 = vmatprep.subr.mxu0 0.0
        %3147 = vmatpush1.xpose.msra.mxu0 0.0
        %3148 = vmatprep.subr.mxu0 0.0
        %3149 = vmatpush1.xpose.msra.mxu0 0.0
        %3150 = vmatprep.subr.mxu0 0.0
        %3151 = vmatpush1.xpose.msra.mxu0 0.0
        %3152 = vmatprep.subr.mxu0 0.0
        %3153 = vmatpush1.xpose.msra.mxu0 0.0
        %3154 = vmatprep.subr.mxu0 0.0
        %3155 = vmatpush1.xpose.msra.mxu0 0.0
        %3156 = vmatprep.subr.mxu0 0.0
        %3157 = vmatpush1.xpose.msra.mxu0 0.0
        %3158 = vmatprep.subr.mxu0 0.0
        %3159 = vmatpush1.xpose.msra.mxu0 0.0
        %3160 = vmatprep.subr.mxu0 0.0
        %3161 = vmatpush1.xpose.msra.mxu0 0.0
        %3162 = vmatprep.subr.mxu0 0.0
        %3163 = vmatpush1.xpose.msra.mxu0 0.0
        %3164 = vmatprep.subr.mxu0 0.0
        %3165 = vmatpush1.xpose.msra.mxu0 0.0
        %3166 = vmatprep.subr.mxu0 0.0
        %3167 = vmatpush1.xpose.msra.mxu0 0.0
        %3168 = vmatprep.subr.mxu0 0.0
        %3169 = vmatpush1.xpose.msra.mxu0 0.0
        %3170 = vmatprep.subr.mxu0 0.0
        %3171 = vmatpush1.xpose.msra.mxu0 0.0
        %3172 = vmatprep.subr.mxu0 0.0
        %3173 = vmatpush1.xpose.msra.mxu0 0.0
        %3174 = vmatprep.subr.mxu0 0.0
        %3175 = vmatpush1.xpose.msra.mxu0 0.0
        %3176 = vmatprep.subr.mxu0 0.0
        %3177 = vmatpush1.xpose.msra.mxu0 0.0
        %3178 = vmatprep.subr.mxu0 0.0
        %3179 = vmatpush1.xpose.msra.mxu0 0.0
        %3180 = vmatprep.subr.mxu0 0.0
        %3181 = vmatpush1.xpose.msra.mxu0 0.0
        %3182 = vmatprep.subr.mxu0 0.0
        %3183 = vmatpush1.xpose.msra.mxu0 0.0
        %3184 = vmatprep.subr.mxu0 0.0
        %3185 = vmatpush1.xpose.msra.mxu0 0.0
        %3186 = vmatprep.subr.mxu0 0.0
        %3187 = vmatpush1.xpose.msra.mxu0 0.0
        %3188 = vmatprep.mubr.f32.mxu0 0.0
        %3189 = vmatmul.mubr.f32.gmra.mrb[0].mxu0 %v3120
        %v3190 = vpop.f32.mrb[0].mxu0
        %v3191 = vadd.f32 0.0, %v3190
        %v3192 = vpop.f32.mrb[0].mxu0
        %3193 = vdwg.mxu0
        %v3194 = vsel %vm885, -1e+12, %v3191
        %v3195 = vsel %vm980, %v3194, -inf
        %3196 = vmax.xlane.f32.xlu0 %v3195
        %v3197 = vpop.xlane.xlu0 %3196
        %v3198 = vsub.f32 %v3194, %v3197
        %v3199 = vmul.f32 %v3198, 1.442695
        %v3200 = vpow.pop %v3199
        %v3201 = vsel %vm980, %v3200, 0.0
        %3202 = vadd.xlane.f32.xlu0 %v3201
        %v3203 = vpop.xlane.xlu0 %3202
        %v3204 = vrcp.pop %v3203
        %v3205 = vmul.f32 %v3200, %v3204
        %3206 = vrot.lane.b32.xlu0 %v3114, 64
        %v3207 = vpop.permute.xlu0 %3206
        %v3210 = vsel %vm980, %v3205, 0
        %3212 = vmatprep.subr.mxu0 0.0
        %3213 = vmatpush1.msra.mxu0 %v3207
        %3214 = vmatprep.subr.mxu0 0.0
        %3215 = vmatpush1.msra.mxu0 0.0
        %3216 = vmatprep.subr.mxu0 0.0
        %3217 = vmatpush1.msra.mxu0 0.0
        %3218 = vmatprep.subr.mxu0 0.0
        %3219 = vmatpush1.msra.mxu0 0.0
        %3220 = vmatprep.subr.mxu0 0.0
        %3221 = vmatpush1.msra.mxu0 0.0
        %3222 = vmatprep.subr.mxu0 0.0
        %3223 = vmatpush1.msra.mxu0 0.0
        %3224 = vmatprep.subr.mxu0 0.0
        %3225 = vmatpush1.msra.mxu0 0.0
        %3226 = vmatprep.subr.mxu0 0.0
        %3227 = vmatpush1.msra.mxu0 0.0
        %3228 = vmatprep.subr.mxu0 0.0
        %3229 = vmatpush1.msra.mxu0 0.0
        %3230 = vmatprep.subr.mxu0 0.0
        %3231 = vmatpush1.msra.mxu0 0.0
        %3232 = vmatprep.subr.mxu0 0.0
        %3233 = vmatpush1.msra.mxu0 0.0
        %3234 = vmatprep.subr.mxu0 0.0
        %3235 = vmatpush1.msra.mxu0 0.0
        %3236 = vmatprep.subr.mxu0 0.0
        %3237 = vmatpush1.msra.mxu0 0.0
        %3238 = vmatprep.subr.mxu0 0.0
        %3239 = vmatpush1.msra.mxu0 0.0
        %3240 = vmatprep.subr.mxu0 0.0
        %3241 = vmatpush1.msra.mxu0 0.0
        %3242 = vmatprep.subr.mxu0 0.0
        %3243 = vmatpush1.msra.mxu0 0.0
        %3244 = vmatprep.subr.mxu0 0.0
        %3245 = vmatpush1.msra.mxu0 0.0
        %3246 = vmatprep.subr.mxu0 0.0
        %3247 = vmatpush1.msra.mxu0 0.0
        %3248 = vmatprep.subr.mxu0 0.0
        %3249 = vmatpush1.msra.mxu0 0.0
        %3250 = vmatprep.subr.mxu0 0.0
        %3251 = vmatpush1.msra.mxu0 0.0
        %3252 = vmatprep.subr.mxu0 0.0
        %3253 = vmatpush1.msra.mxu0 0.0
        %3254 = vmatprep.subr.mxu0 0.0
        %3255 = vmatpush1.msra.mxu0 0.0
        %3256 = vmatprep.subr.mxu0 0.0
        %3257 = vmatpush1.msra.mxu0 0.0
        %3258 = vmatprep.subr.mxu0 0.0
        %3259 = vmatpush1.msra.mxu0 0.0
        %3260 = vmatprep.subr.mxu0 0.0
        %3261 = vmatpush1.msra.mxu0 0.0
        %3262 = vmatprep.subr.mxu0 0.0
        %3263 = vmatpush1.msra.mxu0 0.0
        %3264 = vmatprep.subr.mxu0 0.0
        %3265 = vmatpush1.msra.mxu0 0.0
        %3266 = vmatprep.subr.mxu0 0.0
        %3267 = vmatpush1.msra.mxu0 0.0
        %3268 = vmatprep.subr.mxu0 0.0
        %3269 = vmatpush1.msra.mxu0 0.0
        %3270 = vmatprep.subr.mxu0 0.0
        %3271 = vmatpush1.msra.mxu0 0.0
        %3272 = vmatprep.subr.mxu0 0.0
        %3273 = vmatpush1.msra.mxu0 0.0
        %3274 = vmatprep.subr.mxu0 0.0
        %3275 = vmatpush1.msra.mxu0 0.0
        %3276 = vmatprep.mubr.f32.mxu0 0.0
        %3277 = vmatmul.mubr.f32.gmra.mrb[0].mxu0 %v3210
        %v3278 = vpop.f32.mrb[0].mxu0
        %v3279 = vadd.f32 0.0, %v3278
        %v3280 = vpop.f32.mrb[0].mxu0
        %3281 = vdwg.mxu0
        %3282 = vrot.lane.b32.xlu0 %v3114, 120
        %v3283 = vpop.permute.xlu0 %3282
        %3284 = vrot.lane.b32.xlu0 %v3114, 88
        %v3285 = vpop.permute.xlu0 %3284
        %v3286 = vsel %vm980, %v3283, 0
        %v3288 = vsel %vm980, %v3285, 0
        %3290 = vmatprep.subr.mxu0 0.0
        %3291 = vmatpush1.xpose.msra.mxu0 %v3288
        %3292 = vmatprep.subr.mxu0 0.0
        %3293 = vmatpush1.xpose.msra.mxu0 0.0
        %3294 = vmatprep.subr.mxu0 0.0
        %3295 = vmatpush1.xpose.msra.mxu0 0.0
        %3296 = vmatprep.subr.mxu0 0.0
        %3297 = vmatpush1.xpose.msra.mxu0 0.0
        %3298 = vmatprep.subr.mxu0 0.0
        %3299 = vmatpush1.xpose.msra.mxu0 0.0
        %3300 = vmatprep.subr.mxu0 0.0
        %3301 = vmatpush1.xpose.msra.mxu0 0.0
        %3302 = vmatprep.subr.mxu0 0.0
        %3303 = vmatpush1.xpose.msra.mxu0 0.0
        %3304 = vmatprep.subr.mxu0 0.0
        %3305 = vmatpush1.xpose.msra.mxu0 0.0
        %3306 = vmatprep.subr.mxu0 0.0
        %3307 = vmatpush1.xpose.msra.mxu0 0.0
        %3308 = vmatprep.subr.mxu0 0.0
        %3309 = vmatpush1.xpose.msra.mxu0 0.0
        %3310 = vmatprep.subr.mxu0 0.0
        %3311 = vmatpush1.xpose.msra.mxu0 0.0
        %3312 = vmatprep.subr.mxu0 0.0
        %3313 = vmatpush1.xpose.msra.mxu0 0.0
        %3314 = vmatprep.subr.mxu0 0.0
        %3315 = vmatpush1.xpose.msra.mxu0 0.0
        %3316 = vmatprep.subr.mxu0 0.0
        %3317 = vmatpush1.xpose.msra.mxu0 0.0
        %3318 = vmatprep.subr.mxu0 0.0
        %3319 = vmatpush1.xpose.msra.mxu0 0.0
        %3320 = vmatprep.subr.mxu0 0.0
        %3321 = vmatpush1.xpose.msra.mxu0 0.0
        %3322 = vmatprep.subr.mxu0 0.0
        %3323 = vmatpush1.xpose.msra.mxu0 0.0
        %3324 = vmatprep.subr.mxu0 0.0
        %3325 = vmatpush1.xpose.msra.mxu0 0.0
        %3326 = vmatprep.subr.mxu0 0.0
        %3327 = vmatpush1.xpose.msra.mxu0 0.0
        %3328 = vmatprep.subr.mxu0 0.0
        %3329 = vmatpush1.xpose.msra.mxu0 0.0
        %3330 = vmatprep.subr.mxu0 0.0
        %3331 = vmatpush1.xpose.msra.mxu0 0.0
        %3332 = vmatprep.subr.mxu0 0.0
        %3333 = vmatpush1.xpose.msra.mxu0 0.0
        %3334 = vmatprep.subr.mxu0 0.0
        %3335 = vmatpush1.xpose.msra.mxu0 0.0
        %3336 = vmatprep.subr.mxu0 0.0
        %3337 = vmatpush1.xpose.msra.mxu0 0.0
        %3338 = vmatprep.subr.mxu0 0.0
        %3339 = vmatpush1.xpose.msra.mxu0 0.0
        %3340 = vmatprep.subr.mxu0 0.0
        %3341 = vmatpush1.xpose.msra.mxu0 0.0
        %3342 = vmatprep.subr.mxu0 0.0
        %3343 = vmatpush1.xpose.msra.mxu0 0.0
        %3344 = vmatprep.subr.mxu0 0.0
        %3345 = vmatpush1.xpose.msra.mxu0 0.0
        %3346 = vmatprep.subr.mxu0 0.0
        %3347 = vmatpush1.xpose.msra.mxu0 0.0
        %3348 = vmatprep.subr.mxu0 0.0
        %3349 = vmatpush1.xpose.msra.mxu0 0.0
        %3350 = vmatprep.subr.mxu0 0.0
        %3351 = vmatpush1.xpose.msra.mxu0 0.0
        %3352 = vmatprep.subr.mxu0 0.0
        %3353 = vmatpush1.xpose.msra.mxu0 0.0
        %3354 = vmatprep.mubr.f32.mxu0 0.0
        %3355 = vmatmul.mubr.f32.gmra.mrb[0].mxu0 %v3286
        %v3356 = vpop.f32.mrb[0].mxu0
        %v3357 = vadd.f32 0.0, %v3356
        %v3358 = vpop.f32.mrb[0].mxu0
        %3359 = vdwg.mxu0
        %v3360 = vsel %vm885, -1e+12, %v3357
        %v3361 = vsel %vm980, %v3360, -inf
        %3362 = vmax.xlane.f32.xlu0 %v3361
        %v3363 = vpop.xlane.xlu0 %3362
        %v3364 = vsub.f32 %v3360, %v3363
        %v3365 = vmul.f32 %v3364, 1.442695
        %v3366 = vpow.pop %v3365
        %v3367 = vsel %vm980, %v3366, 0.0
        %3368 = vadd.xlane.f32.xlu0 %v3367
        %v3369 = vpop.xlane.xlu0 %3368
        %v3370 = vrcp.pop %v3369
        %v3371 = vmul.f32 %v3366, %v3370
        %3372 = vrot.lane.b32.xlu0 %v3114, 56
        %v3373 = vpop.permute.xlu0 %3372
        %v3376 = vsel %vm980, %v3371, 0
        %3378 = vmatprep.subr.mxu0 0.0
        %3379 = vmatpush1.msra.mxu0 %v3373
        %3380 = vmatprep.subr.mxu0 0.0
        %3381 = vmatpush1.msra.mxu0 0.0
        %3382 = vmatprep.subr.mxu0 0.0
        %3383 = vmatpush1.msra.mxu0 0.0
        %3384 = vmatprep.subr.mxu0 0.0
        %3385 = vmatpush1.msra.mxu0 0.0
        %3386 = vmatprep.subr.mxu0 0.0
        %3387 = vmatpush1.msra.mxu0 0.0
        %3388 = vmatprep.subr.mxu0 0.0
        %3389 = vmatpush1.msra.mxu0 0.0
        %3390 = vmatprep.subr.mxu0 0.0
        %3391 = vmatpush1.msra.mxu0 0.0
        %3392 = vmatprep.subr.mxu0 0.0
        %3393 = vmatpush1.msra.mxu0 0.0
        %3394 = vmatprep.subr.mxu0 0.0
        %3395 = vmatpush1.msra.mxu0 0.0
        %3396 = vmatprep.subr.mxu0 0.0
        %3397 = vmatpush1.msra.mxu0 0.0
        %3398 = vmatprep.subr.mxu0 0.0
        %3399 = vmatpush1.msra.mxu0 0.0
        %3400 = vmatprep.subr.mxu0 0.0
        %3401 = vmatpush1.msra.mxu0 0.0
        %3402 = vmatprep.subr.mxu0 0.0
        %3403 = vmatpush1.msra.mxu0 0.0
        %3404 = vmatprep.subr.mxu0 0.0
        %3405 = vmatpush1.msra.mxu0 0.0
        %3406 = vmatprep.subr.mxu0 0.0
        %3407 = vmatpush1.msra.mxu0 0.0
        %3408 = vmatprep.subr.mxu0 0.0
        %3409 = vmatpush1.msra.mxu0 0.0
        %3410 = vmatprep.subr.mxu0 0.0
        %3411 = vmatpush1.msra.mxu0 0.0
        %3412 = vmatprep.subr.mxu0 0.0
        %3413 = vmatpush1.msra.mxu0 0.0
        %3414 = vmatprep.subr.mxu0 0.0
        %3415 = vmatpush1.msra.mxu0 0.0
        %3416 = vmatprep.subr.mxu0 0.0
        %3417 = vmatpush1.msra.mxu0 0.0
        %3418 = vmatprep.subr.mxu0 0.0
        %3419 = vmatpush1.msra.mxu0 0.0
        %3420 = vmatprep.subr.mxu0 0.0
        %3421 = vmatpush1.msra.mxu0 0.0
        %3422 = vmatprep.subr.mxu0 0.0
        %3423 = vmatpush1.msra.mxu0 0.0
        %3424 = vmatprep.subr.mxu0 0.0
        %3425 = vmatpush1.msra.mxu0 0.0
        %3426 = vmatprep.subr.mxu0 0.0
        %3427 = vmatpush1.msra.mxu0 0.0
        %3428 = vmatprep.subr.mxu0 0.0
        %3429 = vmatpush1.msra.mxu0 0.0
        %3430 = vmatprep.subr.mxu0 0.0
        %3431 = vmatpush1.msra.mxu0 0.0
        %3432 = vmatprep.subr.mxu0 0.0
        %3433 = vmatpush1.msra.mxu0 0.0
        %3434 = vmatprep.subr.mxu0 0.0
        %3435 = vmatpush1.msra.mxu0 0.0
        %3436 = vmatprep.subr.mxu0 0.0
        %3437 = vmatpush1.msra.mxu0 0.0
        %3438 = vmatprep.subr.mxu0 0.0
        %3439 = vmatpush1.msra.mxu0 0.0
        %3440 = vmatprep.subr.mxu0 0.0
        %3441 = vmatpush1.msra.mxu0 0.0
        %3442 = vmatprep.mubr.f32.mxu0 0.0
        %3443 = vmatmul.mubr.f32.gmra.mrb[0].mxu0 %v3376
        %v3444 = vpop.f32.mrb[0].mxu0
        %v3445 = vadd.f32 0.0, %v3444
        %v3446 = vpop.f32.mrb[0].mxu0
        %3447 = vdwg.mxu0
        %3448 = vrot.lane.b32.xlu0 %v3114, 112
        %v3449 = vpop.permute.xlu0 %3448
        %3450 = vrot.lane.b32.xlu0 %v3114, 80
        %v3451 = vpop.permute.xlu0 %3450
        %v3452 = vsel %vm980, %v3449, 0
        %v3454 = vsel %vm980, %v3451, 0
        %3456 = vmatprep.subr.mxu0 0.0
        %3457 = vmatpush1.xpose.msra.mxu0 %v3454
        %3458 = vmatprep.subr.mxu0 0.0
        %3459 = vmatpush1.xpose.msra.mxu0 0.0
        %3460 = vmatprep.subr.mxu0 0.0
        %3461 = vmatpush1.xpose.msra.mxu0 0.0
        %3462 = vmatprep.subr.mxu0 0.0
        %3463 = vmatpush1.xpose.msra.mxu0 0.0
        %3464 = vmatprep.subr.mxu0 0.0
        %3465 = vmatpush1.xpose.msra.mxu0 0.0
        %3466 = vmatprep.subr.mxu0 0.0
        %3467 = vmatpush1.xpose.msra.mxu0 0.0
        %3468 = vmatprep.subr.mxu0 0.0
        %3469 = vmatpush1.xpose.msra.mxu0 0.0
        %3470 = vmatprep.subr.mxu0 0.0
        %3471 = vmatpush1.xpose.msra.mxu0 0.0
        %3472 = vmatprep.subr.mxu0 0.0
        %3473 = vmatpush1.xpose.msra.mxu0 0.0
        %3474 = vmatprep.subr.mxu0 0.0
        %3475 = vmatpush1.xpose.msra.mxu0 0.0
        %3476 = vmatprep.subr.mxu0 0.0
        %3477 = vmatpush1.xpose.msra.mxu0 0.0
        %3478 = vmatprep.subr.mxu0 0.0
        %3479 = vmatpush1.xpose.msra.mxu0 0.0
        %3480 = vmatprep.subr.mxu0 0.0
        %3481 = vmatpush1.xpose.msra.mxu0 0.0
        %3482 = vmatprep.subr.mxu0 0.0
        %3483 = vmatpush1.xpose.msra.mxu0 0.0
        %3484 = vmatprep.subr.mxu0 0.0
        %3485 = vmatpush1.xpose.msra.mxu0 0.0
        %3486 = vmatprep.subr.mxu0 0.0
        %3487 = vmatpush1.xpose.msra.mxu0 0.0
        %3488 = vmatprep.subr.mxu0 0.0
        %3489 = vmatpush1.xpose.msra.mxu0 0.0
        %3490 = vmatprep.subr.mxu0 0.0
        %3491 = vmatpush1.xpose.msra.mxu0 0.0
        %3492 = vmatprep.subr.mxu0 0.0
        %3493 = vmatpush1.xpose.msra.mxu0 0.0
        %3494 = vmatprep.subr.mxu0 0.0
        %3495 = vmatpush1.xpose.msra.mxu0 0.0
        %3496 = vmatprep.subr.mxu0 0.0
        %3497 = vmatpush1.xpose.msra.mxu0 0.0
        %3498 = vmatprep.subr.mxu0 0.0
        %3499 = vmatpush1.xpose.msra.mxu0 0.0
        %3500 = vmatprep.subr.mxu0 0.0
        %3501 = vmatpush1.xpose.msra.mxu0 0.0
        %3502 = vmatprep.subr.mxu0 0.0
        %3503 = vmatpush1.xpose.msra.mxu0 0.0
        %3504 = vmatprep.subr.mxu0 0.0
        %3505 = vmatpush1.xpose.msra.mxu0 0.0
        %3506 = vmatprep.subr.mxu0 0.0
        %3507 = vmatpush1.xpose.msra.mxu0 0.0
        %3508 = vmatprep.subr.mxu0 0.0
        %3509 = vmatpush1.xpose.msra.mxu0 0.0
        %3510 = vmatprep.subr.mxu0 0.0
        %3511 = vmatpush1.xpose.msra.mxu0 0.0
        %3512 = vmatprep.subr.mxu0 0.0
        %3513 = vmatpush1.xpose.msra.mxu0 0.0
        %3514 = vmatprep.subr.mxu0 0.0
        %3515 = vmatpush1.xpose.msra.mxu0 0.0
        %3516 = vmatprep.subr.mxu0 0.0
        %3517 = vmatpush1.xpose.msra.mxu0 0.0
        %3518 = vmatprep.subr.mxu0 0.0
        %3519 = vmatpush1.xpose.msra.mxu0 0.0
        %3520 = vmatprep.mubr.f32.mxu0 0.0
        %3521 = vmatmul.mubr.f32.gmra.mrb[0].mxu0 %v3452
        %v3522 = vpop.f32.mrb[0].mxu0
        %v3523 = vadd.f32 0.0, %v3522
        %v3524 = vpop.f32.mrb[0].mxu0
        %3525 = vdwg.mxu0
        %v3526 = vsel %vm885, -1e+12, %v3523
        %v3527 = vsel %vm980, %v3526, -inf
        %3528 = vmax.xlane.f32.xlu0 %v3527
        %v3529 = vpop.xlane.xlu0 %3528
        %v3530 = vsub.f32 %v3526, %v3529
        %v3531 = vmul.f32 %v3530, 1.442695
        %v3532 = vpow.pop %v3531
        %v3533 = vsel %vm980, %v3532, 0.0
        %3534 = vadd.xlane.f32.xlu0 %v3533
        %v3535 = vpop.xlane.xlu0 %3534
        %v3536 = vrcp.pop %v3535
        %v3537 = vmul.f32 %v3532, %v3536
        %3538 = vrot.lane.b32.xlu0 %v3114, 48
        %v3539 = vpop.permute.xlu0 %3538
        %v3542 = vsel %vm980, %v3537, 0
        %3544 = vmatprep.subr.mxu0 0.0
        %3545 = vmatpush1.msra.mxu0 %v3539
        %3546 = vmatprep.subr.mxu0 0.0
        %3547 = vmatpush1.msra.mxu0 0.0
        %3548 = vmatprep.subr.mxu0 0.0
        %3549 = vmatpush1.msra.mxu0 0.0
        %3550 = vmatprep.subr.mxu0 0.0
        %3551 = vmatpush1.msra.mxu0 0.0
        %3552 = vmatprep.subr.mxu0 0.0
        %3553 = vmatpush1.msra.mxu0 0.0
        %3554 = vmatprep.subr.mxu0 0.0
        %3555 = vmatpush1.msra.mxu0 0.0
        %3556 = vmatprep.subr.mxu0 0.0
        %3557 = vmatpush1.msra.mxu0 0.0
        %3558 = vmatprep.subr.mxu0 0.0
        %3559 = vmatpush1.msra.mxu0 0.0
        %3560 = vmatprep.subr.mxu0 0.0
        %3561 = vmatpush1.msra.mxu0 0.0
        %3562 = vmatprep.subr.mxu0 0.0
        %3563 = vmatpush1.msra.mxu0 0.0
        %3564 = vmatprep.subr.mxu0 0.0
        %3565 = vmatpush1.msra.mxu0 0.0
        %3566 = vmatprep.subr.mxu0 0.0
        %3567 = vmatpush1.msra.mxu0 0.0
        %3568 = vmatprep.subr.mxu0 0.0
        %3569 = vmatpush1.msra.mxu0 0.0
        %3570 = vmatprep.subr.mxu0 0.0
        %3571 = vmatpush1.msra.mxu0 0.0
        %3572 = vmatprep.subr.mxu0 0.0
        %3573 = vmatpush1.msra.mxu0 0.0
        %3574 = vmatprep.subr.mxu0 0.0
        %3575 = vmatpush1.msra.mxu0 0.0
        %3576 = vmatprep.subr.mxu0 0.0
        %3577 = vmatpush1.msra.mxu0 0.0
        %3578 = vmatprep.subr.mxu0 0.0
        %3579 = vmatpush1.msra.mxu0 0.0
        %3580 = vmatprep.subr.mxu0 0.0
        %3581 = vmatpush1.msra.mxu0 0.0
        %3582 = vmatprep.subr.mxu0 0.0
        %3583 = vmatpush1.msra.mxu0 0.0
        %3584 = vmatprep.subr.mxu0 0.0
        %3585 = vmatpush1.msra.mxu0 0.0
        %3586 = vmatprep.subr.mxu0 0.0
        %3587 = vmatpush1.msra.mxu0 0.0
        %3588 = vmatprep.subr.mxu0 0.0
        %3589 = vmatpush1.msra.mxu0 0.0
        %3590 = vmatprep.subr.mxu0 0.0
        %3591 = vmatpush1.msra.mxu0 0.0
        %3592 = vmatprep.subr.mxu0 0.0
        %3593 = vmatpush1.msra.mxu0 0.0
        %3594 = vmatprep.subr.mxu0 0.0
        %3595 = vmatpush1.msra.mxu0 0.0
        %3596 = vmatprep.subr.mxu0 0.0
        %3597 = vmatpush1.msra.mxu0 0.0
        %3598 = vmatprep.subr.mxu0 0.0
        %3599 = vmatpush1.msra.mxu0 0.0
        %3600 = vmatprep.subr.mxu0 0.0
        %3601 = vmatpush1.msra.mxu0 0.0
        %3602 = vmatprep.subr.mxu0 0.0
        %3603 = vmatpush1.msra.mxu0 0.0
        %3604 = vmatprep.subr.mxu0 0.0
        %3605 = vmatpush1.msra.mxu0 0.0
        %3606 = vmatprep.subr.mxu0 0.0
        %3607 = vmatpush1.msra.mxu0 0.0
        %3608 = vmatprep.mubr.f32.mxu0 0.0
        %3609 = vmatmul.mubr.f32.gmra.mrb[0].mxu0 %v3542
        %v3610 = vpop.f32.mrb[0].mxu0
        %v3611 = vadd.f32 0.0, %v3610
        %v3612 = vpop.f32.mrb[0].mxu0
        %3613 = vdwg.mxu0
        %3614 = vrot.lane.b32.xlu0 %v3114, 104
        %v3615 = vpop.permute.xlu0 %3614
        %3616 = vrot.lane.b32.xlu0 %v3114, 72
        %v3617 = vpop.permute.xlu0 %3616
        %v3618 = vsel %vm980, %v3615, 0
        %v3620 = vsel %vm980, %v3617, 0
        %3622 = vmatprep.subr.mxu0 0.0
        %3623 = vmatpush1.xpose.msra.mxu0 %v3620
        %3624 = vmatprep.subr.mxu0 0.0
        %3625 = vmatpush1.xpose.msra.mxu0 0.0
        %3626 = vmatprep.subr.mxu0 0.0
        %3627 = vmatpush1.xpose.msra.mxu0 0.0
        %3628 = vmatprep.subr.mxu0 0.0
        %3629 = vmatpush1.xpose.msra.mxu0 0.0
        %3630 = vmatprep.subr.mxu0 0.0
        %3631 = vmatpush1.xpose.msra.mxu0 0.0
        %3632 = vmatprep.subr.mxu0 0.0
        %3633 = vmatpush1.xpose.msra.mxu0 0.0
        %3634 = vmatprep.subr.mxu0 0.0
        %3635 = vmatpush1.xpose.msra.mxu0 0.0
        %3636 = vmatprep.subr.mxu0 0.0
        %3637 = vmatpush1.xpose.msra.mxu0 0.0
        %3638 = vmatprep.subr.mxu0 0.0
        %3639 = vmatpush1.xpose.msra.mxu0 0.0
        %3640 = vmatprep.subr.mxu0 0.0
        %3641 = vmatpush1.xpose.msra.mxu0 0.0
        %3642 = vmatprep.subr.mxu0 0.0
        %3643 = vmatpush1.xpose.msra.mxu0 0.0
        %3644 = vmatprep.subr.mxu0 0.0
        %3645 = vmatpush1.xpose.msra.mxu0 0.0
        %3646 = vmatprep.subr.mxu0 0.0
        %3647 = vmatpush1.xpose.msra.mxu0 0.0
        %3648 = vmatprep.subr.mxu0 0.0
        %3649 = vmatpush1.xpose.msra.mxu0 0.0
        %3650 = vmatprep.subr.mxu0 0.0
        %3651 = vmatpush1.xpose.msra.mxu0 0.0
        %3652 = vmatprep.subr.mxu0 0.0
        %3653 = vmatpush1.xpose.msra.mxu0 0.0
        %3654 = vmatprep.subr.mxu0 0.0
        %3655 = vmatpush1.xpose.msra.mxu0 0.0
        %3656 = vmatprep.subr.mxu0 0.0
        %3657 = vmatpush1.xpose.msra.mxu0 0.0
        %3658 = vmatprep.subr.mxu0 0.0
        %3659 = vmatpush1.xpose.msra.mxu0 0.0
        %3660 = vmatprep.subr.mxu0 0.0
        %3661 = vmatpush1.xpose.msra.mxu0 0.0
        %3662 = vmatprep.subr.mxu0 0.0
        %3663 = vmatpush1.xpose.msra.mxu0 0.0
        %3664 = vmatprep.subr.mxu0 0.0
        %3665 = vmatpush1.xpose.msra.mxu0 0.0
        %3666 = vmatprep.subr.mxu0 0.0
        %3667 = vmatpush1.xpose.msra.mxu0 0.0
        %3668 = vmatprep.subr.mxu0 0.0
        %3669 = vmatpush1.xpose.msra.mxu0 0.0
        %3670 = vmatprep.subr.mxu0 0.0
        %3671 = vmatpush1.xpose.msra.mxu0 0.0
        %3672 = vmatprep.subr.mxu0 0.0
        %3673 = vmatpush1.xpose.msra.mxu0 0.0
        %3674 = vmatprep.subr.mxu0 0.0
        %3675 = vmatpush1.xpose.msra.mxu0 0.0
        %3676 = vmatprep.subr.mxu0 0.0
        %3677 = vmatpush1.xpose.msra.mxu0 0.0
        %3678 = vmatprep.subr.mxu0 0.0
        %3679 = vmatpush1.xpose.msra.mxu0 0.0
        %3680 = vmatprep.subr.mxu0 0.0
        %3681 = vmatpush1.xpose.msra.mxu0 0.0
        %3682 = vmatprep.subr.mxu0 0.0
        %3683 = vmatpush1.xpose.msra.mxu0 0.0
        %3684 = vmatprep.subr.mxu0 0.0
        %3685 = vmatpush1.xpose.msra.mxu0 0.0
        %3686 = vmatprep.mubr.f32.mxu0 0.0
        %3687 = vmatmul.mubr.f32.gmra.mrb[0].mxu0 %v3618
        %v3688 = vpop.f32.mrb[0].mxu0
        %v3689 = vadd.f32 0.0, %v3688
        %v3690 = vpop.f32.mrb[0].mxu0
        %3691 = vdwg.mxu0
        %v3692 = vsel %vm885, -1e+12, %v3689
        %v3693 = vsel %vm980, %v3692, -inf
        %3694 = vmax.xlane.f32.xlu0 %v3693
        %v3695 = vpop.xlane.xlu0 %3694
        %v3696 = vsub.f32 %v3692, %v3695
        %v3697 = vmul.f32 %v3696, 1.442695
        %v3698 = vpow.pop %v3697
        %v3699 = vsel %vm980, %v3698, 0.0
        %3700 = vadd.xlane.f32.xlu0 %v3699
        %v3701 = vpop.xlane.xlu0 %3700
        %v3702 = vrcp.pop %v3701
        %v3703 = vmul.f32 %v3698, %v3702
        %3704 = vrot.lane.b32.xlu0 %v3114, 40
        %v3705 = vpop.permute.xlu0 %3704
        %v3708 = vsel %vm980, %v3703, 0
        %3710 = vmatprep.subr.mxu0 0.0
        %3711 = vmatpush1.msra.mxu0 %v3705
        %3712 = vmatprep.subr.mxu0 0.0
        %3713 = vmatpush1.msra.mxu0 0.0
        %3714 = vmatprep.subr.mxu0 0.0
        %3715 = vmatpush1.msra.mxu0 0.0
        %3716 = vmatprep.subr.mxu0 0.0
        %3717 = vmatpush1.msra.mxu0 0.0
        %3718 = vmatprep.subr.mxu0 0.0
        %3719 = vmatpush1.msra.mxu0 0.0
        %3720 = vmatprep.subr.mxu0 0.0
        %3721 = vmatpush1.msra.mxu0 0.0
        %3722 = vmatprep.subr.mxu0 0.0
        %3723 = vmatpush1.msra.mxu0 0.0
        %3724 = vmatprep.subr.mxu0 0.0
        %3725 = vmatpush1.msra.mxu0 0.0
        %3726 = vmatprep.subr.mxu0 0.0
        %3727 = vmatpush1.msra.mxu0 0.0
        %3728 = vmatprep.subr.mxu0 0.0
        %3729 = vmatpush1.msra.mxu0 0.0
        %3730 = vmatprep.subr.mxu0 0.0
        %3731 = vmatpush1.msra.mxu0 0.0
        %3732 = vmatprep.subr.mxu0 0.0
        %3733 = vmatpush1.msra.mxu0 0.0
        %3734 = vmatprep.subr.mxu0 0.0
        %3735 = vmatpush1.msra.mxu0 0.0
        %3736 = vmatprep.subr.mxu0 0.0
        %3737 = vmatpush1.msra.mxu0 0.0
        %3738 = vmatprep.subr.mxu0 0.0
        %3739 = vmatpush1.msra.mxu0 0.0
        %3740 = vmatprep.subr.mxu0 0.0
        %3741 = vmatpush1.msra.mxu0 0.0
        %3742 = vmatprep.subr.mxu0 0.0
        %3743 = vmatpush1.msra.mxu0 0.0
        %3744 = vmatprep.subr.mxu0 0.0
        %3745 = vmatpush1.msra.mxu0 0.0
        %3746 = vmatprep.subr.mxu0 0.0
        %3747 = vmatpush1.msra.mxu0 0.0
        %3748 = vmatprep.subr.mxu0 0.0
        %3749 = vmatpush1.msra.mxu0 0.0
        %3750 = vmatprep.subr.mxu0 0.0
        %3751 = vmatpush1.msra.mxu0 0.0
        %3752 = vmatprep.subr.mxu0 0.0
        %3753 = vmatpush1.msra.mxu0 0.0
        %3754 = vmatprep.subr.mxu0 0.0
        %3755 = vmatpush1.msra.mxu0 0.0
        %3756 = vmatprep.subr.mxu0 0.0
        %3757 = vmatpush1.msra.mxu0 0.0
        %3758 = vmatprep.subr.mxu0 0.0
        %3759 = vmatpush1.msra.mxu0 0.0
        %3760 = vmatprep.subr.mxu0 0.0
        %3761 = vmatpush1.msra.mxu0 0.0
        %3762 = vmatprep.subr.mxu0 0.0
        %3763 = vmatpush1.msra.mxu0 0.0
        %3764 = vmatprep.subr.mxu0 0.0
        %3765 = vmatpush1.msra.mxu0 0.0
        %3766 = vmatprep.subr.mxu0 0.0
        %3767 = vmatpush1.msra.mxu0 0.0
        %3768 = vmatprep.subr.mxu0 0.0
        %3769 = vmatpush1.msra.mxu0 0.0
        %3770 = vmatprep.subr.mxu0 0.0
        %3771 = vmatpush1.msra.mxu0 0.0
        %3772 = vmatprep.subr.mxu0 0.0
        %3773 = vmatpush1.msra.mxu0 0.0
        %3774 = vmatprep.mubr.f32.mxu0 0.0
        %3775 = vmatmul.mubr.f32.gmra.mrb[0].mxu0 %v3708
        %v3776 = vpop.f32.mrb[0].mxu0
        %v3777 = vadd.f32 0.0, %v3776
        %v3778 = vpop.f32.mrb[0].mxu0
        %3779 = vdwg.mxu0
        %3781 = vrot.lane.b32.xlu0 %v3445, 8
        %v3782 = vpop.permute.xlu0 %3781
        %3785 = vrot.lane.b32.xlu0 %v3611, 16
        %v3786 = vpop.permute.xlu0 %3785
        %3789 = vrot.lane.b32.xlu0 %v3777, 24
        %v3790 = vpop.permute.xlu0 %3789
        %v3792 = vsel %vm980, %v3279, %v3782
        %v3793 = vsel %vm1654, %v3792, %v3786
        %v3794 = vsel %vm1656, %v3793, %v3790
        %v3795 = vld [vmem:[%s16] sm:$0xff]
        %v3796 = vld [vmem:[%s16 + $0x8] sm:$0xff]
        %v3797 = vld [vmem:[%s16 + $0x10] sm:$0xff]
        %v3798 = vld [vmem:[%s16 + $0x18] sm:$0xff]
        %v3799 = vlaneseq
        %v3800 = vshrl.u32 %v3799, 7
        %v3801 = vsub.s32 0, %v3800
        %v3802 = vrot.slane %v3031, %v3801
        %v3804 = vsel %vm903, %v3794, 0
        %3806 = vmatprep.subr.mxu0 0.0
        %3807 = vmatpush1.msra.mxu0 %v3795
        %3808 = vmatprep.subr.mxu0 0.0
        %3809 = vmatpush1.msra.mxu0 %v3796
        %3810 = vmatprep.subr.mxu0 0.0
        %3811 = vmatpush1.msra.mxu0 %v3797
        %3812 = vmatprep.subr.mxu0 0.0
        %3813 = vmatpush1.msra.mxu0 %v3798
        %3814 = vmatprep.subr.mxu0 0.0
        %3815 = vmatpush1.msra.mxu0 0.0
        %3816 = vmatprep.subr.mxu0 0.0
        %3817 = vmatpush1.msra.mxu0 0.0
        %3818 = vmatprep.subr.mxu0 0.0
        %3819 = vmatpush1.msra.mxu0 0.0
        %3820 = vmatprep.subr.mxu0 0.0
        %3821 = vmatpush1.msra.mxu0 0.0
        %3822 = vmatprep.subr.mxu0 0.0
        %3823 = vmatpush1.msra.mxu0 0.0
        %3824 = vmatprep.subr.mxu0 0.0
        %3825 = vmatpush1.msra.mxu0 0.0
        %3826 = vmatprep.subr.mxu0 0.0
        %3827 = vmatpush1.msra.mxu0 0.0
        %3828 = vmatprep.subr.mxu0 0.0
        %3829 = vmatpush1.msra.mxu0 0.0
        %3830 = vmatprep.subr.mxu0 0.0
        %3831 = vmatpush1.msra.mxu0 0.0
        %3832 = vmatprep.subr.mxu0 0.0
        %3833 = vmatpush1.msra.mxu0 0.0
        %3834 = vmatprep.subr.mxu0 0.0
        %3835 = vmatpush1.msra.mxu0 0.0
        %3836 = vmatprep.subr.mxu0 0.0
        %3837 = vmatpush1.msra.mxu0 0.0
        %3838 = vmatprep.subr.mxu0 0.0
        %3839 = vmatpush1.msra.mxu0 0.0
        %3840 = vmatprep.subr.mxu0 0.0
        %3841 = vmatpush1.msra.mxu0 0.0
        %3842 = vmatprep.subr.mxu0 0.0
        %3843 = vmatpush1.msra.mxu0 0.0
        %3844 = vmatprep.subr.mxu0 0.0
        %3845 = vmatpush1.msra.mxu0 0.0
        %3846 = vmatprep.subr.mxu0 0.0
        %3847 = vmatpush1.msra.mxu0 0.0
        %3848 = vmatprep.subr.mxu0 0.0
        %3849 = vmatpush1.msra.mxu0 0.0
        %3850 = vmatprep.subr.mxu0 0.0
        %3851 = vmatpush1.msra.mxu0 0.0
        %3852 = vmatprep.subr.mxu0 0.0
        %3853 = vmatpush1.msra.mxu0 0.0
        %3854 = vmatprep.subr.mxu0 0.0
        %3855 = vmatpush1.msra.mxu0 0.0
        %3856 = vmatprep.subr.mxu0 0.0
        %3857 = vmatpush1.msra.mxu0 0.0
        %3858 = vmatprep.subr.mxu0 0.0
        %3859 = vmatpush1.msra.mxu0 0.0
        %3860 = vmatprep.subr.mxu0 0.0
        %3861 = vmatpush1.msra.mxu0 0.0
        %3862 = vmatprep.subr.mxu0 0.0
        %3863 = vmatpush1.msra.mxu0 0.0
        %3864 = vmatprep.subr.mxu0 0.0
        %3865 = vmatpush1.msra.mxu0 0.0
        %3866 = vmatprep.subr.mxu0 0.0
        %3867 = vmatpush1.msra.mxu0 0.0
        %3868 = vmatprep.subr.mxu0 0.0
        %3869 = vmatpush1.msra.mxu0 0.0
        %3870 = vmatprep.mubr.f32.mxu0 0.0
        %3871 = vmatmul.mubr.f32.gmra.mrb[0].mxu0 %v3804
        %v3872 = vpop.f32.mrb[0].mxu0
        %v3873 = vadd.f32 %v3802, %v3872
        %v3874 = vpop.f32.mrb[0].mxu0
        %3875 = vdwg.mxu0
        %v3876 = vadd.f32 %v3030, %v3873
        %v3877 = vsel %vm903, %v3876, 0.0
        %3878 = vadd.xlane.f32.xlu0 %v3877
        %v3879 = vpop.xlane.xlu0 %3878
        %v3880 = vmul.f32 %v3879, %v1743
        %v3881 = vsub.f32 %v3876, %v3880
        %v3882 = vmul.f32 %v3881, %v3881
        %v3883 = vsel %vm903, %v3882, 0.0
        %3884 = vadd.xlane.f32.xlu0 %v3883
        %v3885 = vpop.xlane.xlu0 %3884
        %v3886 = vmul.f32 %v3885, %v1743
        %v3887 = vadd.f32 %v3886, 1e-05
        %v3888 = vrsqrt.pop %v3887
        %v3889 = vmul.f32 %v3881, %v3888
        %v3890 = vlaneseq
        %v3891 = vshrl.u32 %v3890, 7
        %v3892 = vsub.s32 1, %v3891
        %v3893 = vrot.slane %v3031, %v3892
        %v3894 = vmul.f32 %v3889, %v3893
        %v3895 = vlaneseq
        %v3896 = vshrl.u32 %v3895, 7
        %v3897 = vsub.s32 2, %v3896
        %v3898 = vrot.slane %v3031, %v3897
        %v3899 = vadd.f32 %v3894, %v3898
        %v3900 = vld [vmem:[%s17] sm:$0xff]
        %v3901 = vld [vmem:[%s17 + $0x8] sm:$0xff]
        %v3902 = vld [vmem:[%s17 + $0x10] sm:$0xff]
        %v3903 = vld [vmem:[%s17 + $0x18] sm:$0xff]
        %v3904 = vlaneseq
        %v3905 = vshrl.u32 %v3904, 7
        %v3906 = vsub.s32 3, %v3905
        %v3907 = vrot.slane %v3031, %v3906
        %v3909 = vsel %vm903, %v3899, 0
        %3911 = vmatprep.subr.mxu0 0.0
        %3912 = vmatpush1.msra.mxu0 %v3900
        %3913 = vmatprep.subr.mxu0 0.0
        %3914 = vmatpush1.msra.mxu0 %v3901
        %3915 = vmatprep.subr.mxu0 0.0
        %3916 = vmatpush1.msra.mxu0 %v3902
        %3917 = vmatprep.subr.mxu0 0.0
        %3918 = vmatpush1.msra.mxu0 %v3903
        %3919 = vmatprep.subr.mxu0 0.0
        %3920 = vmatpush1.msra.mxu0 0.0
        %3921 = vmatprep.subr.mxu0 0.0
        %3922 = vmatpush1.msra.mxu0 0.0
        %3923 = vmatprep.subr.mxu0 0.0
        %3924 = vmatpush1.msra.mxu0 0.0
        %3925 = vmatprep.subr.mxu0 0.0
        %3926 = vmatpush1.msra.mxu0 0.0
        %3927 = vmatprep.subr.mxu0 0.0
        %3928 = vmatpush1.msra.mxu0 0.0
        %3929 = vmatprep.subr.mxu0 0.0
        %3930 = vmatpush1.msra.mxu0 0.0
        %3931 = vmatprep.subr.mxu0 0.0
        %3932 = vmatpush1.msra.mxu0 0.0
        %3933 = vmatprep.subr.mxu0 0.0
        %3934 = vmatpush1.msra.mxu0 0.0
        %3935 = vmatprep.subr.mxu0 0.0
        %3936 = vmatpush1.msra.mxu0 0.0
        %3937 = vmatprep.subr.mxu0 0.0
        %3938 = vmatpush1.msra.mxu0 0.0
        %3939 = vmatprep.subr.mxu0 0.0
        %3940 = vmatpush1.msra.mxu0 0.0
        %3941 = vmatprep.subr.mxu0 0.0
        %3942 = vmatpush1.msra.mxu0 0.0
        %3943 = vmatprep.subr.mxu0 0.0
        %3944 = vmatpush1.msra.mxu0 0.0
        %3945 = vmatprep.subr.mxu0 0.0
        %3946 = vmatpush1.msra.mxu0 0.0
        %3947 = vmatprep.subr.mxu0 0.0
        %3948 = vmatpush1.msra.mxu0 0.0
        %3949 = vmatprep.subr.mxu0 0.0
        %3950 = vmatpush1.msra.mxu0 0.0
        %3951 = vmatprep.subr.mxu0 0.0
        %3952 = vmatpush1.msra.mxu0 0.0
        %3953 = vmatprep.subr.mxu0 0.0
        %3954 = vmatpush1.msra.mxu0 0.0
        %3955 = vmatprep.subr.mxu0 0.0
        %3956 = vmatpush1.msra.mxu0 0.0
        %3957 = vmatprep.subr.mxu0 0.0
        %3958 = vmatpush1.msra.mxu0 0.0
        %3959 = vmatprep.subr.mxu0 0.0
        %3960 = vmatpush1.msra.mxu0 0.0
        %3961 = vmatprep.subr.mxu0 0.0
        %3962 = vmatpush1.msra.mxu0 0.0
        %3963 = vmatprep.subr.mxu0 0.0
        %3964 = vmatpush1.msra.mxu0 0.0
        %3965 = vmatprep.subr.mxu0 0.0
        %3966 = vmatpush1.msra.mxu0 0.0
        %3967 = vmatprep.subr.mxu0 0.0
        %3968 = vmatpush1.msra.mxu0 0.0
        %3969 = vmatprep.subr.mxu0 0.0
        %3970 = vmatpush1.msra.mxu0 0.0
        %3971 = vmatprep.subr.mxu0 0.0
        %3972 = vmatpush1.msra.mxu0 0.0
        %3973 = vmatprep.subr.mxu0 0.0
        %3974 = vmatpush1.msra.mxu0 0.0
        %3975 = vmatprep.mubr.f32.mxu0 0.0
        %3976 = vmatmul.mubr.f32.gmra.mrb[0].mxu0 %v3909
        %v3977 = vpop.f32.mrb[0].mxu0
        %v3978 = vadd.f32 %v3907, %v3977
        %v3979 = vpop.f32.mrb[0].mxu0
        %3980 = vdwg.mxu0
        %v3981 = vld [vmem:[%s18] sm:$0xff]
        %v3982 = vld [vmem:[%s18 + $0x8] sm:$0xff]
        %v3983 = vld [vmem:[%s18 + $0x10] sm:$0xff]
        %v3984 = vld [vmem:[%s18 + $0x18] sm:$0xff]
        %v3985 = vld [vmem:[%s19] sm:$0x1]
        %v3987 = vlaneseq
        %v3988 = vshrl.u32 %v3987, 7
        %v3989 = vsub.s32 0, %v3988
        %v3990 = vrot.slane %v3985, %v3989
        %v3993 = vsel %vm903, %v3027, 0
        %3995 = vmatprep.subr.mxu0 0.0
        %3996 = vmatpush1.msra.mxu0 %v3981
        %3997 = vmatprep.subr.mxu0 0.0
        %3998 = vmatpush1.msra.mxu0 %v3982
        %3999 = vmatprep.subr.mxu0 0.0
        %4000 = vmatpush1.msra.mxu0 %v3983
        %4001 = vmatprep.subr.mxu0 0.0
        %4002 = vmatpush1.msra.mxu0 %v3984
        %4003 = vmatprep.subr.mxu0 0.0
        %4004 = vmatpush1.msra.mxu0 0.0
        %4005 = vmatprep.subr.mxu0 0.0
        %4006 = vmatpush1.msra.mxu0 0.0
        %4007 = vmatprep.subr.mxu0 0.0
        %4008 = vmatpush1.msra.mxu0 0.0
        %4009 = vmatprep.subr.mxu0 0.0
        %4010 = vmatpush1.msra.mxu0 0.0
        %4011 = vmatprep.subr.mxu0 0.0
        %4012 = vmatpush1.msra.mxu0 0.0
        %4013 = vmatprep.subr.mxu0 0.0
        %4014 = vmatpush1.msra.mxu0 0.0
        %4015 = vmatprep.subr.mxu0 0.0
        %4016 = vmatpush1.msra.mxu0 0.0
        %4017 = vmatprep.subr.mxu0 0.0
        %4018 = vmatpush1.msra.mxu0 0.0
        %4019 = vmatprep.subr.mxu0 0.0
        %4020 = vmatpush1.msra.mxu0 0.0
        %4021 = vmatprep.subr.mxu0 0.0
        %4022 = vmatpush1.msra.mxu0 0.0
        %4023 = vmatprep.subr.mxu0 0.0
        %4024 = vmatpush1.msra.mxu0 0.0
        %4025 = vmatprep.subr.mxu0 0.0
        %4026 = vmatpush1.msra.mxu0 0.0
        %4027 = vmatprep.subr.mxu0 0.0
        %4028 = vmatpush1.msra.mxu0 0.0
        %4029 = vmatprep.subr.mxu0 0.0
        %4030 = vmatpush1.msra.mxu0 0.0
        %4031 = vmatprep.subr.mxu0 0.0
        %4032 = vmatpush1.msra.mxu0 0.0
        %4033 = vmatprep.subr.mxu0 0.0
        %4034 = vmatpush1.msra.mxu0 0.0
        %4035 = vmatprep.subr.mxu0 0.0
        %4036 = vmatpush1.msra.mxu0 0.0
        %4037 = vmatprep.subr.mxu0 0.0
        %4038 = vmatpush1.msra.mxu0 0.0
        %4039 = vmatprep.subr.mxu0 0.0
        %4040 = vmatpush1.msra.mxu0 0.0
        %4041 = vmatprep.subr.mxu0 0.0
        %4042 = vmatpush1.msra.mxu0 0.0
        %4043 = vmatprep.subr.mxu0 0.0
        %4044 = vmatpush1.msra.mxu0 0.0
        %4045 = vmatprep.subr.mxu0 0.0
        %4046 = vmatpush1.msra.mxu0 0.0
        %4047 = vmatprep.subr.mxu0 0.0
        %4048 = vmatpush1.msra.mxu0 0.0
        %4049 = vmatprep.subr.mxu0 0.0
        %4050 = vmatpush1.msra.mxu0 0.0
        %4051 = vmatprep.subr.mxu0 0.0
        %4052 = vmatpush1.msra.mxu0 0.0
        %4053 = vmatprep.subr.mxu0 0.0
        %4054 = vmatpush1.msra.mxu0 0.0
        %4055 = vmatprep.subr.mxu0 0.0
        %4056 = vmatpush1.msra.mxu0 0.0
        %4057 = vmatprep.subr.mxu0 0.0
        %4058 = vmatpush1.msra.mxu0 0.0
        %4059 = vmatprep.mubr.f32.mxu0 0.0
        %4060 = vmatmul.mubr.f32.gmra.mrb[0].mxu0 %v3993
        %v4061 = vpop.f32.mrb[0].mxu0
        %v4062 = vadd.f32 %v3990, %v4061
        %v4063 = vpop.f32.mrb[0].mxu0
        %4064 = vdwg.mxu0
        %v4066 = vsel %vm980, %v3978, 0
        %v4069 = vsel %vm980, %v4062, 0
        %4071 = vmatprep.subr.mxu0 0.0
        %4072 = vmatpush1.xpose.msra.mxu0 %v4069
        %4073 = vmatprep.subr.mxu0 0.0
        %4074 = vmatpush1.xpose.msra.mxu0 0.0
        %4075 = vmatprep.subr.mxu0 0.0
        %4076 = vmatpush1.xpose.msra.mxu0 0.0
        %4077 = vmatprep.subr.mxu0 0.0
        %4078 = vmatpush1.xpose.msra.mxu0 0.0
        %4079 = vmatprep.subr.mxu0 0.0
        %4080 = vmatpush1.xpose.msra.mxu0 0.0
        %4081 = vmatprep.subr.mxu0 0.0
        %4082 = vmatpush1.xpose.msra.mxu0 0.0
        %4083 = vmatprep.subr.mxu0 0.0
        %4084 = vmatpush1.xpose.msra.mxu0 0.0
        %4085 = vmatprep.subr.mxu0 0.0
        %4086 = vmatpush1.xpose.msra.mxu0 0.0
        %4087 = vmatprep.subr.mxu0 0.0
        %4088 = vmatpush1.xpose.msra.mxu0 0.0
        %4089 = vmatprep.subr.mxu0 0.0
        %4090 = vmatpush1.xpose.msra.mxu0 0.0
        %4091 = vmatprep.subr.mxu0 0.0
        %4092 = vmatpush1.xpose.msra.mxu0 0.0
        %4093 = vmatprep.subr.mxu0 0.0
        %4094 = vmatpush1.xpose.msra.mxu0 0.0
        %4095 = vmatprep.subr.mxu0 0.0
        %4096 = vmatpush1.xpose.msra.mxu0 0.0
        %4097 = vmatprep.subr.mxu0 0.0
        %4098 = vmatpush1.xpose.msra.mxu0 0.0
        %4099 = vmatprep.subr.mxu0 0.0
        %4100 = vmatpush1.xpose.msra.mxu0 0.0
        %4101 = vmatprep.subr.mxu0 0.0
        %4102 = vmatpush1.xpose.msra.mxu0 0.0
        %4103 = vmatprep.subr.mxu0 0.0
        %4104 = vmatpush1.xpose.msra.mxu0 0.0
        %4105 = vmatprep.subr.mxu0 0.0
        %4106 = vmatpush1.xpose.msra.mxu0 0.0
        %4107 = vmatprep.subr.mxu0 0.0
        %4108 = vmatpush1.xpose.msra.mxu0 0.0
        %4109 = vmatprep.subr.mxu0 0.0
        %4110 = vmatpush1.xpose.msra.mxu0 0.0
        %4111 = vmatprep.subr.mxu0 0.0
        %4112 = vmatpush1.xpose.msra.mxu0 0.0
        %4113 = vmatprep.subr.mxu0 0.0
        %4114 = vmatpush1.xpose.msra.mxu0 0.0
        %4115 = vmatprep.subr.mxu0 0.0
        %4116 = vmatpush1.xpose.msra.mxu0 0.0
        %4117 = vmatprep.subr.mxu0 0.0
        %4118 = vmatpush1.xpose.msra.mxu0 0.0
        %4119 = vmatprep.subr.mxu0 0.0
        %4120 = vmatpush1.xpose.msra.mxu0 0.0
        %4121 = vmatprep.subr.mxu0 0.0
        %4122 = vmatpush1.xpose.msra.mxu0 0.0
        %4123 = vmatprep.subr.mxu0 0.0
        %4124 = vmatpush1.xpose.msra.mxu0 0.0
        %4125 = vmatprep.subr.mxu0 0.0
        %4126 = vmatpush1.xpose.msra.mxu0 0.0
        %4127 = vmatprep.subr.mxu0 0.0
        %4128 = vmatpush1.xpose.msra.mxu0 0.0
        %4129 = vmatprep.subr.mxu0 0.0
        %4130 = vmatpush1.xpose.msra.mxu0 0.0
        %4131 = vmatprep.subr.mxu0 0.0
        %4132 = vmatpush1.xpose.msra.mxu0 0.0
        %4133 = vmatprep.subr.mxu0 0.0
        %4134 = vmatpush1.xpose.msra.mxu0 0.0
        %4135 = vmatprep.mubr.f32.mxu0 0.0
        %4136 = vmatmul.mubr.f32.gmra.mrb[0].mxu0 %v4066
        %v4137 = vpop.f32.mrb[0].mxu0
        %v4138 = vadd.f32 0.0, %v4137
        %v4139 = vpop.f32.mrb[0].mxu0
        %4140 = vdwg.mxu0
        %v4141 = vsel %vm887, -1e+12, %v4138
        %v4142 = vsel %vm980, %v4141, -inf
        %4143 = vmax.xlane.f32.xlu0 %v4142
        %v4144 = vpop.xlane.xlu0 %4143
        %v4145 = vsub.f32 %v4141, %v4144
        %v4146 = vmul.f32 %v4145, 1.442695
        %v4147 = vpow.pop %v4146
        %v4148 = vsel %vm980, %v4147, 0.0
        %4149 = vadd.xlane.f32.xlu0 %v4148
        %v4150 = vpop.xlane.xlu0 %4149
        %v4151 = vrcp.pop %v4150
        %v4152 = vmul.f32 %v4147, %v4151
        %4153 = vrot.lane.b32.xlu0 %v4062, 96
        %v4154 = vpop.permute.xlu0 %4153
        %v4157 = vsel %vm980, %v4152, 0
        %4159 = vmatprep.subr.mxu0 0.0
        %4160 = vmatpush1.msra.mxu0 %v4154
        %4161 = vmatprep.subr.mxu0 0.0
        %4162 = vmatpush1.msra.mxu0 0.0
        %4163 = vmatprep.subr.mxu0 0.0
        %4164 = vmatpush1.msra.mxu0 0.0
        %4165 = vmatprep.subr.mxu0 0.0
        %4166 = vmatpush1.msra.mxu0 0.0
        %4167 = vmatprep.subr.mxu0 0.0
        %4168 = vmatpush1.msra.mxu0 0.0
        %4169 = vmatprep.subr.mxu0 0.0
        %4170 = vmatpush1.msra.mxu0 0.0
        %4171 = vmatprep.subr.mxu0 0.0
        %4172 = vmatpush1.msra.mxu0 0.0
        %4173 = vmatprep.subr.mxu0 0.0
        %4174 = vmatpush1.msra.mxu0 0.0
        %4175 = vmatprep.subr.mxu0 0.0
        %4176 = vmatpush1.msra.mxu0 0.0
        %4177 = vmatprep.subr.mxu0 0.0
        %4178 = vmatpush1.msra.mxu0 0.0
        %4179 = vmatprep.subr.mxu0 0.0
        %4180 = vmatpush1.msra.mxu0 0.0
        %4181 = vmatprep.subr.mxu0 0.0
        %4182 = vmatpush1.msra.mxu0 0.0
        %4183 = vmatprep.subr.mxu0 0.0
        %4184 = vmatpush1.msra.mxu0 0.0
        %4185 = vmatprep.subr.mxu0 0.0
        %4186 = vmatpush1.msra.mxu0 0.0
        %4187 = vmatprep.subr.mxu0 0.0
        %4188 = vmatpush1.msra.mxu0 0.0
        %4189 = vmatprep.subr.mxu0 0.0
        %4190 = vmatpush1.msra.mxu0 0.0
        %4191 = vmatprep.subr.mxu0 0.0
        %4192 = vmatpush1.msra.mxu0 0.0
        %4193 = vmatprep.subr.mxu0 0.0
        %4194 = vmatpush1.msra.mxu0 0.0
        %4195 = vmatprep.subr.mxu0 0.0
        %4196 = vmatpush1.msra.mxu0 0.0
        %4197 = vmatprep.subr.mxu0 0.0
        %4198 = vmatpush1.msra.mxu0 0.0
        %4199 = vmatprep.subr.mxu0 0.0
        %4200 = vmatpush1.msra.mxu0 0.0
        %4201 = vmatprep.subr.mxu0 0.0
        %4202 = vmatpush1.msra.mxu0 0.0
        %4203 = vmatprep.subr.mxu0 0.0
        %4204 = vmatpush1.msra.mxu0 0.0
        %4205 = vmatprep.subr.mxu0 0.0
        %4206 = vmatpush1.msra.mxu0 0.0
        %4207 = vmatprep.subr.mxu0 0.0
        %4208 = vmatpush1.msra.mxu0 0.0
        %4209 = vmatprep.subr.mxu0 0.0
        %4210 = vmatpush1.msra.mxu0 0.0
        %4211 = vmatprep.subr.mxu0 0.0
        %4212 = vmatpush1.msra.mxu0 0.0
        %4213 = vmatprep.subr.mxu0 0.0
        %4214 = vmatpush1.msra.mxu0 0.0
        %4215 = vmatprep.subr.mxu0 0.0
        %4216 = vmatpush1.msra.mxu0 0.0
        %4217 = vmatprep.subr.mxu0 0.0
        %4218 = vmatpush1.msra.mxu0 0.0
        %4219 = vmatprep.subr.mxu0 0.0
        %4220 = vmatpush1.msra.mxu0 0.0
        %4221 = vmatprep.subr.mxu0 0.0
        %4222 = vmatpush1.msra.mxu0 0.0
        %4223 = vmatprep.mubr.f32.mxu0 0.0
        %4224 = vmatmul.mubr.f32.gmra.mrb[0].mxu0 %v4157
        %v4225 = vpop.f32.mrb[0].mxu0
        %v4226 = vadd.f32 0.0, %v4225
        %v4227 = vpop.f32.mrb[0].mxu0
        %4228 = vdwg.mxu0
        %4229 = vrot.lane.b32.xlu0 %v3978, 120
        %v4230 = vpop.permute.xlu0 %4229
        %4231 = vrot.lane.b32.xlu0 %v4062, 120
        %v4232 = vpop.permute.xlu0 %4231
        %v4233 = vsel %vm980, %v4230, 0
        %v4235 = vsel %vm980, %v4232, 0
        %4237 = vmatprep.subr.mxu0 0.0
        %4238 = vmatpush1.xpose.msra.mxu0 %v4235
        %4239 = vmatprep.subr.mxu0 0.0
        %4240 = vmatpush1.xpose.msra.mxu0 0.0
        %4241 = vmatprep.subr.mxu0 0.0
        %4242 = vmatpush1.xpose.msra.mxu0 0.0
        %4243 = vmatprep.subr.mxu0 0.0
        %4244 = vmatpush1.xpose.msra.mxu0 0.0
        %4245 = vmatprep.subr.mxu0 0.0
        %4246 = vmatpush1.xpose.msra.mxu0 0.0
        %4247 = vmatprep.subr.mxu0 0.0
        %4248 = vmatpush1.xpose.msra.mxu0 0.0
        %4249 = vmatprep.subr.mxu0 0.0
        %4250 = vmatpush1.xpose.msra.mxu0 0.0
        %4251 = vmatprep.subr.mxu0 0.0
        %4252 = vmatpush1.xpose.msra.mxu0 0.0
        %4253 = vmatprep.subr.mxu0 0.0
        %4254 = vmatpush1.xpose.msra.mxu0 0.0
        %4255 = vmatprep.subr.mxu0 0.0
        %4256 = vmatpush1.xpose.msra.mxu0 0.0
        %4257 = vmatprep.subr.mxu0 0.0
        %4258 = vmatpush1.xpose.msra.mxu0 0.0
        %4259 = vmatprep.subr.mxu0 0.0
        %4260 = vmatpush1.xpose.msra.mxu0 0.0
        %4261 = vmatprep.subr.mxu0 0.0
        %4262 = vmatpush1.xpose.msra.mxu0 0.0
        %4263 = vmatprep.subr.mxu0 0.0
        %4264 = vmatpush1.xpose.msra.mxu0 0.0
        %4265 = vmatprep.subr.mxu0 0.0
        %4266 = vmatpush1.xpose.msra.mxu0 0.0
        %4267 = vmatprep.subr.mxu0 0.0
        %4268 = vmatpush1.xpose.msra.mxu0 0.0
        %4269 = vmatprep.subr.mxu0 0.0
        %4270 = vmatpush1.xpose.msra.mxu0 0.0
        %4271 = vmatprep.subr.mxu0 0.0
        %4272 = vmatpush1.xpose.msra.mxu0 0.0
        %4273 = vmatprep.subr.mxu0 0.0
        %4274 = vmatpush1.xpose.msra.mxu0 0.0
        %4275 = vmatprep.subr.mxu0 0.0
        %4276 = vmatpush1.xpose.msra.mxu0 0.0
        %4277 = vmatprep.subr.mxu0 0.0
        %4278 = vmatpush1.xpose.msra.mxu0 0.0
        %4279 = vmatprep.subr.mxu0 0.0
        %4280 = vmatpush1.xpose.msra.mxu0 0.0
        %4281 = vmatprep.subr.mxu0 0.0
        %4282 = vmatpush1.xpose.msra.mxu0 0.0
        %4283 = vmatprep.subr.mxu0 0.0
        %4284 = vmatpush1.xpose.msra.mxu0 0.0
        %4285 = vmatprep.subr.mxu0 0.0
        %4286 = vmatpush1.xpose.msra.mxu0 0.0
        %4287 = vmatprep.subr.mxu0 0.0
        %4288 = vmatpush1.xpose.msra.mxu0 0.0
        %4289 = vmatprep.subr.mxu0 0.0
        %4290 = vmatpush1.xpose.msra.mxu0 0.0
        %4291 = vmatprep.subr.mxu0 0.0
        %4292 = vmatpush1.xpose.msra.mxu0 0.0
        %4293 = vmatprep.subr.mxu0 0.0
        %4294 = vmatpush1.xpose.msra.mxu0 0.0
        %4295 = vmatprep.subr.mxu0 0.0
        %4296 = vmatpush1.xpose.msra.mxu0 0.0
        %4297 = vmatprep.subr.mxu0 0.0
        %4298 = vmatpush1.xpose.msra.mxu0 0.0
        %4299 = vmatprep.subr.mxu0 0.0
        %4300 = vmatpush1.xpose.msra.mxu0 0.0
        %4301 = vmatprep.mubr.f32.mxu0 0.0
        %4302 = vmatmul.mubr.f32.gmra.mrb[0].mxu0 %v4233
        %v4303 = vpop.f32.mrb[0].mxu0
        %v4304 = vadd.f32 0.0, %v4303
        %v4305 = vpop.f32.mrb[0].mxu0
        %4306 = vdwg.mxu0
        %v4307 = vsel %vm887, -1e+12, %v4304
        %v4308 = vsel %vm980, %v4307, -inf
        %4309 = vmax.xlane.f32.xlu0 %v4308
        %v4310 = vpop.xlane.xlu0 %4309
        %v4311 = vsub.f32 %v4307, %v4310
        %v4312 = vmul.f32 %v4311, 1.442695
        %v4313 = vpow.pop %v4312
        %v4314 = vsel %vm980, %v4313, 0.0
        %4315 = vadd.xlane.f32.xlu0 %v4314
        %v4316 = vpop.xlane.xlu0 %4315
        %v4317 = vrcp.pop %v4316
        %v4318 = vmul.f32 %v4313, %v4317
        %4319 = vrot.lane.b32.xlu0 %v4062, 88
        %v4320 = vpop.permute.xlu0 %4319
        %v4323 = vsel %vm980, %v4318, 0
        %4325 = vmatprep.subr.mxu0 0.0
        %4326 = vmatpush1.msra.mxu0 %v4320
        %4327 = vmatprep.subr.mxu0 0.0
        %4328 = vmatpush1.msra.mxu0 0.0
        %4329 = vmatprep.subr.mxu0 0.0
        %4330 = vmatpush1.msra.mxu0 0.0
        %4331 = vmatprep.subr.mxu0 0.0
        %4332 = vmatpush1.msra.mxu0 0.0
        %4333 = vmatprep.subr.mxu0 0.0
        %4334 = vmatpush1.msra.mxu0 0.0
        %4335 = vmatprep.subr.mxu0 0.0
        %4336 = vmatpush1.msra.mxu0 0.0
        %4337 = vmatprep.subr.mxu0 0.0
        %4338 = vmatpush1.msra.mxu0 0.0
        %4339 = vmatprep.subr.mxu0 0.0
        %4340 = vmatpush1.msra.mxu0 0.0
        %4341 = vmatprep.subr.mxu0 0.0
        %4342 = vmatpush1.msra.mxu0 0.0
        %4343 = vmatprep.subr.mxu0 0.0
        %4344 = vmatpush1.msra.mxu0 0.0
        %4345 = vmatprep.subr.mxu0 0.0
        %4346 = vmatpush1.msra.mxu0 0.0
        %4347 = vmatprep.subr.mxu0 0.0
        %4348 = vmatpush1.msra.mxu0 0.0
        %4349 = vmatprep.subr.mxu0 0.0
        %4350 = vmatpush1.msra.mxu0 0.0
        %4351 = vmatprep.subr.mxu0 0.0
        %4352 = vmatpush1.msra.mxu0 0.0
        %4353 = vmatprep.subr.mxu0 0.0
        %4354 = vmatpush1.msra.mxu0 0.0
        %4355 = vmatprep.subr.mxu0 0.0
        %4356 = vmatpush1.msra.mxu0 0.0
        %4357 = vmatprep.subr.mxu0 0.0
        %4358 = vmatpush1.msra.mxu0 0.0
        %4359 = vmatprep.subr.mxu0 0.0
        %4360 = vmatpush1.msra.mxu0 0.0
        %4361 = vmatprep.subr.mxu0 0.0
        %4362 = vmatpush1.msra.mxu0 0.0
        %4363 = vmatprep.subr.mxu0 0.0
        %4364 = vmatpush1.msra.mxu0 0.0
        %4365 = vmatprep.subr.mxu0 0.0
        %4366 = vmatpush1.msra.mxu0 0.0
        %4367 = vmatprep.subr.mxu0 0.0
        %4368 = vmatpush1.msra.mxu0 0.0
        %4369 = vmatprep.subr.mxu0 0.0
        %4370 = vmatpush1.msra.mxu0 0.0
        %4371 = vmatprep.subr.mxu0 0.0
        %4372 = vmatpush1.msra.mxu0 0.0
        %4373 = vmatprep.subr.mxu0 0.0
        %4374 = vmatpush1.msra.mxu0 0.0
        %4375 = vmatprep.subr.mxu0 0.0
        %4376 = vmatpush1.msra.mxu0 0.0
        %4377 = vmatprep.subr.mxu0 0.0
        %4378 = vmatpush1.msra.mxu0 0.0
        %4379 = vmatprep.subr.mxu0 0.0
        %4380 = vmatpush1.msra.mxu0 0.0
        %4381 = vmatprep.subr.mxu0 0.0
        %4382 = vmatpush1.msra.mxu0 0.0
        %4383 = vmatprep.subr.mxu0 0.0
        %4384 = vmatpush1.msra.mxu0 0.0
        %4385 = vmatprep.subr.mxu0 0.0
        %4386 = vmatpush1.msra.mxu0 0.0
        %4387 = vmatprep.subr.mxu0 0.0
        %4388 = vmatpush1.msra.mxu0 0.0
        %4389 = vmatprep.mubr.f32.mxu0 0.0
        %4390 = vmatmul.mubr.f32.gmra.mrb[0].mxu0 %v4323
        %v4391 = vpop.f32.mrb[0].mxu0
        %v4392 = vadd.f32 0.0, %v4391
        %v4393 = vpop.f32.mrb[0].mxu0
        %4394 = vdwg.mxu0
        %4395 = vrot.lane.b32.xlu0 %v3978, 112
        %v4396 = vpop.permute.xlu0 %4395
        %4397 = vrot.lane.b32.xlu0 %v4062, 112
        %v4398 = vpop.permute.xlu0 %4397
        %v4399 = vsel %vm980, %v4396, 0
        %v4401 = vsel %vm980, %v4398, 0
        %4403 = vmatprep.subr.mxu0 0.0
        %4404 = vmatpush1.xpose.msra.mxu0 %v4401
        %4405 = vmatprep.subr.mxu0 0.0
        %4406 = vmatpush1.xpose.msra.mxu0 0.0
        %4407 = vmatprep.subr.mxu0 0.0
        %4408 = vmatpush1.xpose.msra.mxu0 0.0
        %4409 = vmatprep.subr.mxu0 0.0
        %4410 = vmatpush1.xpose.msra.mxu0 0.0
        %4411 = vmatprep.subr.mxu0 0.0
        %4412 = vmatpush1.xpose.msra.mxu0 0.0
        %4413 = vmatprep.subr.mxu0 0.0
        %4414 = vmatpush1.xpose.msra.mxu0 0.0
        %4415 = vmatprep.subr.mxu0 0.0
        %4416 = vmatpush1.xpose.msra.mxu0 0.0
        %4417 = vmatprep.subr.mxu0 0.0
        %4418 = vmatpush1.xpose.msra.mxu0 0.0
        %4419 = vmatprep.subr.mxu0 0.0
        %4420 = vmatpush1.xpose.msra.mxu0 0.0
        %4421 = vmatprep.subr.mxu0 0.0
        %4422 = vmatpush1.xpose.msra.mxu0 0.0
        %4423 = vmatprep.subr.mxu0 0.0
        %4424 = vmatpush1.xpose.msra.mxu0 0.0
        %4425 = vmatprep.subr.mxu0 0.0
        %4426 = vmatpush1.xpose.msra.mxu0 0.0
        %4427 = vmatprep.subr.mxu0 0.0
        %4428 = vmatpush1.xpose.msra.mxu0 0.0
        %4429 = vmatprep.subr.mxu0 0.0
        %4430 = vmatpush1.xpose.msra.mxu0 0.0
        %4431 = vmatprep.subr.mxu0 0.0
        %4432 = vmatpush1.xpose.msra.mxu0 0.0
        %4433 = vmatprep.subr.mxu0 0.0
        %4434 = vmatpush1.xpose.msra.mxu0 0.0
        %4435 = vmatprep.subr.mxu0 0.0
        %4436 = vmatpush1.xpose.msra.mxu0 0.0
        %4437 = vmatprep.subr.mxu0 0.0
        %4438 = vmatpush1.xpose.msra.mxu0 0.0
        %4439 = vmatprep.subr.mxu0 0.0
        %4440 = vmatpush1.xpose.msra.mxu0 0.0
        %4441 = vmatprep.subr.mxu0 0.0
        %4442 = vmatpush1.xpose.msra.mxu0 0.0
        %4443 = vmatprep.subr.mxu0 0.0
        %4444 = vmatpush1.xpose.msra.mxu0 0.0
        %4445 = vmatprep.subr.mxu0 0.0
        %4446 = vmatpush1.xpose.msra.mxu0 0.0
        %4447 = vmatprep.subr.mxu0 0.0
        %4448 = vmatpush1.xpose.msra.mxu0 0.0
        %4449 = vmatprep.subr.mxu0 0.0
        %4450 = vmatpush1.xpose.msra.mxu0 0.0
        %4451 = vmatprep.subr.mxu0 0.0
        %4452 = vmatpush1.xpose.msra.mxu0 0.0
        %4453 = vmatprep.subr.mxu0 0.0
        %4454 = vmatpush1.xpose.msra.mxu0 0.0
        %4455 = vmatprep.subr.mxu0 0.0
        %4456 = vmatpush1.xpose.msra.mxu0 0.0
        %4457 = vmatprep.subr.mxu0 0.0
        %4458 = vmatpush1.xpose.msra.mxu0 0.0
        %4459 = vmatprep.subr.mxu0 0.0
        %4460 = vmatpush1.xpose.msra.mxu0 0.0
        %4461 = vmatprep.subr.mxu0 0.0
        %4462 = vmatpush1.xpose.msra.mxu0 0.0
        %4463 = vmatprep.subr.mxu0 0.0
        %4464 = vmatpush1.xpose.msra.mxu0 0.0
        %4465 = vmatprep.subr.mxu0 0.0
        %4466 = vmatpush1.xpose.msra.mxu0 0.0
        %4467 = vmatprep.mubr.f32.mxu0 0.0
        %4468 = vmatmul.mubr.f32.gmra.mrb[0].mxu0 %v4399
        %v4469 = vpop.f32.mrb[0].mxu0
        %v4470 = vadd.f32 0.0, %v4469
        %v4471 = vpop.f32.mrb[0].mxu0
        %4472 = vdwg.mxu0
        %v4473 = vsel %vm887, -1e+12, %v4470
        %v4474 = vsel %vm980, %v4473, -inf
        %4475 = vmax.xlane.f32.xlu0 %v4474
        %v4476 = vpop.xlane.xlu0 %4475
        %v4477 = vsub.f32 %v4473, %v4476
        %v4478 = vmul.f32 %v4477, 1.442695
        %v4479 = vpow.pop %v4478
        %v4480 = vsel %vm980, %v4479, 0.0
        %4481 = vadd.xlane.f32.xlu0 %v4480
        %v4482 = vpop.xlane.xlu0 %4481
        %v4483 = vrcp.pop %v4482
        %v4484 = vmul.f32 %v4479, %v4483
        %4485 = vrot.lane.b32.xlu0 %v4062, 80
        %v4486 = vpop.permute.xlu0 %4485
        %v4489 = vsel %vm980, %v4484, 0
        %4491 = vmatprep.subr.mxu0 0.0
        %4492 = vmatpush1.msra.mxu0 %v4486
        %4493 = vmatprep.subr.mxu0 0.0
        %4494 = vmatpush1.msra.mxu0 0.0
        %4495 = vmatprep.subr.mxu0 0.0
        %4496 = vmatpush1.msra.mxu0 0.0
        %4497 = vmatprep.subr.mxu0 0.0
        %4498 = vmatpush1.msra.mxu0 0.0
        %4499 = vmatprep.subr.mxu0 0.0
        %4500 = vmatpush1.msra.mxu0 0.0
        %4501 = vmatprep.subr.mxu0 0.0
        %4502 = vmatpush1.msra.mxu0 0.0
        %4503 = vmatprep.subr.mxu0 0.0
        %4504 = vmatpush1.msra.mxu0 0.0
        %4505 = vmatprep.subr.mxu0 0.0
        %4506 = vmatpush1.msra.mxu0 0.0
        %4507 = vmatprep.subr.mxu0 0.0
        %4508 = vmatpush1.msra.mxu0 0.0
        %4509 = vmatprep.subr.mxu0 0.0
        %4510 = vmatpush1.msra.mxu0 0.0
        %4511 = vmatprep.subr.mxu0 0.0
        %4512 = vmatpush1.msra.mxu0 0.0
        %4513 = vmatprep.subr.mxu0 0.0
        %4514 = vmatpush1.msra.mxu0 0.0
        %4515 = vmatprep.subr.mxu0 0.0
        %4516 = vmatpush1.msra.mxu0 0.0
        %4517 = vmatprep.subr.mxu0 0.0
        %4518 = vmatpush1.msra.mxu0 0.0
        %4519 = vmatprep.subr.mxu0 0.0
        %4520 = vmatpush1.msra.mxu0 0.0
        %4521 = vmatprep.subr.mxu0 0.0
        %4522 = vmatpush1.msra.mxu0 0.0
        %4523 = vmatprep.subr.mxu0 0.0
        %4524 = vmatpush1.msra.mxu0 0.0
        %4525 = vmatprep.subr.mxu0 0.0
        %4526 = vmatpush1.msra.mxu0 0.0
        %4527 = vmatprep.subr.mxu0 0.0
        %4528 = vmatpush1.msra.mxu0 0.0
        %4529 = vmatprep.subr.mxu0 0.0
        %4530 = vmatpush1.msra.mxu0 0.0
        %4531 = vmatprep.subr.mxu0 0.0
        %4532 = vmatpush1.msra.mxu0 0.0
        %4533 = vmatprep.subr.mxu0 0.0
        %4534 = vmatpush1.msra.mxu0 0.0
        %4535 = vmatprep.subr.mxu0 0.0
        %4536 = vmatpush1.msra.mxu0 0.0
        %4537 = vmatprep.subr.mxu0 0.0
        %4538 = vmatpush1.msra.mxu0 0.0
        %4539 = vmatprep.subr.mxu0 0.0
        %4540 = vmatpush1.msra.mxu0 0.0
        %4541 = vmatprep.subr.mxu0 0.0
        %4542 = vmatpush1.msra.mxu0 0.0
        %4543 = vmatprep.subr.mxu0 0.0
        %4544 = vmatpush1.msra.mxu0 0.0
        %4545 = vmatprep.subr.mxu0 0.0
        %4546 = vmatpush1.msra.mxu0 0.0
        %4547 = vmatprep.subr.mxu0 0.0
        %4548 = vmatpush1.msra.mxu0 0.0
        %4549 = vmatprep.subr.mxu0 0.0
        %4550 = vmatpush1.msra.mxu0 0.0
        %4551 = vmatprep.subr.mxu0 0.0
        %4552 = vmatpush1.msra.mxu0 0.0
        %4553 = vmatprep.subr.mxu0 0.0
        %4554 = vmatpush1.msra.mxu0 0.0
        %4555 = vmatprep.mubr.f32.mxu0 0.0
        %4556 = vmatmul.mubr.f32.gmra.mrb[0].mxu0 %v4489
        %v4557 = vpop.f32.mrb[0].mxu0
        %v4558 = vadd.f32 0.0, %v4557
        %v4559 = vpop.f32.mrb[0].mxu0
        %4560 = vdwg.mxu0
        %4561 = vrot.lane.b32.xlu0 %v3978, 104
        %v4562 = vpop.permute.xlu0 %4561
        %4563 = vrot.lane.b32.xlu0 %v4062, 104
        %v4564 = vpop.permute.xlu0 %4563
        %v4565 = vsel %vm980, %v4562, 0
        %v4567 = vsel %vm980, %v4564, 0
        %4569 = vmatprep.subr.mxu0 0.0
        %4570 = vmatpush1.xpose.msra.mxu0 %v4567
        %4571 = vmatprep.subr.mxu0 0.0
        %4572 = vmatpush1.xpose.msra.mxu0 0.0
        %4573 = vmatprep.subr.mxu0 0.0
        %4574 = vmatpush1.xpose.msra.mxu0 0.0
        %4575 = vmatprep.subr.mxu0 0.0
        %4576 = vmatpush1.xpose.msra.mxu0 0.0
        %4577 = vmatprep.subr.mxu0 0.0
        %4578 = vmatpush1.xpose.msra.mxu0 0.0
        %4579 = vmatprep.subr.mxu0 0.0
        %4580 = vmatpush1.xpose.msra.mxu0 0.0
        %4581 = vmatprep.subr.mxu0 0.0
        %4582 = vmatpush1.xpose.msra.mxu0 0.0
        %4583 = vmatprep.subr.mxu0 0.0
        %4584 = vmatpush1.xpose.msra.mxu0 0.0
        %4585 = vmatprep.subr.mxu0 0.0
        %4586 = vmatpush1.xpose.msra.mxu0 0.0
        %4587 = vmatprep.subr.mxu0 0.0
        %4588 = vmatpush1.xpose.msra.mxu0 0.0
        %4589 = vmatprep.subr.mxu0 0.0
        %4590 = vmatpush1.xpose.msra.mxu0 0.0
        %4591 = vmatprep.subr.mxu0 0.0
        %4592 = vmatpush1.xpose.msra.mxu0 0.0
        %4593 = vmatprep.subr.mxu0 0.0
        %4594 = vmatpush1.xpose.msra.mxu0 0.0
        %4595 = vmatprep.subr.mxu0 0.0
        %4596 = vmatpush1.xpose.msra.mxu0 0.0
        %4597 = vmatprep.subr.mxu0 0.0
        %4598 = vmatpush1.xpose.msra.mxu0 0.0
        %4599 = vmatprep.subr.mxu0 0.0
        %4600 = vmatpush1.xpose.msra.mxu0 0.0
        %4601 = vmatprep.subr.mxu0 0.0
        %4602 = vmatpush1.xpose.msra.mxu0 0.0
        %4603 = vmatprep.subr.mxu0 0.0
        %4604 = vmatpush1.xpose.msra.mxu0 0.0
        %4605 = vmatprep.subr.mxu0 0.0
        %4606 = vmatpush1.xpose.msra.mxu0 0.0
        %4607 = vmatprep.subr.mxu0 0.0
        %4608 = vmatpush1.xpose.msra.mxu0 0.0
        %4609 = vmatprep.subr.mxu0 0.0
        %4610 = vmatpush1.xpose.msra.mxu0 0.0
        %4611 = vmatprep.subr.mxu0 0.0
        %4612 = vmatpush1.xpose.msra.mxu0 0.0
        %4613 = vmatprep.subr.mxu0 0.0
        %4614 = vmatpush1.xpose.msra.mxu0 0.0
        %4615 = vmatprep.subr.mxu0 0.0
        %4616 = vmatpush1.xpose.msra.mxu0 0.0
        %4617 = vmatprep.subr.mxu0 0.0
        %4618 = vmatpush1.xpose.msra.mxu0 0.0
        %4619 = vmatprep.subr.mxu0 0.0
        %4620 = vmatpush1.xpose.msra.mxu0 0.0
        %4621 = vmatprep.subr.mxu0 0.0
        %4622 = vmatpush1.xpose.msra.mxu0 0.0
        %4623 = vmatprep.subr.mxu0 0.0
        %4624 = vmatpush1.xpose.msra.mxu0 0.0
        %4625 = vmatprep.subr.mxu0 0.0
        %4626 = vmatpush1.xpose.msra.mxu0 0.0
        %4627 = vmatprep.subr.mxu0 0.0
        %4628 = vmatpush1.xpose.msra.mxu0 0.0
        %4629 = vmatprep.subr.mxu0 0.0
        %4630 = vmatpush1.xpose.msra.mxu0 0.0
        %4631 = vmatprep.subr.mxu0 0.0
        %4632 = vmatpush1.xpose.msra.mxu0 0.0
        %4633 = vmatprep.mubr.f32.mxu0 0.0
        %4634 = vmatmul.mubr.f32.gmra.mrb[0].mxu0 %v4565
        %v4635 = vpop.f32.mrb[0].mxu0
        %v4636 = vadd.f32 0.0, %v4635
        %v4637 = vpop.f32.mrb[0].mxu0
        %4638 = vdwg.mxu0
        %v4639 = vsel %vm887, -1e+12, %v4636
        %v4640 = vsel %vm980, %v4639, -inf
        %4641 = vmax.xlane.f32.xlu0 %v4640
        %v4642 = vpop.xlane.xlu0 %4641
        %v4643 = vsub.f32 %v4639, %v4642
        %v4644 = vmul.f32 %v4643, 1.442695
        %v4645 = vpow.pop %v4644
        %v4646 = vsel %vm980, %v4645, 0.0
        %4647 = vadd.xlane.f32.xlu0 %v4646
        %v4648 = vpop.xlane.xlu0 %4647
        %v4649 = vrcp.pop %v4648
        %v4650 = vmul.f32 %v4645, %v4649
        %4651 = vrot.lane.b32.xlu0 %v4062, 72
        %v4652 = vpop.permute.xlu0 %4651
        %v4655 = vsel %vm980, %v4650, 0
        %4657 = vmatprep.subr.mxu0 0.0
        %4658 = vmatpush1.msra.mxu0 %v4652
        %4659 = vmatprep.subr.mxu0 0.0
        %4660 = vmatpush1.msra.mxu0 0.0
        %4661 = vmatprep.subr.mxu0 0.0
        %4662 = vmatpush1.msra.mxu0 0.0
        %4663 = vmatprep.subr.mxu0 0.0
        %4664 = vmatpush1.msra.mxu0 0.0
        %4665 = vmatprep.subr.mxu0 0.0
        %4666 = vmatpush1.msra.mxu0 0.0
        %4667 = vmatprep.subr.mxu0 0.0
        %4668 = vmatpush1.msra.mxu0 0.0
        %4669 = vmatprep.subr.mxu0 0.0
        %4670 = vmatpush1.msra.mxu0 0.0
        %4671 = vmatprep.subr.mxu0 0.0
        %4672 = vmatpush1.msra.mxu0 0.0
        %4673 = vmatprep.subr.mxu0 0.0
        %4674 = vmatpush1.msra.mxu0 0.0
        %4675 = vmatprep.subr.mxu0 0.0
        %4676 = vmatpush1.msra.mxu0 0.0
        %4677 = vmatprep.subr.mxu0 0.0
        %4678 = vmatpush1.msra.mxu0 0.0
        %4679 = vmatprep.subr.mxu0 0.0
        %4680 = vmatpush1.msra.mxu0 0.0
        %4681 = vmatprep.subr.mxu0 0.0
        %4682 = vmatpush1.msra.mxu0 0.0
        %4683 = vmatprep.subr.mxu0 0.0
        %4684 = vmatpush1.msra.mxu0 0.0
        %4685 = vmatprep.subr.mxu0 0.0
        %4686 = vmatpush1.msra.mxu0 0.0
        %4687 = vmatprep.subr.mxu0 0.0
        %4688 = vmatpush1.msra.mxu0 0.0
        %4689 = vmatprep.subr.mxu0 0.0
        %4690 = vmatpush1.msra.mxu0 0.0
        %4691 = vmatprep.subr.mxu0 0.0
        %4692 = vmatpush1.msra.mxu0 0.0
        %4693 = vmatprep.subr.mxu0 0.0
        %4694 = vmatpush1.msra.mxu0 0.0
        %4695 = vmatprep.subr.mxu0 0.0
        %4696 = vmatpush1.msra.mxu0 0.0
        %4697 = vmatprep.subr.mxu0 0.0
        %4698 = vmatpush1.msra.mxu0 0.0
        %4699 = vmatprep.subr.mxu0 0.0
        %4700 = vmatpush1.msra.mxu0 0.0
        %4701 = vmatprep.subr.mxu0 0.0
        %4702 = vmatpush1.msra.mxu0 0.0
        %4703 = vmatprep.subr.mxu0 0.0
        %4704 = vmatpush1.msra.mxu0 0.0
        %4705 = vmatprep.subr.mxu0 0.0
        %4706 = vmatpush1.msra.mxu0 0.0
        %4707 = vmatprep.subr.mxu0 0.0
        %4708 = vmatpush1.msra.mxu0 0.0
        %4709 = vmatprep.subr.mxu0 0.0
        %4710 = vmatpush1.msra.mxu0 0.0
        %4711 = vmatprep.subr.mxu0 0.0
        %4712 = vmatpush1.msra.mxu0 0.0
        %4713 = vmatprep.subr.mxu0 0.0
        %4714 = vmatpush1.msra.mxu0 0.0
        %4715 = vmatprep.subr.mxu0 0.0
        %4716 = vmatpush1.msra.mxu0 0.0
        %4717 = vmatprep.subr.mxu0 0.0
        %4718 = vmatpush1.msra.mxu0 0.0
        %4719 = vmatprep.subr.mxu0 0.0
        %4720 = vmatpush1.msra.mxu0 0.0
        %4721 = vmatprep.mubr.f32.mxu0 0.0
        %4722 = vmatmul.mubr.f32.gmra.mrb[0].mxu0 %v4655
        %v4723 = vpop.f32.mrb[0].mxu0
        %v4724 = vadd.f32 0.0, %v4723
        %v4725 = vpop.f32.mrb[0].mxu0
        %4726 = vdwg.mxu0
        %4728 = vrot.lane.b32.xlu0 %v4392, 8
        %v4729 = vpop.permute.xlu0 %4728
        %4732 = vrot.lane.b32.xlu0 %v4558, 16
        %v4733 = vpop.permute.xlu0 %4732
        %4736 = vrot.lane.b32.xlu0 %v4724, 24
        %v4737 = vpop.permute.xlu0 %4736
        %v4739 = vsel %vm980, %v4226, %v4729
        %v4740 = vsel %vm1654, %v4739, %v4733
        %v4741 = vsel %vm1656, %v4740, %v4737
        %v4742 = vld [vmem:[%s20] sm:$0xff]
        %v4743 = vld [vmem:[%s20 + $0x8] sm:$0xff]
        %v4744 = vld [vmem:[%s20 + $0x10] sm:$0xff]
        %v4745 = vld [vmem:[%s20 + $0x18] sm:$0xff]
        %v4746 = vlaneseq
        %v4747 = vshrl.u32 %v4746, 7
        %v4748 = vsub.s32 4, %v4747
        %v4749 = vrot.slane %v3031, %v4748
        %v4751 = vsel %vm903, %v4741, 0
        %4753 = vmatprep.subr.mxu0 0.0
        %4754 = vmatpush1.msra.mxu0 %v4742
        %4755 = vmatprep.subr.mxu0 0.0
        %4756 = vmatpush1.msra.mxu0 %v4743
        %4757 = vmatprep.subr.mxu0 0.0
        %4758 = vmatpush1.msra.mxu0 %v4744
        %4759 = vmatprep.subr.mxu0 0.0
        %4760 = vmatpush1.msra.mxu0 %v4745
        %4761 = vmatprep.subr.mxu0 0.0
        %4762 = vmatpush1.msra.mxu0 0.0
        %4763 = vmatprep.subr.mxu0 0.0
        %4764 = vmatpush1.msra.mxu0 0.0
        %4765 = vmatprep.subr.mxu0 0.0
        %4766 = vmatpush1.msra.mxu0 0.0
        %4767 = vmatprep.subr.mxu0 0.0
        %4768 = vmatpush1.msra.mxu0 0.0
        %4769 = vmatprep.subr.mxu0 0.0
        %4770 = vmatpush1.msra.mxu0 0.0
        %4771 = vmatprep.subr.mxu0 0.0
        %4772 = vmatpush1.msra.mxu0 0.0
        %4773 = vmatprep.subr.mxu0 0.0
        %4774 = vmatpush1.msra.mxu0 0.0
        %4775 = vmatprep.subr.mxu0 0.0
        %4776 = vmatpush1.msra.mxu0 0.0
        %4777 = vmatprep.subr.mxu0 0.0
        %4778 = vmatpush1.msra.mxu0 0.0
        %4779 = vmatprep.subr.mxu0 0.0
        %4780 = vmatpush1.msra.mxu0 0.0
        %4781 = vmatprep.subr.mxu0 0.0
        %4782 = vmatpush1.msra.mxu0 0.0
        %4783 = vmatprep.subr.mxu0 0.0
        %4784 = vmatpush1.msra.mxu0 0.0
        %4785 = vmatprep.subr.mxu0 0.0
        %4786 = vmatpush1.msra.mxu0 0.0
        %4787 = vmatprep.subr.mxu0 0.0
        %4788 = vmatpush1.msra.mxu0 0.0
        %4789 = vmatprep.subr.mxu0 0.0
        %4790 = vmatpush1.msra.mxu0 0.0
        %4791 = vmatprep.subr.mxu0 0.0
        %4792 = vmatpush1.msra.mxu0 0.0
        %4793 = vmatprep.subr.mxu0 0.0
        %4794 = vmatpush1.msra.mxu0 0.0
        %4795 = vmatprep.subr.mxu0 0.0
        %4796 = vmatpush1.msra.mxu0 0.0
        %4797 = vmatprep.subr.mxu0 0.0
        %4798 = vmatpush1.msra.mxu0 0.0
        %4799 = vmatprep.subr.mxu0 0.0
        %4800 = vmatpush1.msra.mxu0 0.0
        %4801 = vmatprep.subr.mxu0 0.0
        %4802 = vmatpush1.msra.mxu0 0.0
        %4803 = vmatprep.subr.mxu0 0.0
        %4804 = vmatpush1.msra.mxu0 0.0
        %4805 = vmatprep.subr.mxu0 0.0
        %4806 = vmatpush1.msra.mxu0 0.0
        %4807 = vmatprep.subr.mxu0 0.0
        %4808 = vmatpush1.msra.mxu0 0.0
        %4809 = vmatprep.subr.mxu0 0.0
        %4810 = vmatpush1.msra.mxu0 0.0
        %4811 = vmatprep.subr.mxu0 0.0
        %4812 = vmatpush1.msra.mxu0 0.0
        %4813 = vmatprep.subr.mxu0 0.0
        %4814 = vmatpush1.msra.mxu0 0.0
        %4815 = vmatprep.subr.mxu0 0.0
        %4816 = vmatpush1.msra.mxu0 0.0
        %4817 = vmatprep.mubr.f32.mxu0 0.0
        %4818 = vmatmul.mubr.f32.gmra.mrb[0].mxu0 %v4751
        %v4819 = vpop.f32.mrb[0].mxu0
        %v4820 = vadd.f32 %v4749, %v4819
        %v4821 = vpop.f32.mrb[0].mxu0
        %4822 = vdwg.mxu0
        %v4823 = vadd.f32 %v3899, %v4820
        %v4824 = vsel %vm903, %v4823, 0.0
        %4825 = vadd.xlane.f32.xlu0 %v4824
        %v4826 = vpop.xlane.xlu0 %4825
        %v4827 = vmul.f32 %v4826, %v1743
        %v4828 = vsub.f32 %v4823, %v4827
        %v4829 = vmul.f32 %v4828, %v4828
        %v4830 = vsel %vm903, %v4829, 0.0
        %4831 = vadd.xlane.f32.xlu0 %v4830
        %v4832 = vpop.xlane.xlu0 %4831
        %v4833 = vmul.f32 %v4832, %v1743
        %v4834 = vadd.f32 %v4833, 1e-05
        %v4835 = vrsqrt.pop %v4834
        %v4836 = vmul.f32 %v4828, %v4835
        %v4837 = vlaneseq
        %v4838 = vshrl.u32 %v4837, 7
        %v4839 = vsub.s32 5, %v4838
        %v4840 = vrot.slane %v3031, %v4839
        %v4841 = vmul.f32 %v4836, %v4840
        %v4842 = vlaneseq
        %v4843 = vshrl.u32 %v4842, 7
        %v4844 = vsub.s32 6, %v4843
        %v4845 = vrot.slane %v3031, %v4844
        %v4846 = vadd.f32 %v4841, %v4845
        %v4847 = vld [vmem:[%s21] sm:$0xff]
        %v4848 = vld [vmem:[%s21 + $0x8] sm:$0xff]
        %v4849 = vld [vmem:[%s21 + $0x10] sm:$0xff]
        %v4850 = vld [vmem:[%s21 + $0x18] sm:$0xff]
        %v4851 = vld [vmem:[%s22] sm:$0x1]
        %v4853 = vlaneseq
        %v4854 = vshrl.u32 %v4853, 7
        %v4855 = vsub.s32 0, %v4854
        %v4856 = vrot.slane %v4851, %v4855
        %v4859 = vsel %vm903, %v4846, 0
        %4861 = vmatprep.subr.mxu0 0.0
        %4862 = vmatpush1.msra.mxu0 %v4847
        %4863 = vmatprep.subr.mxu0 0.0
        %4864 = vmatpush1.msra.mxu0 %v4848
        %4865 = vmatprep.subr.mxu0 0.0
        %4866 = vmatpush1.msra.mxu0 %v4849
        %4867 = vmatprep.subr.mxu0 0.0
        %4868 = vmatpush1.msra.mxu0 %v4850
        %4869 = vmatprep.subr.mxu0 0.0
        %4870 = vmatpush1.msra.mxu0 0.0
        %4871 = vmatprep.subr.mxu0 0.0
        %4872 = vmatpush1.msra.mxu0 0.0
        %4873 = vmatprep.subr.mxu0 0.0
        %4874 = vmatpush1.msra.mxu0 0.0
        %4875 = vmatprep.subr.mxu0 0.0
        %4876 = vmatpush1.msra.mxu0 0.0
        %4877 = vmatprep.subr.mxu0 0.0
        %4878 = vmatpush1.msra.mxu0 0.0
        %4879 = vmatprep.subr.mxu0 0.0
        %4880 = vmatpush1.msra.mxu0 0.0
        %4881 = vmatprep.subr.mxu0 0.0
        %4882 = vmatpush1.msra.mxu0 0.0
        %4883 = vmatprep.subr.mxu0 0.0
        %4884 = vmatpush1.msra.mxu0 0.0
        %4885 = vmatprep.subr.mxu0 0.0
        %4886 = vmatpush1.msra.mxu0 0.0
        %4887 = vmatprep.subr.mxu0 0.0
        %4888 = vmatpush1.msra.mxu0 0.0
        %4889 = vmatprep.subr.mxu0 0.0
        %4890 = vmatpush1.msra.mxu0 0.0
        %4891 = vmatprep.subr.mxu0 0.0
        %4892 = vmatpush1.msra.mxu0 0.0
        %4893 = vmatprep.subr.mxu0 0.0
        %4894 = vmatpush1.msra.mxu0 0.0
        %4895 = vmatprep.subr.mxu0 0.0
        %4896 = vmatpush1.msra.mxu0 0.0
        %4897 = vmatprep.subr.mxu0 0.0
        %4898 = vmatpush1.msra.mxu0 0.0
        %4899 = vmatprep.subr.mxu0 0.0
        %4900 = vmatpush1.msra.mxu0 0.0
        %4901 = vmatprep.subr.mxu0 0.0
        %4902 = vmatpush1.msra.mxu0 0.0
        %4903 = vmatprep.subr.mxu0 0.0
        %4904 = vmatpush1.msra.mxu0 0.0
        %4905 = vmatprep.subr.mxu0 0.0
        %4906 = vmatpush1.msra.mxu0 0.0
        %4907 = vmatprep.subr.mxu0 0.0
        %4908 = vmatpush1.msra.mxu0 0.0
        %4909 = vmatprep.subr.mxu0 0.0
        %4910 = vmatpush1.msra.mxu0 0.0
        %4911 = vmatprep.subr.mxu0 0.0
        %4912 = vmatpush1.msra.mxu0 0.0
        %4913 = vmatprep.subr.mxu0 0.0
        %4914 = vmatpush1.msra.mxu0 0.0
        %4915 = vmatprep.subr.mxu0 0.0
        %4916 = vmatpush1.msra.mxu0 0.0
        %4917 = vmatprep.subr.mxu0 0.0
        %4918 = vmatpush1.msra.mxu0 0.0
        %4919 = vmatprep.subr.mxu0 0.0
        %4920 = vmatpush1.msra.mxu0 0.0
        %4921 = vmatprep.subr.mxu0 0.0
        %4922 = vmatpush1.msra.mxu0 0.0
        %4923 = vmatprep.subr.mxu0 0.0
        %4924 = vmatpush1.msra.mxu0 0.0
        %4925 = vmatprep.mubr.f32.mxu0 0.0
        %4926 = vmatmul.mubr.f32.gmra.mrb[0].mxu0 %v4859
        %v4927 = vpop.f32.mrb[0].mxu0
        %v4928 = vadd.f32 %v4856, %v4927
        %v4929 = vpop.f32.mrb[0].mxu0
        %4930 = vdwg.mxu0
        %v4931 = vmax.f32 %v4928, 0.0
        %v4932 = vld [vmem:[%s23] sm:$0xff]
        %v4933 = vld [vmem:[%s23 + $0x8] sm:$0xff]
        %v4934 = vld [vmem:[%s23 + $0x10] sm:$0xff]
        %v4935 = vld [vmem:[%s23 + $0x18] sm:$0xff]
        %v4936 = vld [vmem:[%s23 + $0x20] sm:$0xff]
        %v4937 = vld [vmem:[%s23 + $0x28] sm:$0xff]
        %v4938 = vld [vmem:[%s23 + $0x30] sm:$0xff]
        %v4939 = vld [vmem:[%s23 + $0x38] sm:$0xff]
        %v4940 = vlaneseq
        %v4941 = vshrl.u32 %v4940, 7
        %v4942 = vsub.s32 7, %v4941
        %v4943 = vrot.slane %v3031, %v4942
        %v4945 = vsel %vm1861, %v4931, 0
        %4947 = vmatprep.subr.mxu0 0.0
        %4948 = vmatpush1.msra.mxu0 %v4932
        %4949 = vmatprep.subr.mxu0 0.0
        %4950 = vmatpush1.msra.mxu0 %v4933
        %4951 = vmatprep.subr.mxu0 0.0
        %4952 = vmatpush1.msra.mxu0 %v4934
        %4953 = vmatprep.subr.mxu0 0.0
        %4954 = vmatpush1.msra.mxu0 %v4935
        %4955 = vmatprep.subr.mxu0 0.0
        %4956 = vmatpush1.msra.mxu0 %v4936
        %4957 = vmatprep.subr.mxu0 0.0
        %4958 = vmatpush1.msra.mxu0 %v4937
        %4959 = vmatprep.subr.mxu0 0.0
        %4960 = vmatpush1.msra.mxu0 %v4938
        %4961 = vmatprep.subr.mxu0 0.0
        %4962 = vmatpush1.msra.mxu0 %v4939
        %4963 = vmatprep.subr.mxu0 0.0
        %4964 = vmatpush1.msra.mxu0 0.0
        %4965 = vmatprep.subr.mxu0 0.0
        %4966 = vmatpush1.msra.mxu0 0.0
        %4967 = vmatprep.subr.mxu0 0.0
        %4968 = vmatpush1.msra.mxu0 0.0
        %4969 = vmatprep.subr.mxu0 0.0
        %4970 = vmatpush1.msra.mxu0 0.0
        %4971 = vmatprep.subr.mxu0 0.0
        %4972 = vmatpush1.msra.mxu0 0.0
        %4973 = vmatprep.subr.mxu0 0.0
        %4974 = vmatpush1.msra.mxu0 0.0
        %4975 = vmatprep.subr.mxu0 0.0
        %4976 = vmatpush1.msra.mxu0 0.0
        %4977 = vmatprep.subr.mxu0 0.0
        %4978 = vmatpush1.msra.mxu0 0.0
        %4979 = vmatprep.subr.mxu0 0.0
        %4980 = vmatpush1.msra.mxu0 0.0
        %4981 = vmatprep.subr.mxu0 0.0
        %4982 = vmatpush1.msra.mxu0 0.0
        %4983 = vmatprep.subr.mxu0 0.0
        %4984 = vmatpush1.msra.mxu0 0.0
        %4985 = vmatprep.subr.mxu0 0.0
        %4986 = vmatpush1.msra.mxu0 0.0
        %4987 = vmatprep.subr.mxu0 0.0
        %4988 = vmatpush1.msra.mxu0 0.0
        %4989 = vmatprep.subr.mxu0 0.0
        %4990 = vmatpush1.msra.mxu0 0.0
        %4991 = vmatprep.subr.mxu0 0.0
        %4992 = vmatpush1.msra.mxu0 0.0
        %4993 = vmatprep.subr.mxu0 0.0
        %4994 = vmatpush1.msra.mxu0 0.0
        %4995 = vmatprep.subr.mxu0 0.0
        %4996 = vmatpush1.msra.mxu0 0.0
        %4997 = vmatprep.subr.mxu0 0.0
        %4998 = vmatpush1.msra.mxu0 0.0
        %4999 = vmatprep.subr.mxu0 0.0
        %5000 = vmatpush1.msra.mxu0 0.0
        %5001 = vmatprep.subr.mxu0 0.0
        %5002 = vmatpush1.msra.mxu0 0.0
        %5003 = vmatprep.subr.mxu0 0.0
        %5004 = vmatpush1.msra.mxu0 0.0
        %5005 = vmatprep.subr.mxu0 0.0
        %5006 = vmatpush1.msra.mxu0 0.0
        %5007 = vmatprep.subr.mxu0 0.0
        %5008 = vmatpush1.msra.mxu0 0.0
        %5009 = vmatprep.subr.mxu0 0.0
        %5010 = vmatpush1.msra.mxu0 0.0
        %5011 = vmatprep.mubr.f32.mxu0 0.0
        %5012 = vmatmul.mubr.f32.gmra.mrb[0].mxu0 %v4945
        %v5013 = vpop.f32.mrb[0].mxu0
        %v5014 = vadd.f32 %v4943, %v5013
        %v5015 = vpop.f32.mrb[0].mxu0
        %5016 = vdwg.mxu0
        %v5017 = vadd.f32 %v4846, %v5014
        %v5018 = vsel %vm903, %v5017, 0.0
        %5019 = vadd.xlane.f32.xlu0 %v5018
        %v5020 = vpop.xlane.xlu0 %5019
        %v5021 = vmul.f32 %v5020, %v1743
        %v5022 = vsub.f32 %v5017, %v5021
        %v5023 = vmul.f32 %v5022, %v5022
        %v5024 = vsel %vm903, %v5023, 0.0
        %5025 = vadd.xlane.f32.xlu0 %v5024
        %v5026 = vpop.xlane.xlu0 %5025
        %v5027 = vmul.f32 %v5026, %v1743
        %v5028 = vadd.f32 %v5027, 1e-05
        %v5029 = vrsqrt.pop %v5028
        %v5030 = vmul.f32 %v5022, %v5029
        %v5031 = vlaneseq
        %v5032 = vshrl.u32 %v5031, 7
        %v5033 = vsub.s32 0, %v5032
        %v5034 = vrot.slane %v3032, %v5033
        %v5035 = vmul.f32 %v5030, %v5034
        %v5036 = vlaneseq
        %v5037 = vshrl.u32 %v5036, 7
        %v5038 = vsub.s32 1, %v5037
        %v5039 = vrot.slane %v3032, %v5038
        %v5040 = vadd.f32 %v5035, %v5039
        %s5041 = scalar_lea.vmem %s24, 16
        %v5042 = vld [vmem:[%s5041] sm:$0xff]
        %v5043 = vld [vmem:[%s5041 + $0x8] sm:$0x3]
        %s5044 = scalar_lea.vmem %s14, 32
        %v5045 = vld [vmem:[%s5044] sm:$0xff]
        %v5046 = vld [vmem:[%s5044 + $0x8] sm:$0xff]
        %v5047 = vld [vmem:[%s5044 + $0x10] sm:$0xff]
        %v5048 = vld [vmem:[%s5044 + $0x18] sm:$0xff]
        %s5049 = scalar_lea.vmem %s15, 1
        %v5050 = vld [vmem:[%s5049] sm:$0x1]
        %v5052 = vlaneseq
        %v5053 = vshrl.u32 %v5052, 7
        %v5054 = vsub.s32 0, %v5053
        %v5055 = vrot.slane %v5050, %v5054
        %v5058 = vsel %vm903, %v5040, 0
        %5060 = vmatprep.subr.mxu0 0.0
        %5061 = vmatpush1.msra.mxu0 %v5045
        %5062 = vmatprep.subr.mxu0 0.0
        %5063 = vmatpush1.msra.mxu0 %v5046
        %5064 = vmatprep.subr.mxu0 0.0
        %5065 = vmatpush1.msra.mxu0 %v5047
        %5066 = vmatprep.subr.mxu0 0.0
        %5067 = vmatpush1.msra.mxu0 %v5048
        %5068 = vmatprep.subr.mxu0 0.0
        %5069 = vmatpush1.msra.mxu0 0.0
        %5070 = vmatprep.subr.mxu0 0.0
        %5071 = vmatpush1.msra.mxu0 0.0
        %5072 = vmatprep.subr.mxu0 0.0
        %5073 = vmatpush1.msra.mxu0 0.0
        %5074 = vmatprep.subr.mxu0 0.0
        %5075 = vmatpush1.msra.mxu0 0.0
        %5076 = vmatprep.subr.mxu0 0.0
        %5077 = vmatpush1.msra.mxu0 0.0
        %5078 = vmatprep.subr.mxu0 0.0
        %5079 = vmatpush1.msra.mxu0 0.0
        %5080 = vmatprep.subr.mxu0 0.0
        %5081 = vmatpush1.msra.mxu0 0.0
        %5082 = vmatprep.subr.mxu0 0.0
        %5083 = vmatpush1.msra.mxu0 0.0
        %5084 = vmatprep.subr.mxu0 0.0
        %5085 = vmatpush1.msra.mxu0 0.0
        %5086 = vmatprep.subr.mxu0 0.0
        %5087 = vmatpush1.msra.mxu0 0.0
        %5088 = vmatprep.subr.mxu0 0.0
        %5089 = vmatpush1.msra.mxu0 0.0
        %5090 = vmatprep.subr.mxu0 0.0
        %5091 = vmatpush1.msra.mxu0 0.0
        %5092 = vmatprep.subr.mxu0 0.0
        %5093 = vmatpush1.msra.mxu0 0.0
        %5094 = vmatprep.subr.mxu0 0.0
        %5095 = vmatpush1.msra.mxu0 0.0
        %5096 = vmatprep.subr.mxu0 0.0
        %5097 = vmatpush1.msra.mxu0 0.0
        %5098 = vmatprep.subr.mxu0 0.0
        %5099 = vmatpush1.msra.mxu0 0.0
        %5100 = vmatprep.subr.mxu0 0.0
        %5101 = vmatpush1.msra.mxu0 0.0
        %5102 = vmatprep.subr.mxu0 0.0
        %5103 = vmatpush1.msra.mxu0 0.0
        %5104 = vmatprep.subr.mxu0 0.0
        %5105 = vmatpush1.msra.mxu0 0.0
        %5106 = vmatprep.subr.mxu0 0.0
        %5107 = vmatpush1.msra.mxu0 0.0
        %5108 = vmatprep.subr.mxu0 0.0
        %5109 = vmatpush1.msra.mxu0 0.0
        %5110 = vmatprep.subr.mxu0 0.0
        %5111 = vmatpush1.msra.mxu0 0.0
        %5112 = vmatprep.subr.mxu0 0.0
        %5113 = vmatpush1.msra.mxu0 0.0
        %5114 = vmatprep.subr.mxu0 0.0
        %5115 = vmatpush1.msra.mxu0 0.0
        %5116 = vmatprep.subr.mxu0 0.0
        %5117 = vmatpush1.msra.mxu0 0.0
        %5118 = vmatprep.subr.mxu0 0.0
        %5119 = vmatpush1.msra.mxu0 0.0
        %5120 = vmatprep.subr.mxu0 0.0
        %5121 = vmatpush1.msra.mxu0 0.0
        %5122 = vmatprep.subr.mxu0 0.0
        %5123 = vmatpush1.msra.mxu0 0.0
        %5124 = vmatprep.mubr.f32.mxu0 0.0
        %5125 = vmatmul.mubr.f32.gmra.mrb[0].mxu0 %v5058
        %v5126 = vpop.f32.mrb[0].mxu0
        %v5127 = vadd.f32 %v5055, %v5126
        %v5128 = vpop.f32.mrb[0].mxu0
        %5129 = vdwg.mxu0
        %5131 = vrot.lane.b32.xlu0 %v5127, 96
        %v5132 = vpop.permute.xlu0 %5131
        %v5133 = vsel %vm980, %v5127, 0
        %v5135 = vsel %vm980, %v5132, 0
        %5137 = vmatprep.subr.mxu0 0.0
        %5138 = vmatpush1.xpose.msra.mxu0 %v5135
        %5139 = vmatprep.subr.mxu0 0.0
        %5140 = vmatpush1.xpose.msra.mxu0 0.0
        %5141 = vmatprep.subr.mxu0 0.0
        %5142 = vmatpush1.xpose.msra.mxu0 0.0
        %5143 = vmatprep.subr.mxu0 0.0
        %5144 = vmatpush1.xpose.msra.mxu0 0.0
        %5145 = vmatprep.subr.mxu0 0.0
        %5146 = vmatpush1.xpose.msra.mxu0 0.0
        %5147 = vmatprep.subr.mxu0 0.0
        %5148 = vmatpush1.xpose.msra.mxu0 0.0
        %5149 = vmatprep.subr.mxu0 0.0
        %5150 = vmatpush1.xpose.msra.mxu0 0.0
        %5151 = vmatprep.subr.mxu0 0.0
        %5152 = vmatpush1.xpose.msra.mxu0 0.0
        %5153 = vmatprep.subr.mxu0 0.0
        %5154 = vmatpush1.xpose.msra.mxu0 0.0
        %5155 = vmatprep.subr.mxu0 0.0
        %5156 = vmatpush1.xpose.msra.mxu0 0.0
        %5157 = vmatprep.subr.mxu0 0.0
        %5158 = vmatpush1.xpose.msra.mxu0 0.0
        %5159 = vmatprep.subr.mxu0 0.0
        %5160 = vmatpush1.xpose.msra.mxu0 0.0
        %5161 = vmatprep.subr.mxu0 0.0
        %5162 = vmatpush1.xpose.msra.mxu0 0.0
        %5163 = vmatprep.subr.mxu0 0.0
        %5164 = vmatpush1.xpose.msra.mxu0 0.0
        %5165 = vmatprep.subr.mxu0 0.0
        %5166 = vmatpush1.xpose.msra.mxu0 0.0
        %5167 = vmatprep.subr.mxu0 0.0
        %5168 = vmatpush1.xpose.msra.mxu0 0.0
        %5169 = vmatprep.subr.mxu0 0.0
        %5170 = vmatpush1.xpose.msra.mxu0 0.0
        %5171 = vmatprep.subr.mxu0 0.0
        %5172 = vmatpush1.xpose.msra.mxu0 0.0
        %5173 = vmatprep.subr.mxu0 0.0
        %5174 = vmatpush1.xpose.msra.mxu0 0.0
        %5175 = vmatprep.subr.mxu0 0.0
        %5176 = vmatpush1.xpose.msra.mxu0 0.0
        %5177 = vmatprep.subr.mxu0 0.0
        %5178 = vmatpush1.xpose.msra.mxu0 0.0
        %5179 = vmatprep.subr.mxu0 0.0
        %5180 = vmatpush1.xpose.msra.mxu0 0.0
        %5181 = vmatprep.subr.mxu0 0.0
        %5182 = vmatpush1.xpose.msra.mxu0 0.0
        %5183 = vmatprep.subr.mxu0 0.0
        %5184 = vmatpush1.xpose.msra.mxu0 0.0
        %5185 = vmatprep.subr.mxu0 0.0
        %5186 = vmatpush1.xpose.msra.mxu0 0.0
        %5187 = vmatprep.subr.mxu0 0.0
        %5188 = vmatpush1.xpose.msra.mxu0 0.0
        %5189 = vmatprep.subr.mxu0 0.0
        %5190 = vmatpush1.xpose.msra.mxu0 0.0
        %5191 = vmatprep.subr.mxu0 0.0
        %5192 = vmatpush1.xpose.msra.mxu0 0.0
        %5193 = vmatprep.subr.mxu0 0.0
        %5194 = vmatpush1.xpose.msra.mxu0 0.0
        %5195 = vmatprep.subr.mxu0 0.0
        %5196 = vmatpush1.xpose.msra.mxu0 0.0
        %5197 = vmatprep.subr.mxu0 0.0
        %5198 = vmatpush1.xpose.msra.mxu0 0.0
        %5199 = vmatprep.subr.mxu0 0.0
        %5200 = vmatpush1.xpose.msra.mxu0 0.0
        %5201 = vmatprep.mubr.f32.mxu0 0.0
        %5202 = vmatmul.mubr.f32.gmra.mrb[0].mxu0 %v5133
        %v5203 = vpop.f32.mrb[0].mxu0
        %v5204 = vadd.f32 0.0, %v5203
        %v5205 = vpop.f32.mrb[0].mxu0
        %5206 = vdwg.mxu0
        %v5207 = vsel %vm885, -1e+12, %v5204
        %v5208 = vsel %vm980, %v5207, -inf
        %5209 = vmax.xlane.f32.xlu0 %v5208
        %v5210 = vpop.xlane.xlu0 %5209
        %v5211 = vsub.f32 %v5207, %v5210
        %v5212 = vmul.f32 %v5211, 1.442695
        %v5213 = vpow.pop %v5212
        %v5214 = vsel %vm980, %v5213, 0.0
        %5215 = vadd.xlane.f32.xlu0 %v5214
        %v5216 = vpop.xlane.xlu0 %5215
        %v5217 = vrcp.pop %v5216
        %v5218 = vmul.f32 %v5213, %v5217
        %5219 = vrot.lane.b32.xlu0 %v5127, 64
        %v5220 = vpop.permute.xlu0 %5219
        %v5223 = vsel %vm980, %v5218, 0
        %5225 = vmatprep.subr.mxu0 0.0
        %5226 = vmatpush1.msra.mxu0 %v5220
        %5227 = vmatprep.subr.mxu0 0.0
        %5228 = vmatpush1.msra.mxu0 0.0
        %5229 = vmatprep.subr.mxu0 0.0
        %5230 = vmatpush1.msra.mxu0 0.0
        %5231 = vmatprep.subr.mxu0 0.0
        %5232 = vmatpush1.msra.mxu0 0.0
        %5233 = vmatprep.subr.mxu0 0.0
        %5234 = vmatpush1.msra.mxu0 0.0
        %5235 = vmatprep.subr.mxu0 0.0
        %5236 = vmatpush1.msra.mxu0 0.0
        %5237 = vmatprep.subr.mxu0 0.0
        %5238 = vmatpush1.msra.mxu0 0.0
        %5239 = vmatprep.subr.mxu0 0.0
        %5240 = vmatpush1.msra.mxu0 0.0
        %5241 = vmatprep.subr.mxu0 0.0
        %5242 = vmatpush1.msra.mxu0 0.0
        %5243 = vmatprep.subr.mxu0 0.0
        %5244 = vmatpush1.msra.mxu0 0.0
        %5245 = vmatprep.subr.mxu0 0.0
        %5246 = vmatpush1.msra.mxu0 0.0
        %5247 = vmatprep.subr.mxu0 0.0
        %5248 = vmatpush1.msra.mxu0 0.0
        %5249 = vmatprep.subr.mxu0 0.0
        %5250 = vmatpush1.msra.mxu0 0.0
        %5251 = vmatprep.subr.mxu0 0.0
        %5252 = vmatpush1.msra.mxu0 0.0
        %5253 = vmatprep.subr.mxu0 0.0
        %5254 = vmatpush1.msra.mxu0 0.0
        %5255 = vmatprep.subr.mxu0 0.0
        %5256 = vmatpush1.msra.mxu0 0.0
        %5257 = vmatprep.subr.mxu0 0.0
        %5258 = vmatpush1.msra.mxu0 0.0
        %5259 = vmatprep.subr.mxu0 0.0
        %5260 = vmatpush1.msra.mxu0 0.0
        %5261 = vmatprep.subr.mxu0 0.0
        %5262 = vmatpush1.msra.mxu0 0.0
        %5263 = vmatprep.subr.mxu0 0.0
        %5264 = vmatpush1.msra.mxu0 0.0
        %5265 = vmatprep.subr.mxu0 0.0
        %5266 = vmatpush1.msra.mxu0 0.0
        %5267 = vmatprep.subr.mxu0 0.0
        %5268 = vmatpush1.msra.mxu0 0.0
        %5269 = vmatprep.subr.mxu0 0.0
        %5270 = vmatpush1.msra.mxu0 0.0
        %5271 = vmatprep.subr.mxu0 0.0
        %5272 = vmatpush1.msra.mxu0 0.0
        %5273 = vmatprep.subr.mxu0 0.0
        %5274 = vmatpush1.msra.mxu0 0.0
        %5275 = vmatprep.subr.mxu0 0.0
        %5276 = vmatpush1.msra.mxu0 0.0
        %5277 = vmatprep.subr.mxu0 0.0
        %5278 = vmatpush1.msra.mxu0 0.0
        %5279 = vmatprep.subr.mxu0 0.0
        %5280 = vmatpush1.msra.mxu0 0.0
        %5281 = vmatprep.subr.mxu0 0.0
        %5282 = vmatpush1.msra.mxu0 0.0
        %5283 = vmatprep.subr.mxu0 0.0
        %5284 = vmatpush1.msra.mxu0 0.0
        %5285 = vmatprep.subr.mxu0 0.0
        %5286 = vmatpush1.msra.mxu0 0.0
        %5287 = vmatprep.subr.mxu0 0.0
        %5288 = vmatpush1.msra.mxu0 0.0
        %5289 = vmatprep.mubr.f32.mxu0 0.0
        %5290 = vmatmul.mubr.f32.gmra.mrb[0].mxu0 %v5223
        %v5291 = vpop.f32.mrb[0].mxu0
        %v5292 = vadd.f32 0.0, %v5291
        %v5293 = vpop.f32.mrb[0].mxu0
        %5294 = vdwg.mxu0
        %5295 = vrot.lane.b32.xlu0 %v5127, 120
        %v5296 = vpop.permute.xlu0 %5295
        %5297 = vrot.lane.b32.xlu0 %v5127, 88
        %v5298 = vpop.permute.xlu0 %5297
        %v5299 = vsel %vm980, %v5296, 0
        %v5301 = vsel %vm980, %v5298, 0
        %5303 = vmatprep.subr.mxu0 0.0
        %5304 = vmatpush1.xpose.msra.mxu0 %v5301
        %5305 = vmatprep.subr.mxu0 0.0
        %5306 = vmatpush1.xpose.msra.mxu0 0.0
        %5307 = vmatprep.subr.mxu0 0.0
        %5308 = vmatpush1.xpose.msra.mxu0 0.0
        %5309 = vmatprep.subr.mxu0 0.0
        %5310 = vmatpush1.xpose.msra.mxu0 0.0
        %5311 = vmatprep.subr.mxu0 0.0
        %5312 = vmatpush1.xpose.msra.mxu0 0.0
        %5313 = vmatprep.subr.mxu0 0.0
        %5314 = vmatpush1.xpose.msra.mxu0 0.0
        %5315 = vmatprep.subr.mxu0 0.0
        %5316 = vmatpush1.xpose.msra.mxu0 0.0
        %5317 = vmatprep.subr.mxu0 0.0
        %5318 = vmatpush1.xpose.msra.mxu0 0.0
        %5319 = vmatprep.subr.mxu0 0.0
        %5320 = vmatpush1.xpose.msra.mxu0 0.0
        %5321 = vmatprep.subr.mxu0 0.0
        %5322 = vmatpush1.xpose.msra.mxu0 0.0
        %5323 = vmatprep.subr.mxu0 0.0
        %5324 = vmatpush1.xpose.msra.mxu0 0.0
        %5325 = vmatprep.subr.mxu0 0.0
        %5326 = vmatpush1.xpose.msra.mxu0 0.0
        %5327 = vmatprep.subr.mxu0 0.0
        %5328 = vmatpush1.xpose.msra.mxu0 0.0
        %5329 = vmatprep.subr.mxu0 0.0
        %5330 = vmatpush1.xpose.msra.mxu0 0.0
        %5331 = vmatprep.subr.mxu0 0.0
        %5332 = vmatpush1.xpose.msra.mxu0 0.0
        %5333 = vmatprep.subr.mxu0 0.0
        %5334 = vmatpush1.xpose.msra.mxu0 0.0
        %5335 = vmatprep.subr.mxu0 0.0
        %5336 = vmatpush1.xpose.msra.mxu0 0.0
        %5337 = vmatprep.subr.mxu0 0.0
        %5338 = vmatpush1.xpose.msra.mxu0 0.0
        %5339 = vmatprep.subr.mxu0 0.0
        %5340 = vmatpush1.xpose.msra.mxu0 0.0
        %5341 = vmatprep.subr.mxu0 0.0
        %5342 = vmatpush1.xpose.msra.mxu0 0.0
        %5343 = vmatprep.subr.mxu0 0.0
        %5344 = vmatpush1.xpose.msra.mxu0 0.0
        %5345 = vmatprep.subr.mxu0 0.0
        %5346 = vmatpush1.xpose.msra.mxu0 0.0
        %5347 = vmatprep.subr.mxu0 0.0
        %5348 = vmatpush1.xpose.msra.mxu0 0.0
        %5349 = vmatprep.subr.mxu0 0.0
        %5350 = vmatpush1.xpose.msra.mxu0 0.0
        %5351 = vmatprep.subr.mxu0 0.0
        %5352 = vmatpush1.xpose.msra.mxu0 0.0
        %5353 = vmatprep.subr.mxu0 0.0
        %5354 = vmatpush1.xpose.msra.mxu0 0.0
        %5355 = vmatprep.subr.mxu0 0.0
        %5356 = vmatpush1.xpose.msra.mxu0 0.0
        %5357 = vmatprep.subr.mxu0 0.0
        %5358 = vmatpush1.xpose.msra.mxu0 0.0
        %5359 = vmatprep.subr.mxu0 0.0
        %5360 = vmatpush1.xpose.msra.mxu0 0.0
        %5361 = vmatprep.subr.mxu0 0.0
        %5362 = vmatpush1.xpose.msra.mxu0 0.0
        %5363 = vmatprep.subr.mxu0 0.0
        %5364 = vmatpush1.xpose.msra.mxu0 0.0
        %5365 = vmatprep.subr.mxu0 0.0
        %5366 = vmatpush1.xpose.msra.mxu0 0.0
        %5367 = vmatprep.mubr.f32.mxu0 0.0
        %5368 = vmatmul.mubr.f32.gmra.mrb[0].mxu0 %v5299
        %v5369 = vpop.f32.mrb[0].mxu0
        %v5370 = vadd.f32 0.0, %v5369
        %v5371 = vpop.f32.mrb[0].mxu0
        %5372 = vdwg.mxu0
        %v5373 = vsel %vm885, -1e+12, %v5370
        %v5374 = vsel %vm980, %v5373, -inf
        %5375 = vmax.xlane.f32.xlu0 %v5374
        %v5376 = vpop.xlane.xlu0 %5375
        %v5377 = vsub.f32 %v5373, %v5376
        %v5378 = vmul.f32 %v5377, 1.442695
        %v5379 = vpow.pop %v5378
        %v5380 = vsel %vm980, %v5379, 0.0
        %5381 = vadd.xlane.f32.xlu0 %v5380
        %v5382 = vpop.xlane.xlu0 %5381
        %v5383 = vrcp.pop %v5382
        %v5384 = vmul.f32 %v5379, %v5383
        %5385 = vrot.lane.b32.xlu0 %v5127, 56
        %v5386 = vpop.permute.xlu0 %5385
        %v5389 = vsel %vm980, %v5384, 0
        %5391 = vmatprep.subr.mxu0 0.0
        %5392 = vmatpush1.msra.mxu0 %v5386
        %5393 = vmatprep.subr.mxu0 0.0
        %5394 = vmatpush1.msra.mxu0 0.0
        %5395 = vmatprep.subr.mxu0 0.0
        %5396 = vmatpush1.msra.mxu0 0.0
        %5397 = vmatprep.subr.mxu0 0.0
        %5398 = vmatpush1.msra.mxu0 0.0
        %5399 = vmatprep.subr.mxu0 0.0
        %5400 = vmatpush1.msra.mxu0 0.0
        %5401 = vmatprep.subr.mxu0 0.0
        %5402 = vmatpush1.msra.mxu0 0.0
        %5403 = vmatprep.subr.mxu0 0.0
        %5404 = vmatpush1.msra.mxu0 0.0
        %5405 = vmatprep.subr.mxu0 0.0
        %5406 = vmatpush1.msra.mxu0 0.0
        %5407 = vmatprep.subr.mxu0 0.0
        %5408 = vmatpush1.msra.mxu0 0.0
        %5409 = vmatprep.subr.mxu0 0.0
        %5410 = vmatpush1.msra.mxu0 0.0
        %5411 = vmatprep.subr.mxu0 0.0
        %5412 = vmatpush1.msra.mxu0 0.0
        %5413 = vmatprep.subr.mxu0 0.0
        %5414 = vmatpush1.msra.mxu0 0.0
        %5415 = vmatprep.subr.mxu0 0.0
        %5416 = vmatpush1.msra.mxu0 0.0
        %5417 = vmatprep.subr.mxu0 0.0
        %5418 = vmatpush1.msra.mxu0 0.0
        %5419 = vmatprep.subr.mxu0 0.0
        %5420 = vmatpush1.msra.mxu0 0.0
        %5421 = vmatprep.subr.mxu0 0.0
        %5422 = vmatpush1.msra.mxu0 0.0
        %5423 = vmatprep.subr.mxu0 0.0
        %5424 = vmatpush1.msra.mxu0 0.0
        %5425 = vmatprep.subr.mxu0 0.0
        %5426 = vmatpush1.msra.mxu0 0.0
        %5427 = vmatprep.subr.mxu0 0.0
        %5428 = vmatpush1.msra.mxu0 0.0
        %5429 = vmatprep.subr.mxu0 0.0
        %5430 = vmatpush1.msra.mxu0 0.0
        %5431 = vmatprep.subr.mxu0 0.0
        %5432 = vmatpush1.msra.mxu0 0.0
        %5433 = vmatprep.subr.mxu0 0.0
        %5434 = vmatpush1.msra.mxu0 0.0
        %5435 = vmatprep.subr.mxu0 0.0
        %5436 = vmatpush1.msra.mxu0 0.0
        %5437 = vmatprep.subr.mxu0 0.0
        %5438 = vmatpush1.msra.mxu0 0.0
        %5439 = vmatprep.subr.mxu0 0.0
        %5440 = vmatpush1.msra.mxu0 0.0
        %5441 = vmatprep.subr.mxu0 0.0
        %5442 = vmatpush1.msra.mxu0 0.0
        %5443 = vmatprep.subr.mxu0 0.0
        %5444 = vmatpush1.msra.mxu0 0.0
        %5445 = vmatprep.subr.mxu0 0.0
        %5446 = vmatpush1.msra.mxu0 0.0
        %5447 = vmatprep.subr.mxu0 0.0
        %5448 = vmatpush1.msra.mxu0 0.0
        %5449 = vmatprep.subr.mxu0 0.0
        %5450 = vmatpush1.msra.mxu0 0.0
        %5451 = vmatprep.subr.mxu0 0.0
        %5452 = vmatpush1.msra.mxu0 0.0
        %5453 = vmatprep.subr.mxu0 0.0
        %5454 = vmatpush1.msra.mxu0 0.0
        %5455 = vmatprep.mubr.f32.mxu0 0.0
        %5456 = vmatmul.mubr.f32.gmra.mrb[0].mxu0 %v5389
        %v5457 = vpop.f32.mrb[0].mxu0
        %v5458 = vadd.f32 0.0, %v5457
        %v5459 = vpop.f32.mrb[0].mxu0
        %5460 = vdwg.mxu0
        %5461 = vrot.lane.b32.xlu0 %v5127, 112
        %v5462 = vpop.permute.xlu0 %5461
        %5463 = vrot.lane.b32.xlu0 %v5127, 80
        %v5464 = vpop.permute.xlu0 %5463
        %v5465 = vsel %vm980, %v5462, 0
        %v5467 = vsel %vm980, %v5464, 0
        %5469 = vmatprep.subr.mxu0 0.0
        %5470 = vmatpush1.xpose.msra.mxu0 %v5467
        %5471 = vmatprep.subr.mxu0 0.0
        %5472 = vmatpush1.xpose.msra.mxu0 0.0
        %5473 = vmatprep.subr.mxu0 0.0
        %5474 = vmatpush1.xpose.msra.mxu0 0.0
        %5475 = vmatprep.subr.mxu0 0.0
        %5476 = vmatpush1.xpose.msra.mxu0 0.0
        %5477 = vmatprep.subr.mxu0 0.0
        %5478 = vmatpush1.xpose.msra.mxu0 0.0
        %5479 = vmatprep.subr.mxu0 0.0
        %5480 = vmatpush1.xpose.msra.mxu0 0.0
        %5481 = vmatprep.subr.mxu0 0.0
        %5482 = vmatpush1.xpose.msra.mxu0 0.0
        %5483 = vmatprep.subr.mxu0 0.0
        %5484 = vmatpush1.xpose.msra.mxu0 0.0
        %5485 = vmatprep.subr.mxu0 0.0
        %5486 = vmatpush1.xpose.msra.mxu0 0.0
        %5487 = vmatprep.subr.mxu0 0.0
        %5488 = vmatpush1.xpose.msra.mxu0 0.0
        %5489 = vmatprep.subr.mxu0 0.0
        %5490 = vmatpush1.xpose.msra.mxu0 0.0
        %5491 = vmatprep.subr.mxu0 0.0
        %5492 = vmatpush1.xpose.msra.mxu0 0.0
        %5493 = vmatprep.subr.mxu0 0.0
        %5494 = vmatpush1.xpose.msra.mxu0 0.0
        %5495 = vmatprep.subr.mxu0 0.0
        %5496 = vmatpush1.xpose.msra.mxu0 0.0
        %5497 = vmatprep.subr.mxu0 0.0
        %5498 = vmatpush1.xpose.msra.mxu0 0.0
        %5499 = vmatprep.subr.mxu0 0.0
        %5500 = vmatpush1.xpose.msra.mxu0 0.0
        %5501 = vmatprep.subr.mxu0 0.0
        %5502 = vmatpush1.xpose.msra.mxu0 0.0
        %5503 = vmatprep.subr.mxu0 0.0
        %5504 = vmatpush1.xpose.msra.mxu0 0.0
        %5505 = vmatprep.subr.mxu0 0.0
        %5506 = vmatpush1.xpose.msra.mxu0 0.0
        %5507 = vmatprep.subr.mxu0 0.0
        %5508 = vmatpush1.xpose.msra.mxu0 0.0
        %5509 = vmatprep.subr.mxu0 0.0
        %5510 = vmatpush1.xpose.msra.mxu0 0.0
        %5511 = vmatprep.subr.mxu0 0.0
        %5512 = vmatpush1.xpose.msra.mxu0 0.0
        %5513 = vmatprep.subr.mxu0 0.0
        %5514 = vmatpush1.xpose.msra.mxu0 0.0
        %5515 = vmatprep.subr.mxu0 0.0
        %5516 = vmatpush1.xpose.msra.mxu0 0.0
        %5517 = vmatprep.subr.mxu0 0.0
        %5518 = vmatpush1.xpose.msra.mxu0 0.0
        %5519 = vmatprep.subr.mxu0 0.0
        %5520 = vmatpush1.xpose.msra.mxu0 0.0
        %5521 = vmatprep.subr.mxu0 0.0
        %5522 = vmatpush1.xpose.msra.mxu0 0.0
        %5523 = vmatprep.subr.mxu0 0.0
        %5524 = vmatpush1.xpose.msra.mxu0 0.0
        %5525 = vmatprep.subr.mxu0 0.0
        %5526 = vmatpush1.xpose.msra.mxu0 0.0
        %5527 = vmatprep.subr.mxu0 0.0
        %5528 = vmatpush1.xpose.msra.mxu0 0.0
        %5529 = vmatprep.subr.mxu0 0.0
        %5530 = vmatpush1.xpose.msra.mxu0 0.0
        %5531 = vmatprep.subr.mxu0 0.0
        %5532 = vmatpush1.xpose.msra.mxu0 0.0
        %5533 = vmatprep.mubr.f32.mxu0 0.0
        %5534 = vmatmul.mubr.f32.gmra.mrb[0].mxu0 %v5465
        %v5535 = vpop.f32.mrb[0].mxu0
        %v5536 = vadd.f32 0.0, %v5535
        %v5537 = vpop.f32.mrb[0].mxu0
        %5538 = vdwg.mxu0
        %v5539 = vsel %vm885, -1e+12, %v5536
        %v5540 = vsel %vm980, %v5539, -inf
        %5541 = vmax.xlane.f32.xlu0 %v5540
        %v5542 = vpop.xlane.xlu0 %5541
        %v5543 = vsub.f32 %v5539, %v5542
        %v5544 = vmul.f32 %v5543, 1.442695
        %v5545 = vpow.pop %v5544
        %v5546 = vsel %vm980, %v5545, 0.0
        %5547 = vadd.xlane.f32.xlu0 %v5546
        %v5548 = vpop.xlane.xlu0 %5547
        %v5549 = vrcp.pop %v5548
        %v5550 = vmul.f32 %v5545, %v5549
        %5551 = vrot.lane.b32.xlu0 %v5127, 48
        %v5552 = vpop.permute.xlu0 %5551
        %v5555 = vsel %vm980, %v5550, 0
        %5557 = vmatprep.subr.mxu0 0.0
        %5558 = vmatpush1.msra.mxu0 %v5552
        %5559 = vmatprep.subr.mxu0 0.0
        %5560 = vmatpush1.msra.mxu0 0.0
        %5561 = vmatprep.subr.mxu0 0.0
        %5562 = vmatpush1.msra.mxu0 0.0
        %5563 = vmatprep.subr.mxu0 0.0
        %5564 = vmatpush1.msra.mxu0 0.0
        %5565 = vmatprep.subr.mxu0 0.0
        %5566 = vmatpush1.msra.mxu0 0.0
        %5567 = vmatprep.subr.mxu0 0.0
        %5568 = vmatpush1.msra.mxu0 0.0
        %5569 = vmatprep.subr.mxu0 0.0
        %5570 = vmatpush1.msra.mxu0 0.0
        %5571 = vmatprep.subr.mxu0 0.0
        %5572 = vmatpush1.msra.mxu0 0.0
        %5573 = vmatprep.subr.mxu0 0.0
        %5574 = vmatpush1.msra.mxu0 0.0
        %5575 = vmatprep.subr.mxu0 0.0
        %5576 = vmatpush1.msra.mxu0 0.0
        %5577 = vmatprep.subr.mxu0 0.0
        %5578 = vmatpush1.msra.mxu0 0.0
        %5579 = vmatprep.subr.mxu0 0.0
        %5580 = vmatpush1.msra.mxu0 0.0
        %5581 = vmatprep.subr.mxu0 0.0
        %5582 = vmatpush1.msra.mxu0 0.0
        %5583 = vmatprep.subr.mxu0 0.0
        %5584 = vmatpush1.msra.mxu0 0.0
        %5585 = vmatprep.subr.mxu0 0.0
        %5586 = vmatpush1.msra.mxu0 0.0
        %5587 = vmatprep.subr.mxu0 0.0
        %5588 = vmatpush1.msra.mxu0 0.0
        %5589 = vmatprep.subr.mxu0 0.0
        %5590 = vmatpush1.msra.mxu0 0.0
        %5591 = vmatprep.subr.mxu0 0.0
        %5592 = vmatpush1.msra.mxu0 0.0
        %5593 = vmatprep.subr.mxu0 0.0
        %5594 = vmatpush1.msra.mxu0 0.0
        %5595 = vmatprep.subr.mxu0 0.0
        %5596 = vmatpush1.msra.mxu0 0.0
        %5597 = vmatprep.subr.mxu0 0.0
        %5598 = vmatpush1.msra.mxu0 0.0
        %5599 = vmatprep.subr.mxu0 0.0
        %5600 = vmatpush1.msra.mxu0 0.0
        %5601 = vmatprep.subr.mxu0 0.0
        %5602 = vmatpush1.msra.mxu0 0.0
        %5603 = vmatprep.subr.mxu0 0.0
        %5604 = vmatpush1.msra.mxu0 0.0
        %5605 = vmatprep.subr.mxu0 0.0
        %5606 = vmatpush1.msra.mxu0 0.0
        %5607 = vmatprep.subr.mxu0 0.0
        %5608 = vmatpush1.msra.mxu0 0.0
        %5609 = vmatprep.subr.mxu0 0.0
        %5610 = vmatpush1.msra.mxu0 0.0
        %5611 = vmatprep.subr.mxu0 0.0
        %5612 = vmatpush1.msra.mxu0 0.0
        %5613 = vmatprep.subr.mxu0 0.0
        %5614 = vmatpush1.msra.mxu0 0.0
        %5615 = vmatprep.subr.mxu0 0.0
        %5616 = vmatpush1.msra.mxu0 0.0
        %5617 = vmatprep.subr.mxu0 0.0
        %5618 = vmatpush1.msra.mxu0 0.0
        %5619 = vmatprep.subr.mxu0 0.0
        %5620 = vmatpush1.msra.mxu0 0.0
        %5621 = vmatprep.mubr.f32.mxu0 0.0
        %5622 = vmatmul.mubr.f32.gmra.mrb[0].mxu0 %v5555
        %v5623 = vpop.f32.mrb[0].mxu0
        %v5624 = vadd.f32 0.0, %v5623
        %v5625 = vpop.f32.mrb[0].mxu0
        %5626 = vdwg.mxu0
        %5627 = vrot.lane.b32.xlu0 %v5127, 104
        %v5628 = vpop.permute.xlu0 %5627
        %5629 = vrot.lane.b32.xlu0 %v5127, 72
        %v5630 = vpop.permute.xlu0 %5629
        %v5631 = vsel %vm980, %v5628, 0
        %v5633 = vsel %vm980, %v5630, 0
        %5635 = vmatprep.subr.mxu0 0.0
        %5636 = vmatpush1.xpose.msra.mxu0 %v5633
        %5637 = vmatprep.subr.mxu0 0.0
        %5638 = vmatpush1.xpose.msra.mxu0 0.0
        %5639 = vmatprep.subr.mxu0 0.0
        %5640 = vmatpush1.xpose.msra.mxu0 0.0
        %5641 = vmatprep.subr.mxu0 0.0
        %5642 = vmatpush1.xpose.msra.mxu0 0.0
        %5643 = vmatprep.subr.mxu0 0.0
        %5644 = vmatpush1.xpose.msra.mxu0 0.0
        %5645 = vmatprep.subr.mxu0 0.0
        %5646 = vmatpush1.xpose.msra.mxu0 0.0
        %5647 = vmatprep.subr.mxu0 0.0
        %5648 = vmatpush1.xpose.msra.mxu0 0.0
        %5649 = vmatprep.subr.mxu0 0.0
        %5650 = vmatpush1.xpose.msra.mxu0 0.0
        %5651 = vmatprep.subr.mxu0 0.0
        %5652 = vmatpush1.xpose.msra.mxu0 0.0
        %5653 = vmatprep.subr.mxu0 0.0
        %5654 = vmatpush1.xpose.msra.mxu0 0.0
        %5655 = vmatprep.subr.mxu0 0.0
        %5656 = vmatpush1.xpose.msra.mxu0 0.0
        %5657 = vmatprep.subr.mxu0 0.0
        %5658 = vmatpush1.xpose.msra.mxu0 0.0
        %5659 = vmatprep.subr.mxu0 0.0
        %5660 = vmatpush1.xpose.msra.mxu0 0.0
        %5661 = vmatprep.subr.mxu0 0.0
        %5662 = vmatpush1.xpose.msra.mxu0 0.0
        %5663 = vmatprep.subr.mxu0 0.0
        %5664 = vmatpush1.xpose.msra.mxu0 0.0
        %5665 = vmatprep.subr.mxu0 0.0
        %5666 = vmatpush1.xpose.msra.mxu0 0.0
        %5667 = vmatprep.subr.mxu0 0.0
        %5668 = vmatpush1.xpose.msra.mxu0 0.0
        %5669 = vmatprep.subr.mxu0 0.0
        %5670 = vmatpush1.xpose.msra.mxu0 0.0
        %5671 = vmatprep.subr.mxu0 0.0
        %5672 = vmatpush1.xpose.msra.mxu0 0.0
        %5673 = vmatprep.subr.mxu0 0.0
        %5674 = vmatpush1.xpose.msra.mxu0 0.0
        %5675 = vmatprep.subr.mxu0 0.0
        %5676 = vmatpush1.xpose.msra.mxu0 0.0
        %5677 = vmatprep.subr.mxu0 0.0
        %5678 = vmatpush1.xpose.msra.mxu0 0.0
        %5679 = vmatprep.subr.mxu0 0.0
        %5680 = vmatpush1.xpose.msra.mxu0 0.0
        %5681 = vmatprep.subr.mxu0 0.0
        %5682 = vmatpush1.xpose.msra.mxu0 0.0
        %5683 = vmatprep.subr.mxu0 0.0
        %5684 = vmatpush1.xpose.msra.mxu0 0.0
        %5685 = vmatprep.subr.mxu0 0.0
        %5686 = vmatpush1.xpose.msra.mxu0 0.0
        %5687 = vmatprep.subr.mxu0 0.0
        %5688 = vmatpush1.xpose.msra.mxu0 0.0
        %5689 = vmatprep.subr.mxu0 0.0
        %5690 = vmatpush1.xpose.msra.mxu0 0.0
        %5691 = vmatprep.subr.mxu0 0.0
        %5692 = vmatpush1.xpose.msra.mxu0 0.0
        %5693 = vmatprep.subr.mxu0 0.0
        %5694 = vmatpush1.xpose.msra.mxu0 0.0
        %5695 = vmatprep.subr.mxu0 0.0
        %5696 = vmatpush1.xpose.msra.mxu0 0.0
        %5697 = vmatprep.subr.mxu0 0.0
        %5698 = vmatpush1.xpose.msra.mxu0 0.0
        %5699 = vmatprep.mubr.f32.mxu0 0.0
        %5700 = vmatmul.mubr.f32.gmra.mrb[0].mxu0 %v5631
        %v5701 = vpop.f32.mrb[0].mxu0
        %v5702 = vadd.f32 0.0, %v5701
        %v5703 = vpop.f32.mrb[0].mxu0
        %5704 = vdwg.mxu0
        %v5705 = vsel %vm885, -1e+12, %v5702
        %v5706 = vsel %vm980, %v5705, -inf
        %5707 = vmax.xlane.f32.xlu0 %v5706
        %v5708 = vpop.xlane.xlu0 %5707
        %v5709 = vsub.f32 %v5705, %v5708
        %v5710 = vmul.f32 %v5709, 1.442695
        %v5711 = vpow.pop %v5710
        %v5712 = vsel %vm980, %v5711, 0.0
        %5713 = vadd.xlane.f32.xlu0 %v5712
        %v5714 = vpop.xlane.xlu0 %5713
        %v5715 = vrcp.pop %v5714
        %v5716 = vmul.f32 %v5711, %v5715
        %5717 = vrot.lane.b32.xlu0 %v5127, 40
        %v5718 = vpop.permute.xlu0 %5717
        %v5721 = vsel %vm980, %v5716, 0
        %5723 = vmatprep.subr.mxu0 0.0
        %5724 = vmatpush1.msra.mxu0 %v5718
        %5725 = vmatprep.subr.mxu0 0.0
        %5726 = vmatpush1.msra.mxu0 0.0
        %5727 = vmatprep.subr.mxu0 0.0
        %5728 = vmatpush1.msra.mxu0 0.0
        %5729 = vmatprep.subr.mxu0 0.0
        %5730 = vmatpush1.msra.mxu0 0.0
        %5731 = vmatprep.subr.mxu0 0.0
        %5732 = vmatpush1.msra.mxu0 0.0
        %5733 = vmatprep.subr.mxu0 0.0
        %5734 = vmatpush1.msra.mxu0 0.0
        %5735 = vmatprep.subr.mxu0 0.0
        %5736 = vmatpush1.msra.mxu0 0.0
        %5737 = vmatprep.subr.mxu0 0.0
        %5738 = vmatpush1.msra.mxu0 0.0
        %5739 = vmatprep.subr.mxu0 0.0
        %5740 = vmatpush1.msra.mxu0 0.0
        %5741 = vmatprep.subr.mxu0 0.0
        %5742 = vmatpush1.msra.mxu0 0.0
        %5743 = vmatprep.subr.mxu0 0.0
        %5744 = vmatpush1.msra.mxu0 0.0
        %5745 = vmatprep.subr.mxu0 0.0
        %5746 = vmatpush1.msra.mxu0 0.0
        %5747 = vmatprep.subr.mxu0 0.0
        %5748 = vmatpush1.msra.mxu0 0.0
        %5749 = vmatprep.subr.mxu0 0.0
        %5750 = vmatpush1.msra.mxu0 0.0
        %5751 = vmatprep.subr.mxu0 0.0
        %5752 = vmatpush1.msra.mxu0 0.0
        %5753 = vmatprep.subr.mxu0 0.0
        %5754 = vmatpush1.msra.mxu0 0.0
        %5755 = vmatprep.subr.mxu0 0.0
        %5756 = vmatpush1.msra.mxu0 0.0
        %5757 = vmatprep.subr.mxu0 0.0
        %5758 = vmatpush1.msra.mxu0 0.0
        %5759 = vmatprep.subr.mxu0 0.0
        %5760 = vmatpush1.msra.mxu0 0.0
        %5761 = vmatprep.subr.mxu0 0.0
        %5762 = vmatpush1.msra.mxu0 0.0
        %5763 = vmatprep.subr.mxu0 0.0
        %5764 = vmatpush1.msra.mxu0 0.0
        %5765 = vmatprep.subr.mxu0 0.0
        %5766 = vmatpush1.msra.mxu0 0.0
        %5767 = vmatprep.subr.mxu0 0.0
        %5768 = vmatpush1.msra.mxu0 0.0
        %5769 = vmatprep.subr.mxu0 0.0
        %5770 = vmatpush1.msra.mxu0 0.0
        %5771 = vmatprep.subr.mxu0 0.0
        %5772 = vmatpush1.msra.mxu0 0.0
        %5773 = vmatprep.subr.mxu0 0.0
        %5774 = vmatpush1.msra.mxu0 0.0
        %5775 = vmatprep.subr.mxu0 0.0
        %5776 = vmatpush1.msra.mxu0 0.0
        %5777 = vmatprep.subr.mxu0 0.0
        %5778 = vmatpush1.msra.mxu0 0.0
        %5779 = vmatprep.subr.mxu0 0.0
        %5780 = vmatpush1.msra.mxu0 0.0
        %5781 = vmatprep.subr.mxu0 0.0
        %5782 = vmatpush1.msra.mxu0 0.0
        %5783 = vmatprep.subr.mxu0 0.0
        %5784 = vmatpush1.msra.mxu0 0.0
        %5785 = vmatprep.subr.mxu0 0.0
        %5786 = vmatpush1.msra.mxu0 0.0
        %5787 = vmatprep.mubr.f32.mxu0 0.0
        %5788 = vmatmul.mubr.f32.gmra.mrb[0].mxu0 %v5721
        %v5789 = vpop.f32.mrb[0].mxu0
        %v5790 = vadd.f32 0.0, %v5789
        %v5791 = vpop.f32.mrb[0].mxu0
        %5792 = vdwg.mxu0
        %5794 = vrot.lane.b32.xlu0 %v5458, 8
        %v5795 = vpop.permute.xlu0 %5794
        %5798 = vrot.lane.b32.xlu0 %v5624, 16
        %v5799 = vpop.permute.xlu0 %5798
        %5802 = vrot.lane.b32.xlu0 %v5790, 24
        %v5803 = vpop.permute.xlu0 %5802
        %v5805 = vsel %vm980, %v5292, %v5795
        %v5806 = vsel %vm1654, %v5805, %v5799
        %v5807 = vsel %vm1656, %v5806, %v5803
        %s5808 = scalar_lea.vmem %s16, 32
        %v5809 = vld [vmem:[%s5808] sm:$0xff]
        %v5810 = vld [vmem:[%s5808 + $0x8] sm:$0xff]
        %v5811 = vld [vmem:[%s5808 + $0x10] sm:$0xff]
        %v5812 = vld [vmem:[%s5808 + $0x18] sm:$0xff]
        %v5813 = vlaneseq
        %v5814 = vshrl.u32 %v5813, 7
        %v5815 = vsub.s32 0, %v5814
        %v5816 = vrot.slane %v5042, %v5815
        %v5818 = vsel %vm903, %v5807, 0
        %5820 = vmatprep.subr.mxu0 0.0
        %5821 = vmatpush1.msra.mxu0 %v5809
        %5822 = vmatprep.subr.mxu0 0.0
        %5823 = vmatpush1.msra.mxu0 %v5810
        %5824 = vmatprep.subr.mxu0 0.0
        %5825 = vmatpush1.msra.mxu0 %v5811
        %5826 = vmatprep.subr.mxu0 0.0
        %5827 = vmatpush1.msra.mxu0 %v5812
        %5828 = vmatprep.subr.mxu0 0.0
        %5829 = vmatpush1.msra.mxu0 0.0
        %5830 = vmatprep.subr.mxu0 0.0
        %5831 = vmatpush1.msra.mxu0 0.0
        %5832 = vmatprep.subr.mxu0 0.0
        %5833 = vmatpush1.msra.mxu0 0.0
        %5834 = vmatprep.subr.mxu0 0.0
        %5835 = vmatpush1.msra.mxu0 0.0
        %5836 = vmatprep.subr.mxu0 0.0
        %5837 = vmatpush1.msra.mxu0 0.0
        %5838 = vmatprep.subr.mxu0 0.0
        %5839 = vmatpush1.msra.mxu0 0.0
        %5840 = vmatprep.subr.mxu0 0.0
        %5841 = vmatpush1.msra.mxu0 0.0
        %5842 = vmatprep.subr.mxu0 0.0
        %5843 = vmatpush1.msra.mxu0 0.0
        %5844 = vmatprep.subr.mxu0 0.0
        %5845 = vmatpush1.msra.mxu0 0.0
        %5846 = vmatprep.subr.mxu0 0.0
        %5847 = vmatpush1.msra.mxu0 0.0
        %5848 = vmatprep.subr.mxu0 0.0
        %5849 = vmatpush1.msra.mxu0 0.0
        %5850 = vmatprep.subr.mxu0 0.0
        %5851 = vmatpush1.msra.mxu0 0.0
        %5852 = vmatprep.subr.mxu0 0.0
        %5853 = vmatpush1.msra.mxu0 0.0
        %5854 = vmatprep.subr.mxu0 0.0
        %5855 = vmatpush1.msra.mxu0 0.0
        %5856 = vmatprep.subr.mxu0 0.0
        %5857 = vmatpush1.msra.mxu0 0.0
        %5858 = vmatprep.subr.mxu0 0.0
        %5859 = vmatpush1.msra.mxu0 0.0
        %5860 = vmatprep.subr.mxu0 0.0
        %5861 = vmatpush1.msra.mxu0 0.0
        %5862 = vmatprep.subr.mxu0 0.0
        %5863 = vmatpush1.msra.mxu0 0.0
        %5864 = vmatprep.subr.mxu0 0.0
        %5865 = vmatpush1.msra.mxu0 0.0
        %5866 = vmatprep.subr.mxu0 0.0
        %5867 = vmatpush1.msra.mxu0 0.0
        %5868 = vmatprep.subr.mxu0 0.0
        %5869 = vmatpush1.msra.mxu0 0.0
        %5870 = vmatprep.subr.mxu0 0.0
        %5871 = vmatpush1.msra.mxu0 0.0
        %5872 = vmatprep.subr.mxu0 0.0
        %5873 = vmatpush1.msra.mxu0 0.0
        %5874 = vmatprep.subr.mxu0 0.0
        %5875 = vmatpush1.msra.mxu0 0.0
        %5876 = vmatprep.subr.mxu0 0.0
        %5877 = vmatpush1.msra.mxu0 0.0
        %5878 = vmatprep.subr.mxu0 0.0
        %5879 = vmatpush1.msra.mxu0 0.0
        %5880 = vmatprep.subr.mxu0 0.0
        %5881 = vmatpush1.msra.mxu0 0.0
        %5882 = vmatprep.subr.mxu0 0.0
        %5883 = vmatpush1.msra.mxu0 0.0
        %5884 = vmatprep.mubr.f32.mxu0 0.0
        %5885 = vmatmul.mubr.f32.gmra.mrb[0].mxu0 %v5818
        %v5886 = vpop.f32.mrb[0].mxu0
        %v5887 = vadd.f32 %v5816, %v5886
        %v5888 = vpop.f32.mrb[0].mxu0
        %5889 = vdwg.mxu0
        %v5890 = vadd.f32 %v5040, %v5887
        %v5891 = vsel %vm903, %v5890, 0.0
        %5892 = vadd.xlane.f32.xlu0 %v5891
        %v5893 = vpop.xlane.xlu0 %5892
        %v5894 = vmul.f32 %v5893, %v1743
        %v5895 = vsub.f32 %v5890, %v5894
        %v5896 = vmul.f32 %v5895, %v5895
        %v5897 = vsel %vm903, %v5896, 0.0
        %5898 = vadd.xlane.f32.xlu0 %v5897
        %v5899 = vpop.xlane.xlu0 %5898
        %v5900 = vmul.f32 %v5899, %v1743
        %v5901 = vadd.f32 %v5900, 1e-05
        %v5902 = vrsqrt.pop %v5901
        %v5903 = vmul.f32 %v5895, %v5902
        %v5904 = vlaneseq
        %v5905 = vshrl.u32 %v5904, 7
        %v5906 = vsub.s32 1, %v5905
        %v5907 = vrot.slane %v5042, %v5906
        %v5908 = vmul.f32 %v5903, %v5907
        %v5909 = vlaneseq
        %v5910 = vshrl.u32 %v5909, 7
        %v5911 = vsub.s32 2, %v5910
        %v5912 = vrot.slane %v5042, %v5911
        %v5913 = vadd.f32 %v5908, %v5912
        %s5914 = scalar_lea.vmem %s17, 32
        %v5915 = vld [vmem:[%s5914] sm:$0xff]
        %v5916 = vld [vmem:[%s5914 + $0x8] sm:$0xff]
        %v5917 = vld [vmem:[%s5914 + $0x10] sm:$0xff]
        %v5918 = vld [vmem:[%s5914 + $0x18] sm:$0xff]
        %v5919 = vlaneseq
        %v5920 = vshrl.u32 %v5919, 7
        %v5921 = vsub.s32 3, %v5920
        %v5922 = vrot.slane %v5042, %v5921
        %v5924 = vsel %vm903, %v5913, 0
        %5926 = vmatprep.subr.mxu0 0.0
        %5927 = vmatpush1.msra.mxu0 %v5915
        %5928 = vmatprep.subr.mxu0 0.0
        %5929 = vmatpush1.msra.mxu0 %v5916
        %5930 = vmatprep.subr.mxu0 0.0
        %5931 = vmatpush1.msra.mxu0 %v5917
        %5932 = vmatprep.subr.mxu0 0.0
        %5933 = vmatpush1.msra.mxu0 %v5918
        %5934 = vmatprep.subr.mxu0 0.0
        %5935 = vmatpush1.msra.mxu0 0.0
        %5936 = vmatprep.subr.mxu0 0.0
        %5937 = vmatpush1.msra.mxu0 0.0
        %5938 = vmatprep.subr.mxu0 0.0
        %5939 = vmatpush1.msra.mxu0 0.0
        %5940 = vmatprep.subr.mxu0 0.0
        %5941 = vmatpush1.msra.mxu0 0.0
        %5942 = vmatprep.subr.mxu0 0.0
        %5943 = vmatpush1.msra.mxu0 0.0
        %5944 = vmatprep.subr.mxu0 0.0
        %5945 = vmatpush1.msra.mxu0 0.0
        %5946 = vmatprep.subr.mxu0 0.0
        %5947 = vmatpush1.msra.mxu0 0.0
        %5948 = vmatprep.subr.mxu0 0.0
        %5949 = vmatpush1.msra.mxu0 0.0
        %5950 = vmatprep.subr.mxu0 0.0
        %5951 = vmatpush1.msra.mxu0 0.0
        %5952 = vmatprep.subr.mxu0 0.0
        %5953 = vmatpush1.msra.mxu0 0.0
        %5954 = vmatprep.subr.mxu0 0.0
        %5955 = vmatpush1.msra.mxu0 0.0
        %5956 = vmatprep.subr.mxu0 0.0
        %5957 = vmatpush1.msra.mxu0 0.0
        %5958 = vmatprep.subr.mxu0 0.0
        %5959 = vmatpush1.msra.mxu0 0.0
        %5960 = vmatprep.subr.mxu0 0.0
        %5961 = vmatpush1.msra.mxu0 0.0
        %5962 = vmatprep.subr.mxu0 0.0
        %5963 = vmatpush1.msra.mxu0 0.0
        %5964 = vmatprep.subr.mxu0 0.0
        %5965 = vmatpush1.msra.mxu0 0.0
        %5966 = vmatprep.subr.mxu0 0.0
        %5967 = vmatpush1.msra.mxu0 0.0
        %5968 = vmatprep.subr.mxu0 0.0
        %5969 = vmatpush1.msra.mxu0 0.0
        %5970 = vmatprep.subr.mxu0 0.0
        %5971 = vmatpush1.msra.mxu0 0.0
        %5972 = vmatprep.subr.mxu0 0.0
        %5973 = vmatpush1.msra.mxu0 0.0
        %5974 = vmatprep.subr.mxu0 0.0
        %5975 = vmatpush1.msra.mxu0 0.0
        %5976 = vmatprep.subr.mxu0 0.0
        %5977 = vmatpush1.msra.mxu0 0.0
        %5978 = vmatprep.subr.mxu0 0.0
        %5979 = vmatpush1.msra.mxu0 0.0
        %5980 = vmatprep.subr.mxu0 0.0
        %5981 = vmatpush1.msra.mxu0 0.0
        %5982 = vmatprep.subr.mxu0 0.0
        %5983 = vmatpush1.msra.mxu0 0.0
        %5984 = vmatprep.subr.mxu0 0.0
        %5985 = vmatpush1.msra.mxu0 0.0
        %5986 = vmatprep.subr.mxu0 0.0
        %5987 = vmatpush1.msra.mxu0 0.0
        %5988 = vmatprep.subr.mxu0 0.0
        %5989 = vmatpush1.msra.mxu0 0.0
        %5990 = vmatprep.mubr.f32.mxu0 0.0
        %5991 = vmatmul.mubr.f32.gmra.mrb[0].mxu0 %v5924
        %v5992 = vpop.f32.mrb[0].mxu0
        %v5993 = vadd.f32 %v5922, %v5992
        %v5994 = vpop.f32.mrb[0].mxu0
        %5995 = vdwg.mxu0
        %s5996 = scalar_lea.vmem %s18, 32
        %v5997 = vld [vmem:[%s5996] sm:$0xff]
        %v5998 = vld [vmem:[%s5996 + $0x8] sm:$0xff]
        %v5999 = vld [vmem:[%s5996 + $0x10] sm:$0xff]
        %v6000 = vld [vmem:[%s5996 + $0x18] sm:$0xff]
        %s6001 = scalar_lea.vmem %s19, 1
        %v6002 = vld [vmem:[%s6001] sm:$0x1]
        %v6004 = vlaneseq
        %v6005 = vshrl.u32 %v6004, 7
        %v6006 = vsub.s32 0, %v6005
        %v6007 = vrot.slane %v6002, %v6006
        %6009 = vmatprep.subr.mxu0 0.0
        %6010 = vmatpush1.msra.mxu0 %v5997
        %6011 = vmatprep.subr.mxu0 0.0
        %6012 = vmatpush1.msra.mxu0 %v5998
        %6013 = vmatprep.subr.mxu0 0.0
        %6014 = vmatpush1.msra.mxu0 %v5999
        %6015 = vmatprep.subr.mxu0 0.0
        %6016 = vmatpush1.msra.mxu0 %v6000
        %6017 = vmatprep.subr.mxu0 0.0
        %6018 = vmatpush1.msra.mxu0 0.0
        %6019 = vmatprep.subr.mxu0 0.0
        %6020 = vmatpush1.msra.mxu0 0.0
        %6021 = vmatprep.subr.mxu0 0.0
        %6022 = vmatpush1.msra.mxu0 0.0
        %6023 = vmatprep.subr.mxu0 0.0
        %6024 = vmatpush1.msra.mxu0 0.0
        %6025 = vmatprep.subr.mxu0 0.0
        %6026 = vmatpush1.msra.mxu0 0.0
        %6027 = vmatprep.subr.mxu0 0.0
        %6028 = vmatpush1.msra.mxu0 0.0
        %6029 = vmatprep.subr.mxu0 0.0
        %6030 = vmatpush1.msra.mxu0 0.0
        %6031 = vmatprep.subr.mxu0 0.0
        %6032 = vmatpush1.msra.mxu0 0.0
        %6033 = vmatprep.subr.mxu0 0.0
        %6034 = vmatpush1.msra.mxu0 0.0
        %6035 = vmatprep.subr.mxu0 0.0
        %6036 = vmatpush1.msra.mxu0 0.0
        %6037 = vmatprep.subr.mxu0 0.0
        %6038 = vmatpush1.msra.mxu0 0.0
        %6039 = vmatprep.subr.mxu0 0.0
        %6040 = vmatpush1.msra.mxu0 0.0
        %6041 = vmatprep.subr.mxu0 0.0
        %6042 = vmatpush1.msra.mxu0 0.0
        %6043 = vmatprep.subr.mxu0 0.0
        %6044 = vmatpush1.msra.mxu0 0.0
        %6045 = vmatprep.subr.mxu0 0.0
        %6046 = vmatpush1.msra.mxu0 0.0
        %6047 = vmatprep.subr.mxu0 0.0
        %6048 = vmatpush1.msra.mxu0 0.0
        %6049 = vmatprep.subr.mxu0 0.0
        %6050 = vmatpush1.msra.mxu0 0.0
        %6051 = vmatprep.subr.mxu0 0.0
        %6052 = vmatpush1.msra.mxu0 0.0
        %6053 = vmatprep.subr.mxu0 0.0
        %6054 = vmatpush1.msra.mxu0 0.0
        %6055 = vmatprep.subr.mxu0 0.0
        %6056 = vmatpush1.msra.mxu0 0.0
        %6057 = vmatprep.subr.mxu0 0.0
        %6058 = vmatpush1.msra.mxu0 0.0
        %6059 = vmatprep.subr.mxu0 0.0
        %6060 = vmatpush1.msra.mxu0 0.0
        %6061 = vmatprep.subr.mxu0 0.0
        %6062 = vmatpush1.msra.mxu0 0.0
        %6063 = vmatprep.subr.mxu0 0.0
        %6064 = vmatpush1.msra.mxu0 0.0
        %6065 = vmatprep.subr.mxu0 0.0
        %6066 = vmatpush1.msra.mxu0 0.0
        %6067 = vmatprep.subr.mxu0 0.0
        %6068 = vmatpush1.msra.mxu0 0.0
        %6069 = vmatprep.subr.mxu0 0.0
        %6070 = vmatpush1.msra.mxu0 0.0
        %6071 = vmatprep.subr.mxu0 0.0
        %6072 = vmatpush1.msra.mxu0 0.0
        %6073 = vmatprep.mubr.f32.mxu0 0.0
        %6074 = vmatmul.mubr.f32.gmra.mrb[0].mxu0 %v3993
        %v6075 = vpop.f32.mrb[0].mxu0
        %v6076 = vadd.f32 %v6007, %v6075
        %v6077 = vpop.f32.mrb[0].mxu0
        %6078 = vdwg.mxu0
        %v6080 = vsel %vm980, %v5993, 0
        %v6083 = vsel %vm980, %v6076, 0
        %6085 = vmatprep.subr.mxu0 0.0
        %6086 = vmatpush1.xpose.msra.mxu0 %v6083
        %6087 = vmatprep.subr.mxu0 0.0
        %6088 = vmatpush1.xpose.msra.mxu0 0.0
        %6089 = vmatprep.subr.mxu0 0.0
        %6090 = vmatpush1.xpose.msra.mxu0 0.0
        %6091 = vmatprep.subr.mxu0 0.0
        %6092 = vmatpush1.xpose.msra.mxu0 0.0
        %6093 = vmatprep.subr.mxu0 0.0
        %6094 = vmatpush1.xpose.msra.mxu0 0.0
        %6095 = vmatprep.subr.mxu0 0.0
        %6096 = vmatpush1.xpose.msra.mxu0 0.0
        %6097 = vmatprep.subr.mxu0 0.0
        %6098 = vmatpush1.xpose.msra.mxu0 0.0
        %6099 = vmatprep.subr.mxu0 0.0
        %6100 = vmatpush1.xpose.msra.mxu0 0.0
        %6101 = vmatprep.subr.mxu0 0.0
        %6102 = vmatpush1.xpose.msra.mxu0 0.0
        %6103 = vmatprep.subr.mxu0 0.0
        %6104 = vmatpush1.xpose.msra.mxu0 0.0
        %6105 = vmatprep.subr.mxu0 0.0
        %6106 = vmatpush1.xpose.msra.mxu0 0.0
        %6107 = vmatprep.subr.mxu0 0.0
        %6108 = vmatpush1.xpose.msra.mxu0 0.0
        %6109 = vmatprep.subr.mxu0 0.0
        %6110 = vmatpush1.xpose.msra.mxu0 0.0
        %6111 = vmatprep.subr.mxu0 0.0
        %6112 = vmatpush1.xpose.msra.mxu0 0.0
        %6113 = vmatprep.subr.mxu0 0.0
        %6114 = vmatpush1.xpose.msra.mxu0 0.0
        %6115 = vmatprep.subr.mxu0 0.0
        %6116 = vmatpush1.xpose.msra.mxu0 0.0
        %6117 = vmatprep.subr.mxu0 0.0
        %6118 = vmatpush1.xpose.msra.mxu0 0.0
        %6119 = vmatprep.subr.mxu0 0.0
        %6120 = vmatpush1.xpose.msra.mxu0 0.0
        %6121 = vmatprep.subr.mxu0 0.0
        %6122 = vmatpush1.xpose.msra.mxu0 0.0
        %6123 = vmatprep.subr.mxu0 0.0
        %6124 = vmatpush1.xpose.msra.mxu0 0.0
        %6125 = vmatprep.subr.mxu0 0.0
        %6126 = vmatpush1.xpose.msra.mxu0 0.0
        %6127 = vmatprep.subr.mxu0 0.0
        %6128 = vmatpush1.xpose.msra.mxu0 0.0
        %6129 = vmatprep.subr.mxu0 0.0
        %6130 = vmatpush1.xpose.msra.mxu0 0.0
        %6131 = vmatprep.subr.mxu0 0.0
        %6132 = vmatpush1.xpose.msra.mxu0 0.0
        %6133 = vmatprep.subr.mxu0 0.0
        %6134 = vmatpush1.xpose.msra.mxu0 0.0
        %6135 = vmatprep.subr.mxu0 0.0
        %6136 = vmatpush1.xpose.msra.mxu0 0.0
        %6137 = vmatprep.subr.mxu0 0.0
        %6138 = vmatpush1.xpose.msra.mxu0 0.0
        %6139 = vmatprep.subr.mxu0 0.0
        %6140 = vmatpush1.xpose.msra.mxu0 0.0
        %6141 = vmatprep.subr.mxu0 0.0
        %6142 = vmatpush1.xpose.msra.mxu0 0.0
        %6143 = vmatprep.subr.mxu0 0.0
        %6144 = vmatpush1.xpose.msra.mxu0 0.0
        %6145 = vmatprep.subr.mxu0 0.0
        %6146 = vmatpush1.xpose.msra.mxu0 0.0
        %6147 = vmatprep.subr.mxu0 0.0
        %6148 = vmatpush1.xpose.msra.mxu0 0.0
        %6149 = vmatprep.mubr.f32.mxu0 0.0
        %6150 = vmatmul.mubr.f32.gmra.mrb[0].mxu0 %v6080
        %v6151 = vpop.f32.mrb[0].mxu0
        %v6152 = vadd.f32 0.0, %v6151
        %v6153 = vpop.f32.mrb[0].mxu0
        %6154 = vdwg.mxu0
        %v6155 = vsel %vm887, -1e+12, %v6152
        %v6156 = vsel %vm980, %v6155, -inf
        %6157 = vmax.xlane.f32.xlu0 %v6156
        %v6158 = vpop.xlane.xlu0 %6157
        %v6159 = vsub.f32 %v6155, %v6158
        %v6160 = vmul.f32 %v6159, 1.442695
        %v6161 = vpow.pop %v6160
        %v6162 = vsel %vm980, %v6161, 0.0
        %6163 = vadd.xlane.f32.xlu0 %v6162
        %v6164 = vpop.xlane.xlu0 %6163
        %v6165 = vrcp.pop %v6164
        %v6166 = vmul.f32 %v6161, %v6165
        %6167 = vrot.lane.b32.xlu0 %v6076, 96
        %v6168 = vpop.permute.xlu0 %6167
        %v6171 = vsel %vm980, %v6166, 0
        %6173 = vmatprep.subr.mxu0 0.0
        %6174 = vmatpush1.msra.mxu0 %v6168
        %6175 = vmatprep.subr.mxu0 0.0
        %6176 = vmatpush1.msra.mxu0 0.0
        %6177 = vmatprep.subr.mxu0 0.0
        %6178 = vmatpush1.msra.mxu0 0.0
        %6179 = vmatprep.subr.mxu0 0.0
        %6180 = vmatpush1.msra.mxu0 0.0
        %6181 = vmatprep.subr.mxu0 0.0
        %6182 = vmatpush1.msra.mxu0 0.0
        %6183 = vmatprep.subr.mxu0 0.0
        %6184 = vmatpush1.msra.mxu0 0.0
        %6185 = vmatprep.subr.mxu0 0.0
        %6186 = vmatpush1.msra.mxu0 0.0
        %6187 = vmatprep.subr.mxu0 0.0
        %6188 = vmatpush1.msra.mxu0 0.0
        %6189 = vmatprep.subr.mxu0 0.0
        %6190 = vmatpush1.msra.mxu0 0.0
        %6191 = vmatprep.subr.mxu0 0.0
        %6192 = vmatpush1.msra.mxu0 0.0
        %6193 = vmatprep.subr.mxu0 0.0
        %6194 = vmatpush1.msra.mxu0 0.0
        %6195 = vmatprep.subr.mxu0 0.0
        %6196 = vmatpush1.msra.mxu0 0.0
        %6197 = vmatprep.subr.mxu0 0.0
        %6198 = vmatpush1.msra.mxu0 0.0
        %6199 = vmatprep.subr.mxu0 0.0
        %6200 = vmatpush1.msra.mxu0 0.0
        %6201 = vmatprep.subr.mxu0 0.0
        %6202 = vmatpush1.msra.mxu0 0.0
        %6203 = vmatprep.subr.mxu0 0.0
        %6204 = vmatpush1.msra.mxu0 0.0
        %6205 = vmatprep.subr.mxu0 0.0
        %6206 = vmatpush1.msra.mxu0 0.0
        %6207 = vmatprep.subr.mxu0 0.0
        %6208 = vmatpush1.msra.mxu0 0.0
        %6209 = vmatprep.subr.mxu0 0.0
        %6210 = vmatpush1.msra.mxu0 0.0
        %6211 = vmatprep.subr.mxu0 0.0
        %6212 = vmatpush1.msra.mxu0 0.0
        %6213 = vmatprep.subr.mxu0 0.0
        %6214 = vmatpush1.msra.mxu0 0.0
        %6215 = vmatprep.subr.mxu0 0.0
        %6216 = vmatpush1.msra.mxu0 0.0
        %6217 = vmatprep.subr.mxu0 0.0
        %6218 = vmatpush1.msra.mxu0 0.0
        %6219 = vmatprep.subr.mxu0 0.0
        %6220 = vmatpush1.msra.mxu0 0.0
        %6221 = vmatprep.subr.mxu0 0.0
        %6222 = vmatpush1.msra.mxu0 0.0
        %6223 = vmatprep.subr.mxu0 0.0
        %6224 = vmatpush1.msra.mxu0 0.0
        %6225 = vmatprep.subr.mxu0 0.0
        %6226 = vmatpush1.msra.mxu0 0.0
        %6227 = vmatprep.subr.mxu0 0.0
        %6228 = vmatpush1.msra.mxu0 0.0
        %6229 = vmatprep.subr.mxu0 0.0
        %6230 = vmatpush1.msra.mxu0 0.0
        %6231 = vmatprep.subr.mxu0 0.0
        %6232 = vmatpush1.msra.mxu0 0.0
        %6233 = vmatprep.subr.mxu0 0.0
        %6234 = vmatpush1.msra.mxu0 0.0
        %6235 = vmatprep.subr.mxu0 0.0
        %6236 = vmatpush1.msra.mxu0 0.0
        %6237 = vmatprep.mubr.f32.mxu0 0.0
        %6238 = vmatmul.mubr.f32.gmra.mrb[0].mxu0 %v6171
        %v6239 = vpop.f32.mrb[0].mxu0
        %v6240 = vadd.f32 0.0, %v6239
        %v6241 = vpop.f32.mrb[0].mxu0
        %6242 = vdwg.mxu0
        %6243 = vrot.lane.b32.xlu0 %v5993, 120
        %v6244 = vpop.permute.xlu0 %6243
        %6245 = vrot.lane.b32.xlu0 %v6076, 120
        %v6246 = vpop.permute.xlu0 %6245
        %v6247 = vsel %vm980, %v6244, 0
        %v6249 = vsel %vm980, %v6246, 0
        %6251 = vmatprep.subr.mxu0 0.0
        %6252 = vmatpush1.xpose.msra.mxu0 %v6249
        %6253 = vmatprep.subr.mxu0 0.0
        %6254 = vmatpush1.xpose.msra.mxu0 0.0
        %6255 = vmatprep.subr.mxu0 0.0
        %6256 = vmatpush1.xpose.msra.mxu0 0.0
        %6257 = vmatprep.subr.mxu0 0.0
        %6258 = vmatpush1.xpose.msra.mxu0 0.0
        %6259 = vmatprep.subr.mxu0 0.0
        %6260 = vmatpush1.xpose.msra.mxu0 0.0
        %6261 = vmatprep.subr.mxu0 0.0
        %6262 = vmatpush1.xpose.msra.mxu0 0.0
        %6263 = vmatprep.subr.mxu0 0.0
        %6264 = vmatpush1.xpose.msra.mxu0 0.0
        %6265 = vmatprep.subr.mxu0 0.0
        %6266 = vmatpush1.xpose.msra.mxu0 0.0
        %6267 = vmatprep.subr.mxu0 0.0
        %6268 = vmatpush1.xpose.msra.mxu0 0.0
        %6269 = vmatprep.subr.mxu0 0.0
        %6270 = vmatpush1.xpose.msra.mxu0 0.0
        %6271 = vmatprep.subr.mxu0 0.0
        %6272 = vmatpush1.xpose.msra.mxu0 0.0
        %6273 = vmatprep.subr.mxu0 0.0
        %6274 = vmatpush1.xpose.msra.mxu0 0.0
        %6275 = vmatprep.subr.mxu0 0.0
        %6276 = vmatpush1.xpose.msra.mxu0 0.0
        %6277 = vmatprep.subr.mxu0 0.0
        %6278 = vmatpush1.xpose.msra.mxu0 0.0
        %6279 = vmatprep.subr.mxu0 0.0
        %6280 = vmatpush1.xpose.msra.mxu0 0.0
        %6281 = vmatprep.subr.mxu0 0.0
        %6282 = vmatpush1.xpose.msra.mxu0 0.0
        %6283 = vmatprep.subr.mxu0 0.0
        %6284 = vmatpush1.xpose.msra.mxu0 0.0
        %6285 = vmatprep.subr.mxu0 0.0
        %6286 = vmatpush1.xpose.msra.mxu0 0.0
        %6287 = vmatprep.subr.mxu0 0.0
        %6288 = vmatpush1.xpose.msra.mxu0 0.0
        %6289 = vmatprep.subr.mxu0 0.0
        %6290 = vmatpush1.xpose.msra.mxu0 0.0
        %6291 = vmatprep.subr.mxu0 0.0
        %6292 = vmatpush1.xpose.msra.mxu0 0.0
        %6293 = vmatprep.subr.mxu0 0.0
        %6294 = vmatpush1.xpose.msra.mxu0 0.0
        %6295 = vmatprep.subr.mxu0 0.0
        %6296 = vmatpush1.xpose.msra.mxu0 0.0
        %6297 = vmatprep.subr.mxu0 0.0
        %6298 = vmatpush1.xpose.msra.mxu0 0.0
        %6299 = vmatprep.subr.mxu0 0.0
        %6300 = vmatpush1.xpose.msra.mxu0 0.0
        %6301 = vmatprep.subr.mxu0 0.0
        %6302 = vmatpush1.xpose.msra.mxu0 0.0
        %6303 = vmatprep.subr.mxu0 0.0
        %6304 = vmatpush1.xpose.msra.mxu0 0.0
        %6305 = vmatprep.subr.mxu0 0.0
        %6306 = vmatpush1.xpose.msra.mxu0 0.0
        %6307 = vmatprep.subr.mxu0 0.0
        %6308 = vmatpush1.xpose.msra.mxu0 0.0
        %6309 = vmatprep.subr.mxu0 0.0
        %6310 = vmatpush1.xpose.msra.mxu0 0.0
        %6311 = vmatprep.subr.mxu0 0.0
        %6312 = vmatpush1.xpose.msra.mxu0 0.0
        %6313 = vmatprep.subr.mxu0 0.0
        %6314 = vmatpush1.xpose.msra.mxu0 0.0
        %6315 = vmatprep.mubr.f32.mxu0 0.0
        %6316 = vmatmul.mubr.f32.gmra.mrb[0].mxu0 %v6247
        %v6317 = vpop.f32.mrb[0].mxu0
        %v6318 = vadd.f32 0.0, %v6317
        %v6319 = vpop.f32.mrb[0].mxu0
        %6320 = vdwg.mxu0
        %v6321 = vsel %vm887, -1e+12, %v6318
        %v6322 = vsel %vm980, %v6321, -inf
        %6323 = vmax.xlane.f32.xlu0 %v6322
        %v6324 = vpop.xlane.xlu0 %6323
        %v6325 = vsub.f32 %v6321, %v6324
        %v6326 = vmul.f32 %v6325, 1.442695
        %v6327 = vpow.pop %v6326
        %v6328 = vsel %vm980, %v6327, 0.0
        %6329 = vadd.xlane.f32.xlu0 %v6328
        %v6330 = vpop.xlane.xlu0 %6329
        %v6331 = vrcp.pop %v6330
        %v6332 = vmul.f32 %v6327, %v6331
        %6333 = vrot.lane.b32.xlu0 %v6076, 88
        %v6334 = vpop.permute.xlu0 %6333
        %v6337 = vsel %vm980, %v6332, 0
        %6339 = vmatprep.subr.mxu0 0.0
        %6340 = vmatpush1.msra.mxu0 %v6334
        %6341 = vmatprep.subr.mxu0 0.0
        %6342 = vmatpush1.msra.mxu0 0.0
        %6343 = vmatprep.subr.mxu0 0.0
        %6344 = vmatpush1.msra.mxu0 0.0
        %6345 = vmatprep.subr.mxu0 0.0
        %6346 = vmatpush1.msra.mxu0 0.0
        %6347 = vmatprep.subr.mxu0 0.0
        %6348 = vmatpush1.msra.mxu0 0.0
        %6349 = vmatprep.subr.mxu0 0.0
        %6350 = vmatpush1.msra.mxu0 0.0
        %6351 = vmatprep.subr.mxu0 0.0
        %6352 = vmatpush1.msra.mxu0 0.0
        %6353 = vmatprep.subr.mxu0 0.0
        %6354 = vmatpush1.msra.mxu0 0.0
        %6355 = vmatprep.subr.mxu0 0.0
        %6356 = vmatpush1.msra.mxu0 0.0
        %6357 = vmatprep.subr.mxu0 0.0
        %6358 = vmatpush1.msra.mxu0 0.0
        %6359 = vmatprep.subr.mxu0 0.0
        %6360 = vmatpush1.msra.mxu0 0.0
        %6361 = vmatprep.subr.mxu0 0.0
        %6362 = vmatpush1.msra.mxu0 0.0
        %6363 = vmatprep.subr.mxu0 0.0
        %6364 = vmatpush1.msra.mxu0 0.0
        %6365 = vmatprep.subr.mxu0 0.0
        %6366 = vmatpush1.msra.mxu0 0.0
        %6367 = vmatprep.subr.mxu0 0.0
        %6368 = vmatpush1.msra.mxu0 0.0
        %6369 = vmatprep.subr.mxu0 0.0
        %6370 = vmatpush1.msra.mxu0 0.0
        %6371 = vmatprep.subr.mxu0 0.0
        %6372 = vmatpush1.msra.mxu0 0.0
        %6373 = vmatprep.subr.mxu0 0.0
        %6374 = vmatpush1.msra.mxu0 0.0
        %6375 = vmatprep.subr.mxu0 0.0
        %6376 = vmatpush1.msra.mxu0 0.0
        %6377 = vmatprep.subr.mxu0 0.0
        %6378 = vmatpush1.msra.mxu0 0.0
        %6379 = vmatprep.subr.mxu0 0.0
        %6380 = vmatpush1.msra.mxu0 0.0
        %6381 = vmatprep.subr.mxu0 0.0
        %6382 = vmatpush1.msra.mxu0 0.0
        %6383 = vmatprep.subr.mxu0 0.0
        %6384 = vmatpush1.msra.mxu0 0.0
        %6385 = vmatprep.subr.mxu0 0.0
        %6386 = vmatpush1.msra.mxu0 0.0
        %6387 = vmatprep.subr.mxu0 0.0
        %6388 = vmatpush1.msra.mxu0 0.0
        %6389 = vmatprep.subr.mxu0 0.0
        %6390 = vmatpush1.msra.mxu0 0.0
        %6391 = vmatprep.subr.mxu0 0.0
        %6392 = vmatpush1.msra.mxu0 0.0
        %6393 = vmatprep.subr.mxu0 0.0
        %6394 = vmatpush1.msra.mxu0 0.0
        %6395 = vmatprep.subr.mxu0 0.0
        %6396 = vmatpush1.msra.mxu0 0.0
        %6397 = vmatprep.subr.mxu0 0.0
        %6398 = vmatpush1.msra.mxu0 0.0
        %6399 = vmatprep.subr.mxu0 0.0
        %6400 = vmatpush1.msra.mxu0 0.0
        %6401 = vmatprep.subr.mxu0 0.0
        %6402 = vmatpush1.msra.mxu0 0.0
        %6403 = vmatprep.mubr.f32.mxu0 0.0
        %6404 = vmatmul.mubr.f32.gmra.mrb[0].mxu0 %v6337
        %v6405 = vpop.f32.mrb[0].mxu0
        %v6406 = vadd.f32 0.0, %v6405
        %v6407 = vpop.f32.mrb[0].mxu0
        %6408 = vdwg.mxu0
        %6409 = vrot.lane.b32.xlu0 %v5993, 112
        %v6410 = vpop.permute.xlu0 %6409
        %6411 = vrot.lane.b32.xlu0 %v6076, 112
        %v6412 = vpop.permute.xlu0 %6411
        %v6413 = vsel %vm980, %v6410, 0
        %v6415 = vsel %vm980, %v6412, 0
        %6417 = vmatprep.subr.mxu0 0.0
        %6418 = vmatpush1.xpose.msra.mxu0 %v6415
        %6419 = vmatprep.subr.mxu0 0.0
        %6420 = vmatpush1.xpose.msra.mxu0 0.0
        %6421 = vmatprep.subr.mxu0 0.0
        %6422 = vmatpush1.xpose.msra.mxu0 0.0
        %6423 = vmatprep.subr.mxu0 0.0
        %6424 = vmatpush1.xpose.msra.mxu0 0.0
        %6425 = vmatprep.subr.mxu0 0.0
        %6426 = vmatpush1.xpose.msra.mxu0 0.0
        %6427 = vmatprep.subr.mxu0 0.0
        %6428 = vmatpush1.xpose.msra.mxu0 0.0
        %6429 = vmatprep.subr.mxu0 0.0
        %6430 = vmatpush1.xpose.msra.mxu0 0.0
        %6431 = vmatprep.subr.mxu0 0.0
        %6432 = vmatpush1.xpose.msra.mxu0 0.0
        %6433 = vmatprep.subr.mxu0 0.0
        %6434 = vmatpush1.xpose.msra.mxu0 0.0
        %6435 = vmatprep.subr.mxu0 0.0
        %6436 = vmatpush1.xpose.msra.mxu0 0.0
        %6437 = vmatprep.subr.mxu0 0.0
        %6438 = vmatpush1.xpose.msra.mxu0 0.0
        %6439 = vmatprep.subr.mxu0 0.0
        %6440 = vmatpush1.xpose.msra.mxu0 0.0
        %6441 = vmatprep.subr.mxu0 0.0
        %6442 = vmatpush1.xpose.msra.mxu0 0.0
        %6443 = vmatprep.subr.mxu0 0.0
        %6444 = vmatpush1.xpose.msra.mxu0 0.0
        %6445 = vmatprep.subr.mxu0 0.0
        %6446 = vmatpush1.xpose.msra.mxu0 0.0
        %6447 = vmatprep.subr.mxu0 0.0
        %6448 = vmatpush1.xpose.msra.mxu0 0.0
        %6449 = vmatprep.subr.mxu0 0.0
        %6450 = vmatpush1.xpose.msra.mxu0 0.0
        %6451 = vmatprep.subr.mxu0 0.0
        %6452 = vmatpush1.xpose.msra.mxu0 0.0
        %6453 = vmatprep.subr.mxu0 0.0
        %6454 = vmatpush1.xpose.msra.mxu0 0.0
        %6455 = vmatprep.subr.mxu0 0.0
        %6456 = vmatpush1.xpose.msra.mxu0 0.0
        %6457 = vmatprep.subr.mxu0 0.0
        %6458 = vmatpush1.xpose.msra.mxu0 0.0
        %6459 = vmatprep.subr.mxu0 0.0
        %6460 = vmatpush1.xpose.msra.mxu0 0.0
        %6461 = vmatprep.subr.mxu0 0.0
        %6462 = vmatpush1.xpose.msra.mxu0 0.0
        %6463 = vmatprep.subr.mxu0 0.0
        %6464 = vmatpush1.xpose.msra.mxu0 0.0
        %6465 = vmatprep.subr.mxu0 0.0
        %6466 = vmatpush1.xpose.msra.mxu0 0.0
        %6467 = vmatprep.subr.mxu0 0.0
        %6468 = vmatpush1.xpose.msra.mxu0 0.0
        %6469 = vmatprep.subr.mxu0 0.0
        %6470 = vmatpush1.xpose.msra.mxu0 0.0
        %6471 = vmatprep.subr.mxu0 0.0
        %6472 = vmatpush1.xpose.msra.mxu0 0.0
        %6473 = vmatprep.subr.mxu0 0.0
        %6474 = vmatpush1.xpose.msra.mxu0 0.0
        %6475 = vmatprep.subr.mxu0 0.0
        %6476 = vmatpush1.xpose.msra.mxu0 0.0
        %6477 = vmatprep.subr.mxu0 0.0
        %6478 = vmatpush1.xpose.msra.mxu0 0.0
        %6479 = vmatprep.subr.mxu0 0.0
        %6480 = vmatpush1.xpose.msra.mxu0 0.0
        %6481 = vmatprep.mubr.f32.mxu0 0.0
        %6482 = vmatmul.mubr.f32.gmra.mrb[0].mxu0 %v6413
        %v6483 = vpop.f32.mrb[0].mxu0
        %v6484 = vadd.f32 0.0, %v6483
        %v6485 = vpop.f32.mrb[0].mxu0
        %6486 = vdwg.mxu0
        %v6487 = vsel %vm887, -1e+12, %v6484
        %v6488 = vsel %vm980, %v6487, -inf
        %6489 = vmax.xlane.f32.xlu0 %v6488
        %v6490 = vpop.xlane.xlu0 %6489
        %v6491 = vsub.f32 %v6487, %v6490
        %v6492 = vmul.f32 %v6491, 1.442695
        %v6493 = vpow.pop %v6492
        %v6494 = vsel %vm980, %v6493, 0.0
        %6495 = vadd.xlane.f32.xlu0 %v6494
        %v6496 = vpop.xlane.xlu0 %6495
        %v6497 = vrcp.pop %v6496
        %v6498 = vmul.f32 %v6493, %v6497
        %6499 = vrot.lane.b32.xlu0 %v6076, 80
        %v6500 = vpop.permute.xlu0 %6499
        %v6503 = vsel %vm980, %v6498, 0
        %6505 = vmatprep.subr.mxu0 0.0
        %6506 = vmatpush1.msra.mxu0 %v6500
        %6507 = vmatprep.subr.mxu0 0.0
        %6508 = vmatpush1.msra.mxu0 0.0
        %6509 = vmatprep.subr.mxu0 0.0
        %6510 = vmatpush1.msra.mxu0 0.0
        %6511 = vmatprep.subr.mxu0 0.0
        %6512 = vmatpush1.msra.mxu0 0.0
        %6513 = vmatprep.subr.mxu0 0.0
        %6514 = vmatpush1.msra.mxu0 0.0
        %6515 = vmatprep.subr.mxu0 0.0
        %6516 = vmatpush1.msra.mxu0 0.0
        %6517 = vmatprep.subr.mxu0 0.0
        %6518 = vmatpush1.msra.mxu0 0.0
        %6519 = vmatprep.subr.mxu0 0.0
        %6520 = vmatpush1.msra.mxu0 0.0
        %6521 = vmatprep.subr.mxu0 0.0
        %6522 = vmatpush1.msra.mxu0 0.0
        %6523 = vmatprep.subr.mxu0 0.0
        %6524 = vmatpush1.msra.mxu0 0.0
        %6525 = vmatprep.subr.mxu0 0.0
        %6526 = vmatpush1.msra.mxu0 0.0
        %6527 = vmatprep.subr.mxu0 0.0
        %6528 = vmatpush1.msra.mxu0 0.0
        %6529 = vmatprep.subr.mxu0 0.0
        %6530 = vmatpush1.msra.mxu0 0.0
        %6531 = vmatprep.subr.mxu0 0.0
        %6532 = vmatpush1.msra.mxu0 0.0
        %6533 = vmatprep.subr.mxu0 0.0
        %6534 = vmatpush1.msra.mxu0 0.0
        %6535 = vmatprep.subr.mxu0 0.0
        %6536 = vmatpush1.msra.mxu0 0.0
        %6537 = vmatprep.subr.mxu0 0.0
        %6538 = vmatpush1.msra.mxu0 0.0
        %6539 = vmatprep.subr.mxu0 0.0
        %6540 = vmatpush1.msra.mxu0 0.0
        %6541 = vmatprep.subr.mxu0 0.0
        %6542 = vmatpush1.msra.mxu0 0.0
        %6543 = vmatprep.subr.mxu0 0.0
        %6544 = vmatpush1.msra.mxu0 0.0
        %6545 = vmatprep.subr.mxu0 0.0
        %6546 = vmatpush1.msra.mxu0 0.0
        %6547 = vmatprep.subr.mxu0 0.0
        %6548 = vmatpush1.msra.mxu0 0.0
        %6549 = vmatprep.subr.mxu0 0.0
        %6550 = vmatpush1.msra.mxu0 0.0
        %6551 = vmatprep.subr.mxu0 0.0
        %6552 = vmatpush1.msra.mxu0 0.0
        %6553 = vmatprep.subr.mxu0 0.0
        %6554 = vmatpush1.msra.mxu0 0.0
        %6555 = vmatprep.subr.mxu0 0.0
        %6556 = vmatpush1.msra.mxu0 0.0
        %6557 = vmatprep.subr.mxu0 0.0
        %6558 = vmatpush1.msra.mxu0 0.0
        %6559 = vmatprep.subr.mxu0 0.0
        %6560 = vmatpush1.msra.mxu0 0.0
        %6561 = vmatprep.subr.mxu0 0.0
        %6562 = vmatpush1.msra.mxu0 0.0
        %6563 = vmatprep.subr.mxu0 0.0
        %6564 = vmatpush1.msra.mxu0 0.0
        %6565 = vmatprep.subr.mxu0 0.0
        %6566 = vmatpush1.msra.mxu0 0.0
        %6567 = vmatprep.subr.mxu0 0.0
        %6568 = vmatpush1.msra.mxu0 0.0
        %6569 = vmatprep.mubr.f32.mxu0 0.0
        %6570 = vmatmul.mubr.f32.gmra.mrb[0].mxu0 %v6503
        %v6571 = vpop.f32.mrb[0].mxu0
        %v6572 = vadd.f32 0.0, %v6571
        %v6573 = vpop.f32.mrb[0].mxu0
        %6574 = vdwg.mxu0
        %6575 = vrot.lane.b32.xlu0 %v5993, 104
        %v6576 = vpop.permute.xlu0 %6575
        %6577 = vrot.lane.b32.xlu0 %v6076, 104
        %v6578 = vpop.permute.xlu0 %6577
        %v6579 = vsel %vm980, %v6576, 0
        %v6581 = vsel %vm980, %v6578, 0
        %6583 = vmatprep.subr.mxu0 0.0
        %6584 = vmatpush1.xpose.msra.mxu0 %v6581
        %6585 = vmatprep.subr.mxu0 0.0
        %6586 = vmatpush1.xpose.msra.mxu0 0.0
        %6587 = vmatprep.subr.mxu0 0.0
        %6588 = vmatpush1.xpose.msra.mxu0 0.0
        %6589 = vmatprep.subr.mxu0 0.0
        %6590 = vmatpush1.xpose.msra.mxu0 0.0
        %6591 = vmatprep.subr.mxu0 0.0
        %6592 = vmatpush1.xpose.msra.mxu0 0.0
        %6593 = vmatprep.subr.mxu0 0.0
        %6594 = vmatpush1.xpose.msra.mxu0 0.0
        %6595 = vmatprep.subr.mxu0 0.0
        %6596 = vmatpush1.xpose.msra.mxu0 0.0
        %6597 = vmatprep.subr.mxu0 0.0
        %6598 = vmatpush1.xpose.msra.mxu0 0.0
        %6599 = vmatprep.subr.mxu0 0.0
        %6600 = vmatpush1.xpose.msra.mxu0 0.0
        %6601 = vmatprep.subr.mxu0 0.0
        %6602 = vmatpush1.xpose.msra.mxu0 0.0
        %6603 = vmatprep.subr.mxu0 0.0
        %6604 = vmatpush1.xpose.msra.mxu0 0.0
        %6605 = vmatprep.subr.mxu0 0.0
        %6606 = vmatpush1.xpose.msra.mxu0 0.0
        %6607 = vmatprep.subr.mxu0 0.0
        %6608 = vmatpush1.xpose.msra.mxu0 0.0
        %6609 = vmatprep.subr.mxu0 0.0
        %6610 = vmatpush1.xpose.msra.mxu0 0.0
        %6611 = vmatprep.subr.mxu0 0.0
        %6612 = vmatpush1.xpose.msra.mxu0 0.0
        %6613 = vmatprep.subr.mxu0 0.0
        %6614 = vmatpush1.xpose.msra.mxu0 0.0
        %6615 = vmatprep.subr.mxu0 0.0
        %6616 = vmatpush1.xpose.msra.mxu0 0.0
        %6617 = vmatprep.subr.mxu0 0.0
        %6618 = vmatpush1.xpose.msra.mxu0 0.0
        %6619 = vmatprep.subr.mxu0 0.0
        %6620 = vmatpush1.xpose.msra.mxu0 0.0
        %6621 = vmatprep.subr.mxu0 0.0
        %6622 = vmatpush1.xpose.msra.mxu0 0.0
        %6623 = vmatprep.subr.mxu0 0.0
        %6624 = vmatpush1.xpose.msra.mxu0 0.0
        %6625 = vmatprep.subr.mxu0 0.0
        %6626 = vmatpush1.xpose.msra.mxu0 0.0
        %6627 = vmatprep.subr.mxu0 0.0
        %6628 = vmatpush1.xpose.msra.mxu0 0.0
        %6629 = vmatprep.subr.mxu0 0.0
        %6630 = vmatpush1.xpose.msra.mxu0 0.0
        %6631 = vmatprep.subr.mxu0 0.0
        %6632 = vmatpush1.xpose.msra.mxu0 0.0
        %6633 = vmatprep.subr.mxu0 0.0
        %6634 = vmatpush1.xpose.msra.mxu0 0.0
        %6635 = vmatprep.subr.mxu0 0.0
        %6636 = vmatpush1.xpose.msra.mxu0 0.0
        %6637 = vmatprep.subr.mxu0 0.0
        %6638 = vmatpush1.xpose.msra.mxu0 0.0
        %6639 = vmatprep.subr.mxu0 0.0
        %6640 = vmatpush1.xpose.msra.mxu0 0.0
        %6641 = vmatprep.subr.mxu0 0.0
        %6642 = vmatpush1.xpose.msra.mxu0 0.0
        %6643 = vmatprep.subr.mxu0 0.0
        %6644 = vmatpush1.xpose.msra.mxu0 0.0
        %6645 = vmatprep.subr.mxu0 0.0
        %6646 = vmatpush1.xpose.msra.mxu0 0.0
        %6647 = vmatprep.mubr.f32.mxu0 0.0
        %6648 = vmatmul.mubr.f32.gmra.mrb[0].mxu0 %v6579
        %v6649 = vpop.f32.mrb[0].mxu0
        %v6650 = vadd.f32 0.0, %v6649
        %v6651 = vpop.f32.mrb[0].mxu0
        %6652 = vdwg.mxu0
        %v6653 = vsel %vm887, -1e+12, %v6650
        %v6654 = vsel %vm980, %v6653, -inf
        %6655 = vmax.xlane.f32.xlu0 %v6654
        %v6656 = vpop.xlane.xlu0 %6655
        %v6657 = vsub.f32 %v6653, %v6656
        %v6658 = vmul.f32 %v6657, 1.442695
        %v6659 = vpow.pop %v6658
        %v6660 = vsel %vm980, %v6659, 0.0
        %6661 = vadd.xlane.f32.xlu0 %v6660
        %v6662 = vpop.xlane.xlu0 %6661
        %v6663 = vrcp.pop %v6662
        %v6664 = vmul.f32 %v6659, %v6663
        %6665 = vrot.lane.b32.xlu0 %v6076, 72
        %v6666 = vpop.permute.xlu0 %6665
        %v6669 = vsel %vm980, %v6664, 0
        %6671 = vmatprep.subr.mxu0 0.0
        %6672 = vmatpush1.msra.mxu0 %v6666
        %6673 = vmatprep.subr.mxu0 0.0
        %6674 = vmatpush1.msra.mxu0 0.0
        %6675 = vmatprep.subr.mxu0 0.0
        %6676 = vmatpush1.msra.mxu0 0.0
        %6677 = vmatprep.subr.mxu0 0.0
        %6678 = vmatpush1.msra.mxu0 0.0
        %6679 = vmatprep.subr.mxu0 0.0
        %6680 = vmatpush1.msra.mxu0 0.0
        %6681 = vmatprep.subr.mxu0 0.0
        %6682 = vmatpush1.msra.mxu0 0.0
        %6683 = vmatprep.subr.mxu0 0.0
        %6684 = vmatpush1.msra.mxu0 0.0
        %6685 = vmatprep.subr.mxu0 0.0
        %6686 = vmatpush1.msra.mxu0 0.0
        %6687 = vmatprep.subr.mxu0 0.0
        %6688 = vmatpush1.msra.mxu0 0.0
        %6689 = vmatprep.subr.mxu0 0.0
        %6690 = vmatpush1.msra.mxu0 0.0
        %6691 = vmatprep.subr.mxu0 0.0
        %6692 = vmatpush1.msra.mxu0 0.0
        %6693 = vmatprep.subr.mxu0 0.0
        %6694 = vmatpush1.msra.mxu0 0.0
        %6695 = vmatprep.subr.mxu0 0.0
        %6696 = vmatpush1.msra.mxu0 0.0
        %6697 = vmatprep.subr.mxu0 0.0
        %6698 = vmatpush1.msra.mxu0 0.0
        %6699 = vmatprep.subr.mxu0 0.0
        %6700 = vmatpush1.msra.mxu0 0.0
        %6701 = vmatprep.subr.mxu0 0.0
        %6702 = vmatpush1.msra.mxu0 0.0
        %6703 = vmatprep.subr.mxu0 0.0
        %6704 = vmatpush1.msra.mxu0 0.0
        %6705 = vmatprep.subr.mxu0 0.0
        %6706 = vmatpush1.msra.mxu0 0.0
        %6707 = vmatprep.subr.mxu0 0.0
        %6708 = vmatpush1.msra.mxu0 0.0
        %6709 = vmatprep.subr.mxu0 0.0
        %6710 = vmatpush1.msra.mxu0 0.0
        %6711 = vmatprep.subr.mxu0 0.0
        %6712 = vmatpush1.msra.mxu0 0.0
        %6713 = vmatprep.subr.mxu0 0.0
        %6714 = vmatpush1.msra.mxu0 0.0
        %6715 = vmatprep.subr.mxu0 0.0
        %6716 = vmatpush1.msra.mxu0 0.0
        %6717 = vmatprep.subr.mxu0 0.0
        %6718 = vmatpush1.msra.mxu0 0.0
        %6719 = vmatprep.subr.mxu0 0.0
        %6720 = vmatpush1.msra.mxu0 0.0
        %6721 = vmatprep.subr.mxu0 0.0
        %6722 = vmatpush1.msra.mxu0 0.0
        %6723 = vmatprep.subr.mxu0 0.0
        %6724 = vmatpush1.msra.mxu0 0.0
        %6725 = vmatprep.subr.mxu0 0.0
        %6726 = vmatpush1.msra.mxu0 0.0
        %6727 = vmatprep.subr.mxu0 0.0
        %6728 = vmatpush1.msra.mxu0 0.0
        %6729 = vmatprep.subr.mxu0 0.0
        %6730 = vmatpush1.msra.mxu0 0.0
        %6731 = vmatprep.subr.mxu0 0.0
        %6732 = vmatpush1.msra.mxu0 0.0
        %6733 = vmatprep.subr.mxu0 0.0
        %6734 = vmatpush1.msra.mxu0 0.0
        %6735 = vmatprep.mubr.f32.mxu0 0.0
        %6736 = vmatmul.mubr.f32.gmra.mrb[0].mxu0 %v6669
        %v6737 = vpop.f32.mrb[0].mxu0
        %v6738 = vadd.f32 0.0, %v6737
        %v6739 = vpop.f32.mrb[0].mxu0
        %6740 = vdwg.mxu0
        %6742 = vrot.lane.b32.xlu0 %v6406, 8
        %v6743 = vpop.permute.xlu0 %6742
        %6746 = vrot.lane.b32.xlu0 %v6572, 16
        %v6747 = vpop.permute.xlu0 %6746
        %6750 = vrot.lane.b32.xlu0 %v6738, 24
        %v6751 = vpop.permute.xlu0 %6750
        %v6753 = vsel %vm980, %v6240, %v6743
        %v6754 = vsel %vm1654, %v6753, %v6747
        %v6755 = vsel %vm1656, %v6754, %v6751
        %s6756 = scalar_lea.vmem %s20, 32
        %v6757 = vld [vmem:[%s6756] sm:$0xff]
        %v6758 = vld [vmem:[%s6756 + $0x8] sm:$0xff]
        %v6759 = vld [vmem:[%s6756 + $0x10] sm:$0xff]
        %v6760 = vld [vmem:[%s6756 + $0x18] sm:$0xff]
        %v6761 = vlaneseq
        %v6762 = vshrl.u32 %v6761, 7
        %v6763 = vsub.s32 4, %v6762
        %v6764 = vrot.slane %v5042, %v6763
        %v6766 = vsel %vm903, %v6755, 0
        %6768 = vmatprep.subr.mxu0 0.0
        %6769 = vmatpush1.msra.mxu0 %v6757
        %6770 = vmatprep.subr.mxu0 0.0
        %6771 = vmatpush1.msra.mxu0 %v6758
        %6772 = vmatprep.subr.mxu0 0.0
        %6773 = vmatpush1.msra.mxu0 %v6759
        %6774 = vmatprep.subr.mxu0 0.0
        %6775 = vmatpush1.msra.mxu0 %v6760
        %6776 = vmatprep.subr.mxu0 0.0
        %6777 = vmatpush1.msra.mxu0 0.0
        %6778 = vmatprep.subr.mxu0 0.0
        %6779 = vmatpush1.msra.mxu0 0.0
        %6780 = vmatprep.subr.mxu0 0.0
        %6781 = vmatpush1.msra.mxu0 0.0
        %6782 = vmatprep.subr.mxu0 0.0
        %6783 = vmatpush1.msra.mxu0 0.0
        %6784 = vmatprep.subr.mxu0 0.0
        %6785 = vmatpush1.msra.mxu0 0.0
        %6786 = vmatprep.subr.mxu0 0.0
        %6787 = vmatpush1.msra.mxu0 0.0
        %6788 = vmatprep.subr.mxu0 0.0
        %6789 = vmatpush1.msra.mxu0 0.0
        %6790 = vmatprep.subr.mxu0 0.0
        %6791 = vmatpush1.msra.mxu0 0.0
        %6792 = vmatprep.subr.mxu0 0.0
        %6793 = vmatpush1.msra.mxu0 0.0
        %6794 = vmatprep.subr.mxu0 0.0
        %6795 = vmatpush1.msra.mxu0 0.0
        %6796 = vmatprep.subr.mxu0 0.0
        %6797 = vmatpush1.msra.mxu0 0.0
        %6798 = vmatprep.subr.mxu0 0.0
        %6799 = vmatpush1.msra.mxu0 0.0
        %6800 = vmatprep.subr.mxu0 0.0
        %6801 = vmatpush1.msra.mxu0 0.0
        %6802 = vmatprep.subr.mxu0 0.0
        %6803 = vmatpush1.msra.mxu0 0.0
        %6804 = vmatprep.subr.mxu0 0.0
        %6805 = vmatpush1.msra.mxu0 0.0
        %6806 = vmatprep.subr.mxu0 0.0
        %6807 = vmatpush1.msra.mxu0 0.0
        %6808 = vmatprep.subr.mxu0 0.0
        %6809 = vmatpush1.msra.mxu0 0.0
        %6810 = vmatprep.subr.mxu0 0.0
        %6811 = vmatpush1.msra.mxu0 0.0
        %6812 = vmatprep.subr.mxu0 0.0
        %6813 = vmatpush1.msra.mxu0 0.0
        %6814 = vmatprep.subr.mxu0 0.0
        %6815 = vmatpush1.msra.mxu0 0.0
        %6816 = vmatprep.subr.mxu0 0.0
        %6817 = vmatpush1.msra.mxu0 0.0
        %6818 = vmatprep.subr.mxu0 0.0
        %6819 = vmatpush1.msra.mxu0 0.0
        %6820 = vmatprep.subr.mxu0 0.0
        %6821 = vmatpush1.msra.mxu0 0.0
        %6822 = vmatprep.subr.mxu0 0.0
        %6823 = vmatpush1.msra.mxu0 0.0
        %6824 = vmatprep.subr.mxu0 0.0
        %6825 = vmatpush1.msra.mxu0 0.0
        %6826 = vmatprep.subr.mxu0 0.0
        %6827 = vmatpush1.msra.mxu0 0.0
        %6828 = vmatprep.subr.mxu0 0.0
        %6829 = vmatpush1.msra.mxu0 0.0
        %6830 = vmatprep.subr.mxu0 0.0
        %6831 = vmatpush1.msra.mxu0 0.0
        %6832 = vmatprep.mubr.f32.mxu0 0.0
        %6833 = vmatmul.mubr.f32.gmra.mrb[0].mxu0 %v6766
        %v6834 = vpop.f32.mrb[0].mxu0
        %v6835 = vadd.f32 %v6764, %v6834
        %v6836 = vpop.f32.mrb[0].mxu0
        %6837 = vdwg.mxu0
        %v6838 = vadd.f32 %v5913, %v6835
        %v6839 = vsel %vm903, %v6838, 0.0
        %6840 = vadd.xlane.f32.xlu0 %v6839
        %v6841 = vpop.xlane.xlu0 %6840
        %v6842 = vmul.f32 %v6841, %v1743
        %v6843 = vsub.f32 %v6838, %v6842
        %v6844 = vmul.f32 %v6843, %v6843
        %v6845 = vsel %vm903, %v6844, 0.0
        %6846 = vadd.xlane.f32.xlu0 %v6845
        %v6847 = vpop.xlane.xlu0 %6846
        %v6848 = vmul.f32 %v6847, %v1743
        %v6849 = vadd.f32 %v6848, 1e-05
        %v6850 = vrsqrt.pop %v6849
        %v6851 = vmul.f32 %v6843, %v6850
        %v6852 = vlaneseq
        %v6853 = vshrl.u32 %v6852, 7
        %v6854 = vsub.s32 5, %v6853
        %v6855 = vrot.slane %v5042, %v6854
        %v6856 = vmul.f32 %v6851, %v6855
        %v6857 = vlaneseq
        %v6858 = vshrl.u32 %v6857, 7
        %v6859 = vsub.s32 6, %v6858
        %v6860 = vrot.slane %v5042, %v6859
        %v6861 = vadd.f32 %v6856, %v6860
        %s6862 = scalar_lea.vmem %s21, 32
        %v6863 = vld [vmem:[%s6862] sm:$0xff]
        %v6864 = vld [vmem:[%s6862 + $0x8] sm:$0xff]
        %v6865 = vld [vmem:[%s6862 + $0x10] sm:$0xff]
        %v6866 = vld [vmem:[%s6862 + $0x18] sm:$0xff]
        %s6867 = scalar_lea.vmem %s22, 1
        %v6868 = vld [vmem:[%s6867] sm:$0x1]
        %v6870 = vlaneseq
        %v6871 = vshrl.u32 %v6870, 7
        %v6872 = vsub.s32 0, %v6871
        %v6873 = vrot.slane %v6868, %v6872
        %v6876 = vsel %vm903, %v6861, 0
        %6878 = vmatprep.subr.mxu0 0.0
        %6879 = vmatpush1.msra.mxu0 %v6863
        %6880 = vmatprep.subr.mxu0 0.0
        %6881 = vmatpush1.msra.mxu0 %v6864
        %6882 = vmatprep.subr.mxu0 0.0
        %6883 = vmatpush1.msra.mxu0 %v6865
        %6884 = vmatprep.subr.mxu0 0.0
        %6885 = vmatpush1.msra.mxu0 %v6866
        %6886 = vmatprep.subr.mxu0 0.0
        %6887 = vmatpush1.msra.mxu0 0.0
        %6888 = vmatprep.subr.mxu0 0.0
        %6889 = vmatpush1.msra.mxu0 0.0
        %6890 = vmatprep.subr.mxu0 0.0
        %6891 = vmatpush1.msra.mxu0 0.0
        %6892 = vmatprep.subr.mxu0 0.0
        %6893 = vmatpush1.msra.mxu0 0.0
        %6894 = vmatprep.subr.mxu0 0.0
        %6895 = vmatpush1.msra.mxu0 0.0
        %6896 = vmatprep.subr.mxu0 0.0
        %6897 = vmatpush1.msra.mxu0 0.0
        %6898 = vmatprep.subr.mxu0 0.0
        %6899 = vmatpush1.msra.mxu0 0.0
        %6900 = vmatprep.subr.mxu0 0.0
        %6901 = vmatpush1.msra.mxu0 0.0
        %6902 = vmatprep.subr.mxu0 0.0
        %6903 = vmatpush1.msra.mxu0 0.0
        %6904 = vmatprep.subr.mxu0 0.0
        %6905 = vmatpush1.msra.mxu0 0.0
        %6906 = vmatprep.subr.mxu0 0.0
        %6907 = vmatpush1.msra.mxu0 0.0
        %6908 = vmatprep.subr.mxu0 0.0
        %6909 = vmatpush1.msra.mxu0 0.0
        %6910 = vmatprep.subr.mxu0 0.0
        %6911 = vmatpush1.msra.mxu0 0.0
        %6912 = vmatprep.subr.mxu0 0.0
        %6913 = vmatpush1.msra.mxu0 0.0
        %6914 = vmatprep.subr.mxu0 0.0
        %6915 = vmatpush1.msra.mxu0 0.0
        %6916 = vmatprep.subr.mxu0 0.0
        %6917 = vmatpush1.msra.mxu0 0.0
        %6918 = vmatprep.subr.mxu0 0.0
        %6919 = vmatpush1.msra.mxu0 0.0
        %6920 = vmatprep.subr.mxu0 0.0
        %6921 = vmatpush1.msra.mxu0 0.0
        %6922 = vmatprep.subr.mxu0 0.0
        %6923 = vmatpush1.msra.mxu0 0.0
        %6924 = vmatprep.subr.mxu0 0.0
        %6925 = vmatpush1.msra.mxu0 0.0
        %6926 = vmatprep.subr.mxu0 0.0
        %6927 = vmatpush1.msra.mxu0 0.0
        %6928 = vmatprep.subr.mxu0 0.0
        %6929 = vmatpush1.msra.mxu0 0.0
        %6930 = vmatprep.subr.mxu0 0.0
        %6931 = vmatpush1.msra.mxu0 0.0
        %6932 = vmatprep.subr.mxu0 0.0
        %6933 = vmatpush1.msra.mxu0 0.0
        %6934 = vmatprep.subr.mxu0 0.0
        %6935 = vmatpush1.msra.mxu0 0.0
        %6936 = vmatprep.subr.mxu0 0.0
        %6937 = vmatpush1.msra.mxu0 0.0
        %6938 = vmatprep.subr.mxu0 0.0
        %6939 = vmatpush1.msra.mxu0 0.0
        %6940 = vmatprep.subr.mxu0 0.0
        %6941 = vmatpush1.msra.mxu0 0.0
        %6942 = vmatprep.mubr.f32.mxu0 0.0
        %6943 = vmatmul.mubr.f32.gmra.mrb[0].mxu0 %v6876
        %v6944 = vpop.f32.mrb[0].mxu0
        %v6945 = vadd.f32 %v6873, %v6944
        %v6946 = vpop.f32.mrb[0].mxu0
        %6947 = vdwg.mxu0
        %v6948 = vmax.f32 %v6945, 0.0
        %s6949 = scalar_lea.vmem %s23, 64
        %v6950 = vld [vmem:[%s6949] sm:$0xff]
        %v6951 = vld [vmem:[%s6949 + $0x8] sm:$0xff]
        %v6952 = vld [vmem:[%s6949 + $0x10] sm:$0xff]
        %v6953 = vld [vmem:[%s6949 + $0x18] sm:$0xff]
        %v6954 = vld [vmem:[%s6949 + $0x20] sm:$0xff]
        %v6955 = vld [vmem:[%s6949 + $0x28] sm:$0xff]
        %v6956 = vld [vmem:[%s6949 + $0x30] sm:$0xff]
        %v6957 = vld [vmem:[%s6949 + $0x38] sm:$0xff]
        %v6958 = vlaneseq
        %v6959 = vshrl.u32 %v6958, 7
        %v6960 = vsub.s32 7, %v6959
        %v6961 = vrot.slane %v5042, %v6960
        %v6963 = vsel %vm1861, %v6948, 0
        %6965 = vmatprep.subr.mxu0 0.0
        %6966 = vmatpush1.msra.mxu0 %v6950
        %6967 = vmatprep.subr.mxu0 0.0
        %6968 = vmatpush1.msra.mxu0 %v6951
        %6969 = vmatprep.subr.mxu0 0.0
        %6970 = vmatpush1.msra.mxu0 %v6952
        %6971 = vmatprep.subr.mxu0 0.0
        %6972 = vmatpush1.msra.mxu0 %v6953
        %6973 = vmatprep.subr.mxu0 0.0
        %6974 = vmatpush1.msra.mxu0 %v6954
        %6975 = vmatprep.subr.mxu0 0.0
        %6976 = vmatpush1.msra.mxu0 %v6955
        %6977 = vmatprep.subr.mxu0 0.0
        %6978 = vmatpush1.msra.mxu0 %v6956
        %6979 = vmatprep.subr.mxu0 0.0
        %6980 = vmatpush1.msra.mxu0 %v6957
        %6981 = vmatprep.subr.mxu0 0.0
        %6982 = vmatpush1.msra.mxu0 0.0
        %6983 = vmatprep.subr.mxu0 0.0
        %6984 = vmatpush1.msra.mxu0 0.0
        %6985 = vmatprep.subr.mxu0 0.0
        %6986 = vmatpush1.msra.mxu0 0.0
        %6987 = vmatprep.subr.mxu0 0.0
        %6988 = vmatpush1.msra.mxu0 0.0
        %6989 = vmatprep.subr.mxu0 0.0
        %6990 = vmatpush1.msra.mxu0 0.0
        %6991 = vmatprep.subr.mxu0 0.0
        %6992 = vmatpush1.msra.mxu0 0.0
        %6993 = vmatprep.subr.mxu0 0.0
        %6994 = vmatpush1.msra.mxu0 0.0
        %6995 = vmatprep.subr.mxu0 0.0
        %6996 = vmatpush1.msra.mxu0 0.0
        %6997 = vmatprep.subr.mxu0 0.0
        %6998 = vmatpush1.msra.mxu0 0.0
        %6999 = vmatprep.subr.mxu0 0.0
        %7000 = vmatpush1.msra.mxu0 0.0
        %7001 = vmatprep.subr.mxu0 0.0
        %7002 = vmatpush1.msra.mxu0 0.0
        %7003 = vmatprep.subr.mxu0 0.0
        %7004 = vmatpush1.msra.mxu0 0.0
        %7005 = vmatprep.subr.mxu0 0.0
        %7006 = vmatpush1.msra.mxu0 0.0
        %7007 = vmatprep.subr.mxu0 0.0
        %7008 = vmatpush1.msra.mxu0 0.0
        %7009 = vmatprep.subr.mxu0 0.0
        %7010 = vmatpush1.msra.mxu0 0.0
        %7011 = vmatprep.subr.mxu0 0.0
        %7012 = vmatpush1.msra.mxu0 0.0
        %7013 = vmatprep.subr.mxu0 0.0
        %7014 = vmatpush1.msra.mxu0 0.0
        %7015 = vmatprep.subr.mxu0 0.0
        %7016 = vmatpush1.msra.mxu0 0.0
        %7017 = vmatprep.subr.mxu0 0.0
        %7018 = vmatpush1.msra.mxu0 0.0
        %7019 = vmatprep.subr.mxu0 0.0
        %7020 = vmatpush1.msra.mxu0 0.0
        %7021 = vmatprep.subr.mxu0 0.0
        %7022 = vmatpush1.msra.mxu0 0.0
        %7023 = vmatprep.subr.mxu0 0.0
        %7024 = vmatpush1.msra.mxu0 0.0
        %7025 = vmatprep.subr.mxu0 0.0
        %7026 = vmatpush1.msra.mxu0 0.0
        %7027 = vmatprep.subr.mxu0 0.0
        %7028 = vmatpush1.msra.mxu0 0.0
        %7029 = vmatprep.mubr.f32.mxu0 0.0
        %7030 = vmatmul.mubr.f32.gmra.mrb[0].mxu0 %v6963
        %v7031 = vpop.f32.mrb[0].mxu0
        %v7032 = vadd.f32 %v6961, %v7031
        %v7033 = vpop.f32.mrb[0].mxu0
        %7034 = vdwg.mxu0
        %v7035 = vadd.f32 %v6861, %v7032
        %v7036 = vsel %vm903, %v7035, 0.0
        %7037 = vadd.xlane.f32.xlu0 %v7036
        %v7038 = vpop.xlane.xlu0 %7037
        %v7039 = vmul.f32 %v7038, %v1743
        %v7040 = vsub.f32 %v7035, %v7039
        %v7041 = vmul.f32 %v7040, %v7040
        %v7042 = vsel %vm903, %v7041, 0.0
        %7043 = vadd.xlane.f32.xlu0 %v7042
        %v7044 = vpop.xlane.xlu0 %7043
        %v7045 = vmul.f32 %v7044, %v1743
        %v7046 = vadd.f32 %v7045, 1e-05
        %v7047 = vrsqrt.pop %v7046
        %v7048 = vmul.f32 %v7040, %v7047
        %v7049 = vlaneseq
        %v7050 = vshrl.u32 %v7049, 7
        %v7051 = vsub.s32 0, %v7050
        %v7052 = vrot.slane %v5043, %v7051
        %v7053 = vmul.f32 %v7048, %v7052
        %v7054 = vlaneseq
        %v7055 = vshrl.u32 %v7054, 7
        %v7056 = vsub.s32 1, %v7055
        %v7057 = vrot.slane %v5043, %v7056
        %v7058 = vadd.f32 %v7053, %v7057
        %v7059 = vld [vmem:[%s25] sm:$0xff]
        %v7060 = vld [vmem:[%s25 + $0x8] sm:$0xff]
        %v7061 = vld [vmem:[%s25 + $0x10] sm:$0xff]
        %v7062 = vld [vmem:[%s25 + $0x18] sm:$0xff]
        %v7063 = vld [vmem:[%s26] sm:$0x1]
        %v7065 = vlaneseq
        %v7066 = vshrl.u32 %v7065, 7
        %v7067 = vsub.s32 0, %v7066
        %v7068 = vrot.slane %v7063, %v7067
        %v7071 = vsel %vm903, %v7058, 0
        %7073 = vmatprep.subr.mxu0 0.0
        %7074 = vmatpush1.msra.mxu0 %v7059
        %7075 = vmatprep.subr.mxu0 0.0
        %7076 = vmatpush1.msra.mxu0 %v7060
        %7077 = vmatprep.subr.mxu0 0.0
        %7078 = vmatpush1.msra.mxu0 %v7061
        %7079 = vmatprep.subr.mxu0 0.0
        %7080 = vmatpush1.msra.mxu0 %v7062
        %7081 = vmatprep.subr.mxu0 0.0
        %7082 = vmatpush1.msra.mxu0 0.0
        %7083 = vmatprep.subr.mxu0 0.0
        %7084 = vmatpush1.msra.mxu0 0.0
        %7085 = vmatprep.subr.mxu0 0.0
        %7086 = vmatpush1.msra.mxu0 0.0
        %7087 = vmatprep.subr.mxu0 0.0
        %7088 = vmatpush1.msra.mxu0 0.0
        %7089 = vmatprep.subr.mxu0 0.0
        %7090 = vmatpush1.msra.mxu0 0.0
        %7091 = vmatprep.subr.mxu0 0.0
        %7092 = vmatpush1.msra.mxu0 0.0
        %7093 = vmatprep.subr.mxu0 0.0
        %7094 = vmatpush1.msra.mxu0 0.0
        %7095 = vmatprep.subr.mxu0 0.0
        %7096 = vmatpush1.msra.mxu0 0.0
        %7097 = vmatprep.subr.mxu0 0.0
        %7098 = vmatpush1.msra.mxu0 0.0
        %7099 = vmatprep.subr.mxu0 0.0
        %7100 = vmatpush1.msra.mxu0 0.0
        %7101 = vmatprep.subr.mxu0 0.0
        %7102 = vmatpush1.msra.mxu0 0.0
        %7103 = vmatprep.subr.mxu0 0.0
        %7104 = vmatpush1.msra.mxu0 0.0
        %7105 = vmatprep.subr.mxu0 0.0
        %7106 = vmatpush1.msra.mxu0 0.0
        %7107 = vmatprep.subr.mxu0 0.0
        %7108 = vmatpush1.msra.mxu0 0.0
        %7109 = vmatprep.subr.mxu0 0.0
        %7110 = vmatpush1.msra.mxu0 0.0
        %7111 = vmatprep.subr.mxu0 0.0
        %7112 = vmatpush1.msra.mxu0 0.0
        %7113 = vmatprep.subr.mxu0 0.0
        %7114 = vmatpush1.msra.mxu0 0.0
        %7115 = vmatprep.subr.mxu0 0.0
        %7116 = vmatpush1.msra.mxu0 0.0
        %7117 = vmatprep.subr.mxu0 0.0
        %7118 = vmatpush1.msra.mxu0 0.0
        %7119 = vmatprep.subr.mxu0 0.0
        %7120 = vmatpush1.msra.mxu0 0.0
        %7121 = vmatprep.subr.mxu0 0.0
        %7122 = vmatpush1.msra.mxu0 0.0
        %7123 = vmatprep.subr.mxu0 0.0
        %7124 = vmatpush1.msra.mxu0 0.0
        %7125 = vmatprep.subr.mxu0 0.0
        %7126 = vmatpush1.msra.mxu0 0.0
        %7127 = vmatprep.subr.mxu0 0.0
        %7128 = vmatpush1.msra.mxu0 0.0
        %7129 = vmatprep.subr.mxu0 0.0
        %7130 = vmatpush1.msra.mxu0 0.0
        %7131 = vmatprep.subr.mxu0 0.0
        %7132 = vmatpush1.msra.mxu0 0.0
        %7133 = vmatprep.subr.mxu0 0.0
        %7134 = vmatpush1.msra.mxu0 0.0
        %7135 = vmatprep.subr.mxu0 0.0
        %7136 = vmatpush1.msra.mxu0 0.0
        %7137 = vmatprep.mubr.f32.mxu0 0.0
        %7138 = vmatmul.mubr.f32.gmra.mrb[0].mxu0 %v7071
        %v7139 = vpop.f32.mrb[0].mxu0
        %v7140 = vadd.f32 %v7068, %v7139
        %v7141 = vpop.f32.mrb[0].mxu0
        %7142 = vdwg.mxu0
        %7143 = vst [vmem:[%s861] sm:$0xff] %v7140
        %s7144 = sand.u32 %s641, 1
        %s7145 = scalar_lea.sflag [#allocation3], %s7144
        %s7146 = sand.u32 %s641, 1
        %s7147 = smul.addr %s7146, 8
        %s7148 = scalar_lea.vmem [#allocation2], %s7147
        // Predicated region
        $region129: #{transformer_forward.1} parent=127 // pred_check
          %p7149 = pneg %p651
        $region130: #{transformer_forward.1} parent=127 // pred_check_branch
          %7151 = sbr.rel (%p7149) target = $region132
        $region131: #{transformer_forward.1} parent=127 // pred_region
          %s7153 = ssub.s32 128, 128
          %7154 = vsyncadd %s7145, %s7153
          %s7155 = smul.addr %s41, 128
          %s7156 = scalar_lea.hbm %s27, %s7155
          %s7158 = sshll.u32 %s7148, 4
          %s7159 = int_to_ptr.vmem [resolvable:$true] %s7158
          %7161 = dma.vmem_to_hbm [thread:$0]  %s7159, 128, %s7156, %s7145
        $region132: #{transformer_forward.1} parent=127 // pred_fallthru
          _
      $region128: #{transformer_forward.1} parent=5 // pred_fallthru
        _
      %p7162 = scmp.le.s32.totalorder 2, %s36
      // Predicated region
      $region133: #{transformer_forward.1} parent=5 // pred_check
        %p7163 = pneg %p7162
      $region134: #{transformer_forward.1} parent=5 // pred_check_branch
        %7165 = sbr.rel (%p7163) target = $region136
      $region135: #{transformer_forward.1} parent=5 // pred_region
        %s7166 = ssub.s32 %s36, 2
        // Predicated region
        $region137: #{transformer_forward.1} parent=135 // pred_check
          %p7167 = pneg %p657
        $region138: #{transformer_forward.1} parent=135 // pred_check_branch
          %7169 = sbr.rel (%p7167) target = $region140
        $region139: #{transformer_forward.1} parent=135 // pred_region
          %s7170 = sand.u32 %s642, 1
          %s7171 = scalar_lea.sflag [#allocation3], %s7170
          %s7172 = sand.u32 %s642, 1
          %s7173 = smul.addr %s7172, 8
          %s7174 = scalar_lea.vmem [#allocation2], %s7173
          %7175 = dma.done %s7171, 128
        $region140: #{transformer_forward.1} parent=135 // pred_fallthru
          _
      $region136: #{transformer_forward.1} parent=5 // pred_fallthru
        _
    $region6: #{transformer_forward.1} parent=1 // loop_footer
      %s40 = sadd.s32 1, %s36
    $region7: #{transformer_forward.1} parent=1 // loop_footer_branch
      %35 = sbr.rel target = $region3
    $region8: #{transformer_forward.1} parent=1 // loop_exit
      _
    %7176 = vsyncpa [#allocation3], 1
    %s7177 = scalar_lea.sflag [#allocation3], 1
    %7178 = vsyncpa %s7177, 1

</llo_original>
